<compile_context>
chip_gen: v5e
topology: v5e:2x2
jax: 0.10.0
libtpu: 0.0.40
codegen_flags: <defaults>
</compile_context>

<pallas_src>
import functools

import jax
import jax.numpy as jnp
from jax.experimental import pallas as pl
from jax.experimental.pallas import tpu as pltpu


def _silu(x):
    return x * jax.nn.sigmoid(x)


def _round_up(v, m):
    return ((v + m - 1) // m) * m


# ---------------------------------------------------------------------------
# VMEM budgeting / tile selection
# ---------------------------------------------------------------------------
def _vmem_estimate_bytes(tile, h, h2, g_pad):
    """Rough VMEM working set: double-buffered tiles + resident weights + live temporaries."""
    lane = lambda c: _round_up(max(c, 1), 128)          # lane dim pads to 128 in VMEM
    b = 0
    b += 2 * tile * lane(2 * h) * 2                     # [x|xw] tile, bf16, double buffered
    b += 2 * tile * lane(4) * 4                         # [pos|bid] tile, f32
    b += 2 * tile * lane(3) * 4                         # v output tile, f32
    b += 2 * 8 * lane(g_pad) * 4                        # per-graph accumulator block
    b += 2 * _round_up(2 * h, 8) * lane(2 * h2) * 2     # blockdiag(w1, w1v), bf16
    b += 2 * 4 * 8 * lane(h2) * 4                       # bias rows / 2nd-layer weight rows
    b += tile * lane(2 * h2) * 4 * 3                    # h_all + SiLU temporaries (f32)
    b += tile * lane(g_pad) * 4 * 2                     # graph-id iota + masked contributions
    b += tile * lane(h2) * 4 * 4                        # per-direction temporaries
    return b


def _pick_tile(n, h, h2, g_pad, num_cores, requested, budget_bytes):
    """Largest 128-multiple tile <= requested that covers N/num_cores and fits the VMEM budget."""
    need = _round_up(max(1, -(-n // num_cores)), 128)
    tile = max(128, min(_round_up(requested, 128), need))
    while tile > 128 and _vmem_estimate_bytes(tile, h, h2, g_pad) > budget_bytes:
        tile = max(128, _round_up(tile // 2, 128))
    return tile


# ---------------------------------------------------------------------------
# Fused Pallas kernel: scalar head + segment-sum + self-supervised vector head
# ---------------------------------------------------------------------------
def _fused_heads_kernel(xcat_ref, posb_ref, wblk_ref, b1_ref, w2r_ref, b1v_ref, w2vr_ref,
                        b2_ref, b2v_ref, y_ref, v_ref, *, h2, g_pad, training_std):
    t = pl.program_id(1)                       # atom-tile index within this core's slice

    # y is a resident per-core accumulator (same output block across the "arbitrary" axis).
    @pl.when(t == 0)
    def _init():
        y_ref[...] = jnp.zeros_like(y_ref)

    # ---- first layers of both heads in one MXU push:  [x | xw] @ blockdiag(w1, w1v)
    h_all = jnp.dot(xcat_ref[...], wblk_ref[...],
                    preferred_element_type=jnp.float32)          # [T, 2*H2]  bf16 in, f32 acc
    h_s = _silu(h_all[:, :h2] + b1_ref[...])                     # scalar-head hidden    [T,H2]
    base_v = h_all[:, h2:]                                       # xw @ W1v (bias added after
                                                                 # direction scaling)    [T,H2]

    # ---- scalar head layer 2: Linear(H/2,1) as VPU row-multiply + lane reduce (f32 math; v5e-safe)
    s = jnp.sum(h_s * w2r_ref[...], axis=-1, keepdims=True) + b2_ref[0, 0]   # [T,1]
    s = s * training_std                                                     # x = x * training_std

    # ---- reduce(x, batch), reduce_op='sum': iota==batch mask into the resident accumulator
    bid = posb_ref[:, 3:4].astype(jnp.int32)                                 # [T,1]; -1 = padded atom
    gids = jax.lax.broadcasted_iota(jnp.int32, (s.shape[0], g_pad), 1)
    contrib = jnp.where(gids == bid, s, 0.0)                                 # [T, g_pad]
    y_ref[...] += jnp.sum(contrib, axis=0, keepdims=True)[None]              # [1,1,g_pad]
    # TODO(synk): for hundreds+ graphs, scalar-prefetch per-tile graph-id ranges
    # (PrefetchScalarGridSpec) and mask only that window instead of the full g_pad width.

    # ---- self-supervised vector head on v[n,d,:] = dirs[n,d] * xw[n,:]  (stand-in rank-1 structure)
    pos = posb_ref[:, :3]                                                    # [T,3]
    nrm = jnp.sqrt(jnp.sum(pos * pos, axis=-1, keepdims=True))
    dirs = pos / (nrm + 1e-9)
    outs = []
    for d in range(3):                                                       # static unroll x,y,z
        hd = _silu(dirs[:, d:d + 1] * base_v + b1v_ref[...])                 # [T,H2]
        outs.append(jnp.sum(hd * w2vr_ref[...], axis=-1, keepdims=True) + b2v_ref[0, 0])
    lane = jax.lax.broadcasted_iota(jnp.int32, (pos.shape[0], 3), 1)
    od = jnp.where(lane == 0, outs[0], jnp.where(lane == 1, outs[1], outs[2]))  # [T,3]
    v_ref[...] = pos + od                                                    # single full-block store


# ---------------------------------------------------------------------------
# pallas_call wrapper
# ---------------------------------------------------------------------------
def fused_heads(x, xw, pos, batch,
                w1, b1, w2, b2, w1v, b1v, w2v, b2v,
                *, num_graphs, training_mean, training_std,
                tile_n=1024, num_cores=2, vmem_budget_bytes=16 * 2**20):
    N, H = x.shape
    H2 = w1.shape[1]
    g_pad = _round_up(num_graphs, 128)                       # lane-dense accumulator width
    tile = _pick_tile(N, H, H2, g_pad, num_cores, tile_n, vmem_budget_bytes)
    tpc = -(-N // (tile * num_cores))                        # tiles per core
    n_pad = num_cores * tpc * tile

    # Single fused pad+cast pass in bf16 (no f32 intermediate copies); -1 marks padded atoms.
    xcat = jnp.concatenate([x.astype(jnp.bfloat16), xw.astype(jnp.bfloat16)], axis=1)
    xcat = jnp.pad(xcat, ((0, n_pad - N), (0, 0)))
    posb = jnp.concatenate([pos.astype(jnp.float32),
                            batch.astype(jnp.float32).reshape(N, 1)], axis=1)
    posb = jnp.pad(posb, ((0, n_pad - N), (0, 0)), constant_values=-1.0)

    # blockdiag(w1, w1v): one (2H, 2H2) bf16 weight => one MXU push per atom tile.
    w_blk = jnp.zeros((2 * H, 2 * H2), jnp.float32)
    w_blk = w_blk.at[:H, :H2].set(w1).at[H:, H2:].set(w1v).astype(jnp.bfloat16)
    b1_r = b1.reshape(1, H2).astype(jnp.float32)
    b1v_r = b1v.reshape(1, H2).astype(jnp.float32)
    w2_r = w2.reshape(1, H2).astype(jnp.float32)             # [H2,1] column -> [1,H2] row
    w2v_r = w2v.reshape(1, H2).astype(jnp.float32)
    b2_s = jnp.asarray(b2, jnp.float32).reshape(1, 1)
    b2v_s = jnp.asarray(b2v, jnp.float32).reshape(1, 1)

    tiled = lambda shape: pl.BlockSpec(shape, lambda c, t: (c * tpc + t, 0))
    resident = lambda shape: pl.BlockSpec(shape, lambda c, t: (0, 0))   # constant index_map
    smem = pl.BlockSpec(memory_space=pltpu.MemorySpace.SMEM)

    kernel = functools.partial(_fused_heads_kernel, h2=H2, g_pad=g_pad,
                               training_std=float(training_std))

    y_acc, v_pad = pl.pallas_call(
        kernel,
        grid=(num_cores, tpc),
        in_specs=[
            tiled((tile, 2 * H)),          # [x | xw]   bf16
            tiled((tile, 4)),              # [pos | bid] f32 (packed side input)
            resident((2 * H, 2 * H2)),     # blockdiag(w1, w1v)
            resident((1, H2)),             # b1
            resident((1, H2)),             # w2 row
            resident((1, H2)),             # b1v
            resident((1, H2)),             # w2v row
            smem,                          # b2  (scalar)
            smem,                          # b2v (scalar)
        ],
        out_specs=[
            pl.BlockSpec((1, 1, g_pad), lambda c, t: (c, 0, 0)),    # per-core graph accumulator
            pl.BlockSpec((tile, 3), lambda c, t: (c * tpc + t, 0)),  # per-atom vector head
        ],
        out_shape=[
            jax.ShapeDtypeStruct((num_cores, 1, g_pad), jnp.float32),
            jax.ShapeDtypeStruct((n_pad, 3), jnp.float32),
        ],
        compiler_params=pltpu.CompilerParams(
            # leading core axis shards across v7x's 2 TensorCores; atom axis accumulates y.
            dimension_semantics=("parallel", "arbitrary"),
        ),
    )(xcat, posb, w_blk, b1_r, w2_r, b1v_r, w2v_r, b2_s, b2v_s)

    # Cross-core combine + training_mean in the wrapper (keeps padded graph lanes clean).
    y = y_acc.sum(axis=(0, 1))[:num_graphs].reshape(num_graphs, 1) + training_mean
    v = v_pad[:N]                                            # drop padded atoms
    return y, v


# ---------------------------------------------------------------------------
# Representation stand-in (glue, plain JAX)
# ---------------------------------------------------------------------------
def representation_stand_in(z, pos, emb, wv, dtype=jnp.float32):
    # TODO(synk): the full TorchMD-ET representation model (RBF distance expansion + equivariant
    # attention stack) is checkpoint-configured and not reproduced here; this deterministic
    # stand-in emits x:[N,H] and per-atom vector magnitudes xw:[N,H].  The equivariant features
    # v[n,d,:] = dirs[n,d]*xw[n,:] are consumed directly by the fused kernel (rank-1 per atom)
    # and never materialized as [N,3,H]; the real representation's v is not rank-1.
    x = emb[z]                                               # [N,H] embedding lookup
    mu = x.mean(-1, keepdims=True)
    var = x.var(-1, keepdims=True)
    x = (x - mu) / jnp.sqrt(var + 1e-5)                      # out_norm LayerNorm (no affine)
    xw = x @ wv                                              # [N,H]
    return x.astype(dtype), xw.astype(dtype)                 # casts fuse into the producers


# ---------------------------------------------------------------------------
# Full forward
# ---------------------------------------------------------------------------
def et_model_forward(z, pos, batch, params, num_graphs, training_mean, training_std,
                     self_supervised=True, tile_n=1024, num_cores=2):
    N = z.shape[0]
    x, xw = representation_stand_in(z, pos, params["embedding"], params["wv"],
                                    dtype=jnp.bfloat16)

    if self_supervised:
        vp = (params["w1v"], params["b1v"], params["w2v"], params["b2v"])
    else:
        vp = (params["w1"], params["b1"], params["w2"], params["b2"])   # vector head unused

    y, v_head = fused_heads(
        x, xw, pos, batch,
        params["w1"], params["b1"], params["w2"], params["b2"],
        vp[0], vp[1], vp[2], vp[3],
        num_graphs=num_graphs, training_mean=training_mean,
        training_std=training_std, tile_n=tile_n, num_cores=num_cores)

    if self_supervised:
        v = v_head.reshape(N, 3, 1)
    else:
        dirs = pos / (jnp.linalg.norm(pos, axis=-1, keepdims=True) + 1e-9)
        v = dirs[:, :, None] * xw.astype(jnp.float32)[:, None, :]       # raw features [N,3,H]
    return y, v


# ---------------------------------------------------------------------------
# Pure-JAX reference (f32) for a loose numerical sanity check
# ---------------------------------------------------------------------------
def _reference_forward(z, pos, batch, params, num_graphs, training_mean, training_std):
    x, xw = representation_stand_in(z, pos, params["embedding"], params["wv"])
    h = _silu(x @ params["w1"] + params["b1"])
    s = (h @ params["w2"] + params["b2"]) * training_std
    y = jax.ops.segment_sum(s[:, 0], batch, num_segments=num_graphs)
    y = y.reshape(num_graphs, 1) + training_mean
    dirs = pos / (jnp.linalg.norm(pos, axis=-1, keepdims=True) + 1e-9)
    v = dirs[:, :, None] * xw[:, None, :]
    hv = _silu(v @ params["w1v"] + params["b1v"])
    ov = hv @ params["w2v"] + params["b2v"]
    return y, pos[:, :, None] + ov


def _xavier(key, shape):
    fan_in, fan_out = shape
    lim = jnp.sqrt(6.0 / (fan_in + fan_out))
    return jax.random.uniform(key, shape, jnp.float32, -lim, lim)


if __name__ == "__main__":
    N, H = 600, 64        # atoms, embedding_dimension (hidden_channels)
    H2 = H // 2
    G = 4                 # molecules in the batch
    TRAINING_MEAN, TRAINING_STD = 0.25, 1.5

    key = jax.random.PRNGKey(0)
    ks = jax.random.split(key, 10)

    z = jax.random.randint(ks[0], (N,), 1, 10)                   # atomic numbers
    pos = jax.random.normal(ks[1], (N, 3), jnp.float32)          # positions
    batch = jnp.repeat(jnp.arange(G, dtype=jnp.int32), N // G)   # 150 atoms per molecule

    params = {
        # representation stand-in
        "embedding": jax.random.normal(ks[2], (100, H), jnp.float32) * 0.1,
        "wv": _xavier(ks[3], (H, H)),
        # ScalarWithDropout.output_network (xavier_uniform weights, zero biases)
        "w1": _xavier(ks[4], (H, H2)), "b1": jnp.zeros((H2,), jnp.float32),
        "w2": _xavier(ks[5], (H2, 1)), "b2": jnp.zeros((1,), jnp.float32),
        # self_supervised output_vector head
        "w1v": _xavier(ks[6], (H, H2)), "b1v": jnp.zeros((H2,), jnp.float32),
        "w2v": _xavier(ks[7], (H2, 1)), "b2v": jnp.zeros((1,), jnp.float32),
    }

    y_ref, v_ref = _reference_forward(z, pos, batch, params, G, TRAINING_MEAN, TRAINING_STD)

    def check(y, v):
        y = jax.block_until_ready(y)
        v = jax.block_until_ready(v)
        assert y.shape == (G, 1) and v.shape == (N, 3, 1)
        assert bool(jnp.all(jnp.isfinite(y))) and bool(jnp.all(jnp.isfinite(v)))
        # Loose tolerance: first-layer matmuls run with bf16 inputs (f32 accumulation).
        assert bool(jnp.allclose(y, y_ref, rtol=5e-2, atol=0.5))
        assert bool(jnp.allclose(v, v_ref, rtol=5e-2, atol=0.1))

    # Default tile size (clamps to N/num_cores for this small demo): grid (2, 1).
    check(*et_model_forward(z, pos, batch, params, G, TRAINING_MEAN, TRAINING_STD,
                            self_supervised=True))
    # Force several atom tiles per core to exercise the resident accumulator path: grid (2, 3).
    check(*et_model_forward(z, pos, batch, params, G, TRAINING_MEAN, TRAINING_STD,
                            self_supervised=True, tile_n=128))

    print("KERNEL_OK")
</pallas_src>

<mosaic_0001>
module attributes {stable_mosaic.version = 11 : i64} {
  func.func @_fused_heads_kernel(%arg0: i32, %arg1: i32, %arg2: memref<384x128xbf16, #tpu.memory_space<vmem>>, %arg3: memref<384x4xf32, #tpu.memory_space<vmem>>, %arg4: memref<128x64xbf16, #tpu.memory_space<vmem>>, %arg5: memref<1x32xf32, #tpu.memory_space<vmem>>, %arg6: memref<1x32xf32, #tpu.memory_space<vmem>>, %arg7: memref<1x32xf32, #tpu.memory_space<vmem>>, %arg8: memref<1x32xf32, #tpu.memory_space<vmem>>, %arg9: memref<1x1xf32, #tpu.memory_space<smem>>, %arg10: memref<1x1xf32, #tpu.memory_space<smem>>, %arg11: memref<1x1x128xf32, #tpu.memory_space<vmem>>, %arg12: memref<384x3xf32, #tpu.memory_space<vmem>>) attributes {dimension_semantics = [#tpu.dimension_semantics<parallel>, #tpu.dimension_semantics<arbitrary>], iteration_bounds = array<i64: 2, 1>, scalar_prefetch = 0 : i64, scratch_operands = 0 : i64, tpu.core_type = #tpu.core_type<tc>, window_params = [{transform_indices = @transform_0, window_bounds = array<i64: 384, 128>}, {transform_indices = @transform_1, window_bounds = array<i64: 384, 4>}, {pipeline_mode = #tpu.pipeline_mode<synchronous>, transform_indices = @transform_2, window_bounds = array<i64: 128, 64>}, {pipeline_mode = #tpu.pipeline_mode<synchronous>, transform_indices = @transform_3, window_bounds = array<i64: 1, 32>}, {pipeline_mode = #tpu.pipeline_mode<synchronous>, transform_indices = @transform_4, window_bounds = array<i64: 1, 32>}, {pipeline_mode = #tpu.pipeline_mode<synchronous>, transform_indices = @transform_5, window_bounds = array<i64: 1, 32>}, {pipeline_mode = #tpu.pipeline_mode<synchronous>, transform_indices = @transform_6, window_bounds = array<i64: 1, 32>}, {transform_indices = @transform_7, window_bounds = array<i64: 1, 1>}, {transform_indices = @transform_8, window_bounds = array<i64: 1, 1>}, {transform_indices = @transform_9, window_bounds = array<i64: 1, 1, 128>}, {transform_indices = @transform_10, window_bounds = array<i64: 384, 3>}]} {
    %c0_i32 = arith.constant 0 : i32
    %0 = arith.cmpi eq, %arg1, %c0_i32 : i32
    %1 = arith.extui %0 : i1 to i32
    %c0_i32_0 = arith.constant 0 : i32
    %2 = arith.cmpi ne, %1, %c0_i32_0 : i32
    scf.if %2 {
      %cst_53 = arith.constant 0.000000e+00 : f32
      %126 = vector.broadcast %cst_53 : f32 to vector<1x1x128xf32>
      %c0_54 = arith.constant 0 : index
      %c0_55 = arith.constant 0 : index
      %c0_56 = arith.constant 0 : index
      %127 = vector.load %arg11[%c0_54, %c0_55, %c0_56] : memref<1x1x128xf32, #tpu.memory_space<vmem>>, vector<1x1x128xf32>
      tpu.vector_store %arg11[%c0_54, %c0_55, %c0_56], %126 {strides = array<i32>} : memref<1x1x128xf32, #tpu.memory_space<vmem>>, vector<1x1x128xf32>,
    } else {
    }
    %c0 = arith.constant 0 : index
    %c0_1 = arith.constant 0 : index
    %3 = vector.load %arg2[%c0, %c0_1] : memref<384x128xbf16, #tpu.memory_space<vmem>>, vector<384x128xbf16>
    %c0_2 = arith.constant 0 : index
    %c0_3 = arith.constant 0 : index
    %4 = vector.load %arg4[%c0_2, %c0_3] : memref<128x64xbf16, #tpu.memory_space<vmem>>, vector<128x64xbf16>
    %cst = arith.constant dense<0.000000e+00> : vector<384x64xf32>
    %5 = tpu.matmul %3, %4, %cst {dimension_numbers = #tpu.dot_dimension_numbers<[1], [0], [0], [1], [0, 0, 1, 1], [], []>} : vector<384x128xbf16>, vector<128x64xbf16>, vector<384x64xf32> -> vector<384x64xf32>
    %6 = vector.extract_strided_slice %5 {offsets = [0, 0], sizes = [384, 32], strides = [1, 1]} : vector<384x64xf32> to vector<384x32xf32>
    %c0_4 = arith.constant 0 : index
    %c0_5 = arith.constant 0 : index
    %7 = vector.load %arg5[%c0_4, %c0_5] : memref<1x32xf32, #tpu.memory_space<vmem>>, vector<1x32xf32>
    %8 = vector.broadcast %7 : vector<1x32xf32> to vector<384x32xf32>
    %9 = arith.addf %6, %8 : vector<384x32xf32>
    %10 = arith.negf %9 : vector<384x32xf32>
    %11 = math.exp %10 : vector<384x32xf32>
    %cst_6 = arith.constant 1.000000e+00 : f32
    %12 = vector.broadcast %cst_6 : f32 to vector<384x32xf32>
    %13 = arith.addf %12, %11 : vector<384x32xf32>
    %14 = arith.divf %12, %13 : vector<384x32xf32>
    %15 = arith.mulf %9, %14 : vector<384x32xf32>
    %16 = vector.extract_strided_slice %5 {offsets = [0, 32], sizes = [384, 32], strides = [1, 1]} : vector<384x64xf32> to vector<384x32xf32>
    %c0_7 = arith.constant 0 : index
    %c0_8 = arith.constant 0 : index
    %17 = vector.load %arg6[%c0_7, %c0_8] : memref<1x32xf32, #tpu.memory_space<vmem>>, vector<1x32xf32>
    %18 = vector.broadcast %17 : vector<1x32xf32> to vector<384x32xf32>
    %19 = arith.mulf %15, %18 : vector<384x32xf32>
    %cst_9 = arith.constant dense<0.000000e+00> : vector<384xf32>
    %20 = vector.multi_reduction <add>, %19, %cst_9 [1] : vector<384x32xf32> to vector<384xf32>
    %21 = vector.shape_cast %20 : vector<384xf32> to vector<384x1xf32>
    %c0_10 = arith.constant 0 : index
    %c0_11 = arith.constant 0 : index
    %22 = memref.load %arg9[%c0_10, %c0_11] : memref<1x1xf32, #tpu.memory_space<smem>>
    %23 = vector.broadcast %22 : f32 to vector<384x1xf32>
    %24 = arith.addf %21, %23 : vector<384x1xf32>
    %cst_12 = arith.constant 1.500000e+00 : f32
    %25 = vector.broadcast %cst_12 : f32 to vector<384x1xf32>
    %26 = arith.mulf %24, %25 : vector<384x1xf32>
    %c0_13 = arith.constant 0 : index
    %c3 = arith.constant 3 : index
    %27 = vector.load %arg3[%c0_13, %c3] : memref<384x4xf32, #tpu.memory_space<vmem>>, vector<384x1xf32>
    %28 = arith.fptosi %27 : vector<384x1xf32> to vector<384x1xi32>
    %29 = tpu.iota {dimensions = array<i32: 1>} : vector<384x128xi32>
    %30 = vector.broadcast %28 : vector<384x1xi32> to vector<384x128xi32>
    %31 = arith.cmpi eq, %29, %30 : vector<384x128xi32>
    %cst_14 = arith.constant 0.000000e+00 : f32
    %32 = vector.shape_cast %26 : vector<384x1xf32> to vector<384x1xf32>
    %33 = vector.broadcast %32 : vector<384x1xf32> to vector<384x128xf32>
    %34 = vector.broadcast %cst_14 : f32 to vector<384x128xf32>
    %35 = arith.select %31, %33, %34 : vector<384x128xi1>, vector<384x128xf32>
    %c0_15 = arith.constant 0 : index
    %c0_16 = arith.constant 0 : index
    %c0_17 = arith.constant 0 : index
    %36 = vector.load %arg11[%c0_15, %c0_16, %c0_17] : memref<1x1x128xf32, #tpu.memory_space<vmem>>, vector<1x1x128xf32>
    %cst_18 = arith.constant dense<0.000000e+00> : vector<128xf32>
    %37 = vector.multi_reduction <add>, %35, %cst_18 [0] : vector<384x128xf32> to vector<128xf32>
    %38 = vector.shape_cast %37 : vector<128xf32> to vector<1x128xf32>
    %39 = vector.shape_cast %38 : vector<1x128xf32> to vector<1x1x128xf32>
    %40 = arith.addf %36, %39 : vector<1x1x128xf32>
    %c0_19 = arith.constant 0 : index
    %c0_20 = arith.constant 0 : index
    %c0_21 = arith.constant 0 : index
    %41 = vector.load %arg11[%c0_19, %c0_20, %c0_21] : memref<1x1x128xf32, #tpu.memory_space<vmem>>, vector<1x1x128xf32>
    tpu.vector_store %arg11[%c0_19, %c0_20, %c0_21], %40 {strides = array<i32>} : memref<1x1x128xf32, #tpu.memory_space<vmem>>, vector<1x1x128xf32>,
    %c0_22 = arith.constant 0 : index
    %c0_23 = arith.constant 0 : index
    %42 = vector.load %arg3[%c0_22, %c0_23] : memref<384x4xf32, #tpu.memory_space<vmem>>, vector<384x3xf32>
    %43 = arith.mulf %42, %42 : vector<384x3xf32>
    %cst_24 = arith.constant dense<0.000000e+00> : vector<384xf32>
    %44 = vector.multi_reduction <add>, %43, %cst_24 [1] : vector<384x3xf32> to vector<384xf32>
    %45 = vector.shape_cast %44 : vector<384xf32> to vector<384x1xf32>
    %46 = math.sqrt %45 : vector<384x1xf32>
    %cst_25 = arith.constant 9.99999971E-10 : f32
    %47 = vector.broadcast %cst_25 : f32 to vector<384x1xf32>
    %48 = arith.addf %46, %47 : vector<384x1xf32>
    %49 = vector.broadcast %48 : vector<384x1xf32> to vector<384x3xf32>
    %50 = arith.divf %42, %49 : vector<384x3xf32>
    %51 = vector.extract_strided_slice %50 {offsets = [0, 0], sizes = [384, 1], strides = [1, 1]} : vector<384x3xf32> to vector<384x1xf32>
    %52 = vector.broadcast %51 : vector<384x1xf32> to vector<384x32xf32>
    %53 = arith.mulf %52, %16 : vector<384x32xf32>
    %c0_26 = arith.constant 0 : index
    %c0_27 = arith.constant 0 : index
    %54 = vector.load %arg7[%c0_26, %c0_27] : memref<1x32xf32, #tpu.memory_space<vmem>>, vector<1x32xf32>
    %55 = vector.broadcast %54 : vector<1x32xf32> to vector<384x32xf32>
    %56 = arith.addf %53, %55 : vector<384x32xf32>
    %57 = arith.negf %56 : vector<384x32xf32>
    %58 = math.exp %57 : vector<384x32xf32>
    %cst_28 = arith.constant 1.000000e+00 : f32
    %59 = vector.broadcast %cst_28 : f32 to vector<384x32xf32>
    %60 = arith.addf %59, %58 : vector<384x32xf32>
    %61 = arith.divf %59, %60 : vector<384x32xf32>
    %62 = arith.mulf %56, %61 : vector<384x32xf32>
    %c0_29 = arith.constant 0 : index
    %c0_30 = arith.constant 0 : index
    %63 = vector.load %arg8[%c0_29, %c0_30] : memref<1x32xf32, #tpu.memory_space<vmem>>, vector<1x32xf32>
    %64 = vector.broadcast %63 : vector<1x32xf32> to vector<384x32xf32>
    %65 = arith.mulf %62, %64 : vector<384x32xf32>
    %cst_31 = arith.constant dense<0.000000e+00> : vector<384xf32>
    %66 = vector.multi_reduction <add>, %65, %cst_31 [1] : vector<384x32xf32> to vector<384xf32>
    %67 = vector.shape_cast %66 : vector<384xf32> to vector<384x1xf32>
    %c0_32 = arith.constant 0 : index
    %c0_33 = arith.constant 0 : index
    %68 = memref.load %arg10[%c0_32, %c0_33] : memref<1x1xf32, #tpu.memory_space<smem>>
    %69 = vector.broadcast %68 : f32 to vector<384x1xf32>
    %70 = arith.addf %67, %69 : vector<384x1xf32>
    %71 = vector.extract_strided_slice %50 {offsets = [0, 1], sizes = [384, 1], strides = [1, 1]} : vector<384x3xf32> to vector<384x1xf32>
    %72 = vector.broadcast %71 : vector<384x1xf32> to vector<384x32xf32>
    %73 = arith.mulf %72, %16 : vector<384x32xf32>
    %c0_34 = arith.constant 0 : index
    %c0_35 = arith.constant 0 : index
    %74 = vector.load %arg7[%c0_34, %c0_35] : memref<1x32xf32, #tpu.memory_space<vmem>>, vector<1x32xf32>
    %75 = vector.broadcast %74 : vector<1x32xf32> to vector<384x32xf32>
    %76 = arith.addf %73, %75 : vector<384x32xf32>
    %77 = arith.negf %76 : vector<384x32xf32>
    %78 = math.exp %77 : vector<384x32xf32>
    %cst_36 = arith.constant 1.000000e+00 : f32
    %79 = vector.broadcast %cst_36 : f32 to vector<384x32xf32>
    %80 = arith.addf %79, %78 : vector<384x32xf32>
    %81 = arith.divf %79, %80 : vector<384x32xf32>
    %82 = arith.mulf %76, %81 : vector<384x32xf32>
    %c0_37 = arith.constant 0 : index
    %c0_38 = arith.constant 0 : index
    %83 = vector.load %arg8[%c0_37, %c0_38] : memref<1x32xf32, #tpu.memory_space<vmem>>, vector<1x32xf32>
    %84 = vector.broadcast %83 : vector<1x32xf32> to vector<384x32xf32>
    %85 = arith.mulf %82, %84 : vector<384x32xf32>
    %cst_39 = arith.constant dense<0.000000e+00> : vector<384xf32>
    %86 = vector.multi_reduction <add>, %85, %cst_39 [1] : vector<384x32xf32> to vector<384xf32>
    %87 = vector.shape_cast %86 : vector<384xf32> to vector<384x1xf32>
    %c0_40 = arith.constant 0 : index
    %c0_41 = arith.constant 0 : index
    %88 = memref.load %arg10[%c0_40, %c0_41] : memref<1x1xf32, #tpu.memory_space<smem>>
    %89 = vector.broadcast %88 : f32 to vector<384x1xf32>
    %90 = arith.addf %87, %89 : vector<384x1xf32>
    %91 = vector.extract_strided_slice %50 {offsets = [0, 2], sizes = [384, 1], strides = [1, 1]} : vector<384x3xf32> to vector<384x1xf32>
    %92 = vector.broadcast %91 : vector<384x1xf32> to vector<384x32xf32>
    %93 = arith.mulf %92, %16 : vector<384x32xf32>
    %c0_42 = arith.constant 0 : index
    %c0_43 = arith.constant 0 : index
    %94 = vector.load %arg7[%c0_42, %c0_43] : memref<1x32xf32, #tpu.memory_space<vmem>>, vector<1x32xf32>
    %95 = vector.broadcast %94 : vector<1x32xf32> to vector<384x32xf32>
    %96 = arith.addf %93, %95 : vector<384x32xf32>
    %97 = arith.negf %96 : vector<384x32xf32>
    %98 = math.exp %97 : vector<384x32xf32>
    %cst_44 = arith.constant 1.000000e+00 : f32
    %99 = vector.broadcast %cst_44 : f32 to vector<384x32xf32>
    %100 = arith.addf %99, %98 : vector<384x32xf32>
    %101 = arith.divf %99, %100 : vector<384x32xf32>
    %102 = arith.mulf %96, %101 : vector<384x32xf32>
    %c0_45 = arith.constant 0 : index
    %c0_46 = arith.constant 0 : index
    %103 = vector.load %arg8[%c0_45, %c0_46] : memref<1x32xf32, #tpu.memory_space<vmem>>, vector<1x32xf32>
    %104 = vector.broadcast %103 : vector<1x32xf32> to vector<384x32xf32>
    %105 = arith.mulf %102, %104 : vector<384x32xf32>
    %cst_47 = arith.constant dense<0.000000e+00> : vector<384xf32>
    %106 = vector.multi_reduction <add>, %105, %cst_47 [1] : vector<384x32xf32> to vector<384xf32>
    %107 = vector.shape_cast %106 : vector<384xf32> to vector<384x1xf32>
    %c0_48 = arith.constant 0 : index
    %c0_49 = arith.constant 0 : index
    %108 = memref.load %arg10[%c0_48, %c0_49] : memref<1x1xf32, #tpu.memory_space<smem>>
    %109 = vector.broadcast %108 : f32 to vector<384x1xf32>
    %110 = arith.addf %107, %109 : vector<384x1xf32>
    %111 = tpu.iota {dimensions = array<i32: 1>} : vector<384x3xi32>
    %c0_i32_50 = arith.constant 0 : i32
    %112 = vector.broadcast %c0_i32_50 : i32 to vector<384x3xi32>
    %113 = arith.cmpi eq, %111, %112 : vector<384x3xi32>
    %c1_i32 = arith.constant 1 : i32
    %114 = vector.broadcast %c1_i32 : i32 to vector<384x3xi32>
    %115 = arith.cmpi eq, %111, %114 : vector<384x3xi32>
    %116 = vector.shape_cast %90 : vector<384x1xf32> to vector<384x1xf32>
    %117 = vector.broadcast %116 : vector<384x1xf32> to vector<384x3xf32>
    %118 = vector.shape_cast %110 : vector<384x1xf32> to vector<384x1xf32>
    %119 = vector.broadcast %118 : vector<384x1xf32> to vector<384x3xf32>
    %120 = arith.select %115, %117, %119 : vector<384x3xi1>, vector<384x3xf32>
    %121 = vector.shape_cast %70 : vector<384x1xf32> to vector<384x1xf32>
    %122 = vector.broadcast %121 : vector<384x1xf32> to vector<384x3xf32>
    %123 = arith.select %113, %122, %120 : vector<384x3xi1>, vector<384x3xf32>
    %124 = arith.addf %42, %123 : vector<384x3xf32>
    %c0_51 = arith.constant 0 : index
    %c0_52 = arith.constant 0 : index
    %125 = vector.load %arg12[%c0_51, %c0_52] : memref<384x3xf32, #tpu.memory_space<vmem>>, vector<384x3xf32>
    tpu.vector_store %arg12[%c0_51, %c0_52], %124 {strides = array<i32>} : memref<384x3xf32, #tpu.memory_space<vmem>>, vector<384x3xf32>,
    return
  }
  func.func @transform_0(%arg0: i32, %arg1: i32) -> (i32, i32) {
    %c1_i32 = arith.constant 1 : i32
    %0 = arith.muli %arg0, %c1_i32 : i32
    %1 = arith.addi %0, %arg1 : i32
    %c0_i32 = arith.constant 0 : i32
    %c0_i32_0 = arith.constant 0 : i32
    return %1, %c0_i32 : i32, i32
  }
  func.func @transform_1(%arg0: i32, %arg1: i32) -> (i32, i32) {
    %c1_i32 = arith.constant 1 : i32
    %0 = arith.muli %arg0, %c1_i32 : i32
    %1 = arith.addi %0, %arg1 : i32
    %c0_i32 = arith.constant 0 : i32
    %c0_i32_0 = arith.constant 0 : i32
    return %1, %c0_i32 : i32, i32
  }
  func.func @transform_2(%arg0: i32, %arg1: i32) -> (i32, i32) {
    %c0_i32 = arith.constant 0 : i32
    %c0_i32_0 = arith.constant 0 : i32
    %c0_i32_1 = arith.constant 0 : i32
    return %c0_i32, %c0_i32_0 : i32, i32
  }
  func.func @transform_3(%arg0: i32, %arg1: i32) -> (i32, i32) {
    %c0_i32 = arith.constant 0 : i32
    %c0_i32_0 = arith.constant 0 : i32
    %c0_i32_1 = arith.constant 0 : i32
    return %c0_i32, %c0_i32_0 : i32, i32
  }
  func.func @transform_4(%arg0: i32, %arg1: i32) -> (i32, i32) {
    %c0_i32 = arith.constant 0 : i32
    %c0_i32_0 = arith.constant 0 : i32
    %c0_i32_1 = arith.constant 0 : i32
    return %c0_i32, %c0_i32_0 : i32, i32
  }
  func.func @transform_5(%arg0: i32, %arg1: i32) -> (i32, i32) {
    %c0_i32 = arith.constant 0 : i32
    %c0_i32_0 = arith.constant 0 : i32
    %c0_i32_1 = arith.constant 0 : i32
    return %c0_i32, %c0_i32_0 : i32, i32
  }
  func.func @transform_6(%arg0: i32, %arg1: i32) -> (i32, i32) {
    %c0_i32 = arith.constant 0 : i32
    %c0_i32_0 = arith.constant 0 : i32
    %c0_i32_1 = arith.constant 0 : i32
    return %c0_i32, %c0_i32_0 : i32, i32
  }
  func.func @transform_7(%arg0: i32, %arg1: i32) -> (i32, i32) {
    %c0_i32 = arith.constant 0 : i32
    %c0_i32_0 = arith.constant 0 : i32
    %c0_i32_1 = arith.constant 0 : i32
    return %c0_i32, %c0_i32_0 : i32, i32
  }
  func.func @transform_8(%arg0: i32, %arg1: i32) -> (i32, i32) {
    %c0_i32 = arith.constant 0 : i32
    %c0_i32_0 = arith.constant 0 : i32
    %c0_i32_1 = arith.constant 0 : i32
    return %c0_i32, %c0_i32_0 : i32, i32
  }
  func.func @transform_9(%arg0: i32, %arg1: i32) -> (i32, i32, i32) {
    %c0_i32 = arith.constant 0 : i32
    %c0_i32_0 = arith.constant 0 : i32
    %c0_i32_1 = arith.constant 0 : i32
    return %arg0, %c0_i32, %c0_i32_0 : i32, i32, i32
  }
  func.func @transform_10(%arg0: i32, %arg1: i32) -> (i32, i32) {
    %c1_i32 = arith.constant 1 : i32
    %0 = arith.muli %arg0, %c1_i32 : i32
    %1 = arith.addi %0, %arg1 : i32
    %c0_i32 = arith.constant 0 : i32
    %c0_i32_0 = arith.constant 0 : i32
    return %1, %c0_i32 : i32, i32
  }
}

</mosaic_0001>

<llo_original>
// kernel: tpu_custom_call.1
$region0: #{tpu_custom_call.1}
  #allocation0 [shape = 'u32[]', space=smem, size = 0x4, offset = 0x4, fixed_abs, tag = 'smem constant byte address 0x4 - core index']
  #allocation1 [shape = 'u32[72,128]{1,0:T(1,128)}', space=vmem, size = 0x9000, scoped, tag = 'internal scratch']
  #allocation2 [shape = 'f32[1,1]{1,0:T(1,128)S(6)}', space=smem, size = 0x200, scoped, tag = 'scoped memory for tpu_custom_call.1']
  #allocation3 [shape = 'f32[1,1]{1,0:T(1,128)S(6)}', space=smem, size = 0x200, scoped, tag = 'scoped memory for tpu_custom_call.1']
  %s0 = inlined_call_operand.vmem [shape: bf16[768,128], index: 0, kind: input, shape index: {}]
  %s1 = inlined_call_operand.vmem [shape: f32[768,4], index: 1, kind: input, shape index: {}]
  %s2 = inlined_call_operand.vmem [shape: bf16[128,64], index: 2, kind: input, shape index: {}]
  %s3 = inlined_call_operand.vmem [shape: f32[1,32], index: 3, kind: input, shape index: {}]
  %s4 = inlined_call_operand.vmem [shape: f32[1,32], index: 4, kind: input, shape index: {}]
  %s5 = inlined_call_operand.vmem [shape: f32[1,32], index: 5, kind: input, shape index: {}]
  %s6 = inlined_call_operand.vmem [shape: f32[1,32], index: 6, kind: input, shape index: {}]
  %s7 = inlined_call_operand.<no memory space> [shape: f32[1,1], index: 7, kind: input, shape index: {}]
  %s8 = inlined_call_operand.<no memory space> [shape: f32[1,1], index: 8, kind: input, shape index: {}]
  %s9 = inlined_call_operand.hbm [shape: f32[2,1,128], index: 9, kind: output, shape index: {0}]
  %s10 = inlined_call_operand.vmem [shape: f32[768,3], index: 10, kind: output, shape index: {1}]
  %11 = xla_tuple %s9, %s10
  %s12 = sld [smem:[#allocation0]]
  $region81: #{tpu_custom_call.1} parent=0
    _
  %s14 = ssub.s32 1, %s12
  %s15 = scalar_select 0, %s14, %s12
  %16 = sst [smem:[#allocation2]] %s7
  %17 = sst [smem:[#allocation3]] %s8
  $region1: #{tpu_custom_call.1} parent=0
    #allocation4 [shape = 'u8[1024]{0}', space=vmem, size = 0x400, scoped, tag = 'output window, operand 0']
    #allocation5 [shape = 's32[2]{0}', space=sflag, size = 0x8, scoped, tag = 'scoped memory for tpu_custom_call.1']
    %18 = vsyncpa [#allocation5], 0
    %s19 = scalar_lea.sflag [#allocation5], 1
    %20 = vsyncpa %s19, 0
    loop: start=0, step=1, limit=4
    $region2: #{tpu_custom_call.1} parent=1 // loop_pre_header
      _
    $region3: #{tpu_custom_call.1} parent=1 // loop_header
      %s22 = sphi 0, %s26
      %p23 = scmp.ge.s32.totalorder %s22, 4
      %s29 = sphi 0, %s41
      %s30 = sphi 0, %s37
      %s31 = sphi 0, %s29
      %s32 = sphi 0, %s30
      %s33 = sphi 0, %s31
      %s34 = sphi 0, %s32
      %s46 = sphi 0, %s48
      %s49 = sphi 0, %s46
      %s50 = sphi 0, %s49
      %s66 = sphi 0, %s50
      %s74 = sphi 0, %s76
      %s77 = sphi 0, %s74
      %s78 = sphi 0, %s77
      %s94 = sphi 0, %s78
      %s98 = sphi 0, %s98
      %s100 = sphi 0, %s98
      %s101 = sphi 0, %s100
      %s115 = sphi 0, %s101
      %s119 = sphi 0, %s119
      %s121 = sphi 0, %s119
      %s122 = sphi 0, %s121
      %s136 = sphi 0, %s122
      %s140 = sphi 0, %s140
      %s142 = sphi 0, %s140
      %s143 = sphi 0, %s142
      %s157 = sphi 0, %s143
      %s161 = sphi 0, %s161
      %s163 = sphi 0, %s161
      %s164 = sphi 0, %s163
      %s178 = sphi 0, %s164
      %s182 = sphi 0, %s182
      %s184 = sphi 0, %s182
      %s185 = sphi 0, %s184
      %s199 = sphi 0, %s185
      %s203 = sphi 0, %s203
      %s205 = sphi 0, %s203
      %s206 = sphi 0, %s205
      %s220 = sphi 0, %s206
      %s224 = sphi 0, %s224
      %s226 = sphi 0, %s224
      %s227 = sphi 0, %s226
      %s241 = sphi 0, %s227
      %s247 = sphi 0, %s249
      %s250 = sphi 0, %s247
      %s251 = sphi 0, %s250
      %s267 = sphi 0, %s251
      %s275 = sphi 0, %s277
      %s278 = sphi 0, %s275
      %s279 = sphi 0, %s278
      %s295 = sphi 0, %s279
    $region4: #{tpu_custom_call.1} parent=1 // loop_header_branch
      %25 = sbr.rel (%p23) target = $region8
    $region5: #{tpu_custom_call.1} parent=1 // loop_body
      %s27 = ssub.s32 %s22, 1
      %s28 = ssub.s32 %s22, 2
      %s35 = sadd.s32 1, %s30
      %p36 = scmp.ge.s32.totalorder %s35, 1
      %s37 = scalar_select %p36, 0, %s35
      %s38 = sadd.s32 1, %s29
      %s39 = scalar_select %p36, %s38, %s29
      %p40 = scmp.ge.s32.totalorder %s39, 2
      %s41 = scalar_select %p40, 0, %s39
      %s42 = sadd.s32 %s29, %s30
      %s43 = sadd.s32 %s41, %s37
      %s44 = ssub.s32 %s42, %s43
      %p45 = scmp.eq.s32.totalorder %s44, 0
      %s47 = sadd.s32 %s46, 1
      %s48 = scalar_select %p45, %s46, %s47
      %p51 = pneg %p45
      %p52 = scmp.eq.s32.totalorder %s22, 1
      %p53 = por %p51, %p52
      %p54 = scmp.ne.s32.totalorder %s46, %s49
      %p55 = scmp.eq.s32.totalorder %s22, 0
      %p56 = por %p54, %p55
      %p57 = scmp.ne.s32.totalorder %s46, %s49
      %p58 = scmp.eq.s32.totalorder %s27, 1
      %p59 = por %p57, %p58
      %p60 = scmp.ne.s32.totalorder %s49, %s50
      %p61 = scmp.eq.s32.totalorder %s27, 0
      %p62 = por %p60, %p61
      %p63 = scmp.ne.s32.totalorder %s49, %s50
      %p64 = scmp.eq.s32.totalorder %s28, 1
      %p65 = por %p63, %p64
      %p67 = scmp.ne.s32.totalorder %s50, %s66
      %p68 = scmp.eq.s32.totalorder %s28, 0
      %p69 = por %p67, %p68
      %s70 = sadd.s32 %s29, %s30
      %s71 = sadd.s32 %s41, %s37
      %s72 = ssub.s32 %s70, %s71
      %p73 = scmp.eq.s32.totalorder %s72, 0
      %s75 = sadd.s32 %s74, 1
      %s76 = scalar_select %p73, %s74, %s75
      %p79 = pneg %p73
      %p80 = scmp.eq.s32.totalorder %s22, 1
      %p81 = por %p79, %p80
      %p82 = scmp.ne.s32.totalorder %s74, %s77
      %p83 = scmp.eq.s32.totalorder %s22, 0
      %p84 = por %p82, %p83
      %p85 = scmp.ne.s32.totalorder %s74, %s77
      %p86 = scmp.eq.s32.totalorder %s27, 1
      %p87 = por %p85, %p86
      %p88 = scmp.ne.s32.totalorder %s77, %s78
      %p89 = scmp.eq.s32.totalorder %s27, 0
      %p90 = por %p88, %p89
      %p91 = scmp.ne.s32.totalorder %s77, %s78
      %p92 = scmp.eq.s32.totalorder %s28, 1
      %p93 = por %p91, %p92
      %p95 = scmp.ne.s32.totalorder %s78, %s94
      %p96 = scmp.eq.s32.totalorder %s28, 0
      %p97 = por %p95, %p96
      %s99 = sadd.s32 %s98, 1
      %p102 = scmp.eq.s32.totalorder %s22, 1
      %p103 = scmp.ne.s32.totalorder %s98, %s100
      %p104 = scmp.eq.s32.totalorder %s22, 0
      %p105 = por %p103, %p104
      %p106 = scmp.ne.s32.totalorder %s98, %s100
      %p107 = scmp.eq.s32.totalorder %s27, 1
      %p108 = por %p106, %p107
      %p109 = scmp.ne.s32.totalorder %s100, %s101
      %p110 = scmp.eq.s32.totalorder %s27, 0
      %p111 = por %p109, %p110
      %p112 = scmp.ne.s32.totalorder %s100, %s101
      %p113 = scmp.eq.s32.totalorder %s28, 1
      %p114 = por %p112, %p113
      %p116 = scmp.ne.s32.totalorder %s101, %s115
      %p117 = scmp.eq.s32.totalorder %s28, 0
      %p118 = por %p116, %p117
      %s120 = sadd.s32 %s119, 1
      %p123 = scmp.eq.s32.totalorder %s22, 1
      %p124 = scmp.ne.s32.totalorder %s119, %s121
      %p125 = scmp.eq.s32.totalorder %s22, 0
      %p126 = por %p124, %p125
      %p127 = scmp.ne.s32.totalorder %s119, %s121
      %p128 = scmp.eq.s32.totalorder %s27, 1
      %p129 = por %p127, %p128
      %p130 = scmp.ne.s32.totalorder %s121, %s122
      %p131 = scmp.eq.s32.totalorder %s27, 0
      %p132 = por %p130, %p131
      %p133 = scmp.ne.s32.totalorder %s121, %s122
      %p134 = scmp.eq.s32.totalorder %s28, 1
      %p135 = por %p133, %p134
      %p137 = scmp.ne.s32.totalorder %s122, %s136
      %p138 = scmp.eq.s32.totalorder %s28, 0
      %p139 = por %p137, %p138
      %s141 = sadd.s32 %s140, 1
      %p144 = scmp.eq.s32.totalorder %s22, 1
      %p145 = scmp.ne.s32.totalorder %s140, %s142
      %p146 = scmp.eq.s32.totalorder %s22, 0
      %p147 = por %p145, %p146
      %p148 = scmp.ne.s32.totalorder %s140, %s142
      %p149 = scmp.eq.s32.totalorder %s27, 1
      %p150 = por %p148, %p149
      %p151 = scmp.ne.s32.totalorder %s142, %s143
      %p152 = scmp.eq.s32.totalorder %s27, 0
      %p153 = por %p151, %p152
      %p154 = scmp.ne.s32.totalorder %s142, %s143
      %p155 = scmp.eq.s32.totalorder %s28, 1
      %p156 = por %p154, %p155
      %p158 = scmp.ne.s32.totalorder %s143, %s157
      %p159 = scmp.eq.s32.totalorder %s28, 0
      %p160 = por %p158, %p159
      %s162 = sadd.s32 %s161, 1
      %p165 = scmp.eq.s32.totalorder %s22, 1
      %p166 = scmp.ne.s32.totalorder %s161, %s163
      %p167 = scmp.eq.s32.totalorder %s22, 0
      %p168 = por %p166, %p167
      %p169 = scmp.ne.s32.totalorder %s161, %s163
      %p170 = scmp.eq.s32.totalorder %s27, 1
      %p171 = por %p169, %p170
      %p172 = scmp.ne.s32.totalorder %s163, %s164
      %p173 = scmp.eq.s32.totalorder %s27, 0
      %p174 = por %p172, %p173
      %p175 = scmp.ne.s32.totalorder %s163, %s164
      %p176 = scmp.eq.s32.totalorder %s28, 1
      %p177 = por %p175, %p176
      %p179 = scmp.ne.s32.totalorder %s164, %s178
      %p180 = scmp.eq.s32.totalorder %s28, 0
      %p181 = por %p179, %p180
      %s183 = sadd.s32 %s182, 1
      %p186 = scmp.eq.s32.totalorder %s22, 1
      %p187 = scmp.ne.s32.totalorder %s182, %s184
      %p188 = scmp.eq.s32.totalorder %s22, 0
      %p189 = por %p187, %p188
      %p190 = scmp.ne.s32.totalorder %s182, %s184
      %p191 = scmp.eq.s32.totalorder %s27, 1
      %p192 = por %p190, %p191
      %p193 = scmp.ne.s32.totalorder %s184, %s185
      %p194 = scmp.eq.s32.totalorder %s27, 0
      %p195 = por %p193, %p194
      %p196 = scmp.ne.s32.totalorder %s184, %s185
      %p197 = scmp.eq.s32.totalorder %s28, 1
      %p198 = por %p196, %p197
      %p200 = scmp.ne.s32.totalorder %s185, %s199
      %p201 = scmp.eq.s32.totalorder %s28, 0
      %p202 = por %p200, %p201
      %s204 = sadd.s32 %s203, 1
      %p207 = scmp.eq.s32.totalorder %s22, 1
      %p208 = scmp.ne.s32.totalorder %s203, %s205
      %p209 = scmp.eq.s32.totalorder %s22, 0
      %p210 = por %p208, %p209
      %p211 = scmp.ne.s32.totalorder %s203, %s205
      %p212 = scmp.eq.s32.totalorder %s27, 1
      %p213 = por %p211, %p212
      %p214 = scmp.ne.s32.totalorder %s205, %s206
      %p215 = scmp.eq.s32.totalorder %s27, 0
      %p216 = por %p214, %p215
      %p217 = scmp.ne.s32.totalorder %s205, %s206
      %p218 = scmp.eq.s32.totalorder %s28, 1
      %p219 = por %p217, %p218
      %p221 = scmp.ne.s32.totalorder %s206, %s220
      %p222 = scmp.eq.s32.totalorder %s28, 0
      %p223 = por %p221, %p222
      %s225 = sadd.s32 %s224, 1
      %p228 = scmp.eq.s32.totalorder %s22, 1
      %p229 = scmp.ne.s32.totalorder %s224, %s226
      %p230 = scmp.eq.s32.totalorder %s22, 0
      %p231 = por %p229, %p230
      %p232 = scmp.ne.s32.totalorder %s224, %s226
      %p233 = scmp.eq.s32.totalorder %s27, 1
      %p234 = por %p232, %p233
      %p235 = scmp.ne.s32.totalorder %s226, %s227
      %p236 = scmp.eq.s32.totalorder %s27, 0
      %p237 = por %p235, %p236
      %p238 = scmp.ne.s32.totalorder %s226, %s227
      %p239 = scmp.eq.s32.totalorder %s28, 1
      %p240 = por %p238, %p239
      %p242 = scmp.ne.s32.totalorder %s227, %s241
      %p243 = scmp.eq.s32.totalorder %s28, 0
      %p244 = por %p242, %p243
      %s245 = ssub.s32 %s29, %s41
      %p246 = scmp.eq.s32.totalorder %s245, 0
      %s248 = sadd.s32 %s247, 1
      %s249 = scalar_select %p246, %s247, %s248
      %p252 = pneg %p246
      %p253 = scmp.eq.s32.totalorder %s22, 1
      %p254 = por %p252, %p253
      %p255 = scmp.ne.s32.totalorder %s247, %s250
      %p256 = scmp.eq.s32.totalorder %s22, 0
      %p257 = por %p255, %p256
      %p258 = scmp.ne.s32.totalorder %s247, %s250
      %p259 = scmp.eq.s32.totalorder %s27, 1
      %p260 = por %p258, %p259
      %p261 = scmp.ne.s32.totalorder %s250, %s251
      %p262 = scmp.eq.s32.totalorder %s27, 0
      %p263 = por %p261, %p262
      %p264 = scmp.ne.s32.totalorder %s250, %s251
      %p265 = scmp.eq.s32.totalorder %s28, 1
      %p266 = por %p264, %p265
      %p268 = scmp.ne.s32.totalorder %s251, %s267
      %p269 = scmp.eq.s32.totalorder %s28, 0
      %p270 = por %p268, %p269
      %s271 = sadd.s32 %s29, %s30
      %s272 = sadd.s32 %s41, %s37
      %s273 = ssub.s32 %s271, %s272
      %p274 = scmp.eq.s32.totalorder %s273, 0
      %s276 = sadd.s32 %s275, 1
      %s277 = scalar_select %p274, %s275, %s276
      %p280 = pneg %p274
      %p281 = scmp.eq.s32.totalorder %s22, 1
      %p282 = por %p280, %p281
      %p283 = scmp.ne.s32.totalorder %s275, %s278
      %p284 = scmp.eq.s32.totalorder %s22, 0
      %p285 = por %p283, %p284
      %p286 = scmp.ne.s32.totalorder %s275, %s278
      %p287 = scmp.eq.s32.totalorder %s27, 1
      %p288 = por %p286, %p287
      %p289 = scmp.ne.s32.totalorder %s278, %s279
      %p290 = scmp.eq.s32.totalorder %s27, 0
      %p291 = por %p289, %p290
      %p292 = scmp.ne.s32.totalorder %s278, %s279
      %p293 = scmp.eq.s32.totalorder %s28, 1
      %p294 = por %p292, %p293
      %p296 = scmp.ne.s32.totalorder %s279, %s295
      %p297 = scmp.eq.s32.totalorder %s28, 0
      %p298 = por %p296, %p297
      %p299 = scmp.le.s32.totalorder 1, %s22
      %p300 = scmp.lt.s32.totalorder %s22, 3
      %p301 = pnand %p299, %p300
      %p302 = pneg %p301
      // Predicated region
      $region9: #{tpu_custom_call.1} parent=5 // pred_check
        _
      $region10: #{tpu_custom_call.1} parent=5 // pred_check_branch
        %304 = sbr.rel (%p301) target = $region12
      $region11: #{tpu_custom_call.1} parent=5 // pred_region
        %s305 = ssub.s32 %s22, 1
        // Predicated region
        $region13: #{tpu_custom_call.1} parent=11 // pred_check
          %p306 = pneg %p111
        $region14: #{tpu_custom_call.1} parent=11 // pred_check_branch
          %308 = sbr.rel (%p306) target = $region16
        $region15: #{tpu_custom_call.1} parent=11 // pred_region
          _
        $region16: #{tpu_custom_call.1} parent=11 // pred_fallthru
          _
        // Predicated region
        $region17: #{tpu_custom_call.1} parent=11 // pred_check
          %p309 = pneg %p132
        $region18: #{tpu_custom_call.1} parent=11 // pred_check_branch
          %311 = sbr.rel (%p309) target = $region20
        $region19: #{tpu_custom_call.1} parent=11 // pred_region
          _
        $region20: #{tpu_custom_call.1} parent=11 // pred_fallthru
          _
        // Predicated region
        $region21: #{tpu_custom_call.1} parent=11 // pred_check
          %p312 = pneg %p153
        $region22: #{tpu_custom_call.1} parent=11 // pred_check_branch
          %314 = sbr.rel (%p312) target = $region24
        $region23: #{tpu_custom_call.1} parent=11 // pred_region
          _
        $region24: #{tpu_custom_call.1} parent=11 // pred_fallthru
          _
        // Predicated region
        $region25: #{tpu_custom_call.1} parent=11 // pred_check
          %p315 = pneg %p174
        $region26: #{tpu_custom_call.1} parent=11 // pred_check_branch
          %317 = sbr.rel (%p315) target = $region28
        $region27: #{tpu_custom_call.1} parent=11 // pred_region
          _
        $region28: #{tpu_custom_call.1} parent=11 // pred_fallthru
          _
        // Predicated region
        $region29: #{tpu_custom_call.1} parent=11 // pred_check
          %p318 = pneg %p195
        $region30: #{tpu_custom_call.1} parent=11 // pred_check_branch
          %320 = sbr.rel (%p318) target = $region32
        $region31: #{tpu_custom_call.1} parent=11 // pred_region
          _
        $region32: #{tpu_custom_call.1} parent=11 // pred_fallthru
          _
        // Predicated region
        $region33: #{tpu_custom_call.1} parent=11 // pred_check
          %p321 = pneg %p216
        $region34: #{tpu_custom_call.1} parent=11 // pred_check_branch
          %323 = sbr.rel (%p321) target = $region36
        $region35: #{tpu_custom_call.1} parent=11 // pred_region
          _
        $region36: #{tpu_custom_call.1} parent=11 // pred_fallthru
          _
        // Predicated region
        $region37: #{tpu_custom_call.1} parent=11 // pred_check
          %p324 = pneg %p237
        $region38: #{tpu_custom_call.1} parent=11 // pred_check_branch
          %326 = sbr.rel (%p324) target = $region40
        $region39: #{tpu_custom_call.1} parent=11 // pred_region
          _
        $region40: #{tpu_custom_call.1} parent=11 // pred_fallthru
          _
      $region12: #{tpu_custom_call.1} parent=5 // pred_fallthru
        _
      %p327 = scmp.lt.s32.totalorder %s22, 2
      // Predicated region
      $region41: #{tpu_custom_call.1} parent=5 // pred_check
        %p328 = pneg %p327
      $region42: #{tpu_custom_call.1} parent=5 // pred_check_branch
        %330 = sbr.rel (%p328) target = $region44
      $region43: #{tpu_custom_call.1} parent=5 // pred_region
        // Predicated region
        $region45: #{tpu_custom_call.1} parent=43 // pred_check
          %p331 = pneg %p56
        $region46: #{tpu_custom_call.1} parent=43 // pred_check_branch
          %333 = sbr.rel (%p331) target = $region48
        $region47: #{tpu_custom_call.1} parent=43 // pred_region
          %s334 = sadd.s32 %s29, %s30
          %s335 = smul.u32 48, %s334
          %p336 = scmp.lt.s32.totalorder %s335, 95
          %s337 = scalar_select %p336, %s335, 95
          %s338 = smul.addr %s337, 4
          %s339 = scalar_lea.vmem %s0, %s338
          %s340 = sadd.s32 %s29, %s30
          %s341 = smul.u32 48, %s340
        $region48: #{tpu_custom_call.1} parent=43 // pred_fallthru
          _
        // Predicated region
        $region49: #{tpu_custom_call.1} parent=43 // pred_check
          %p342 = pneg %p84
        $region50: #{tpu_custom_call.1} parent=43 // pred_check_branch
          %344 = sbr.rel (%p342) target = $region52
        $region51: #{tpu_custom_call.1} parent=43 // pred_region
          %s345 = sadd.s32 %s29, %s30
          %s346 = smul.u32 48, %s345
          %p347 = scmp.lt.s32.totalorder %s346, 95
          %s348 = scalar_select %p347, %s346, 95
          %s349 = smul.addr %s348, 8
          %s350 = scalar_lea.vmem %s1, %s349
          %s351 = sadd.s32 %s29, %s30
          %s352 = smul.u32 48, %s351
        $region52: #{tpu_custom_call.1} parent=43 // pred_fallthru
          _
      $region44: #{tpu_custom_call.1} parent=5 // pred_fallthru
        _
      %p353 = scmp.le.s32.totalorder 1, %s22
      %p354 = scmp.lt.s32.totalorder %s22, 3
      %p355 = pnand %p353, %p354
      %p356 = pneg %p355
      // Predicated region
      $region53: #{tpu_custom_call.1} parent=5 // pred_check
        _
      $region54: #{tpu_custom_call.1} parent=5 // pred_check_branch
        %358 = sbr.rel (%p355) target = $region56
      $region55: #{tpu_custom_call.1} parent=5 // pred_region
        %s359 = ssub.s32 %s22, 1
        %s360 = sadd.s32 %s31, %s32
        %s361 = smul.u32 48, %s360
        %p362 = scmp.lt.s32.totalorder %s361, 95
        %s363 = scalar_select %p362, %s361, 95
        %s364 = smul.addr %s363, 4
        %s365 = scalar_lea.vmem %s0, %s364
        %p366 = pneg %p62
        %p367 = pneg %p59
        %s368 = sadd.s32 %s31, %s32
        %s369 = smul.u32 48, %s368
        %p370 = scmp.lt.s32.totalorder %s369, 95
        %s371 = scalar_select %p370, %s369, 95
        %s372 = smul.addr %s371, 8
        %s373 = scalar_lea.vmem %s1, %s372
        %p374 = pneg %p90
        %p375 = pneg %p87
        %p376 = pneg %p111
        %p377 = pneg %p108
        %p378 = pneg %p132
        %p379 = pneg %p129
        %p380 = pneg %p153
        %p381 = pneg %p150
        %p382 = pneg %p174
        %p383 = pneg %p171
        %p384 = pneg %p195
        %p385 = pneg %p192
        %p386 = pneg %p216
        %p387 = pneg %p213
        %p388 = pneg %p237
        %p389 = pneg %p234
        %p390 = pneg %p263
        %p391 = pneg %p260
        %s392 = sand.u32 %s250, 1
        %s393 = scalar_lea.sflag [#allocation5], %s392
        %s394 = sand.u32 %s250, 1
        %s395 = scalar_lea.vmem [#allocation4], %s394
        %p396 = pneg %p291
        %p397 = pneg %p288
        %s398 = sadd.s32 %s31, %s32
        %s399 = smul.u32 48, %s398
        %p400 = scmp.lt.s32.totalorder %s399, 95
        %s401 = scalar_select %p400, %s399, 95
        %s402 = smul.addr %s401, 8
        %s403 = scalar_lea.vmem %s10, %s402
        %s404 = sadd.s32 %s31, %s32
        %s405 = smul.u32 48, %s404
        %p406 = scmp.lt.s32.totalorder %s405, 95
        %s407 = scalar_select %p406, %s405, 95
        %s408 = smul.addr %s407, 4
        %s409 = scalar_lea.vmem %s0, %s408
        %s410 = sadd.s32 %s31, %s32
        %s411 = smul.u32 48, %s410
        %s412 = sadd.s32 %s31, %s32
        %s413 = smul.u32 48, %s412
        %p414 = scmp.lt.s32.totalorder %s413, 95
        %s415 = scalar_select %p414, %s413, 95
        %s416 = smul.addr %s415, 8
        %s417 = scalar_lea.vmem %s1, %s416
        %s418 = sadd.s32 %s31, %s32
        %s419 = smul.u32 48, %s418
        %s420 = sadd.s32 %s31, %s32
        %s421 = smul.u32 48, %s420
        %p422 = scmp.lt.s32.totalorder %s421, 95
        %s423 = scalar_select %p422, %s421, 95
        %s424 = smul.addr %s423, 8
        %s425 = scalar_lea.vmem %s10, %s424
        %s426 = sadd.s32 %s31, %s32
        %s427 = smul.u32 48, %s426
        %p428 = scmp.eq.s32.totalorder %s32, 0
        // Predicated region
        $region57: #{tpu_custom_call.1} parent=55 // pred_check
          %p429 = pneg %p428
        $region58: #{tpu_custom_call.1} parent=55 // pred_check_branch
          %431 = sbr.rel (%p429) target = $region60
        $region59: #{tpu_custom_call.1} parent=55 // pred_region
          %432 = vst [vmem:[%s395] sm:$0x1] 0.0
        $region60: #{tpu_custom_call.1} parent=55 // pred_fallthru
          _
        %v433 = vld [vmem:[%s409] sm:$0xf]
        %v434 = vld [vmem:[%s409 + $0x4] sm:$0xf]
        %v435 = vld [vmem:[%s409 + $0x8] sm:$0xf]
        %v436 = vld [vmem:[%s409 + $0xc] sm:$0xf]
        %v437 = vld [vmem:[%s409 + $0x10] sm:$0xf]
        %v438 = vld [vmem:[%s409 + $0x14] sm:$0xf]
        %v439 = vld [vmem:[%s409 + $0x18] sm:$0xf]
        %v440 = vld [vmem:[%s409 + $0x1c] sm:$0xf]
        %v441 = vld [vmem:[%s409 + $0x20] sm:$0xf]
        %v442 = vld [vmem:[%s409 + $0x24] sm:$0xf]
        %v443 = vld [vmem:[%s409 + $0x28] sm:$0xf]
        %v444 = vld [vmem:[%s409 + $0x2c] sm:$0xf]
        %v445 = vld [vmem:[%s409 + $0x30] sm:$0xf]
        %v446 = vld [vmem:[%s409 + $0x34] sm:$0xf]
        %v447 = vld [vmem:[%s409 + $0x38] sm:$0xf]
        %v448 = vld [vmem:[%s409 + $0x3c] sm:$0xf]
        %v449 = vld [vmem:[%s409 + $0x40] sm:$0xf]
        %v450 = vld [vmem:[%s409 + $0x44] sm:$0xf]
        %v451 = vld [vmem:[%s409 + $0x48] sm:$0xf]
        %v452 = vld [vmem:[%s409 + $0x4c] sm:$0xf]
        %v453 = vld [vmem:[%s409 + $0x50] sm:$0xf]
        %v454 = vld [vmem:[%s409 + $0x54] sm:$0xf]
        %v455 = vld [vmem:[%s409 + $0x58] sm:$0xf]
        %v456 = vld [vmem:[%s409 + $0x5c] sm:$0xf]
        %v457 = vld [vmem:[%s409 + $0x60] sm:$0xf]
        %v458 = vld [vmem:[%s409 + $0x64] sm:$0xf]
        %v459 = vld [vmem:[%s409 + $0x68] sm:$0xf]
        %v460 = vld [vmem:[%s409 + $0x6c] sm:$0xf]
        %v461 = vld [vmem:[%s409 + $0x70] sm:$0xf]
        %v462 = vld [vmem:[%s409 + $0x74] sm:$0xf]
        %v463 = vld [vmem:[%s409 + $0x78] sm:$0xf]
        %v464 = vld [vmem:[%s409 + $0x7c] sm:$0xf]
        %v465 = vld [vmem:[%s409 + $0x80] sm:$0xf]
        %v466 = vld [vmem:[%s409 + $0x84] sm:$0xf]
        %v467 = vld [vmem:[%s409 + $0x88] sm:$0xf]
        %v468 = vld [vmem:[%s409 + $0x8c] sm:$0xf]
        %v469 = vld [vmem:[%s409 + $0x90] sm:$0xf]
        %v470 = vld [vmem:[%s409 + $0x94] sm:$0xf]
        %v471 = vld [vmem:[%s409 + $0x98] sm:$0xf]
        %v472 = vld [vmem:[%s409 + $0x9c] sm:$0xf]
        %v473 = vld [vmem:[%s409 + $0xa0] sm:$0xf]
        %v474 = vld [vmem:[%s409 + $0xa4] sm:$0xf]
        %v475 = vld [vmem:[%s409 + $0xa8] sm:$0xf]
        %v476 = vld [vmem:[%s409 + $0xac] sm:$0xf]
        %v477 = vld [vmem:[%s409 + $0xb0] sm:$0xf]
        %v478 = vld [vmem:[%s409 + $0xb4] sm:$0xf]
        %v479 = vld [vmem:[%s409 + $0xb8] sm:$0xf]
        %v480 = vld [vmem:[%s409 + $0xbc] sm:$0xf]
        %v481 = vld [vmem:[%s2] sm:$0xf]
        %v482 = vld [vmem:[%s2 + $0x4] sm:$0xf]
        %v483 = vld [vmem:[%s2 + $0x8] sm:$0xf]
        %v484 = vld [vmem:[%s2 + $0xc] sm:$0xf]
        %v485 = vld [vmem:[%s2 + $0x10] sm:$0xf]
        %v486 = vld [vmem:[%s2 + $0x14] sm:$0xf]
        %v487 = vld [vmem:[%s2 + $0x18] sm:$0xf]
        %v488 = vld [vmem:[%s2 + $0x1c] sm:$0xf]
        %v489 = vld [vmem:[%s2 + $0x20] sm:$0xf]
        %v490 = vld [vmem:[%s2 + $0x24] sm:$0xf]
        %v491 = vld [vmem:[%s2 + $0x28] sm:$0xf]
        %v492 = vld [vmem:[%s2 + $0x2c] sm:$0xf]
        %v493 = vld [vmem:[%s2 + $0x30] sm:$0xf]
        %v494 = vld [vmem:[%s2 + $0x34] sm:$0xf]
        %v495 = vld [vmem:[%s2 + $0x38] sm:$0xf]
        %v496 = vld [vmem:[%s2 + $0x3c] sm:$0xf]
        %v545 = vunpack.c.l.b16 %v433
        %v546 = vunpack.c.l.b16 %v434
        %v547 = vunpack.c.l.b16 %v435
        %v548 = vunpack.c.l.b16 %v436
        %v549 = vunpack.c.l.b16 %v437
        %v550 = vunpack.c.l.b16 %v438
        %v551 = vunpack.c.l.b16 %v439
        %v552 = vunpack.c.l.b16 %v440
        %v553 = vunpack.c.l.b16 %v441
        %v554 = vunpack.c.l.b16 %v442
        %v555 = vunpack.c.l.b16 %v443
        %v556 = vunpack.c.l.b16 %v444
        %v557 = vunpack.c.l.b16 %v445
        %v558 = vunpack.c.l.b16 %v446
        %v559 = vunpack.c.l.b16 %v447
        %v560 = vunpack.c.l.b16 %v448
        %v561 = vunpack.c.l.b16 %v449
        %v562 = vunpack.c.l.b16 %v450
        %v563 = vunpack.c.l.b16 %v451
        %v564 = vunpack.c.l.b16 %v452
        %v565 = vunpack.c.l.b16 %v453
        %v566 = vunpack.c.l.b16 %v454
        %v567 = vunpack.c.l.b16 %v455
        %v568 = vunpack.c.l.b16 %v456
        %v569 = vunpack.c.l.b16 %v457
        %v570 = vunpack.c.l.b16 %v458
        %v571 = vunpack.c.l.b16 %v459
        %v572 = vunpack.c.l.b16 %v460
        %v573 = vunpack.c.l.b16 %v461
        %v574 = vunpack.c.l.b16 %v462
        %v575 = vunpack.c.l.b16 %v463
        %v576 = vunpack.c.l.b16 %v464
        %v577 = vunpack.c.l.b16 %v465
        %v578 = vunpack.c.l.b16 %v466
        %v579 = vunpack.c.l.b16 %v467
        %v580 = vunpack.c.l.b16 %v468
        %v581 = vunpack.c.l.b16 %v469
        %v582 = vunpack.c.l.b16 %v470
        %v583 = vunpack.c.l.b16 %v471
        %v584 = vunpack.c.l.b16 %v472
        %v585 = vunpack.c.l.b16 %v473
        %v586 = vunpack.c.l.b16 %v474
        %v587 = vunpack.c.l.b16 %v475
        %v588 = vunpack.c.l.b16 %v476
        %v589 = vunpack.c.l.b16 %v477
        %v590 = vunpack.c.l.b16 %v478
        %v591 = vunpack.c.l.b16 %v479
        %v592 = vunpack.c.l.b16 %v480
        %v593 = vpack.c.b16 %v546, %v545
        %v594 = vpack.c.b16 %v548, %v547
        %v595 = vpack.c.b16 %v550, %v549
        %v596 = vpack.c.b16 %v552, %v551
        %v597 = vpack.c.b16 %v554, %v553
        %v598 = vpack.c.b16 %v556, %v555
        %v599 = vpack.c.b16 %v558, %v557
        %v600 = vpack.c.b16 %v560, %v559
        %v601 = vpack.c.b16 %v562, %v561
        %v602 = vpack.c.b16 %v564, %v563
        %v603 = vpack.c.b16 %v566, %v565
        %v604 = vpack.c.b16 %v568, %v567
        %v605 = vpack.c.b16 %v570, %v569
        %v606 = vpack.c.b16 %v572, %v571
        %v607 = vpack.c.b16 %v574, %v573
        %v608 = vpack.c.b16 %v576, %v575
        %v609 = vpack.c.b16 %v578, %v577
        %v610 = vpack.c.b16 %v580, %v579
        %v611 = vpack.c.b16 %v582, %v581
        %v612 = vpack.c.b16 %v584, %v583
        %v613 = vpack.c.b16 %v586, %v585
        %v614 = vpack.c.b16 %v588, %v587
        %v615 = vpack.c.b16 %v590, %v589
        %v616 = vpack.c.b16 %v592, %v591
        %v657 = vunpack.c.l.b16 %v481
        %v658 = vunpack.c.l.b16 %v482
        %v659 = vunpack.c.l.b16 %v483
        %v660 = vunpack.c.l.b16 %v484
        %v661 = vunpack.c.l.b16 %v485
        %v662 = vunpack.c.l.b16 %v486
        %v663 = vunpack.c.l.b16 %v487
        %v664 = vunpack.c.l.b16 %v488
        %v665 = vunpack.c.l.b16 %v489
        %v666 = vunpack.c.l.b16 %v490
        %v667 = vunpack.c.l.b16 %v491
        %v668 = vunpack.c.l.b16 %v492
        %v669 = vunpack.c.l.b16 %v493
        %v670 = vunpack.c.l.b16 %v494
        %v671 = vunpack.c.l.b16 %v495
        %v672 = vunpack.c.l.b16 %v496
        %v673 = vpack.c.b16 %v658, %v657
        %v674 = vpack.c.b16 %v660, %v659
        %v675 = vpack.c.b16 %v662, %v661
        %v676 = vpack.c.b16 %v664, %v663
        %v677 = vpack.c.b16 %v666, %v665
        %v678 = vpack.c.b16 %v668, %v667
        %v679 = vpack.c.b16 %v670, %v669
        %v680 = vpack.c.b16 %v672, %v671
        %689 = vmatpush.bf16.msra.mxu0 %v680
        %690 = vmatpush.bf16.msra.mxu0 %v679
        %691 = vmatpush.bf16.msra.mxu0 %v678
        %692 = vmatpush.bf16.msra.mxu0 %v677
        %693 = vmatpush.bf16.msra.mxu0 %v676
        %694 = vmatpush.bf16.msra.mxu0 %v675
        %695 = vmatpush.bf16.msra.mxu0 %v674
        %696 = vmatpush.bf16.msra.mxu0 %v673
        %697 = vmatmul.bf16.gmra.mxu0 %v593
        %v698 = vpop.f32.mrf.mxu0
        %v699 = vadd.f32 0.0, %v698
        %v700 = vpop.f32.mrf.mxu0
        %v701 = vadd.f32 0.0, %v700
        %702 = vmatmul.bf16.gmra.mxu0 %v594
        %v703 = vpop.f32.mrf.mxu0
        %v704 = vadd.f32 0.0, %v703
        %v705 = vpop.f32.mrf.mxu0
        %v706 = vadd.f32 0.0, %v705
        %707 = vmatmul.bf16.gmra.mxu0 %v595
        %v708 = vpop.f32.mrf.mxu0
        %v709 = vadd.f32 0.0, %v708
        %v710 = vpop.f32.mrf.mxu0
        %v711 = vadd.f32 0.0, %v710
        %712 = vmatmul.bf16.gmra.mxu0 %v596
        %v713 = vpop.f32.mrf.mxu0
        %v714 = vadd.f32 0.0, %v713
        %v715 = vpop.f32.mrf.mxu0
        %v716 = vadd.f32 0.0, %v715
        %717 = vmatmul.bf16.gmra.mxu0 %v597
        %v718 = vpop.f32.mrf.mxu0
        %v719 = vadd.f32 0.0, %v718
        %v720 = vpop.f32.mrf.mxu0
        %v721 = vadd.f32 0.0, %v720
        %722 = vmatmul.bf16.gmra.mxu0 %v598
        %v723 = vpop.f32.mrf.mxu0
        %v724 = vadd.f32 0.0, %v723
        %v725 = vpop.f32.mrf.mxu0
        %v726 = vadd.f32 0.0, %v725
        %727 = vmatmul.bf16.gmra.mxu0 %v599
        %v728 = vpop.f32.mrf.mxu0
        %v729 = vadd.f32 0.0, %v728
        %v730 = vpop.f32.mrf.mxu0
        %v731 = vadd.f32 0.0, %v730
        %732 = vmatmul.bf16.gmra.mxu0 %v600
        %v733 = vpop.f32.mrf.mxu0
        %v734 = vadd.f32 0.0, %v733
        %v735 = vpop.f32.mrf.mxu0
        %v736 = vadd.f32 0.0, %v735
        %737 = vmatmul.bf16.gmra.mxu0 %v601
        %v738 = vpop.f32.mrf.mxu0
        %v739 = vadd.f32 0.0, %v738
        %v740 = vpop.f32.mrf.mxu0
        %v741 = vadd.f32 0.0, %v740
        %742 = vmatmul.bf16.gmra.mxu0 %v602
        %v743 = vpop.f32.mrf.mxu0
        %v744 = vadd.f32 0.0, %v743
        %v745 = vpop.f32.mrf.mxu0
        %v746 = vadd.f32 0.0, %v745
        %747 = vmatmul.bf16.gmra.mxu0 %v603
        %v748 = vpop.f32.mrf.mxu0
        %v749 = vadd.f32 0.0, %v748
        %v750 = vpop.f32.mrf.mxu0
        %v751 = vadd.f32 0.0, %v750
        %752 = vmatmul.bf16.gmra.mxu0 %v604
        %v753 = vpop.f32.mrf.mxu0
        %v754 = vadd.f32 0.0, %v753
        %v755 = vpop.f32.mrf.mxu0
        %v756 = vadd.f32 0.0, %v755
        %757 = vmatmul.bf16.gmra.mxu0 %v605
        %v758 = vpop.f32.mrf.mxu0
        %v759 = vadd.f32 0.0, %v758
        %v760 = vpop.f32.mrf.mxu0
        %v761 = vadd.f32 0.0, %v760
        %762 = vmatmul.bf16.gmra.mxu0 %v606
        %v763 = vpop.f32.mrf.mxu0
        %v764 = vadd.f32 0.0, %v763
        %v765 = vpop.f32.mrf.mxu0
        %v766 = vadd.f32 0.0, %v765
        %767 = vmatmul.bf16.gmra.mxu0 %v607
        %v768 = vpop.f32.mrf.mxu0
        %v769 = vadd.f32 0.0, %v768
        %v770 = vpop.f32.mrf.mxu0
        %v771 = vadd.f32 0.0, %v770
        %772 = vmatmul.bf16.gmra.mxu0 %v608
        %v773 = vpop.f32.mrf.mxu0
        %v774 = vadd.f32 0.0, %v773
        %v775 = vpop.f32.mrf.mxu0
        %v776 = vadd.f32 0.0, %v775
        %777 = vmatmul.bf16.gmra.mxu0 %v609
        %v778 = vpop.f32.mrf.mxu0
        %v779 = vadd.f32 0.0, %v778
        %v780 = vpop.f32.mrf.mxu0
        %v781 = vadd.f32 0.0, %v780
        %782 = vmatmul.bf16.gmra.mxu0 %v610
        %v783 = vpop.f32.mrf.mxu0
        %v784 = vadd.f32 0.0, %v783
        %v785 = vpop.f32.mrf.mxu0
        %v786 = vadd.f32 0.0, %v785
        %787 = vmatmul.bf16.gmra.mxu0 %v611
        %v788 = vpop.f32.mrf.mxu0
        %v789 = vadd.f32 0.0, %v788
        %v790 = vpop.f32.mrf.mxu0
        %v791 = vadd.f32 0.0, %v790
        %792 = vmatmul.bf16.gmra.mxu0 %v612
        %v793 = vpop.f32.mrf.mxu0
        %v794 = vadd.f32 0.0, %v793
        %v795 = vpop.f32.mrf.mxu0
        %v796 = vadd.f32 0.0, %v795
        %797 = vmatmul.bf16.gmra.mxu0 %v613
        %v798 = vpop.f32.mrf.mxu0
        %v799 = vadd.f32 0.0, %v798
        %v800 = vpop.f32.mrf.mxu0
        %v801 = vadd.f32 0.0, %v800
        %802 = vmatmul.bf16.gmra.mxu0 %v614
        %v803 = vpop.f32.mrf.mxu0
        %v804 = vadd.f32 0.0, %v803
        %v805 = vpop.f32.mrf.mxu0
        %v806 = vadd.f32 0.0, %v805
        %807 = vmatmul.bf16.gmra.mxu0 %v615
        %v808 = vpop.f32.mrf.mxu0
        %v809 = vadd.f32 0.0, %v808
        %v810 = vpop.f32.mrf.mxu0
        %v811 = vadd.f32 0.0, %v810
        %812 = vmatmul.bf16.gmra.mxu0 %v616
        %v813 = vpop.f32.mrf.mxu0
        %v814 = vadd.f32 0.0, %v813
        %v815 = vpop.f32.mrf.mxu0
        %v816 = vadd.f32 0.0, %v815
        %817 = vdwg.mxu0
        %v818 = vld [vmem:[%s3] sm:$0x1]
        %v820 = vperm.slane %v818, 0
        %v822 = vadd.f32 %v699, %v820
        %v823 = vadd.f32 %v701, %v820
        %v824 = vadd.f32 %v704, %v820
        %v825 = vadd.f32 %v706, %v820
        %v826 = vadd.f32 %v709, %v820
        %v827 = vadd.f32 %v711, %v820
        %v828 = vadd.f32 %v714, %v820
        %v829 = vadd.f32 %v716, %v820
        %v830 = vadd.f32 %v719, %v820
        %v831 = vadd.f32 %v721, %v820
        %v832 = vadd.f32 %v724, %v820
        %v833 = vadd.f32 %v726, %v820
        %v834 = vadd.f32 %v729, %v820
        %v835 = vadd.f32 %v731, %v820
        %v836 = vadd.f32 %v734, %v820
        %v837 = vadd.f32 %v736, %v820
        %v838 = vadd.f32 %v739, %v820
        %v839 = vadd.f32 %v741, %v820
        %v840 = vadd.f32 %v744, %v820
        %v841 = vadd.f32 %v746, %v820
        %v842 = vadd.f32 %v749, %v820
        %v843 = vadd.f32 %v751, %v820
        %v844 = vadd.f32 %v754, %v820
        %v845 = vadd.f32 %v756, %v820
        %v846 = vadd.f32 %v759, %v820
        %v847 = vadd.f32 %v761, %v820
        %v848 = vadd.f32 %v764, %v820
        %v849 = vadd.f32 %v766, %v820
        %v850 = vadd.f32 %v769, %v820
        %v851 = vadd.f32 %v771, %v820
        %v852 = vadd.f32 %v774, %v820
        %v853 = vadd.f32 %v776, %v820
        %v854 = vadd.f32 %v779, %v820
        %v855 = vadd.f32 %v781, %v820
        %v856 = vadd.f32 %v784, %v820
        %v857 = vadd.f32 %v786, %v820
        %v858 = vadd.f32 %v789, %v820
        %v859 = vadd.f32 %v791, %v820
        %v860 = vadd.f32 %v794, %v820
        %v861 = vadd.f32 %v796, %v820
        %v862 = vadd.f32 %v799, %v820
        %v863 = vadd.f32 %v801, %v820
        %v864 = vadd.f32 %v804, %v820
        %v865 = vadd.f32 %v806, %v820
        %v866 = vadd.f32 %v809, %v820
        %v867 = vadd.f32 %v811, %v820
        %v868 = vadd.f32 %v814, %v820
        %v869 = vadd.f32 %v816, %v820
        %v870 = vxor.u32 %v822, 2147483648
        %v871 = vxor.u32 %v823, 2147483648
        %v872 = vxor.u32 %v824, 2147483648
        %v873 = vxor.u32 %v825, 2147483648
        %v874 = vxor.u32 %v826, 2147483648
        %v875 = vxor.u32 %v827, 2147483648
        %v876 = vxor.u32 %v828, 2147483648
        %v877 = vxor.u32 %v829, 2147483648
        %v878 = vxor.u32 %v830, 2147483648
        %v879 = vxor.u32 %v831, 2147483648
        %v880 = vxor.u32 %v832, 2147483648
        %v881 = vxor.u32 %v833, 2147483648
        %v882 = vxor.u32 %v834, 2147483648
        %v883 = vxor.u32 %v835, 2147483648
        %v884 = vxor.u32 %v836, 2147483648
        %v885 = vxor.u32 %v837, 2147483648
        %v886 = vxor.u32 %v838, 2147483648
        %v887 = vxor.u32 %v839, 2147483648
        %v888 = vxor.u32 %v840, 2147483648
        %v889 = vxor.u32 %v841, 2147483648
        %v890 = vxor.u32 %v842, 2147483648
        %v891 = vxor.u32 %v843, 2147483648
        %v892 = vxor.u32 %v844, 2147483648
        %v893 = vxor.u32 %v845, 2147483648
        %v894 = vxor.u32 %v846, 2147483648
        %v895 = vxor.u32 %v847, 2147483648
        %v896 = vxor.u32 %v848, 2147483648
        %v897 = vxor.u32 %v849, 2147483648
        %v898 = vxor.u32 %v850, 2147483648
        %v899 = vxor.u32 %v851, 2147483648
        %v900 = vxor.u32 %v852, 2147483648
        %v901 = vxor.u32 %v853, 2147483648
        %v902 = vxor.u32 %v854, 2147483648
        %v903 = vxor.u32 %v855, 2147483648
        %v904 = vxor.u32 %v856, 2147483648
        %v905 = vxor.u32 %v857, 2147483648
        %v906 = vxor.u32 %v858, 2147483648
        %v907 = vxor.u32 %v859, 2147483648
        %v908 = vxor.u32 %v860, 2147483648
        %v909 = vxor.u32 %v861, 2147483648
        %v910 = vxor.u32 %v862, 2147483648
        %v911 = vxor.u32 %v863, 2147483648
        %v912 = vxor.u32 %v864, 2147483648
        %v913 = vxor.u32 %v865, 2147483648
        %v914 = vxor.u32 %v866, 2147483648
        %v915 = vxor.u32 %v867, 2147483648
        %v916 = vxor.u32 %v868, 2147483648
        %v917 = vxor.u32 %v869, 2147483648
        %v918 = vmul.f32 %v870, 1.442695
        %v919 = vpow.pop %v918
        %v920 = vmul.f32 %v871, 1.442695
        %v921 = vpow.pop %v920
        %v922 = vmul.f32 %v872, 1.442695
        %v923 = vpow.pop %v922
        %v924 = vmul.f32 %v873, 1.442695
        %v925 = vpow.pop %v924
        %v926 = vmul.f32 %v874, 1.442695
        %v927 = vpow.pop %v926
        %v928 = vmul.f32 %v875, 1.442695
        %v929 = vpow.pop %v928
        %v930 = vmul.f32 %v876, 1.442695
        %v931 = vpow.pop %v930
        %v932 = vmul.f32 %v877, 1.442695
        %v933 = vpow.pop %v932
        %v934 = vmul.f32 %v878, 1.442695
        %v935 = vpow.pop %v934
        %v936 = vmul.f32 %v879, 1.442695
        %v937 = vpow.pop %v936
        %v938 = vmul.f32 %v880, 1.442695
        %v939 = vpow.pop %v938
        %v940 = vmul.f32 %v881, 1.442695
        %v941 = vpow.pop %v940
        %v942 = vmul.f32 %v882, 1.442695
        %v943 = vpow.pop %v942
        %v944 = vmul.f32 %v883, 1.442695
        %v945 = vpow.pop %v944
        %v946 = vmul.f32 %v884, 1.442695
        %v947 = vpow.pop %v946
        %v948 = vmul.f32 %v885, 1.442695
        %v949 = vpow.pop %v948
        %v950 = vmul.f32 %v886, 1.442695
        %v951 = vpow.pop %v950
        %v952 = vmul.f32 %v887, 1.442695
        %v953 = vpow.pop %v952
        %v954 = vmul.f32 %v888, 1.442695
        %v955 = vpow.pop %v954
        %v956 = vmul.f32 %v889, 1.442695
        %v957 = vpow.pop %v956
        %v958 = vmul.f32 %v890, 1.442695
        %v959 = vpow.pop %v958
        %v960 = vmul.f32 %v891, 1.442695
        %v961 = vpow.pop %v960
        %v962 = vmul.f32 %v892, 1.442695
        %v963 = vpow.pop %v962
        %v964 = vmul.f32 %v893, 1.442695
        %v965 = vpow.pop %v964
        %v966 = vmul.f32 %v894, 1.442695
        %v967 = vpow.pop %v966
        %v968 = vmul.f32 %v895, 1.442695
        %v969 = vpow.pop %v968
        %v970 = vmul.f32 %v896, 1.442695
        %v971 = vpow.pop %v970
        %v972 = vmul.f32 %v897, 1.442695
        %v973 = vpow.pop %v972
        %v974 = vmul.f32 %v898, 1.442695
        %v975 = vpow.pop %v974
        %v976 = vmul.f32 %v899, 1.442695
        %v977 = vpow.pop %v976
        %v978 = vmul.f32 %v900, 1.442695
        %v979 = vpow.pop %v978
        %v980 = vmul.f32 %v901, 1.442695
        %v981 = vpow.pop %v980
        %v982 = vmul.f32 %v902, 1.442695
        %v983 = vpow.pop %v982
        %v984 = vmul.f32 %v903, 1.442695
        %v985 = vpow.pop %v984
        %v986 = vmul.f32 %v904, 1.442695
        %v987 = vpow.pop %v986
        %v988 = vmul.f32 %v905, 1.442695
        %v989 = vpow.pop %v988
        %v990 = vmul.f32 %v906, 1.442695
        %v991 = vpow.pop %v990
        %v992 = vmul.f32 %v907, 1.442695
        %v993 = vpow.pop %v992
        %v994 = vmul.f32 %v908, 1.442695
        %v995 = vpow.pop %v994
        %v996 = vmul.f32 %v909, 1.442695
        %v997 = vpow.pop %v996
        %v998 = vmul.f32 %v910, 1.442695
        %v999 = vpow.pop %v998
        %v1000 = vmul.f32 %v911, 1.442695
        %v1001 = vpow.pop %v1000
        %v1002 = vmul.f32 %v912, 1.442695
        %v1003 = vpow.pop %v1002
        %v1004 = vmul.f32 %v913, 1.442695
        %v1005 = vpow.pop %v1004
        %v1006 = vmul.f32 %v914, 1.442695
        %v1007 = vpow.pop %v1006
        %v1008 = vmul.f32 %v915, 1.442695
        %v1009 = vpow.pop %v1008
        %v1010 = vmul.f32 %v916, 1.442695
        %v1011 = vpow.pop %v1010
        %v1012 = vmul.f32 %v917, 1.442695
        %v1013 = vpow.pop %v1012
        %v1014 = vadd.f32 %v919, 1.0
        %v1015 = vadd.f32 %v921, 1.0
        %v1016 = vadd.f32 %v923, 1.0
        %v1017 = vadd.f32 %v925, 1.0
        %v1018 = vadd.f32 %v927, 1.0
        %v1019 = vadd.f32 %v929, 1.0
        %v1020 = vadd.f32 %v931, 1.0
        %v1021 = vadd.f32 %v933, 1.0
        %v1022 = vadd.f32 %v935, 1.0
        %v1023 = vadd.f32 %v937, 1.0
        %v1024 = vadd.f32 %v939, 1.0
        %v1025 = vadd.f32 %v941, 1.0
        %v1026 = vadd.f32 %v943, 1.0
        %v1027 = vadd.f32 %v945, 1.0
        %v1028 = vadd.f32 %v947, 1.0
        %v1029 = vadd.f32 %v949, 1.0
        %v1030 = vadd.f32 %v951, 1.0
        %v1031 = vadd.f32 %v953, 1.0
        %v1032 = vadd.f32 %v955, 1.0
        %v1033 = vadd.f32 %v957, 1.0
        %v1034 = vadd.f32 %v959, 1.0
        %v1035 = vadd.f32 %v961, 1.0
        %v1036 = vadd.f32 %v963, 1.0
        %v1037 = vadd.f32 %v965, 1.0
        %v1038 = vadd.f32 %v967, 1.0
        %v1039 = vadd.f32 %v969, 1.0
        %v1040 = vadd.f32 %v971, 1.0
        %v1041 = vadd.f32 %v973, 1.0
        %v1042 = vadd.f32 %v975, 1.0
        %v1043 = vadd.f32 %v977, 1.0
        %v1044 = vadd.f32 %v979, 1.0
        %v1045 = vadd.f32 %v981, 1.0
        %v1046 = vadd.f32 %v983, 1.0
        %v1047 = vadd.f32 %v985, 1.0
        %v1048 = vadd.f32 %v987, 1.0
        %v1049 = vadd.f32 %v989, 1.0
        %v1050 = vadd.f32 %v991, 1.0
        %v1051 = vadd.f32 %v993, 1.0
        %v1052 = vadd.f32 %v995, 1.0
        %v1053 = vadd.f32 %v997, 1.0
        %v1054 = vadd.f32 %v999, 1.0
        %v1055 = vadd.f32 %v1001, 1.0
        %v1056 = vadd.f32 %v1003, 1.0
        %v1057 = vadd.f32 %v1005, 1.0
        %v1058 = vadd.f32 %v1007, 1.0
        %v1059 = vadd.f32 %v1009, 1.0
        %v1060 = vadd.f32 %v1011, 1.0
        %v1061 = vadd.f32 %v1013, 1.0
        %v1062 = vrcp.pop %v1014
        %v1063 = vmul.f32 %v1014, %v1062
        %v1064 = vsub.f32 1.0, %v1063
        %v1065 = vmul.f32 %v1062, %v1064
        %v1066 = vadd.f32 %v1062, %v1065
        %vm1067 = vweird.f32 %v1014
        %vm1068 = vweird.f32 %v1062
        %vm1069 = vmor %vm1067, %vm1068
        %v1070 = vsel %vm1069, %v1062, %v1066
        %v1071 = vand.u32 2147483647, %v1014
        %vm1072 = vcmp.eq.f32.partialorder %v1071, 8.507059e+37
        %v1073 = vand.u32 %v1014, 2147483648
        %v1074 = vor.u32 1.1754944e-38, %v1073
        %v1075 = vsel %vm1072, %v1074, %v1070
        %v1076 = vmul.f32 1.0, %v1075
        %v1077 = vrcp.pop %v1015
        %v1078 = vmul.f32 %v1015, %v1077
        %v1079 = vsub.f32 1.0, %v1078
        %v1080 = vmul.f32 %v1077, %v1079
        %v1081 = vadd.f32 %v1077, %v1080
        %vm1082 = vweird.f32 %v1015
        %vm1083 = vweird.f32 %v1077
        %vm1084 = vmor %vm1082, %vm1083
        %v1085 = vsel %vm1084, %v1077, %v1081
        %v1086 = vand.u32 2147483647, %v1015
        %vm1087 = vcmp.eq.f32.partialorder %v1086, 8.507059e+37
        %v1088 = vand.u32 %v1015, 2147483648
        %v1089 = vor.u32 1.1754944e-38, %v1088
        %v1090 = vsel %vm1087, %v1089, %v1085
        %v1091 = vmul.f32 1.0, %v1090
        %v1092 = vrcp.pop %v1016
        %v1093 = vmul.f32 %v1016, %v1092
        %v1094 = vsub.f32 1.0, %v1093
        %v1095 = vmul.f32 %v1092, %v1094
        %v1096 = vadd.f32 %v1092, %v1095
        %vm1097 = vweird.f32 %v1016
        %vm1098 = vweird.f32 %v1092
        %vm1099 = vmor %vm1097, %vm1098
        %v1100 = vsel %vm1099, %v1092, %v1096
        %v1101 = vand.u32 2147483647, %v1016
        %vm1102 = vcmp.eq.f32.partialorder %v1101, 8.507059e+37
        %v1103 = vand.u32 %v1016, 2147483648
        %v1104 = vor.u32 1.1754944e-38, %v1103
        %v1105 = vsel %vm1102, %v1104, %v1100
        %v1106 = vmul.f32 1.0, %v1105
        %v1107 = vrcp.pop %v1017
        %v1108 = vmul.f32 %v1017, %v1107
        %v1109 = vsub.f32 1.0, %v1108
        %v1110 = vmul.f32 %v1107, %v1109
        %v1111 = vadd.f32 %v1107, %v1110
        %vm1112 = vweird.f32 %v1017
        %vm1113 = vweird.f32 %v1107
        %vm1114 = vmor %vm1112, %vm1113
        %v1115 = vsel %vm1114, %v1107, %v1111
        %v1116 = vand.u32 2147483647, %v1017
        %vm1117 = vcmp.eq.f32.partialorder %v1116, 8.507059e+37
        %v1118 = vand.u32 %v1017, 2147483648
        %v1119 = vor.u32 1.1754944e-38, %v1118
        %v1120 = vsel %vm1117, %v1119, %v1115
        %v1121 = vmul.f32 1.0, %v1120
        %v1122 = vrcp.pop %v1018
        %v1123 = vmul.f32 %v1018, %v1122
        %v1124 = vsub.f32 1.0, %v1123
        %v1125 = vmul.f32 %v1122, %v1124
        %v1126 = vadd.f32 %v1122, %v1125
        %vm1127 = vweird.f32 %v1018
        %vm1128 = vweird.f32 %v1122
        %vm1129 = vmor %vm1127, %vm1128
        %v1130 = vsel %vm1129, %v1122, %v1126
        %v1131 = vand.u32 2147483647, %v1018
        %vm1132 = vcmp.eq.f32.partialorder %v1131, 8.507059e+37
        %v1133 = vand.u32 %v1018, 2147483648
        %v1134 = vor.u32 1.1754944e-38, %v1133
        %v1135 = vsel %vm1132, %v1134, %v1130
        %v1136 = vmul.f32 1.0, %v1135
        %v1137 = vrcp.pop %v1019
        %v1138 = vmul.f32 %v1019, %v1137
        %v1139 = vsub.f32 1.0, %v1138
        %v1140 = vmul.f32 %v1137, %v1139
        %v1141 = vadd.f32 %v1137, %v1140
        %vm1142 = vweird.f32 %v1019
        %vm1143 = vweird.f32 %v1137
        %vm1144 = vmor %vm1142, %vm1143
        %v1145 = vsel %vm1144, %v1137, %v1141
        %v1146 = vand.u32 2147483647, %v1019
        %vm1147 = vcmp.eq.f32.partialorder %v1146, 8.507059e+37
        %v1148 = vand.u32 %v1019, 2147483648
        %v1149 = vor.u32 1.1754944e-38, %v1148
        %v1150 = vsel %vm1147, %v1149, %v1145
        %v1151 = vmul.f32 1.0, %v1150
        %v1152 = vrcp.pop %v1020
        %v1153 = vmul.f32 %v1020, %v1152
        %v1154 = vsub.f32 1.0, %v1153
        %v1155 = vmul.f32 %v1152, %v1154
        %v1156 = vadd.f32 %v1152, %v1155
        %vm1157 = vweird.f32 %v1020
        %vm1158 = vweird.f32 %v1152
        %vm1159 = vmor %vm1157, %vm1158
        %v1160 = vsel %vm1159, %v1152, %v1156
        %v1161 = vand.u32 2147483647, %v1020
        %vm1162 = vcmp.eq.f32.partialorder %v1161, 8.507059e+37
        %v1163 = vand.u32 %v1020, 2147483648
        %v1164 = vor.u32 1.1754944e-38, %v1163
        %v1165 = vsel %vm1162, %v1164, %v1160
        %v1166 = vmul.f32 1.0, %v1165
        %v1167 = vrcp.pop %v1021
        %v1168 = vmul.f32 %v1021, %v1167
        %v1169 = vsub.f32 1.0, %v1168
        %v1170 = vmul.f32 %v1167, %v1169
        %v1171 = vadd.f32 %v1167, %v1170
        %vm1172 = vweird.f32 %v1021
        %vm1173 = vweird.f32 %v1167
        %vm1174 = vmor %vm1172, %vm1173
        %v1175 = vsel %vm1174, %v1167, %v1171
        %v1176 = vand.u32 2147483647, %v1021
        %vm1177 = vcmp.eq.f32.partialorder %v1176, 8.507059e+37
        %v1178 = vand.u32 %v1021, 2147483648
        %v1179 = vor.u32 1.1754944e-38, %v1178
        %v1180 = vsel %vm1177, %v1179, %v1175
        %v1181 = vmul.f32 1.0, %v1180
        %v1182 = vrcp.pop %v1022
        %v1183 = vmul.f32 %v1022, %v1182
        %v1184 = vsub.f32 1.0, %v1183
        %v1185 = vmul.f32 %v1182, %v1184
        %v1186 = vadd.f32 %v1182, %v1185
        %vm1187 = vweird.f32 %v1022
        %vm1188 = vweird.f32 %v1182
        %vm1189 = vmor %vm1187, %vm1188
        %v1190 = vsel %vm1189, %v1182, %v1186
        %v1191 = vand.u32 2147483647, %v1022
        %vm1192 = vcmp.eq.f32.partialorder %v1191, 8.507059e+37
        %v1193 = vand.u32 %v1022, 2147483648
        %v1194 = vor.u32 1.1754944e-38, %v1193
        %v1195 = vsel %vm1192, %v1194, %v1190
        %v1196 = vmul.f32 1.0, %v1195
        %v1197 = vrcp.pop %v1023
        %v1198 = vmul.f32 %v1023, %v1197
        %v1199 = vsub.f32 1.0, %v1198
        %v1200 = vmul.f32 %v1197, %v1199
        %v1201 = vadd.f32 %v1197, %v1200
        %vm1202 = vweird.f32 %v1023
        %vm1203 = vweird.f32 %v1197
        %vm1204 = vmor %vm1202, %vm1203
        %v1205 = vsel %vm1204, %v1197, %v1201
        %v1206 = vand.u32 2147483647, %v1023
        %vm1207 = vcmp.eq.f32.partialorder %v1206, 8.507059e+37
        %v1208 = vand.u32 %v1023, 2147483648
        %v1209 = vor.u32 1.1754944e-38, %v1208
        %v1210 = vsel %vm1207, %v1209, %v1205
        %v1211 = vmul.f32 1.0, %v1210
        %v1212 = vrcp.pop %v1024
        %v1213 = vmul.f32 %v1024, %v1212
        %v1214 = vsub.f32 1.0, %v1213
        %v1215 = vmul.f32 %v1212, %v1214
        %v1216 = vadd.f32 %v1212, %v1215
        %vm1217 = vweird.f32 %v1024
        %vm1218 = vweird.f32 %v1212
        %vm1219 = vmor %vm1217, %vm1218
        %v1220 = vsel %vm1219, %v1212, %v1216
        %v1221 = vand.u32 2147483647, %v1024
        %vm1222 = vcmp.eq.f32.partialorder %v1221, 8.507059e+37
        %v1223 = vand.u32 %v1024, 2147483648
        %v1224 = vor.u32 1.1754944e-38, %v1223
        %v1225 = vsel %vm1222, %v1224, %v1220
        %v1226 = vmul.f32 1.0, %v1225
        %v1227 = vrcp.pop %v1025
        %v1228 = vmul.f32 %v1025, %v1227
        %v1229 = vsub.f32 1.0, %v1228
        %v1230 = vmul.f32 %v1227, %v1229
        %v1231 = vadd.f32 %v1227, %v1230
        %vm1232 = vweird.f32 %v1025
        %vm1233 = vweird.f32 %v1227
        %vm1234 = vmor %vm1232, %vm1233
        %v1235 = vsel %vm1234, %v1227, %v1231
        %v1236 = vand.u32 2147483647, %v1025
        %vm1237 = vcmp.eq.f32.partialorder %v1236, 8.507059e+37
        %v1238 = vand.u32 %v1025, 2147483648
        %v1239 = vor.u32 1.1754944e-38, %v1238
        %v1240 = vsel %vm1237, %v1239, %v1235
        %v1241 = vmul.f32 1.0, %v1240
        %v1242 = vrcp.pop %v1026
        %v1243 = vmul.f32 %v1026, %v1242
        %v1244 = vsub.f32 1.0, %v1243
        %v1245 = vmul.f32 %v1242, %v1244
        %v1246 = vadd.f32 %v1242, %v1245
        %vm1247 = vweird.f32 %v1026
        %vm1248 = vweird.f32 %v1242
        %vm1249 = vmor %vm1247, %vm1248
        %v1250 = vsel %vm1249, %v1242, %v1246
        %v1251 = vand.u32 2147483647, %v1026
        %vm1252 = vcmp.eq.f32.partialorder %v1251, 8.507059e+37
        %v1253 = vand.u32 %v1026, 2147483648
        %v1254 = vor.u32 1.1754944e-38, %v1253
        %v1255 = vsel %vm1252, %v1254, %v1250
        %v1256 = vmul.f32 1.0, %v1255
        %v1257 = vrcp.pop %v1027
        %v1258 = vmul.f32 %v1027, %v1257
        %v1259 = vsub.f32 1.0, %v1258
        %v1260 = vmul.f32 %v1257, %v1259
        %v1261 = vadd.f32 %v1257, %v1260
        %vm1262 = vweird.f32 %v1027
        %vm1263 = vweird.f32 %v1257
        %vm1264 = vmor %vm1262, %vm1263
        %v1265 = vsel %vm1264, %v1257, %v1261
        %v1266 = vand.u32 2147483647, %v1027
        %vm1267 = vcmp.eq.f32.partialorder %v1266, 8.507059e+37
        %v1268 = vand.u32 %v1027, 2147483648
        %v1269 = vor.u32 1.1754944e-38, %v1268
        %v1270 = vsel %vm1267, %v1269, %v1265
        %v1271 = vmul.f32 1.0, %v1270
        %v1272 = vrcp.pop %v1028
        %v1273 = vmul.f32 %v1028, %v1272
        %v1274 = vsub.f32 1.0, %v1273
        %v1275 = vmul.f32 %v1272, %v1274
        %v1276 = vadd.f32 %v1272, %v1275
        %vm1277 = vweird.f32 %v1028
        %vm1278 = vweird.f32 %v1272
        %vm1279 = vmor %vm1277, %vm1278
        %v1280 = vsel %vm1279, %v1272, %v1276
        %v1281 = vand.u32 2147483647, %v1028
        %vm1282 = vcmp.eq.f32.partialorder %v1281, 8.507059e+37
        %v1283 = vand.u32 %v1028, 2147483648
        %v1284 = vor.u32 1.1754944e-38, %v1283
        %v1285 = vsel %vm1282, %v1284, %v1280
        %v1286 = vmul.f32 1.0, %v1285
        %v1287 = vrcp.pop %v1029
        %v1288 = vmul.f32 %v1029, %v1287
        %v1289 = vsub.f32 1.0, %v1288
        %v1290 = vmul.f32 %v1287, %v1289
        %v1291 = vadd.f32 %v1287, %v1290
        %vm1292 = vweird.f32 %v1029
        %vm1293 = vweird.f32 %v1287
        %vm1294 = vmor %vm1292, %vm1293
        %v1295 = vsel %vm1294, %v1287, %v1291
        %v1296 = vand.u32 2147483647, %v1029
        %vm1297 = vcmp.eq.f32.partialorder %v1296, 8.507059e+37
        %v1298 = vand.u32 %v1029, 2147483648
        %v1299 = vor.u32 1.1754944e-38, %v1298
        %v1300 = vsel %vm1297, %v1299, %v1295
        %v1301 = vmul.f32 1.0, %v1300
        %v1302 = vrcp.pop %v1030
        %v1303 = vmul.f32 %v1030, %v1302
        %v1304 = vsub.f32 1.0, %v1303
        %v1305 = vmul.f32 %v1302, %v1304
        %v1306 = vadd.f32 %v1302, %v1305
        %vm1307 = vweird.f32 %v1030
        %vm1308 = vweird.f32 %v1302
        %vm1309 = vmor %vm1307, %vm1308
        %v1310 = vsel %vm1309, %v1302, %v1306
        %v1311 = vand.u32 2147483647, %v1030
        %vm1312 = vcmp.eq.f32.partialorder %v1311, 8.507059e+37
        %v1313 = vand.u32 %v1030, 2147483648
        %v1314 = vor.u32 1.1754944e-38, %v1313
        %v1315 = vsel %vm1312, %v1314, %v1310
        %v1316 = vmul.f32 1.0, %v1315
        %v1317 = vrcp.pop %v1031
        %v1318 = vmul.f32 %v1031, %v1317
        %v1319 = vsub.f32 1.0, %v1318
        %v1320 = vmul.f32 %v1317, %v1319
        %v1321 = vadd.f32 %v1317, %v1320
        %vm1322 = vweird.f32 %v1031
        %vm1323 = vweird.f32 %v1317
        %vm1324 = vmor %vm1322, %vm1323
        %v1325 = vsel %vm1324, %v1317, %v1321
        %v1326 = vand.u32 2147483647, %v1031
        %vm1327 = vcmp.eq.f32.partialorder %v1326, 8.507059e+37
        %v1328 = vand.u32 %v1031, 2147483648
        %v1329 = vor.u32 1.1754944e-38, %v1328
        %v1330 = vsel %vm1327, %v1329, %v1325
        %v1331 = vmul.f32 1.0, %v1330
        %v1332 = vrcp.pop %v1032
        %v1333 = vmul.f32 %v1032, %v1332
        %v1334 = vsub.f32 1.0, %v1333
        %v1335 = vmul.f32 %v1332, %v1334
        %v1336 = vadd.f32 %v1332, %v1335
        %vm1337 = vweird.f32 %v1032
        %vm1338 = vweird.f32 %v1332
        %vm1339 = vmor %vm1337, %vm1338
        %v1340 = vsel %vm1339, %v1332, %v1336
        %v1341 = vand.u32 2147483647, %v1032
        %vm1342 = vcmp.eq.f32.partialorder %v1341, 8.507059e+37
        %v1343 = vand.u32 %v1032, 2147483648
        %v1344 = vor.u32 1.1754944e-38, %v1343
        %v1345 = vsel %vm1342, %v1344, %v1340
        %v1346 = vmul.f32 1.0, %v1345
        %v1347 = vrcp.pop %v1033
        %v1348 = vmul.f32 %v1033, %v1347
        %v1349 = vsub.f32 1.0, %v1348
        %v1350 = vmul.f32 %v1347, %v1349
        %v1351 = vadd.f32 %v1347, %v1350
        %vm1352 = vweird.f32 %v1033
        %vm1353 = vweird.f32 %v1347
        %vm1354 = vmor %vm1352, %vm1353
        %v1355 = vsel %vm1354, %v1347, %v1351
        %v1356 = vand.u32 2147483647, %v1033
        %vm1357 = vcmp.eq.f32.partialorder %v1356, 8.507059e+37
        %v1358 = vand.u32 %v1033, 2147483648
        %v1359 = vor.u32 1.1754944e-38, %v1358
        %v1360 = vsel %vm1357, %v1359, %v1355
        %v1361 = vmul.f32 1.0, %v1360
        %v1362 = vrcp.pop %v1034
        %v1363 = vmul.f32 %v1034, %v1362
        %v1364 = vsub.f32 1.0, %v1363
        %v1365 = vmul.f32 %v1362, %v1364
        %v1366 = vadd.f32 %v1362, %v1365
        %vm1367 = vweird.f32 %v1034
        %vm1368 = vweird.f32 %v1362
        %vm1369 = vmor %vm1367, %vm1368
        %v1370 = vsel %vm1369, %v1362, %v1366
        %v1371 = vand.u32 2147483647, %v1034
        %vm1372 = vcmp.eq.f32.partialorder %v1371, 8.507059e+37
        %v1373 = vand.u32 %v1034, 2147483648
        %v1374 = vor.u32 1.1754944e-38, %v1373
        %v1375 = vsel %vm1372, %v1374, %v1370
        %v1376 = vmul.f32 1.0, %v1375
        %v1377 = vrcp.pop %v1035
        %v1378 = vmul.f32 %v1035, %v1377
        %v1379 = vsub.f32 1.0, %v1378
        %v1380 = vmul.f32 %v1377, %v1379
        %v1381 = vadd.f32 %v1377, %v1380
        %vm1382 = vweird.f32 %v1035
        %vm1383 = vweird.f32 %v1377
        %vm1384 = vmor %vm1382, %vm1383
        %v1385 = vsel %vm1384, %v1377, %v1381
        %v1386 = vand.u32 2147483647, %v1035
        %vm1387 = vcmp.eq.f32.partialorder %v1386, 8.507059e+37
        %v1388 = vand.u32 %v1035, 2147483648
        %v1389 = vor.u32 1.1754944e-38, %v1388
        %v1390 = vsel %vm1387, %v1389, %v1385
        %v1391 = vmul.f32 1.0, %v1390
        %v1392 = vrcp.pop %v1036
        %v1393 = vmul.f32 %v1036, %v1392
        %v1394 = vsub.f32 1.0, %v1393
        %v1395 = vmul.f32 %v1392, %v1394
        %v1396 = vadd.f32 %v1392, %v1395
        %vm1397 = vweird.f32 %v1036
        %vm1398 = vweird.f32 %v1392
        %vm1399 = vmor %vm1397, %vm1398
        %v1400 = vsel %vm1399, %v1392, %v1396
        %v1401 = vand.u32 2147483647, %v1036
        %vm1402 = vcmp.eq.f32.partialorder %v1401, 8.507059e+37
        %v1403 = vand.u32 %v1036, 2147483648
        %v1404 = vor.u32 1.1754944e-38, %v1403
        %v1405 = vsel %vm1402, %v1404, %v1400
        %v1406 = vmul.f32 1.0, %v1405
        %v1407 = vrcp.pop %v1037
        %v1408 = vmul.f32 %v1037, %v1407
        %v1409 = vsub.f32 1.0, %v1408
        %v1410 = vmul.f32 %v1407, %v1409
        %v1411 = vadd.f32 %v1407, %v1410
        %vm1412 = vweird.f32 %v1037
        %vm1413 = vweird.f32 %v1407
        %vm1414 = vmor %vm1412, %vm1413
        %v1415 = vsel %vm1414, %v1407, %v1411
        %v1416 = vand.u32 2147483647, %v1037
        %vm1417 = vcmp.eq.f32.partialorder %v1416, 8.507059e+37
        %v1418 = vand.u32 %v1037, 2147483648
        %v1419 = vor.u32 1.1754944e-38, %v1418
        %v1420 = vsel %vm1417, %v1419, %v1415
        %v1421 = vmul.f32 1.0, %v1420
        %v1422 = vrcp.pop %v1038
        %v1423 = vmul.f32 %v1038, %v1422
        %v1424 = vsub.f32 1.0, %v1423
        %v1425 = vmul.f32 %v1422, %v1424
        %v1426 = vadd.f32 %v1422, %v1425
        %vm1427 = vweird.f32 %v1038
        %vm1428 = vweird.f32 %v1422
        %vm1429 = vmor %vm1427, %vm1428
        %v1430 = vsel %vm1429, %v1422, %v1426
        %v1431 = vand.u32 2147483647, %v1038
        %vm1432 = vcmp.eq.f32.partialorder %v1431, 8.507059e+37
        %v1433 = vand.u32 %v1038, 2147483648
        %v1434 = vor.u32 1.1754944e-38, %v1433
        %v1435 = vsel %vm1432, %v1434, %v1430
        %v1436 = vmul.f32 1.0, %v1435
        %v1437 = vrcp.pop %v1039
        %v1438 = vmul.f32 %v1039, %v1437
        %v1439 = vsub.f32 1.0, %v1438
        %v1440 = vmul.f32 %v1437, %v1439
        %v1441 = vadd.f32 %v1437, %v1440
        %vm1442 = vweird.f32 %v1039
        %vm1443 = vweird.f32 %v1437
        %vm1444 = vmor %vm1442, %vm1443
        %v1445 = vsel %vm1444, %v1437, %v1441
        %v1446 = vand.u32 2147483647, %v1039
        %vm1447 = vcmp.eq.f32.partialorder %v1446, 8.507059e+37
        %v1448 = vand.u32 %v1039, 2147483648
        %v1449 = vor.u32 1.1754944e-38, %v1448
        %v1450 = vsel %vm1447, %v1449, %v1445
        %v1451 = vmul.f32 1.0, %v1450
        %v1452 = vrcp.pop %v1040
        %v1453 = vmul.f32 %v1040, %v1452
        %v1454 = vsub.f32 1.0, %v1453
        %v1455 = vmul.f32 %v1452, %v1454
        %v1456 = vadd.f32 %v1452, %v1455
        %vm1457 = vweird.f32 %v1040
        %vm1458 = vweird.f32 %v1452
        %vm1459 = vmor %vm1457, %vm1458
        %v1460 = vsel %vm1459, %v1452, %v1456
        %v1461 = vand.u32 2147483647, %v1040
        %vm1462 = vcmp.eq.f32.partialorder %v1461, 8.507059e+37
        %v1463 = vand.u32 %v1040, 2147483648
        %v1464 = vor.u32 1.1754944e-38, %v1463
        %v1465 = vsel %vm1462, %v1464, %v1460
        %v1466 = vmul.f32 1.0, %v1465
        %v1467 = vrcp.pop %v1041
        %v1468 = vmul.f32 %v1041, %v1467
        %v1469 = vsub.f32 1.0, %v1468
        %v1470 = vmul.f32 %v1467, %v1469
        %v1471 = vadd.f32 %v1467, %v1470
        %vm1472 = vweird.f32 %v1041
        %vm1473 = vweird.f32 %v1467
        %vm1474 = vmor %vm1472, %vm1473
        %v1475 = vsel %vm1474, %v1467, %v1471
        %v1476 = vand.u32 2147483647, %v1041
        %vm1477 = vcmp.eq.f32.partialorder %v1476, 8.507059e+37
        %v1478 = vand.u32 %v1041, 2147483648
        %v1479 = vor.u32 1.1754944e-38, %v1478
        %v1480 = vsel %vm1477, %v1479, %v1475
        %v1481 = vmul.f32 1.0, %v1480
        %v1482 = vrcp.pop %v1042
        %v1483 = vmul.f32 %v1042, %v1482
        %v1484 = vsub.f32 1.0, %v1483
        %v1485 = vmul.f32 %v1482, %v1484
        %v1486 = vadd.f32 %v1482, %v1485
        %vm1487 = vweird.f32 %v1042
        %vm1488 = vweird.f32 %v1482
        %vm1489 = vmor %vm1487, %vm1488
        %v1490 = vsel %vm1489, %v1482, %v1486
        %v1491 = vand.u32 2147483647, %v1042
        %vm1492 = vcmp.eq.f32.partialorder %v1491, 8.507059e+37
        %v1493 = vand.u32 %v1042, 2147483648
        %v1494 = vor.u32 1.1754944e-38, %v1493
        %v1495 = vsel %vm1492, %v1494, %v1490
        %v1496 = vmul.f32 1.0, %v1495
        %v1497 = vrcp.pop %v1043
        %v1498 = vmul.f32 %v1043, %v1497
        %v1499 = vsub.f32 1.0, %v1498
        %v1500 = vmul.f32 %v1497, %v1499
        %v1501 = vadd.f32 %v1497, %v1500
        %vm1502 = vweird.f32 %v1043
        %vm1503 = vweird.f32 %v1497
        %vm1504 = vmor %vm1502, %vm1503
        %v1505 = vsel %vm1504, %v1497, %v1501
        %v1506 = vand.u32 2147483647, %v1043
        %vm1507 = vcmp.eq.f32.partialorder %v1506, 8.507059e+37
        %v1508 = vand.u32 %v1043, 2147483648
        %v1509 = vor.u32 1.1754944e-38, %v1508
        %v1510 = vsel %vm1507, %v1509, %v1505
        %v1511 = vmul.f32 1.0, %v1510
        %v1512 = vrcp.pop %v1044
        %v1513 = vmul.f32 %v1044, %v1512
        %v1514 = vsub.f32 1.0, %v1513
        %v1515 = vmul.f32 %v1512, %v1514
        %v1516 = vadd.f32 %v1512, %v1515
        %vm1517 = vweird.f32 %v1044
        %vm1518 = vweird.f32 %v1512
        %vm1519 = vmor %vm1517, %vm1518
        %v1520 = vsel %vm1519, %v1512, %v1516
        %v1521 = vand.u32 2147483647, %v1044
        %vm1522 = vcmp.eq.f32.partialorder %v1521, 8.507059e+37
        %v1523 = vand.u32 %v1044, 2147483648
        %v1524 = vor.u32 1.1754944e-38, %v1523
        %v1525 = vsel %vm1522, %v1524, %v1520
        %v1526 = vmul.f32 1.0, %v1525
        %v1527 = vrcp.pop %v1045
        %v1528 = vmul.f32 %v1045, %v1527
        %v1529 = vsub.f32 1.0, %v1528
        %v1530 = vmul.f32 %v1527, %v1529
        %v1531 = vadd.f32 %v1527, %v1530
        %vm1532 = vweird.f32 %v1045
        %vm1533 = vweird.f32 %v1527
        %vm1534 = vmor %vm1532, %vm1533
        %v1535 = vsel %vm1534, %v1527, %v1531
        %v1536 = vand.u32 2147483647, %v1045
        %vm1537 = vcmp.eq.f32.partialorder %v1536, 8.507059e+37
        %v1538 = vand.u32 %v1045, 2147483648
        %v1539 = vor.u32 1.1754944e-38, %v1538
        %v1540 = vsel %vm1537, %v1539, %v1535
        %v1541 = vmul.f32 1.0, %v1540
        %v1542 = vrcp.pop %v1046
        %v1543 = vmul.f32 %v1046, %v1542
        %v1544 = vsub.f32 1.0, %v1543
        %v1545 = vmul.f32 %v1542, %v1544
        %v1546 = vadd.f32 %v1542, %v1545
        %vm1547 = vweird.f32 %v1046
        %vm1548 = vweird.f32 %v1542
        %vm1549 = vmor %vm1547, %vm1548
        %v1550 = vsel %vm1549, %v1542, %v1546
        %v1551 = vand.u32 2147483647, %v1046
        %vm1552 = vcmp.eq.f32.partialorder %v1551, 8.507059e+37
        %v1553 = vand.u32 %v1046, 2147483648
        %v1554 = vor.u32 1.1754944e-38, %v1553
        %v1555 = vsel %vm1552, %v1554, %v1550
        %v1556 = vmul.f32 1.0, %v1555
        %v1557 = vrcp.pop %v1047
        %v1558 = vmul.f32 %v1047, %v1557
        %v1559 = vsub.f32 1.0, %v1558
        %v1560 = vmul.f32 %v1557, %v1559
        %v1561 = vadd.f32 %v1557, %v1560
        %vm1562 = vweird.f32 %v1047
        %vm1563 = vweird.f32 %v1557
        %vm1564 = vmor %vm1562, %vm1563
        %v1565 = vsel %vm1564, %v1557, %v1561
        %v1566 = vand.u32 2147483647, %v1047
        %vm1567 = vcmp.eq.f32.partialorder %v1566, 8.507059e+37
        %v1568 = vand.u32 %v1047, 2147483648
        %v1569 = vor.u32 1.1754944e-38, %v1568
        %v1570 = vsel %vm1567, %v1569, %v1565
        %v1571 = vmul.f32 1.0, %v1570
        %v1572 = vrcp.pop %v1048
        %v1573 = vmul.f32 %v1048, %v1572
        %v1574 = vsub.f32 1.0, %v1573
        %v1575 = vmul.f32 %v1572, %v1574
        %v1576 = vadd.f32 %v1572, %v1575
        %vm1577 = vweird.f32 %v1048
        %vm1578 = vweird.f32 %v1572
        %vm1579 = vmor %vm1577, %vm1578
        %v1580 = vsel %vm1579, %v1572, %v1576
        %v1581 = vand.u32 2147483647, %v1048
        %vm1582 = vcmp.eq.f32.partialorder %v1581, 8.507059e+37
        %v1583 = vand.u32 %v1048, 2147483648
        %v1584 = vor.u32 1.1754944e-38, %v1583
        %v1585 = vsel %vm1582, %v1584, %v1580
        %v1586 = vmul.f32 1.0, %v1585
        %v1587 = vrcp.pop %v1049
        %v1588 = vmul.f32 %v1049, %v1587
        %v1589 = vsub.f32 1.0, %v1588
        %v1590 = vmul.f32 %v1587, %v1589
        %v1591 = vadd.f32 %v1587, %v1590
        %vm1592 = vweird.f32 %v1049
        %vm1593 = vweird.f32 %v1587
        %vm1594 = vmor %vm1592, %vm1593
        %v1595 = vsel %vm1594, %v1587, %v1591
        %v1596 = vand.u32 2147483647, %v1049
        %vm1597 = vcmp.eq.f32.partialorder %v1596, 8.507059e+37
        %v1598 = vand.u32 %v1049, 2147483648
        %v1599 = vor.u32 1.1754944e-38, %v1598
        %v1600 = vsel %vm1597, %v1599, %v1595
        %v1601 = vmul.f32 1.0, %v1600
        %v1602 = vrcp.pop %v1050
        %v1603 = vmul.f32 %v1050, %v1602
        %v1604 = vsub.f32 1.0, %v1603
        %v1605 = vmul.f32 %v1602, %v1604
        %v1606 = vadd.f32 %v1602, %v1605
        %vm1607 = vweird.f32 %v1050
        %vm1608 = vweird.f32 %v1602
        %vm1609 = vmor %vm1607, %vm1608
        %v1610 = vsel %vm1609, %v1602, %v1606
        %v1611 = vand.u32 2147483647, %v1050
        %vm1612 = vcmp.eq.f32.partialorder %v1611, 8.507059e+37
        %v1613 = vand.u32 %v1050, 2147483648
        %v1614 = vor.u32 1.1754944e-38, %v1613
        %v1615 = vsel %vm1612, %v1614, %v1610
        %v1616 = vmul.f32 1.0, %v1615
        %v1617 = vrcp.pop %v1051
        %v1618 = vmul.f32 %v1051, %v1617
        %v1619 = vsub.f32 1.0, %v1618
        %v1620 = vmul.f32 %v1617, %v1619
        %v1621 = vadd.f32 %v1617, %v1620
        %vm1622 = vweird.f32 %v1051
        %vm1623 = vweird.f32 %v1617
        %vm1624 = vmor %vm1622, %vm1623
        %v1625 = vsel %vm1624, %v1617, %v1621
        %v1626 = vand.u32 2147483647, %v1051
        %vm1627 = vcmp.eq.f32.partialorder %v1626, 8.507059e+37
        %v1628 = vand.u32 %v1051, 2147483648
        %v1629 = vor.u32 1.1754944e-38, %v1628
        %v1630 = vsel %vm1627, %v1629, %v1625
        %v1631 = vmul.f32 1.0, %v1630
        %v1632 = vrcp.pop %v1052
        %v1633 = vmul.f32 %v1052, %v1632
        %v1634 = vsub.f32 1.0, %v1633
        %v1635 = vmul.f32 %v1632, %v1634
        %v1636 = vadd.f32 %v1632, %v1635
        %vm1637 = vweird.f32 %v1052
        %vm1638 = vweird.f32 %v1632
        %vm1639 = vmor %vm1637, %vm1638
        %v1640 = vsel %vm1639, %v1632, %v1636
        %v1641 = vand.u32 2147483647, %v1052
        %vm1642 = vcmp.eq.f32.partialorder %v1641, 8.507059e+37
        %v1643 = vand.u32 %v1052, 2147483648
        %v1644 = vor.u32 1.1754944e-38, %v1643
        %v1645 = vsel %vm1642, %v1644, %v1640
        %v1646 = vmul.f32 1.0, %v1645
        %v1647 = vrcp.pop %v1053
        %v1648 = vmul.f32 %v1053, %v1647
        %v1649 = vsub.f32 1.0, %v1648
        %v1650 = vmul.f32 %v1647, %v1649
        %v1651 = vadd.f32 %v1647, %v1650
        %vm1652 = vweird.f32 %v1053
        %vm1653 = vweird.f32 %v1647
        %vm1654 = vmor %vm1652, %vm1653
        %v1655 = vsel %vm1654, %v1647, %v1651
        %v1656 = vand.u32 2147483647, %v1053
        %vm1657 = vcmp.eq.f32.partialorder %v1656, 8.507059e+37
        %v1658 = vand.u32 %v1053, 2147483648
        %v1659 = vor.u32 1.1754944e-38, %v1658
        %v1660 = vsel %vm1657, %v1659, %v1655
        %v1661 = vmul.f32 1.0, %v1660
        %v1662 = vrcp.pop %v1054
        %v1663 = vmul.f32 %v1054, %v1662
        %v1664 = vsub.f32 1.0, %v1663
        %v1665 = vmul.f32 %v1662, %v1664
        %v1666 = vadd.f32 %v1662, %v1665
        %vm1667 = vweird.f32 %v1054
        %vm1668 = vweird.f32 %v1662
        %vm1669 = vmor %vm1667, %vm1668
        %v1670 = vsel %vm1669, %v1662, %v1666
        %v1671 = vand.u32 2147483647, %v1054
        %vm1672 = vcmp.eq.f32.partialorder %v1671, 8.507059e+37
        %v1673 = vand.u32 %v1054, 2147483648
        %v1674 = vor.u32 1.1754944e-38, %v1673
        %v1675 = vsel %vm1672, %v1674, %v1670
        %v1676 = vmul.f32 1.0, %v1675
        %v1677 = vrcp.pop %v1055
        %v1678 = vmul.f32 %v1055, %v1677
        %v1679 = vsub.f32 1.0, %v1678
        %v1680 = vmul.f32 %v1677, %v1679
        %v1681 = vadd.f32 %v1677, %v1680
        %vm1682 = vweird.f32 %v1055
        %vm1683 = vweird.f32 %v1677
        %vm1684 = vmor %vm1682, %vm1683
        %v1685 = vsel %vm1684, %v1677, %v1681
        %v1686 = vand.u32 2147483647, %v1055
        %vm1687 = vcmp.eq.f32.partialorder %v1686, 8.507059e+37
        %v1688 = vand.u32 %v1055, 2147483648
        %v1689 = vor.u32 1.1754944e-38, %v1688
        %v1690 = vsel %vm1687, %v1689, %v1685
        %v1691 = vmul.f32 1.0, %v1690
        %v1692 = vrcp.pop %v1056
        %v1693 = vmul.f32 %v1056, %v1692
        %v1694 = vsub.f32 1.0, %v1693
        %v1695 = vmul.f32 %v1692, %v1694
        %v1696 = vadd.f32 %v1692, %v1695
        %vm1697 = vweird.f32 %v1056
        %vm1698 = vweird.f32 %v1692
        %vm1699 = vmor %vm1697, %vm1698
        %v1700 = vsel %vm1699, %v1692, %v1696
        %v1701 = vand.u32 2147483647, %v1056
        %vm1702 = vcmp.eq.f32.partialorder %v1701, 8.507059e+37
        %v1703 = vand.u32 %v1056, 2147483648
        %v1704 = vor.u32 1.1754944e-38, %v1703
        %v1705 = vsel %vm1702, %v1704, %v1700
        %v1706 = vmul.f32 1.0, %v1705
        %v1707 = vrcp.pop %v1057
        %v1708 = vmul.f32 %v1057, %v1707
        %v1709 = vsub.f32 1.0, %v1708
        %v1710 = vmul.f32 %v1707, %v1709
        %v1711 = vadd.f32 %v1707, %v1710
        %vm1712 = vweird.f32 %v1057
        %vm1713 = vweird.f32 %v1707
        %vm1714 = vmor %vm1712, %vm1713
        %v1715 = vsel %vm1714, %v1707, %v1711
        %v1716 = vand.u32 2147483647, %v1057
        %vm1717 = vcmp.eq.f32.partialorder %v1716, 8.507059e+37
        %v1718 = vand.u32 %v1057, 2147483648
        %v1719 = vor.u32 1.1754944e-38, %v1718
        %v1720 = vsel %vm1717, %v1719, %v1715
        %v1721 = vmul.f32 1.0, %v1720
        %v1722 = vrcp.pop %v1058
        %v1723 = vmul.f32 %v1058, %v1722
        %v1724 = vsub.f32 1.0, %v1723
        %v1725 = vmul.f32 %v1722, %v1724
        %v1726 = vadd.f32 %v1722, %v1725
        %vm1727 = vweird.f32 %v1058
        %vm1728 = vweird.f32 %v1722
        %vm1729 = vmor %vm1727, %vm1728
        %v1730 = vsel %vm1729, %v1722, %v1726
        %v1731 = vand.u32 2147483647, %v1058
        %vm1732 = vcmp.eq.f32.partialorder %v1731, 8.507059e+37
        %v1733 = vand.u32 %v1058, 2147483648
        %v1734 = vor.u32 1.1754944e-38, %v1733
        %v1735 = vsel %vm1732, %v1734, %v1730
        %v1736 = vmul.f32 1.0, %v1735
        %v1737 = vrcp.pop %v1059
        %v1738 = vmul.f32 %v1059, %v1737
        %v1739 = vsub.f32 1.0, %v1738
        %v1740 = vmul.f32 %v1737, %v1739
        %v1741 = vadd.f32 %v1737, %v1740
        %vm1742 = vweird.f32 %v1059
        %vm1743 = vweird.f32 %v1737
        %vm1744 = vmor %vm1742, %vm1743
        %v1745 = vsel %vm1744, %v1737, %v1741
        %v1746 = vand.u32 2147483647, %v1059
        %vm1747 = vcmp.eq.f32.partialorder %v1746, 8.507059e+37
        %v1748 = vand.u32 %v1059, 2147483648
        %v1749 = vor.u32 1.1754944e-38, %v1748
        %v1750 = vsel %vm1747, %v1749, %v1745
        %v1751 = vmul.f32 1.0, %v1750
        %v1752 = vrcp.pop %v1060
        %v1753 = vmul.f32 %v1060, %v1752
        %v1754 = vsub.f32 1.0, %v1753
        %v1755 = vmul.f32 %v1752, %v1754
        %v1756 = vadd.f32 %v1752, %v1755
        %vm1757 = vweird.f32 %v1060
        %vm1758 = vweird.f32 %v1752
        %vm1759 = vmor %vm1757, %vm1758
        %v1760 = vsel %vm1759, %v1752, %v1756
        %v1761 = vand.u32 2147483647, %v1060
        %vm1762 = vcmp.eq.f32.partialorder %v1761, 8.507059e+37
        %v1763 = vand.u32 %v1060, 2147483648
        %v1764 = vor.u32 1.1754944e-38, %v1763
        %v1765 = vsel %vm1762, %v1764, %v1760
        %v1766 = vmul.f32 1.0, %v1765
        %v1767 = vrcp.pop %v1061
        %v1768 = vmul.f32 %v1061, %v1767
        %v1769 = vsub.f32 1.0, %v1768
        %v1770 = vmul.f32 %v1767, %v1769
        %v1771 = vadd.f32 %v1767, %v1770
        %vm1772 = vweird.f32 %v1061
        %vm1773 = vweird.f32 %v1767
        %vm1774 = vmor %vm1772, %vm1773
        %v1775 = vsel %vm1774, %v1767, %v1771
        %v1776 = vand.u32 2147483647, %v1061
        %vm1777 = vcmp.eq.f32.partialorder %v1776, 8.507059e+37
        %v1778 = vand.u32 %v1061, 2147483648
        %v1779 = vor.u32 1.1754944e-38, %v1778
        %v1780 = vsel %vm1777, %v1779, %v1775
        %v1781 = vmul.f32 1.0, %v1780
        %v1782 = vmul.f32 %v822, %v1076
        %v1783 = vmul.f32 %v823, %v1091
        %v1784 = vmul.f32 %v824, %v1106
        %v1785 = vmul.f32 %v825, %v1121
        %v1786 = vmul.f32 %v826, %v1136
        %v1787 = vmul.f32 %v827, %v1151
        %v1788 = vmul.f32 %v828, %v1166
        %v1789 = vmul.f32 %v829, %v1181
        %v1790 = vmul.f32 %v830, %v1196
        %v1791 = vmul.f32 %v831, %v1211
        %v1792 = vmul.f32 %v832, %v1226
        %v1793 = vmul.f32 %v833, %v1241
        %v1794 = vmul.f32 %v834, %v1256
        %v1795 = vmul.f32 %v835, %v1271
        %v1796 = vmul.f32 %v836, %v1286
        %v1797 = vmul.f32 %v837, %v1301
        %v1798 = vmul.f32 %v838, %v1316
        %v1799 = vmul.f32 %v839, %v1331
        %v1800 = vmul.f32 %v840, %v1346
        %v1801 = vmul.f32 %v841, %v1361
        %v1802 = vmul.f32 %v842, %v1376
        %v1803 = vmul.f32 %v843, %v1391
        %v1804 = vmul.f32 %v844, %v1406
        %v1805 = vmul.f32 %v845, %v1421
        %v1806 = vmul.f32 %v846, %v1436
        %v1807 = vmul.f32 %v847, %v1451
        %v1808 = vmul.f32 %v848, %v1466
        %v1809 = vmul.f32 %v849, %v1481
        %v1810 = vmul.f32 %v850, %v1496
        %v1811 = vmul.f32 %v851, %v1511
        %v1812 = vmul.f32 %v852, %v1526
        %v1813 = vmul.f32 %v853, %v1541
        %v1814 = vmul.f32 %v854, %v1556
        %v1815 = vmul.f32 %v855, %v1571
        %v1816 = vmul.f32 %v856, %v1586
        %v1817 = vmul.f32 %v857, %v1601
        %v1818 = vmul.f32 %v858, %v1616
        %v1819 = vmul.f32 %v859, %v1631
        %v1820 = vmul.f32 %v860, %v1646
        %v1821 = vmul.f32 %v861, %v1661
        %v1822 = vmul.f32 %v862, %v1676
        %v1823 = vmul.f32 %v863, %v1691
        %v1824 = vmul.f32 %v864, %v1706
        %v1825 = vmul.f32 %v865, %v1721
        %v1826 = vmul.f32 %v866, %v1736
        %v1827 = vmul.f32 %v867, %v1751
        %v1828 = vmul.f32 %v868, %v1766
        %v1829 = vmul.f32 %v869, %v1781
        %v1830 = vld [vmem:[%s4] sm:$0x1]
        %v1832 = vperm.slane %v1830, 0
        %v1834 = vmul.f32 %v1782, %v1832
        %v1835 = vmul.f32 %v1783, %v1832
        %v1836 = vmul.f32 %v1784, %v1832
        %v1837 = vmul.f32 %v1785, %v1832
        %v1838 = vmul.f32 %v1786, %v1832
        %v1839 = vmul.f32 %v1787, %v1832
        %v1840 = vmul.f32 %v1788, %v1832
        %v1841 = vmul.f32 %v1789, %v1832
        %v1842 = vmul.f32 %v1790, %v1832
        %v1843 = vmul.f32 %v1791, %v1832
        %v1844 = vmul.f32 %v1792, %v1832
        %v1845 = vmul.f32 %v1793, %v1832
        %v1846 = vmul.f32 %v1794, %v1832
        %v1847 = vmul.f32 %v1795, %v1832
        %v1848 = vmul.f32 %v1796, %v1832
        %v1849 = vmul.f32 %v1797, %v1832
        %v1850 = vmul.f32 %v1798, %v1832
        %v1851 = vmul.f32 %v1799, %v1832
        %v1852 = vmul.f32 %v1800, %v1832
        %v1853 = vmul.f32 %v1801, %v1832
        %v1854 = vmul.f32 %v1802, %v1832
        %v1855 = vmul.f32 %v1803, %v1832
        %v1856 = vmul.f32 %v1804, %v1832
        %v1857 = vmul.f32 %v1805, %v1832
        %v1858 = vmul.f32 %v1806, %v1832
        %v1859 = vmul.f32 %v1807, %v1832
        %v1860 = vmul.f32 %v1808, %v1832
        %v1861 = vmul.f32 %v1809, %v1832
        %v1862 = vmul.f32 %v1810, %v1832
        %v1863 = vmul.f32 %v1811, %v1832
        %v1864 = vmul.f32 %v1812, %v1832
        %v1865 = vmul.f32 %v1813, %v1832
        %v1866 = vmul.f32 %v1814, %v1832
        %v1867 = vmul.f32 %v1815, %v1832
        %v1868 = vmul.f32 %v1816, %v1832
        %v1869 = vmul.f32 %v1817, %v1832
        %v1870 = vmul.f32 %v1818, %v1832
        %v1871 = vmul.f32 %v1819, %v1832
        %v1872 = vmul.f32 %v1820, %v1832
        %v1873 = vmul.f32 %v1821, %v1832
        %v1874 = vmul.f32 %v1822, %v1832
        %v1875 = vmul.f32 %v1823, %v1832
        %v1876 = vmul.f32 %v1824, %v1832
        %v1877 = vmul.f32 %v1825, %v1832
        %v1878 = vmul.f32 %v1826, %v1832
        %v1879 = vmul.f32 %v1827, %v1832
        %v1880 = vmul.f32 %v1828, %v1832
        %v1881 = vmul.f32 %v1829, %v1832
        %vm1882 = vcmask 261120
        %v1883 = vsel %vm1882, %v1834, 0.0
        %1884 = vadd.xlane.f32.xlu0 %v1883
        %v1885 = vpop.xlane.xlu0 %1884
        %v1886 = vsel %vm1882, %v1835, 0.0
        %1887 = vadd.xlane.f32.xlu0 %v1886
        %v1888 = vpop.xlane.xlu0 %1887
        %v1889 = vsel %vm1882, %v1836, 0.0
        %1890 = vadd.xlane.f32.xlu0 %v1889
        %v1891 = vpop.xlane.xlu0 %1890
        %v1892 = vsel %vm1882, %v1837, 0.0
        %1893 = vadd.xlane.f32.xlu0 %v1892
        %v1894 = vpop.xlane.xlu0 %1893
        %v1895 = vsel %vm1882, %v1838, 0.0
        %1896 = vadd.xlane.f32.xlu0 %v1895
        %v1897 = vpop.xlane.xlu0 %1896
        %v1898 = vsel %vm1882, %v1839, 0.0
        %1899 = vadd.xlane.f32.xlu0 %v1898
        %v1900 = vpop.xlane.xlu0 %1899
        %v1901 = vsel %vm1882, %v1840, 0.0
        %1902 = vadd.xlane.f32.xlu0 %v1901
        %v1903 = vpop.xlane.xlu0 %1902
        %v1904 = vsel %vm1882, %v1841, 0.0
        %1905 = vadd.xlane.f32.xlu0 %v1904
        %v1906 = vpop.xlane.xlu0 %1905
        %v1907 = vsel %vm1882, %v1842, 0.0
        %1908 = vadd.xlane.f32.xlu0 %v1907
        %v1909 = vpop.xlane.xlu0 %1908
        %v1910 = vsel %vm1882, %v1843, 0.0
        %1911 = vadd.xlane.f32.xlu0 %v1910
        %v1912 = vpop.xlane.xlu0 %1911
        %v1913 = vsel %vm1882, %v1844, 0.0
        %1914 = vadd.xlane.f32.xlu0 %v1913
        %v1915 = vpop.xlane.xlu0 %1914
        %v1916 = vsel %vm1882, %v1845, 0.0
        %1917 = vadd.xlane.f32.xlu0 %v1916
        %v1918 = vpop.xlane.xlu0 %1917
        %v1919 = vsel %vm1882, %v1846, 0.0
        %1920 = vadd.xlane.f32.xlu0 %v1919
        %v1921 = vpop.xlane.xlu0 %1920
        %v1922 = vsel %vm1882, %v1847, 0.0
        %1923 = vadd.xlane.f32.xlu0 %v1922
        %v1924 = vpop.xlane.xlu0 %1923
        %v1925 = vsel %vm1882, %v1848, 0.0
        %1926 = vadd.xlane.f32.xlu0 %v1925
        %v1927 = vpop.xlane.xlu0 %1926
        %v1928 = vsel %vm1882, %v1849, 0.0
        %1929 = vadd.xlane.f32.xlu0 %v1928
        %v1930 = vpop.xlane.xlu0 %1929
        %v1931 = vsel %vm1882, %v1850, 0.0
        %1932 = vadd.xlane.f32.xlu0 %v1931
        %v1933 = vpop.xlane.xlu0 %1932
        %v1934 = vsel %vm1882, %v1851, 0.0
        %1935 = vadd.xlane.f32.xlu0 %v1934
        %v1936 = vpop.xlane.xlu0 %1935
        %v1937 = vsel %vm1882, %v1852, 0.0
        %1938 = vadd.xlane.f32.xlu0 %v1937
        %v1939 = vpop.xlane.xlu0 %1938
        %v1940 = vsel %vm1882, %v1853, 0.0
        %1941 = vadd.xlane.f32.xlu0 %v1940
        %v1942 = vpop.xlane.xlu0 %1941
        %v1943 = vsel %vm1882, %v1854, 0.0
        %1944 = vadd.xlane.f32.xlu0 %v1943
        %v1945 = vpop.xlane.xlu0 %1944
        %v1946 = vsel %vm1882, %v1855, 0.0
        %1947 = vadd.xlane.f32.xlu0 %v1946
        %v1948 = vpop.xlane.xlu0 %1947
        %v1949 = vsel %vm1882, %v1856, 0.0
        %1950 = vadd.xlane.f32.xlu0 %v1949
        %v1951 = vpop.xlane.xlu0 %1950
        %v1952 = vsel %vm1882, %v1857, 0.0
        %1953 = vadd.xlane.f32.xlu0 %v1952
        %v1954 = vpop.xlane.xlu0 %1953
        %v1955 = vsel %vm1882, %v1858, 0.0
        %1956 = vadd.xlane.f32.xlu0 %v1955
        %v1957 = vpop.xlane.xlu0 %1956
        %v1958 = vsel %vm1882, %v1859, 0.0
        %1959 = vadd.xlane.f32.xlu0 %v1958
        %v1960 = vpop.xlane.xlu0 %1959
        %v1961 = vsel %vm1882, %v1860, 0.0
        %1962 = vadd.xlane.f32.xlu0 %v1961
        %v1963 = vpop.xlane.xlu0 %1962
        %v1964 = vsel %vm1882, %v1861, 0.0
        %1965 = vadd.xlane.f32.xlu0 %v1964
        %v1966 = vpop.xlane.xlu0 %1965
        %v1967 = vsel %vm1882, %v1862, 0.0
        %1968 = vadd.xlane.f32.xlu0 %v1967
        %v1969 = vpop.xlane.xlu0 %1968
        %v1970 = vsel %vm1882, %v1863, 0.0
        %1971 = vadd.xlane.f32.xlu0 %v1970
        %v1972 = vpop.xlane.xlu0 %1971
        %v1973 = vsel %vm1882, %v1864, 0.0
        %1974 = vadd.xlane.f32.xlu0 %v1973
        %v1975 = vpop.xlane.xlu0 %1974
        %v1976 = vsel %vm1882, %v1865, 0.0
        %1977 = vadd.xlane.f32.xlu0 %v1976
        %v1978 = vpop.xlane.xlu0 %1977
        %v1979 = vsel %vm1882, %v1866, 0.0
        %1980 = vadd.xlane.f32.xlu0 %v1979
        %v1981 = vpop.xlane.xlu0 %1980
        %v1982 = vsel %vm1882, %v1867, 0.0
        %1983 = vadd.xlane.f32.xlu0 %v1982
        %v1984 = vpop.xlane.xlu0 %1983
        %v1985 = vsel %vm1882, %v1868, 0.0
        %1986 = vadd.xlane.f32.xlu0 %v1985
        %v1987 = vpop.xlane.xlu0 %1986
        %v1988 = vsel %vm1882, %v1869, 0.0
        %1989 = vadd.xlane.f32.xlu0 %v1988
        %v1990 = vpop.xlane.xlu0 %1989
        %v1991 = vsel %vm1882, %v1870, 0.0
        %1992 = vadd.xlane.f32.xlu0 %v1991
        %v1993 = vpop.xlane.xlu0 %1992
        %v1994 = vsel %vm1882, %v1871, 0.0
        %1995 = vadd.xlane.f32.xlu0 %v1994
        %v1996 = vpop.xlane.xlu0 %1995
        %v1997 = vsel %vm1882, %v1872, 0.0
        %1998 = vadd.xlane.f32.xlu0 %v1997
        %v1999 = vpop.xlane.xlu0 %1998
        %v2000 = vsel %vm1882, %v1873, 0.0
        %2001 = vadd.xlane.f32.xlu0 %v2000
        %v2002 = vpop.xlane.xlu0 %2001
        %v2003 = vsel %vm1882, %v1874, 0.0
        %2004 = vadd.xlane.f32.xlu0 %v2003
        %v2005 = vpop.xlane.xlu0 %2004
        %v2006 = vsel %vm1882, %v1875, 0.0
        %2007 = vadd.xlane.f32.xlu0 %v2006
        %v2008 = vpop.xlane.xlu0 %2007
        %v2009 = vsel %vm1882, %v1876, 0.0
        %2010 = vadd.xlane.f32.xlu0 %v2009
        %v2011 = vpop.xlane.xlu0 %2010
        %v2012 = vsel %vm1882, %v1877, 0.0
        %2013 = vadd.xlane.f32.xlu0 %v2012
        %v2014 = vpop.xlane.xlu0 %2013
        %v2015 = vsel %vm1882, %v1878, 0.0
        %2016 = vadd.xlane.f32.xlu0 %v2015
        %v2017 = vpop.xlane.xlu0 %2016
        %v2018 = vsel %vm1882, %v1879, 0.0
        %2019 = vadd.xlane.f32.xlu0 %v2018
        %v2020 = vpop.xlane.xlu0 %2019
        %v2021 = vsel %vm1882, %v1880, 0.0
        %2022 = vadd.xlane.f32.xlu0 %v2021
        %v2023 = vpop.xlane.xlu0 %2022
        %v2024 = vsel %vm1882, %v1881, 0.0
        %2025 = vadd.xlane.f32.xlu0 %v2024
        %v2026 = vpop.xlane.xlu0 %2025
        %s2027 = sld [smem:[#allocation2]]
        %v2028 = vstv %s2027
        %v2029 = vadd.f32 %v1885, %v2028
        %v2030 = vadd.f32 %v1888, %v2028
        %v2031 = vadd.f32 %v1891, %v2028
        %v2032 = vadd.f32 %v1894, %v2028
        %v2033 = vadd.f32 %v1897, %v2028
        %v2034 = vadd.f32 %v1900, %v2028
        %v2035 = vadd.f32 %v1903, %v2028
        %v2036 = vadd.f32 %v1906, %v2028
        %v2037 = vadd.f32 %v1909, %v2028
        %v2038 = vadd.f32 %v1912, %v2028
        %v2039 = vadd.f32 %v1915, %v2028
        %v2040 = vadd.f32 %v1918, %v2028
        %v2041 = vadd.f32 %v1921, %v2028
        %v2042 = vadd.f32 %v1924, %v2028
        %v2043 = vadd.f32 %v1927, %v2028
        %v2044 = vadd.f32 %v1930, %v2028
        %v2045 = vadd.f32 %v1933, %v2028
        %v2046 = vadd.f32 %v1936, %v2028
        %v2047 = vadd.f32 %v1939, %v2028
        %v2048 = vadd.f32 %v1942, %v2028
        %v2049 = vadd.f32 %v1945, %v2028
        %v2050 = vadd.f32 %v1948, %v2028
        %v2051 = vadd.f32 %v1951, %v2028
        %v2052 = vadd.f32 %v1954, %v2028
        %v2053 = vadd.f32 %v1957, %v2028
        %v2054 = vadd.f32 %v1960, %v2028
        %v2055 = vadd.f32 %v1963, %v2028
        %v2056 = vadd.f32 %v1966, %v2028
        %v2057 = vadd.f32 %v1969, %v2028
        %v2058 = vadd.f32 %v1972, %v2028
        %v2059 = vadd.f32 %v1975, %v2028
        %v2060 = vadd.f32 %v1978, %v2028
        %v2061 = vadd.f32 %v1981, %v2028
        %v2062 = vadd.f32 %v1984, %v2028
        %v2063 = vadd.f32 %v1987, %v2028
        %v2064 = vadd.f32 %v1990, %v2028
        %v2065 = vadd.f32 %v1993, %v2028
        %v2066 = vadd.f32 %v1996, %v2028
        %v2067 = vadd.f32 %v1999, %v2028
        %v2068 = vadd.f32 %v2002, %v2028
        %v2069 = vadd.f32 %v2005, %v2028
        %v2070 = vadd.f32 %v2008, %v2028
        %v2071 = vadd.f32 %v2011, %v2028
        %v2072 = vadd.f32 %v2014, %v2028
        %v2073 = vadd.f32 %v2017, %v2028
        %v2074 = vadd.f32 %v2020, %v2028
        %v2075 = vadd.f32 %v2023, %v2028
        %v2076 = vadd.f32 %v2026, %v2028
        %v2077 = vmul.f32 %v2029, 1.5
        %v2078 = vmul.f32 %v2030, 1.5
        %v2079 = vmul.f32 %v2031, 1.5
        %v2080 = vmul.f32 %v2032, 1.5
        %v2081 = vmul.f32 %v2033, 1.5
        %v2082 = vmul.f32 %v2034, 1.5
        %v2083 = vmul.f32 %v2035, 1.5
        %v2084 = vmul.f32 %v2036, 1.5
        %v2085 = vmul.f32 %v2037, 1.5
        %v2086 = vmul.f32 %v2038, 1.5
        %v2087 = vmul.f32 %v2039, 1.5
        %v2088 = vmul.f32 %v2040, 1.5
        %v2089 = vmul.f32 %v2041, 1.5
        %v2090 = vmul.f32 %v2042, 1.5
        %v2091 = vmul.f32 %v2043, 1.5
        %v2092 = vmul.f32 %v2044, 1.5
        %v2093 = vmul.f32 %v2045, 1.5
        %v2094 = vmul.f32 %v2046, 1.5
        %v2095 = vmul.f32 %v2047, 1.5
        %v2096 = vmul.f32 %v2048, 1.5
        %v2097 = vmul.f32 %v2049, 1.5
        %v2098 = vmul.f32 %v2050, 1.5
        %v2099 = vmul.f32 %v2051, 1.5
        %v2100 = vmul.f32 %v2052, 1.5
        %v2101 = vmul.f32 %v2053, 1.5
        %v2102 = vmul.f32 %v2054, 1.5
        %v2103 = vmul.f32 %v2055, 1.5
        %v2104 = vmul.f32 %v2056, 1.5
        %v2105 = vmul.f32 %v2057, 1.5
        %v2106 = vmul.f32 %v2058, 1.5
        %v2107 = vmul.f32 %v2059, 1.5
        %v2108 = vmul.f32 %v2060, 1.5
        %v2109 = vmul.f32 %v2061, 1.5
        %v2110 = vmul.f32 %v2062, 1.5
        %v2111 = vmul.f32 %v2063, 1.5
        %v2112 = vmul.f32 %v2064, 1.5
        %v2113 = vmul.f32 %v2065, 1.5
        %v2114 = vmul.f32 %v2066, 1.5
        %v2115 = vmul.f32 %v2067, 1.5
        %v2116 = vmul.f32 %v2068, 1.5
        %v2117 = vmul.f32 %v2069, 1.5
        %v2118 = vmul.f32 %v2070, 1.5
        %v2119 = vmul.f32 %v2071, 1.5
        %v2120 = vmul.f32 %v2072, 1.5
        %v2121 = vmul.f32 %v2073, 1.5
        %v2122 = vmul.f32 %v2074, 1.5
        %v2123 = vmul.f32 %v2075, 1.5
        %v2124 = vmul.f32 %v2076, 1.5
        %v2125 = vld [vmem:[%s417] sm:$0xff]
        %v2126 = vld [vmem:[%s417 + $0x8] sm:$0xff]
        %v2127 = vld [vmem:[%s417 + $0x10] sm:$0xff]
        %v2128 = vld [vmem:[%s417 + $0x18] sm:$0xff]
        %v2129 = vld [vmem:[%s417 + $0x20] sm:$0xff]
        %v2130 = vld [vmem:[%s417 + $0x28] sm:$0xff]
        %v2131 = vld [vmem:[%s417 + $0x30] sm:$0xff]
        %v2132 = vld [vmem:[%s417 + $0x38] sm:$0xff]
        %v2133 = vld [vmem:[%s417 + $0x40] sm:$0xff]
        %v2134 = vld [vmem:[%s417 + $0x48] sm:$0xff]
        %v2135 = vld [vmem:[%s417 + $0x50] sm:$0xff]
        %v2136 = vld [vmem:[%s417 + $0x58] sm:$0xff]
        %v2137 = vld [vmem:[%s417 + $0x60] sm:$0xff]
        %v2138 = vld [vmem:[%s417 + $0x68] sm:$0xff]
        %v2139 = vld [vmem:[%s417 + $0x70] sm:$0xff]
        %v2140 = vld [vmem:[%s417 + $0x78] sm:$0xff]
        %v2141 = vld [vmem:[%s417 + $0x80] sm:$0xff]
        %v2142 = vld [vmem:[%s417 + $0x88] sm:$0xff]
        %v2143 = vld [vmem:[%s417 + $0x90] sm:$0xff]
        %v2144 = vld [vmem:[%s417 + $0x98] sm:$0xff]
        %v2145 = vld [vmem:[%s417 + $0xa0] sm:$0xff]
        %v2146 = vld [vmem:[%s417 + $0xa8] sm:$0xff]
        %v2147 = vld [vmem:[%s417 + $0xb0] sm:$0xff]
        %v2148 = vld [vmem:[%s417 + $0xb8] sm:$0xff]
        %v2149 = vld [vmem:[%s417 + $0xc0] sm:$0xff]
        %v2150 = vld [vmem:[%s417 + $0xc8] sm:$0xff]
        %v2151 = vld [vmem:[%s417 + $0xd0] sm:$0xff]
        %v2152 = vld [vmem:[%s417 + $0xd8] sm:$0xff]
        %v2153 = vld [vmem:[%s417 + $0xe0] sm:$0xff]
        %v2154 = vld [vmem:[%s417 + $0xe8] sm:$0xff]
        %v2155 = vld [vmem:[%s417 + $0xf0] sm:$0xff]
        %v2156 = vld [vmem:[%s417 + $0xf8] sm:$0xff]
        %v2157 = vld [vmem:[%s417 + $0x100] sm:$0xff]
        %v2158 = vld [vmem:[%s417 + $0x108] sm:$0xff]
        %v2159 = vld [vmem:[%s417 + $0x110] sm:$0xff]
        %v2160 = vld [vmem:[%s417 + $0x118] sm:$0xff]
        %v2161 = vld [vmem:[%s417 + $0x120] sm:$0xff]
        %v2162 = vld [vmem:[%s417 + $0x128] sm:$0xff]
        %v2163 = vld [vmem:[%s417 + $0x130] sm:$0xff]
        %v2164 = vld [vmem:[%s417 + $0x138] sm:$0xff]
        %v2165 = vld [vmem:[%s417 + $0x140] sm:$0xff]
        %v2166 = vld [vmem:[%s417 + $0x148] sm:$0xff]
        %v2167 = vld [vmem:[%s417 + $0x150] sm:$0xff]
        %v2168 = vld [vmem:[%s417 + $0x158] sm:$0xff]
        %v2169 = vld [vmem:[%s417 + $0x160] sm:$0xff]
        %v2170 = vld [vmem:[%s417 + $0x168] sm:$0xff]
        %v2171 = vld [vmem:[%s417 + $0x170] sm:$0xff]
        %v2172 = vld [vmem:[%s417 + $0x178] sm:$0xff]
        %v2173 = vcvt.f32.s32.to.zero.pseudo %v2125
        %v2174 = vcvt.f32.s32.to.zero.pseudo %v2126
        %v2175 = vcvt.f32.s32.to.zero.pseudo %v2127
        %v2176 = vcvt.f32.s32.to.zero.pseudo %v2128
        %v2177 = vcvt.f32.s32.to.zero.pseudo %v2129
        %v2178 = vcvt.f32.s32.to.zero.pseudo %v2130
        %v2179 = vcvt.f32.s32.to.zero.pseudo %v2131
        %v2180 = vcvt.f32.s32.to.zero.pseudo %v2132
        %v2181 = vcvt.f32.s32.to.zero.pseudo %v2133
        %v2182 = vcvt.f32.s32.to.zero.pseudo %v2134
        %v2183 = vcvt.f32.s32.to.zero.pseudo %v2135
        %v2184 = vcvt.f32.s32.to.zero.pseudo %v2136
        %v2185 = vcvt.f32.s32.to.zero.pseudo %v2137
        %v2186 = vcvt.f32.s32.to.zero.pseudo %v2138
        %v2187 = vcvt.f32.s32.to.zero.pseudo %v2139
        %v2188 = vcvt.f32.s32.to.zero.pseudo %v2140
        %v2189 = vcvt.f32.s32.to.zero.pseudo %v2141
        %v2190 = vcvt.f32.s32.to.zero.pseudo %v2142
        %v2191 = vcvt.f32.s32.to.zero.pseudo %v2143
        %v2192 = vcvt.f32.s32.to.zero.pseudo %v2144
        %v2193 = vcvt.f32.s32.to.zero.pseudo %v2145
        %v2194 = vcvt.f32.s32.to.zero.pseudo %v2146
        %v2195 = vcvt.f32.s32.to.zero.pseudo %v2147
        %v2196 = vcvt.f32.s32.to.zero.pseudo %v2148
        %v2197 = vcvt.f32.s32.to.zero.pseudo %v2149
        %v2198 = vcvt.f32.s32.to.zero.pseudo %v2150
        %v2199 = vcvt.f32.s32.to.zero.pseudo %v2151
        %v2200 = vcvt.f32.s32.to.zero.pseudo %v2152
        %v2201 = vcvt.f32.s32.to.zero.pseudo %v2153
        %v2202 = vcvt.f32.s32.to.zero.pseudo %v2154
        %v2203 = vcvt.f32.s32.to.zero.pseudo %v2155
        %v2204 = vcvt.f32.s32.to.zero.pseudo %v2156
        %v2205 = vcvt.f32.s32.to.zero.pseudo %v2157
        %v2206 = vcvt.f32.s32.to.zero.pseudo %v2158
        %v2207 = vcvt.f32.s32.to.zero.pseudo %v2159
        %v2208 = vcvt.f32.s32.to.zero.pseudo %v2160
        %v2209 = vcvt.f32.s32.to.zero.pseudo %v2161
        %v2210 = vcvt.f32.s32.to.zero.pseudo %v2162
        %v2211 = vcvt.f32.s32.to.zero.pseudo %v2163
        %v2212 = vcvt.f32.s32.to.zero.pseudo %v2164
        %v2213 = vcvt.f32.s32.to.zero.pseudo %v2165
        %v2214 = vcvt.f32.s32.to.zero.pseudo %v2166
        %v2215 = vcvt.f32.s32.to.zero.pseudo %v2167
        %v2216 = vcvt.f32.s32.to.zero.pseudo %v2168
        %v2217 = vcvt.f32.s32.to.zero.pseudo %v2169
        %v2218 = vcvt.f32.s32.to.zero.pseudo %v2170
        %v2219 = vcvt.f32.s32.to.zero.pseudo %v2171
        %v2220 = vcvt.f32.s32.to.zero.pseudo %v2172
        %v2221 = vlaneseq
        %v2222 = vand.u32 %v2221, 127
        %2223 = vset.pattern.permute.xlu0 3
        %2224 = vperm.xlu0 %2223, %v2173
        %v2225 = vpop.permute.xlu0 %2224
        %2226 = vset.pattern.permute.xlu0 3
        %2227 = vperm.xlu0 %2226, %v2174
        %v2228 = vpop.permute.xlu0 %2227
        %2229 = vset.pattern.permute.xlu0 3
        %2230 = vperm.xlu0 %2229, %v2175
        %v2231 = vpop.permute.xlu0 %2230
        %2232 = vset.pattern.permute.xlu0 3
        %2233 = vperm.xlu0 %2232, %v2176
        %v2234 = vpop.permute.xlu0 %2233
        %2235 = vset.pattern.permute.xlu0 3
        %2236 = vperm.xlu0 %2235, %v2177
        %v2237 = vpop.permute.xlu0 %2236
        %2238 = vset.pattern.permute.xlu0 3
        %2239 = vperm.xlu0 %2238, %v2178
        %v2240 = vpop.permute.xlu0 %2239
        %2241 = vset.pattern.permute.xlu0 3
        %2242 = vperm.xlu0 %2241, %v2179
        %v2243 = vpop.permute.xlu0 %2242
        %2244 = vset.pattern.permute.xlu0 3
        %2245 = vperm.xlu0 %2244, %v2180
        %v2246 = vpop.permute.xlu0 %2245
        %2247 = vset.pattern.permute.xlu0 3
        %2248 = vperm.xlu0 %2247, %v2181
        %v2249 = vpop.permute.xlu0 %2248
        %2250 = vset.pattern.permute.xlu0 3
        %2251 = vperm.xlu0 %2250, %v2182
        %v2252 = vpop.permute.xlu0 %2251
        %2253 = vset.pattern.permute.xlu0 3
        %2254 = vperm.xlu0 %2253, %v2183
        %v2255 = vpop.permute.xlu0 %2254
        %2256 = vset.pattern.permute.xlu0 3
        %2257 = vperm.xlu0 %2256, %v2184
        %v2258 = vpop.permute.xlu0 %2257
        %2259 = vset.pattern.permute.xlu0 3
        %2260 = vperm.xlu0 %2259, %v2185
        %v2261 = vpop.permute.xlu0 %2260
        %2262 = vset.pattern.permute.xlu0 3
        %2263 = vperm.xlu0 %2262, %v2186
        %v2264 = vpop.permute.xlu0 %2263
        %2265 = vset.pattern.permute.xlu0 3
        %2266 = vperm.xlu0 %2265, %v2187
        %v2267 = vpop.permute.xlu0 %2266
        %2268 = vset.pattern.permute.xlu0 3
        %2269 = vperm.xlu0 %2268, %v2188
        %v2270 = vpop.permute.xlu0 %2269
        %2271 = vset.pattern.permute.xlu0 3
        %2272 = vperm.xlu0 %2271, %v2189
        %v2273 = vpop.permute.xlu0 %2272
        %2274 = vset.pattern.permute.xlu0 3
        %2275 = vperm.xlu0 %2274, %v2190
        %v2276 = vpop.permute.xlu0 %2275
        %2277 = vset.pattern.permute.xlu0 3
        %2278 = vperm.xlu0 %2277, %v2191
        %v2279 = vpop.permute.xlu0 %2278
        %2280 = vset.pattern.permute.xlu0 3
        %2281 = vperm.xlu0 %2280, %v2192
        %v2282 = vpop.permute.xlu0 %2281
        %2283 = vset.pattern.permute.xlu0 3
        %2284 = vperm.xlu0 %2283, %v2193
        %v2285 = vpop.permute.xlu0 %2284
        %2286 = vset.pattern.permute.xlu0 3
        %2287 = vperm.xlu0 %2286, %v2194
        %v2288 = vpop.permute.xlu0 %2287
        %2289 = vset.pattern.permute.xlu0 3
        %2290 = vperm.xlu0 %2289, %v2195
        %v2291 = vpop.permute.xlu0 %2290
        %2292 = vset.pattern.permute.xlu0 3
        %2293 = vperm.xlu0 %2292, %v2196
        %v2294 = vpop.permute.xlu0 %2293
        %2295 = vset.pattern.permute.xlu0 3
        %2296 = vperm.xlu0 %2295, %v2197
        %v2297 = vpop.permute.xlu0 %2296
        %2298 = vset.pattern.permute.xlu0 3
        %2299 = vperm.xlu0 %2298, %v2198
        %v2300 = vpop.permute.xlu0 %2299
        %2301 = vset.pattern.permute.xlu0 3
        %2302 = vperm.xlu0 %2301, %v2199
        %v2303 = vpop.permute.xlu0 %2302
        %2304 = vset.pattern.permute.xlu0 3
        %2305 = vperm.xlu0 %2304, %v2200
        %v2306 = vpop.permute.xlu0 %2305
        %2307 = vset.pattern.permute.xlu0 3
        %2308 = vperm.xlu0 %2307, %v2201
        %v2309 = vpop.permute.xlu0 %2308
        %2310 = vset.pattern.permute.xlu0 3
        %2311 = vperm.xlu0 %2310, %v2202
        %v2312 = vpop.permute.xlu0 %2311
        %2313 = vset.pattern.permute.xlu0 3
        %2314 = vperm.xlu0 %2313, %v2203
        %v2315 = vpop.permute.xlu0 %2314
        %2316 = vset.pattern.permute.xlu0 3
        %2317 = vperm.xlu0 %2316, %v2204
        %v2318 = vpop.permute.xlu0 %2317
        %2319 = vset.pattern.permute.xlu0 3
        %2320 = vperm.xlu0 %2319, %v2205
        %v2321 = vpop.permute.xlu0 %2320
        %2322 = vset.pattern.permute.xlu0 3
        %2323 = vperm.xlu0 %2322, %v2206
        %v2324 = vpop.permute.xlu0 %2323
        %2325 = vset.pattern.permute.xlu0 3
        %2326 = vperm.xlu0 %2325, %v2207
        %v2327 = vpop.permute.xlu0 %2326
        %2328 = vset.pattern.permute.xlu0 3
        %2329 = vperm.xlu0 %2328, %v2208
        %v2330 = vpop.permute.xlu0 %2329
        %2331 = vset.pattern.permute.xlu0 3
        %2332 = vperm.xlu0 %2331, %v2209
        %v2333 = vpop.permute.xlu0 %2332
        %2334 = vset.pattern.permute.xlu0 3
        %2335 = vperm.xlu0 %2334, %v2210
        %v2336 = vpop.permute.xlu0 %2335
        %2337 = vset.pattern.permute.xlu0 3
        %2338 = vperm.xlu0 %2337, %v2211
        %v2339 = vpop.permute.xlu0 %2338
        %2340 = vset.pattern.permute.xlu0 3
        %2341 = vperm.xlu0 %2340, %v2212
        %v2342 = vpop.permute.xlu0 %2341
        %2343 = vset.pattern.permute.xlu0 3
        %2344 = vperm.xlu0 %2343, %v2213
        %v2345 = vpop.permute.xlu0 %2344
        %2346 = vset.pattern.permute.xlu0 3
        %2347 = vperm.xlu0 %2346, %v2214
        %v2348 = vpop.permute.xlu0 %2347
        %2349 = vset.pattern.permute.xlu0 3
        %2350 = vperm.xlu0 %2349, %v2215
        %v2351 = vpop.permute.xlu0 %2350
        %2352 = vset.pattern.permute.xlu0 3
        %2353 = vperm.xlu0 %2352, %v2216
        %v2354 = vpop.permute.xlu0 %2353
        %2355 = vset.pattern.permute.xlu0 3
        %2356 = vperm.xlu0 %2355, %v2217
        %v2357 = vpop.permute.xlu0 %2356
        %2358 = vset.pattern.permute.xlu0 3
        %2359 = vperm.xlu0 %2358, %v2218
        %v2360 = vpop.permute.xlu0 %2359
        %2361 = vset.pattern.permute.xlu0 3
        %2362 = vperm.xlu0 %2361, %v2219
        %v2363 = vpop.permute.xlu0 %2362
        %2364 = vset.pattern.permute.xlu0 3
        %2365 = vperm.xlu0 %2364, %v2220
        %v2366 = vpop.permute.xlu0 %2365
        %vm2367 = vcmp.eq.s32.totalorder %v2222, %v2225
        %vm2368 = vcmp.eq.s32.totalorder %v2222, %v2228
        %vm2369 = vcmp.eq.s32.totalorder %v2222, %v2231
        %vm2370 = vcmp.eq.s32.totalorder %v2222, %v2234
        %vm2371 = vcmp.eq.s32.totalorder %v2222, %v2237
        %vm2372 = vcmp.eq.s32.totalorder %v2222, %v2240
        %vm2373 = vcmp.eq.s32.totalorder %v2222, %v2243
        %vm2374 = vcmp.eq.s32.totalorder %v2222, %v2246
        %vm2375 = vcmp.eq.s32.totalorder %v2222, %v2249
        %vm2376 = vcmp.eq.s32.totalorder %v2222, %v2252
        %vm2377 = vcmp.eq.s32.totalorder %v2222, %v2255
        %vm2378 = vcmp.eq.s32.totalorder %v2222, %v2258
        %vm2379 = vcmp.eq.s32.totalorder %v2222, %v2261
        %vm2380 = vcmp.eq.s32.totalorder %v2222, %v2264
        %vm2381 = vcmp.eq.s32.totalorder %v2222, %v2267
        %vm2382 = vcmp.eq.s32.totalorder %v2222, %v2270
        %vm2383 = vcmp.eq.s32.totalorder %v2222, %v2273
        %vm2384 = vcmp.eq.s32.totalorder %v2222, %v2276
        %vm2385 = vcmp.eq.s32.totalorder %v2222, %v2279
        %vm2386 = vcmp.eq.s32.totalorder %v2222, %v2282
        %vm2387 = vcmp.eq.s32.totalorder %v2222, %v2285
        %vm2388 = vcmp.eq.s32.totalorder %v2222, %v2288
        %vm2389 = vcmp.eq.s32.totalorder %v2222, %v2291
        %vm2390 = vcmp.eq.s32.totalorder %v2222, %v2294
        %vm2391 = vcmp.eq.s32.totalorder %v2222, %v2297
        %vm2392 = vcmp.eq.s32.totalorder %v2222, %v2300
        %vm2393 = vcmp.eq.s32.totalorder %v2222, %v2303
        %vm2394 = vcmp.eq.s32.totalorder %v2222, %v2306
        %vm2395 = vcmp.eq.s32.totalorder %v2222, %v2309
        %vm2396 = vcmp.eq.s32.totalorder %v2222, %v2312
        %vm2397 = vcmp.eq.s32.totalorder %v2222, %v2315
        %vm2398 = vcmp.eq.s32.totalorder %v2222, %v2318
        %vm2399 = vcmp.eq.s32.totalorder %v2222, %v2321
        %vm2400 = vcmp.eq.s32.totalorder %v2222, %v2324
        %vm2401 = vcmp.eq.s32.totalorder %v2222, %v2327
        %vm2402 = vcmp.eq.s32.totalorder %v2222, %v2330
        %vm2403 = vcmp.eq.s32.totalorder %v2222, %v2333
        %vm2404 = vcmp.eq.s32.totalorder %v2222, %v2336
        %vm2405 = vcmp.eq.s32.totalorder %v2222, %v2339
        %vm2406 = vcmp.eq.s32.totalorder %v2222, %v2342
        %vm2407 = vcmp.eq.s32.totalorder %v2222, %v2345
        %vm2408 = vcmp.eq.s32.totalorder %v2222, %v2348
        %vm2409 = vcmp.eq.s32.totalorder %v2222, %v2351
        %vm2410 = vcmp.eq.s32.totalorder %v2222, %v2354
        %vm2411 = vcmp.eq.s32.totalorder %v2222, %v2357
        %vm2412 = vcmp.eq.s32.totalorder %v2222, %v2360
        %vm2413 = vcmp.eq.s32.totalorder %v2222, %v2363
        %vm2414 = vcmp.eq.s32.totalorder %v2222, %v2366
        %v2415 = vsel %vm2367, %v2077, 0.0
        %v2416 = vsel %vm2368, %v2078, 0.0
        %v2417 = vsel %vm2369, %v2079, 0.0
        %v2418 = vsel %vm2370, %v2080, 0.0
        %v2419 = vsel %vm2371, %v2081, 0.0
        %v2420 = vsel %vm2372, %v2082, 0.0
        %v2421 = vsel %vm2373, %v2083, 0.0
        %v2422 = vsel %vm2374, %v2084, 0.0
        %v2423 = vsel %vm2375, %v2085, 0.0
        %v2424 = vsel %vm2376, %v2086, 0.0
        %v2425 = vsel %vm2377, %v2087, 0.0
        %v2426 = vsel %vm2378, %v2088, 0.0
        %v2427 = vsel %vm2379, %v2089, 0.0
        %v2428 = vsel %vm2380, %v2090, 0.0
        %v2429 = vsel %vm2381, %v2091, 0.0
        %v2430 = vsel %vm2382, %v2092, 0.0
        %v2431 = vsel %vm2383, %v2093, 0.0
        %v2432 = vsel %vm2384, %v2094, 0.0
        %v2433 = vsel %vm2385, %v2095, 0.0
        %v2434 = vsel %vm2386, %v2096, 0.0
        %v2435 = vsel %vm2387, %v2097, 0.0
        %v2436 = vsel %vm2388, %v2098, 0.0
        %v2437 = vsel %vm2389, %v2099, 0.0
        %v2438 = vsel %vm2390, %v2100, 0.0
        %v2439 = vsel %vm2391, %v2101, 0.0
        %v2440 = vsel %vm2392, %v2102, 0.0
        %v2441 = vsel %vm2393, %v2103, 0.0
        %v2442 = vsel %vm2394, %v2104, 0.0
        %v2443 = vsel %vm2395, %v2105, 0.0
        %v2444 = vsel %vm2396, %v2106, 0.0
        %v2445 = vsel %vm2397, %v2107, 0.0
        %v2446 = vsel %vm2398, %v2108, 0.0
        %v2447 = vsel %vm2399, %v2109, 0.0
        %v2448 = vsel %vm2400, %v2110, 0.0
        %v2449 = vsel %vm2401, %v2111, 0.0
        %v2450 = vsel %vm2402, %v2112, 0.0
        %v2451 = vsel %vm2403, %v2113, 0.0
        %v2452 = vsel %vm2404, %v2114, 0.0
        %v2453 = vsel %vm2405, %v2115, 0.0
        %v2454 = vsel %vm2406, %v2116, 0.0
        %v2455 = vsel %vm2407, %v2117, 0.0
        %v2456 = vsel %vm2408, %v2118, 0.0
        %v2457 = vsel %vm2409, %v2119, 0.0
        %v2458 = vsel %vm2410, %v2120, 0.0
        %v2459 = vsel %vm2411, %v2121, 0.0
        %v2460 = vsel %vm2412, %v2122, 0.0
        %v2461 = vsel %vm2413, %v2123, 0.0
        %v2462 = vsel %vm2414, %v2124, 0.0
        %v2463 = vld [vmem:[%s395] sm:$0x1]
        %v2464 = vadd.f32 %v2415, %v2416
        %v2465 = vadd.f32 %v2464, %v2417
        %v2466 = vadd.f32 %v2465, %v2418
        %v2467 = vadd.f32 %v2466, %v2419
        %v2468 = vadd.f32 %v2467, %v2420
        %v2469 = vadd.f32 %v2468, %v2421
        %v2470 = vadd.f32 %v2469, %v2422
        %v2471 = vadd.f32 %v2470, %v2423
        %v2472 = vadd.f32 %v2471, %v2424
        %v2473 = vadd.f32 %v2472, %v2425
        %v2474 = vadd.f32 %v2473, %v2426
        %v2475 = vadd.f32 %v2474, %v2427
        %v2476 = vadd.f32 %v2475, %v2428
        %v2477 = vadd.f32 %v2476, %v2429
        %v2478 = vadd.f32 %v2477, %v2430
        %v2479 = vadd.f32 %v2478, %v2431
        %v2480 = vadd.f32 %v2479, %v2432
        %v2481 = vadd.f32 %v2480, %v2433
        %v2482 = vadd.f32 %v2481, %v2434
        %v2483 = vadd.f32 %v2482, %v2435
        %v2484 = vadd.f32 %v2483, %v2436
        %v2485 = vadd.f32 %v2484, %v2437
        %v2486 = vadd.f32 %v2485, %v2438
        %v2487 = vadd.f32 %v2486, %v2439
        %v2488 = vadd.f32 %v2487, %v2440
        %v2489 = vadd.f32 %v2488, %v2441
        %v2490 = vadd.f32 %v2489, %v2442
        %v2491 = vadd.f32 %v2490, %v2443
        %v2492 = vadd.f32 %v2491, %v2444
        %v2493 = vadd.f32 %v2492, %v2445
        %v2494 = vadd.f32 %v2493, %v2446
        %v2495 = vadd.f32 %v2494, %v2447
        %v2496 = vadd.f32 %v2495, %v2448
        %v2497 = vadd.f32 %v2496, %v2449
        %v2498 = vadd.f32 %v2497, %v2450
        %v2499 = vadd.f32 %v2498, %v2451
        %v2500 = vadd.f32 %v2499, %v2452
        %v2501 = vadd.f32 %v2500, %v2453
        %v2502 = vadd.f32 %v2501, %v2454
        %v2503 = vadd.f32 %v2502, %v2455
        %v2504 = vadd.f32 %v2503, %v2456
        %v2505 = vadd.f32 %v2504, %v2457
        %v2506 = vadd.f32 %v2505, %v2458
        %v2507 = vadd.f32 %v2506, %v2459
        %v2508 = vadd.f32 %v2507, %v2460
        %v2509 = vadd.f32 %v2508, %v2461
        %v2510 = vadd.f32 %v2509, %v2462
        %v2511 = vrot.slane %v2510, 4
        %v2512 = vadd.f32 %v2510, %v2511
        %v2513 = vrot.slane %v2512, 2
        %v2514 = vadd.f32 %v2512, %v2513
        %v2515 = vrot.slane %v2514, 1
        %v2516 = vadd.f32 %v2514, %v2515
        %v2517 = vadd.f32 %v2463, %v2516
        %2518 = vst [vmem:[%s395] sm:$0x1] %v2517
        %v2519 = vld [vmem:[%s417] sm:$0xff]
        %v2520 = vld [vmem:[%s417 + $0x8] sm:$0xff]
        %v2521 = vld [vmem:[%s417 + $0x10] sm:$0xff]
        %v2522 = vld [vmem:[%s417 + $0x18] sm:$0xff]
        %v2523 = vld [vmem:[%s417 + $0x20] sm:$0xff]
        %v2524 = vld [vmem:[%s417 + $0x28] sm:$0xff]
        %v2525 = vld [vmem:[%s417 + $0x30] sm:$0xff]
        %v2526 = vld [vmem:[%s417 + $0x38] sm:$0xff]
        %v2527 = vld [vmem:[%s417 + $0x40] sm:$0xff]
        %v2528 = vld [vmem:[%s417 + $0x48] sm:$0xff]
        %v2529 = vld [vmem:[%s417 + $0x50] sm:$0xff]
        %v2530 = vld [vmem:[%s417 + $0x58] sm:$0xff]
        %v2531 = vld [vmem:[%s417 + $0x60] sm:$0xff]
        %v2532 = vld [vmem:[%s417 + $0x68] sm:$0xff]
        %v2533 = vld [vmem:[%s417 + $0x70] sm:$0xff]
        %v2534 = vld [vmem:[%s417 + $0x78] sm:$0xff]
        %v2535 = vld [vmem:[%s417 + $0x80] sm:$0xff]
        %v2536 = vld [vmem:[%s417 + $0x88] sm:$0xff]
        %v2537 = vld [vmem:[%s417 + $0x90] sm:$0xff]
        %v2538 = vld [vmem:[%s417 + $0x98] sm:$0xff]
        %v2539 = vld [vmem:[%s417 + $0xa0] sm:$0xff]
        %v2540 = vld [vmem:[%s417 + $0xa8] sm:$0xff]
        %v2541 = vld [vmem:[%s417 + $0xb0] sm:$0xff]
        %v2542 = vld [vmem:[%s417 + $0xb8] sm:$0xff]
        %v2543 = vld [vmem:[%s417 + $0xc0] sm:$0xff]
        %v2544 = vld [vmem:[%s417 + $0xc8] sm:$0xff]
        %v2545 = vld [vmem:[%s417 + $0xd0] sm:$0xff]
        %v2546 = vld [vmem:[%s417 + $0xd8] sm:$0xff]
        %v2547 = vld [vmem:[%s417 + $0xe0] sm:$0xff]
        %v2548 = vld [vmem:[%s417 + $0xe8] sm:$0xff]
        %v2549 = vld [vmem:[%s417 + $0xf0] sm:$0xff]
        %v2550 = vld [vmem:[%s417 + $0xf8] sm:$0xff]
        %v2551 = vld [vmem:[%s417 + $0x100] sm:$0xff]
        %v2552 = vld [vmem:[%s417 + $0x108] sm:$0xff]
        %v2553 = vld [vmem:[%s417 + $0x110] sm:$0xff]
        %v2554 = vld [vmem:[%s417 + $0x118] sm:$0xff]
        %v2555 = vld [vmem:[%s417 + $0x120] sm:$0xff]
        %v2556 = vld [vmem:[%s417 + $0x128] sm:$0xff]
        %v2557 = vld [vmem:[%s417 + $0x130] sm:$0xff]
        %v2558 = vld [vmem:[%s417 + $0x138] sm:$0xff]
        %v2559 = vld [vmem:[%s417 + $0x140] sm:$0xff]
        %v2560 = vld [vmem:[%s417 + $0x148] sm:$0xff]
        %v2561 = vld [vmem:[%s417 + $0x150] sm:$0xff]
        %v2562 = vld [vmem:[%s417 + $0x158] sm:$0xff]
        %v2563 = vld [vmem:[%s417 + $0x160] sm:$0xff]
        %v2564 = vld [vmem:[%s417 + $0x168] sm:$0xff]
        %v2565 = vld [vmem:[%s417 + $0x170] sm:$0xff]
        %v2566 = vld [vmem:[%s417 + $0x178] sm:$0xff]
        %v2567 = vmul.f32 %v2519, %v2519
        %v2568 = vmul.f32 %v2520, %v2520
        %v2569 = vmul.f32 %v2521, %v2521
        %v2570 = vmul.f32 %v2522, %v2522
        %v2571 = vmul.f32 %v2523, %v2523
        %v2572 = vmul.f32 %v2524, %v2524
        %v2573 = vmul.f32 %v2525, %v2525
        %v2574 = vmul.f32 %v2526, %v2526
        %v2575 = vmul.f32 %v2527, %v2527
        %v2576 = vmul.f32 %v2528, %v2528
        %v2577 = vmul.f32 %v2529, %v2529
        %v2578 = vmul.f32 %v2530, %v2530
        %v2579 = vmul.f32 %v2531, %v2531
        %v2580 = vmul.f32 %v2532, %v2532
        %v2581 = vmul.f32 %v2533, %v2533
        %v2582 = vmul.f32 %v2534, %v2534
        %v2583 = vmul.f32 %v2535, %v2535
        %v2584 = vmul.f32 %v2536, %v2536
        %v2585 = vmul.f32 %v2537, %v2537
        %v2586 = vmul.f32 %v2538, %v2538
        %v2587 = vmul.f32 %v2539, %v2539
        %v2588 = vmul.f32 %v2540, %v2540
        %v2589 = vmul.f32 %v2541, %v2541
        %v2590 = vmul.f32 %v2542, %v2542
        %v2591 = vmul.f32 %v2543, %v2543
        %v2592 = vmul.f32 %v2544, %v2544
        %v2593 = vmul.f32 %v2545, %v2545
        %v2594 = vmul.f32 %v2546, %v2546
        %v2595 = vmul.f32 %v2547, %v2547
        %v2596 = vmul.f32 %v2548, %v2548
        %v2597 = vmul.f32 %v2549, %v2549
        %v2598 = vmul.f32 %v2550, %v2550
        %v2599 = vmul.f32 %v2551, %v2551
        %v2600 = vmul.f32 %v2552, %v2552
        %v2601 = vmul.f32 %v2553, %v2553
        %v2602 = vmul.f32 %v2554, %v2554
        %v2603 = vmul.f32 %v2555, %v2555
        %v2604 = vmul.f32 %v2556, %v2556
        %v2605 = vmul.f32 %v2557, %v2557
        %v2606 = vmul.f32 %v2558, %v2558
        %v2607 = vmul.f32 %v2559, %v2559
        %v2608 = vmul.f32 %v2560, %v2560
        %v2609 = vmul.f32 %v2561, %v2561
        %v2610 = vmul.f32 %v2562, %v2562
        %v2611 = vmul.f32 %v2563, %v2563
        %v2612 = vmul.f32 %v2564, %v2564
        %v2613 = vmul.f32 %v2565, %v2565
        %v2614 = vmul.f32 %v2566, %v2566
        %vm2615 = vcmask 23552
        %v2616 = vsel %vm2615, %v2567, 0.0
        %2617 = vadd.xlane.f32.xlu0 %v2616
        %v2618 = vpop.xlane.xlu0 %2617
        %v2619 = vsel %vm2615, %v2568, 0.0
        %2620 = vadd.xlane.f32.xlu0 %v2619
        %v2621 = vpop.xlane.xlu0 %2620
        %v2622 = vsel %vm2615, %v2569, 0.0
        %2623 = vadd.xlane.f32.xlu0 %v2622
        %v2624 = vpop.xlane.xlu0 %2623
        %v2625 = vsel %vm2615, %v2570, 0.0
        %2626 = vadd.xlane.f32.xlu0 %v2625
        %v2627 = vpop.xlane.xlu0 %2626
        %v2628 = vsel %vm2615, %v2571, 0.0
        %2629 = vadd.xlane.f32.xlu0 %v2628
        %v2630 = vpop.xlane.xlu0 %2629
        %v2631 = vsel %vm2615, %v2572, 0.0
        %2632 = vadd.xlane.f32.xlu0 %v2631
        %v2633 = vpop.xlane.xlu0 %2632
        %v2634 = vsel %vm2615, %v2573, 0.0
        %2635 = vadd.xlane.f32.xlu0 %v2634
        %v2636 = vpop.xlane.xlu0 %2635
        %v2637 = vsel %vm2615, %v2574, 0.0
        %2638 = vadd.xlane.f32.xlu0 %v2637
        %v2639 = vpop.xlane.xlu0 %2638
        %v2640 = vsel %vm2615, %v2575, 0.0
        %2641 = vadd.xlane.f32.xlu0 %v2640
        %v2642 = vpop.xlane.xlu0 %2641
        %v2643 = vsel %vm2615, %v2576, 0.0
        %2644 = vadd.xlane.f32.xlu0 %v2643
        %v2645 = vpop.xlane.xlu0 %2644
        %v2646 = vsel %vm2615, %v2577, 0.0
        %2647 = vadd.xlane.f32.xlu0 %v2646
        %v2648 = vpop.xlane.xlu0 %2647
        %v2649 = vsel %vm2615, %v2578, 0.0
        %2650 = vadd.xlane.f32.xlu0 %v2649
        %v2651 = vpop.xlane.xlu0 %2650
        %v2652 = vsel %vm2615, %v2579, 0.0
        %2653 = vadd.xlane.f32.xlu0 %v2652
        %v2654 = vpop.xlane.xlu0 %2653
        %v2655 = vsel %vm2615, %v2580, 0.0
        %2656 = vadd.xlane.f32.xlu0 %v2655
        %v2657 = vpop.xlane.xlu0 %2656
        %v2658 = vsel %vm2615, %v2581, 0.0
        %2659 = vadd.xlane.f32.xlu0 %v2658
        %v2660 = vpop.xlane.xlu0 %2659
        %v2661 = vsel %vm2615, %v2582, 0.0
        %2662 = vadd.xlane.f32.xlu0 %v2661
        %v2663 = vpop.xlane.xlu0 %2662
        %v2664 = vsel %vm2615, %v2583, 0.0
        %2665 = vadd.xlane.f32.xlu0 %v2664
        %v2666 = vpop.xlane.xlu0 %2665
        %v2667 = vsel %vm2615, %v2584, 0.0
        %2668 = vadd.xlane.f32.xlu0 %v2667
        %v2669 = vpop.xlane.xlu0 %2668
        %v2670 = vsel %vm2615, %v2585, 0.0
        %2671 = vadd.xlane.f32.xlu0 %v2670
        %v2672 = vpop.xlane.xlu0 %2671
        %v2673 = vsel %vm2615, %v2586, 0.0
        %2674 = vadd.xlane.f32.xlu0 %v2673
        %v2675 = vpop.xlane.xlu0 %2674
        %v2676 = vsel %vm2615, %v2587, 0.0
        %2677 = vadd.xlane.f32.xlu0 %v2676
        %v2678 = vpop.xlane.xlu0 %2677
        %v2679 = vsel %vm2615, %v2588, 0.0
        %2680 = vadd.xlane.f32.xlu0 %v2679
        %v2681 = vpop.xlane.xlu0 %2680
        %v2682 = vsel %vm2615, %v2589, 0.0
        %2683 = vadd.xlane.f32.xlu0 %v2682
        %v2684 = vpop.xlane.xlu0 %2683
        %v2685 = vsel %vm2615, %v2590, 0.0
        %2686 = vadd.xlane.f32.xlu0 %v2685
        %v2687 = vpop.xlane.xlu0 %2686
        %v2688 = vsel %vm2615, %v2591, 0.0
        %2689 = vadd.xlane.f32.xlu0 %v2688
        %v2690 = vpop.xlane.xlu0 %2689
        %v2691 = vsel %vm2615, %v2592, 0.0
        %2692 = vadd.xlane.f32.xlu0 %v2691
        %v2693 = vpop.xlane.xlu0 %2692
        %v2694 = vsel %vm2615, %v2593, 0.0
        %2695 = vadd.xlane.f32.xlu0 %v2694
        %v2696 = vpop.xlane.xlu0 %2695
        %v2697 = vsel %vm2615, %v2594, 0.0
        %2698 = vadd.xlane.f32.xlu0 %v2697
        %v2699 = vpop.xlane.xlu0 %2698
        %v2700 = vsel %vm2615, %v2595, 0.0
        %2701 = vadd.xlane.f32.xlu0 %v2700
        %v2702 = vpop.xlane.xlu0 %2701
        %v2703 = vsel %vm2615, %v2596, 0.0
        %2704 = vadd.xlane.f32.xlu0 %v2703
        %v2705 = vpop.xlane.xlu0 %2704
        %v2706 = vsel %vm2615, %v2597, 0.0
        %2707 = vadd.xlane.f32.xlu0 %v2706
        %v2708 = vpop.xlane.xlu0 %2707
        %v2709 = vsel %vm2615, %v2598, 0.0
        %2710 = vadd.xlane.f32.xlu0 %v2709
        %v2711 = vpop.xlane.xlu0 %2710
        %v2712 = vsel %vm2615, %v2599, 0.0
        %2713 = vadd.xlane.f32.xlu0 %v2712
        %v2714 = vpop.xlane.xlu0 %2713
        %v2715 = vsel %vm2615, %v2600, 0.0
        %2716 = vadd.xlane.f32.xlu0 %v2715
        %v2717 = vpop.xlane.xlu0 %2716
        %v2718 = vsel %vm2615, %v2601, 0.0
        %2719 = vadd.xlane.f32.xlu0 %v2718
        %v2720 = vpop.xlane.xlu0 %2719
        %v2721 = vsel %vm2615, %v2602, 0.0
        %2722 = vadd.xlane.f32.xlu0 %v2721
        %v2723 = vpop.xlane.xlu0 %2722
        %v2724 = vsel %vm2615, %v2603, 0.0
        %2725 = vadd.xlane.f32.xlu0 %v2724
        %v2726 = vpop.xlane.xlu0 %2725
        %v2727 = vsel %vm2615, %v2604, 0.0
        %2728 = vadd.xlane.f32.xlu0 %v2727
        %v2729 = vpop.xlane.xlu0 %2728
        %v2730 = vsel %vm2615, %v2605, 0.0
        %2731 = vadd.xlane.f32.xlu0 %v2730
        %v2732 = vpop.xlane.xlu0 %2731
        %v2733 = vsel %vm2615, %v2606, 0.0
        %2734 = vadd.xlane.f32.xlu0 %v2733
        %v2735 = vpop.xlane.xlu0 %2734
        %v2736 = vsel %vm2615, %v2607, 0.0
        %2737 = vadd.xlane.f32.xlu0 %v2736
        %v2738 = vpop.xlane.xlu0 %2737
        %v2739 = vsel %vm2615, %v2608, 0.0
        %2740 = vadd.xlane.f32.xlu0 %v2739
        %v2741 = vpop.xlane.xlu0 %2740
        %v2742 = vsel %vm2615, %v2609, 0.0
        %2743 = vadd.xlane.f32.xlu0 %v2742
        %v2744 = vpop.xlane.xlu0 %2743
        %v2745 = vsel %vm2615, %v2610, 0.0
        %2746 = vadd.xlane.f32.xlu0 %v2745
        %v2747 = vpop.xlane.xlu0 %2746
        %v2748 = vsel %vm2615, %v2611, 0.0
        %2749 = vadd.xlane.f32.xlu0 %v2748
        %v2750 = vpop.xlane.xlu0 %2749
        %v2751 = vsel %vm2615, %v2612, 0.0
        %2752 = vadd.xlane.f32.xlu0 %v2751
        %v2753 = vpop.xlane.xlu0 %2752
        %v2754 = vsel %vm2615, %v2613, 0.0
        %2755 = vadd.xlane.f32.xlu0 %v2754
        %v2756 = vpop.xlane.xlu0 %2755
        %v2757 = vsel %vm2615, %v2614, 0.0
        %2758 = vadd.xlane.f32.xlu0 %v2757
        %v2759 = vpop.xlane.xlu0 %2758
        %v2760 = vrsqrt.pop %v2618
        %v2761 = vmul.f32 %v2760, %v2618
        %v2762 = vmul.f32 %v2761, %v2760
        %v2763 = vmul.f32 0.5, %v2762
        %v2764 = vsub.f32 1.5, %v2763
        %v2765 = vmul.f32 %v2760, %v2764
        %v2766 = vmul.f32 %v2618, %v2765
        %vm2767 = vcmp.eq.f32.partialorder %v2618, inf
        %v2768 = vsel %vm2767, %v2618, %v2766
        %vm2769 = vcmp.eq.f32.partialorder %v2618, 0.0
        %v2770 = vand.u32 %v2618, 2147483648
        %v2771 = vsel %vm2769, %v2770, %v2768
        %v2772 = vrsqrt.pop %v2621
        %v2773 = vmul.f32 %v2772, %v2621
        %v2774 = vmul.f32 %v2773, %v2772
        %v2775 = vmul.f32 0.5, %v2774
        %v2776 = vsub.f32 1.5, %v2775
        %v2777 = vmul.f32 %v2772, %v2776
        %v2778 = vmul.f32 %v2621, %v2777
        %vm2779 = vcmp.eq.f32.partialorder %v2621, inf
        %v2780 = vsel %vm2779, %v2621, %v2778
        %vm2781 = vcmp.eq.f32.partialorder %v2621, 0.0
        %v2782 = vand.u32 %v2621, 2147483648
        %v2783 = vsel %vm2781, %v2782, %v2780
        %v2784 = vrsqrt.pop %v2624
        %v2785 = vmul.f32 %v2784, %v2624
        %v2786 = vmul.f32 %v2785, %v2784
        %v2787 = vmul.f32 0.5, %v2786
        %v2788 = vsub.f32 1.5, %v2787
        %v2789 = vmul.f32 %v2784, %v2788
        %v2790 = vmul.f32 %v2624, %v2789
        %vm2791 = vcmp.eq.f32.partialorder %v2624, inf
        %v2792 = vsel %vm2791, %v2624, %v2790
        %vm2793 = vcmp.eq.f32.partialorder %v2624, 0.0
        %v2794 = vand.u32 %v2624, 2147483648
        %v2795 = vsel %vm2793, %v2794, %v2792
        %v2796 = vrsqrt.pop %v2627
        %v2797 = vmul.f32 %v2796, %v2627
        %v2798 = vmul.f32 %v2797, %v2796
        %v2799 = vmul.f32 0.5, %v2798
        %v2800 = vsub.f32 1.5, %v2799
        %v2801 = vmul.f32 %v2796, %v2800
        %v2802 = vmul.f32 %v2627, %v2801
        %vm2803 = vcmp.eq.f32.partialorder %v2627, inf
        %v2804 = vsel %vm2803, %v2627, %v2802
        %vm2805 = vcmp.eq.f32.partialorder %v2627, 0.0
        %v2806 = vand.u32 %v2627, 2147483648
        %v2807 = vsel %vm2805, %v2806, %v2804
        %v2808 = vrsqrt.pop %v2630
        %v2809 = vmul.f32 %v2808, %v2630
        %v2810 = vmul.f32 %v2809, %v2808
        %v2811 = vmul.f32 0.5, %v2810
        %v2812 = vsub.f32 1.5, %v2811
        %v2813 = vmul.f32 %v2808, %v2812
        %v2814 = vmul.f32 %v2630, %v2813
        %vm2815 = vcmp.eq.f32.partialorder %v2630, inf
        %v2816 = vsel %vm2815, %v2630, %v2814
        %vm2817 = vcmp.eq.f32.partialorder %v2630, 0.0
        %v2818 = vand.u32 %v2630, 2147483648
        %v2819 = vsel %vm2817, %v2818, %v2816
        %v2820 = vrsqrt.pop %v2633
        %v2821 = vmul.f32 %v2820, %v2633
        %v2822 = vmul.f32 %v2821, %v2820
        %v2823 = vmul.f32 0.5, %v2822
        %v2824 = vsub.f32 1.5, %v2823
        %v2825 = vmul.f32 %v2820, %v2824
        %v2826 = vmul.f32 %v2633, %v2825
        %vm2827 = vcmp.eq.f32.partialorder %v2633, inf
        %v2828 = vsel %vm2827, %v2633, %v2826
        %vm2829 = vcmp.eq.f32.partialorder %v2633, 0.0
        %v2830 = vand.u32 %v2633, 2147483648
        %v2831 = vsel %vm2829, %v2830, %v2828
        %v2832 = vrsqrt.pop %v2636
        %v2833 = vmul.f32 %v2832, %v2636
        %v2834 = vmul.f32 %v2833, %v2832
        %v2835 = vmul.f32 0.5, %v2834
        %v2836 = vsub.f32 1.5, %v2835
        %v2837 = vmul.f32 %v2832, %v2836
        %v2838 = vmul.f32 %v2636, %v2837
        %vm2839 = vcmp.eq.f32.partialorder %v2636, inf
        %v2840 = vsel %vm2839, %v2636, %v2838
        %vm2841 = vcmp.eq.f32.partialorder %v2636, 0.0
        %v2842 = vand.u32 %v2636, 2147483648
        %v2843 = vsel %vm2841, %v2842, %v2840
        %v2844 = vrsqrt.pop %v2639
        %v2845 = vmul.f32 %v2844, %v2639
        %v2846 = vmul.f32 %v2845, %v2844
        %v2847 = vmul.f32 0.5, %v2846
        %v2848 = vsub.f32 1.5, %v2847
        %v2849 = vmul.f32 %v2844, %v2848
        %v2850 = vmul.f32 %v2639, %v2849
        %vm2851 = vcmp.eq.f32.partialorder %v2639, inf
        %v2852 = vsel %vm2851, %v2639, %v2850
        %vm2853 = vcmp.eq.f32.partialorder %v2639, 0.0
        %v2854 = vand.u32 %v2639, 2147483648
        %v2855 = vsel %vm2853, %v2854, %v2852
        %v2856 = vrsqrt.pop %v2642
        %v2857 = vmul.f32 %v2856, %v2642
        %v2858 = vmul.f32 %v2857, %v2856
        %v2859 = vmul.f32 0.5, %v2858
        %v2860 = vsub.f32 1.5, %v2859
        %v2861 = vmul.f32 %v2856, %v2860
        %v2862 = vmul.f32 %v2642, %v2861
        %vm2863 = vcmp.eq.f32.partialorder %v2642, inf
        %v2864 = vsel %vm2863, %v2642, %v2862
        %vm2865 = vcmp.eq.f32.partialorder %v2642, 0.0
        %v2866 = vand.u32 %v2642, 2147483648
        %v2867 = vsel %vm2865, %v2866, %v2864
        %v2868 = vrsqrt.pop %v2645
        %v2869 = vmul.f32 %v2868, %v2645
        %v2870 = vmul.f32 %v2869, %v2868
        %v2871 = vmul.f32 0.5, %v2870
        %v2872 = vsub.f32 1.5, %v2871
        %v2873 = vmul.f32 %v2868, %v2872
        %v2874 = vmul.f32 %v2645, %v2873
        %vm2875 = vcmp.eq.f32.partialorder %v2645, inf
        %v2876 = vsel %vm2875, %v2645, %v2874
        %vm2877 = vcmp.eq.f32.partialorder %v2645, 0.0
        %v2878 = vand.u32 %v2645, 2147483648
        %v2879 = vsel %vm2877, %v2878, %v2876
        %v2880 = vrsqrt.pop %v2648
        %v2881 = vmul.f32 %v2880, %v2648
        %v2882 = vmul.f32 %v2881, %v2880
        %v2883 = vmul.f32 0.5, %v2882
        %v2884 = vsub.f32 1.5, %v2883
        %v2885 = vmul.f32 %v2880, %v2884
        %v2886 = vmul.f32 %v2648, %v2885
        %vm2887 = vcmp.eq.f32.partialorder %v2648, inf
        %v2888 = vsel %vm2887, %v2648, %v2886
        %vm2889 = vcmp.eq.f32.partialorder %v2648, 0.0
        %v2890 = vand.u32 %v2648, 2147483648
        %v2891 = vsel %vm2889, %v2890, %v2888
        %v2892 = vrsqrt.pop %v2651
        %v2893 = vmul.f32 %v2892, %v2651
        %v2894 = vmul.f32 %v2893, %v2892
        %v2895 = vmul.f32 0.5, %v2894
        %v2896 = vsub.f32 1.5, %v2895
        %v2897 = vmul.f32 %v2892, %v2896
        %v2898 = vmul.f32 %v2651, %v2897
        %vm2899 = vcmp.eq.f32.partialorder %v2651, inf
        %v2900 = vsel %vm2899, %v2651, %v2898
        %vm2901 = vcmp.eq.f32.partialorder %v2651, 0.0
        %v2902 = vand.u32 %v2651, 2147483648
        %v2903 = vsel %vm2901, %v2902, %v2900
        %v2904 = vrsqrt.pop %v2654
        %v2905 = vmul.f32 %v2904, %v2654
        %v2906 = vmul.f32 %v2905, %v2904
        %v2907 = vmul.f32 0.5, %v2906
        %v2908 = vsub.f32 1.5, %v2907
        %v2909 = vmul.f32 %v2904, %v2908
        %v2910 = vmul.f32 %v2654, %v2909
        %vm2911 = vcmp.eq.f32.partialorder %v2654, inf
        %v2912 = vsel %vm2911, %v2654, %v2910
        %vm2913 = vcmp.eq.f32.partialorder %v2654, 0.0
        %v2914 = vand.u32 %v2654, 2147483648
        %v2915 = vsel %vm2913, %v2914, %v2912
        %v2916 = vrsqrt.pop %v2657
        %v2917 = vmul.f32 %v2916, %v2657
        %v2918 = vmul.f32 %v2917, %v2916
        %v2919 = vmul.f32 0.5, %v2918
        %v2920 = vsub.f32 1.5, %v2919
        %v2921 = vmul.f32 %v2916, %v2920
        %v2922 = vmul.f32 %v2657, %v2921
        %vm2923 = vcmp.eq.f32.partialorder %v2657, inf
        %v2924 = vsel %vm2923, %v2657, %v2922
        %vm2925 = vcmp.eq.f32.partialorder %v2657, 0.0
        %v2926 = vand.u32 %v2657, 2147483648
        %v2927 = vsel %vm2925, %v2926, %v2924
        %v2928 = vrsqrt.pop %v2660
        %v2929 = vmul.f32 %v2928, %v2660
        %v2930 = vmul.f32 %v2929, %v2928
        %v2931 = vmul.f32 0.5, %v2930
        %v2932 = vsub.f32 1.5, %v2931
        %v2933 = vmul.f32 %v2928, %v2932
        %v2934 = vmul.f32 %v2660, %v2933
        %vm2935 = vcmp.eq.f32.partialorder %v2660, inf
        %v2936 = vsel %vm2935, %v2660, %v2934
        %vm2937 = vcmp.eq.f32.partialorder %v2660, 0.0
        %v2938 = vand.u32 %v2660, 2147483648
        %v2939 = vsel %vm2937, %v2938, %v2936
        %v2940 = vrsqrt.pop %v2663
        %v2941 = vmul.f32 %v2940, %v2663
        %v2942 = vmul.f32 %v2941, %v2940
        %v2943 = vmul.f32 0.5, %v2942
        %v2944 = vsub.f32 1.5, %v2943
        %v2945 = vmul.f32 %v2940, %v2944
        %v2946 = vmul.f32 %v2663, %v2945
        %vm2947 = vcmp.eq.f32.partialorder %v2663, inf
        %v2948 = vsel %vm2947, %v2663, %v2946
        %vm2949 = vcmp.eq.f32.partialorder %v2663, 0.0
        %v2950 = vand.u32 %v2663, 2147483648
        %v2951 = vsel %vm2949, %v2950, %v2948
        %v2952 = vrsqrt.pop %v2666
        %v2953 = vmul.f32 %v2952, %v2666
        %v2954 = vmul.f32 %v2953, %v2952
        %v2955 = vmul.f32 0.5, %v2954
        %v2956 = vsub.f32 1.5, %v2955
        %v2957 = vmul.f32 %v2952, %v2956
        %v2958 = vmul.f32 %v2666, %v2957
        %vm2959 = vcmp.eq.f32.partialorder %v2666, inf
        %v2960 = vsel %vm2959, %v2666, %v2958
        %vm2961 = vcmp.eq.f32.partialorder %v2666, 0.0
        %v2962 = vand.u32 %v2666, 2147483648
        %v2963 = vsel %vm2961, %v2962, %v2960
        %v2964 = vrsqrt.pop %v2669
        %v2965 = vmul.f32 %v2964, %v2669
        %v2966 = vmul.f32 %v2965, %v2964
        %v2967 = vmul.f32 0.5, %v2966
        %v2968 = vsub.f32 1.5, %v2967
        %v2969 = vmul.f32 %v2964, %v2968
        %v2970 = vmul.f32 %v2669, %v2969
        %vm2971 = vcmp.eq.f32.partialorder %v2669, inf
        %v2972 = vsel %vm2971, %v2669, %v2970
        %vm2973 = vcmp.eq.f32.partialorder %v2669, 0.0
        %v2974 = vand.u32 %v2669, 2147483648
        %v2975 = vsel %vm2973, %v2974, %v2972
        %v2976 = vrsqrt.pop %v2672
        %v2977 = vmul.f32 %v2976, %v2672
        %v2978 = vmul.f32 %v2977, %v2976
        %v2979 = vmul.f32 0.5, %v2978
        %v2980 = vsub.f32 1.5, %v2979
        %v2981 = vmul.f32 %v2976, %v2980
        %v2982 = vmul.f32 %v2672, %v2981
        %vm2983 = vcmp.eq.f32.partialorder %v2672, inf
        %v2984 = vsel %vm2983, %v2672, %v2982
        %vm2985 = vcmp.eq.f32.partialorder %v2672, 0.0
        %v2986 = vand.u32 %v2672, 2147483648
        %v2987 = vsel %vm2985, %v2986, %v2984
        %v2988 = vrsqrt.pop %v2675
        %v2989 = vmul.f32 %v2988, %v2675
        %v2990 = vmul.f32 %v2989, %v2988
        %v2991 = vmul.f32 0.5, %v2990
        %v2992 = vsub.f32 1.5, %v2991
        %v2993 = vmul.f32 %v2988, %v2992
        %v2994 = vmul.f32 %v2675, %v2993
        %vm2995 = vcmp.eq.f32.partialorder %v2675, inf
        %v2996 = vsel %vm2995, %v2675, %v2994
        %vm2997 = vcmp.eq.f32.partialorder %v2675, 0.0
        %v2998 = vand.u32 %v2675, 2147483648
        %v2999 = vsel %vm2997, %v2998, %v2996
        %v3000 = vrsqrt.pop %v2678
        %v3001 = vmul.f32 %v3000, %v2678
        %v3002 = vmul.f32 %v3001, %v3000
        %v3003 = vmul.f32 0.5, %v3002
        %v3004 = vsub.f32 1.5, %v3003
        %v3005 = vmul.f32 %v3000, %v3004
        %v3006 = vmul.f32 %v2678, %v3005
        %vm3007 = vcmp.eq.f32.partialorder %v2678, inf
        %v3008 = vsel %vm3007, %v2678, %v3006
        %vm3009 = vcmp.eq.f32.partialorder %v2678, 0.0
        %v3010 = vand.u32 %v2678, 2147483648
        %v3011 = vsel %vm3009, %v3010, %v3008
        %v3012 = vrsqrt.pop %v2681
        %v3013 = vmul.f32 %v3012, %v2681
        %v3014 = vmul.f32 %v3013, %v3012
        %v3015 = vmul.f32 0.5, %v3014
        %v3016 = vsub.f32 1.5, %v3015
        %v3017 = vmul.f32 %v3012, %v3016
        %v3018 = vmul.f32 %v2681, %v3017
        %vm3019 = vcmp.eq.f32.partialorder %v2681, inf
        %v3020 = vsel %vm3019, %v2681, %v3018
        %vm3021 = vcmp.eq.f32.partialorder %v2681, 0.0
        %v3022 = vand.u32 %v2681, 2147483648
        %v3023 = vsel %vm3021, %v3022, %v3020
        %v3024 = vrsqrt.pop %v2684
        %v3025 = vmul.f32 %v3024, %v2684
        %v3026 = vmul.f32 %v3025, %v3024
        %v3027 = vmul.f32 0.5, %v3026
        %v3028 = vsub.f32 1.5, %v3027
        %v3029 = vmul.f32 %v3024, %v3028
        %v3030 = vmul.f32 %v2684, %v3029
        %vm3031 = vcmp.eq.f32.partialorder %v2684, inf
        %v3032 = vsel %vm3031, %v2684, %v3030
        %vm3033 = vcmp.eq.f32.partialorder %v2684, 0.0
        %v3034 = vand.u32 %v2684, 2147483648
        %v3035 = vsel %vm3033, %v3034, %v3032
        %v3036 = vrsqrt.pop %v2687
        %v3037 = vmul.f32 %v3036, %v2687
        %v3038 = vmul.f32 %v3037, %v3036
        %v3039 = vmul.f32 0.5, %v3038
        %v3040 = vsub.f32 1.5, %v3039
        %v3041 = vmul.f32 %v3036, %v3040
        %v3042 = vmul.f32 %v2687, %v3041
        %vm3043 = vcmp.eq.f32.partialorder %v2687, inf
        %v3044 = vsel %vm3043, %v2687, %v3042
        %vm3045 = vcmp.eq.f32.partialorder %v2687, 0.0
        %v3046 = vand.u32 %v2687, 2147483648
        %v3047 = vsel %vm3045, %v3046, %v3044
        %v3048 = vrsqrt.pop %v2690
        %v3049 = vmul.f32 %v3048, %v2690
        %v3050 = vmul.f32 %v3049, %v3048
        %v3051 = vmul.f32 0.5, %v3050
        %v3052 = vsub.f32 1.5, %v3051
        %v3053 = vmul.f32 %v3048, %v3052
        %v3054 = vmul.f32 %v2690, %v3053
        %vm3055 = vcmp.eq.f32.partialorder %v2690, inf
        %v3056 = vsel %vm3055, %v2690, %v3054
        %vm3057 = vcmp.eq.f32.partialorder %v2690, 0.0
        %v3058 = vand.u32 %v2690, 2147483648
        %v3059 = vsel %vm3057, %v3058, %v3056
        %v3060 = vrsqrt.pop %v2693
        %v3061 = vmul.f32 %v3060, %v2693
        %v3062 = vmul.f32 %v3061, %v3060
        %v3063 = vmul.f32 0.5, %v3062
        %v3064 = vsub.f32 1.5, %v3063
        %v3065 = vmul.f32 %v3060, %v3064
        %v3066 = vmul.f32 %v2693, %v3065
        %vm3067 = vcmp.eq.f32.partialorder %v2693, inf
        %v3068 = vsel %vm3067, %v2693, %v3066
        %vm3069 = vcmp.eq.f32.partialorder %v2693, 0.0
        %v3070 = vand.u32 %v2693, 2147483648
        %v3071 = vsel %vm3069, %v3070, %v3068
        %v3072 = vrsqrt.pop %v2696
        %v3073 = vmul.f32 %v3072, %v2696
        %v3074 = vmul.f32 %v3073, %v3072
        %v3075 = vmul.f32 0.5, %v3074
        %v3076 = vsub.f32 1.5, %v3075
        %v3077 = vmul.f32 %v3072, %v3076
        %v3078 = vmul.f32 %v2696, %v3077
        %vm3079 = vcmp.eq.f32.partialorder %v2696, inf
        %v3080 = vsel %vm3079, %v2696, %v3078
        %vm3081 = vcmp.eq.f32.partialorder %v2696, 0.0
        %v3082 = vand.u32 %v2696, 2147483648
        %v3083 = vsel %vm3081, %v3082, %v3080
        %v3084 = vrsqrt.pop %v2699
        %v3085 = vmul.f32 %v3084, %v2699
        %v3086 = vmul.f32 %v3085, %v3084
        %v3087 = vmul.f32 0.5, %v3086
        %v3088 = vsub.f32 1.5, %v3087
        %v3089 = vmul.f32 %v3084, %v3088
        %v3090 = vmul.f32 %v2699, %v3089
        %vm3091 = vcmp.eq.f32.partialorder %v2699, inf
        %v3092 = vsel %vm3091, %v2699, %v3090
        %vm3093 = vcmp.eq.f32.partialorder %v2699, 0.0
        %v3094 = vand.u32 %v2699, 2147483648
        %v3095 = vsel %vm3093, %v3094, %v3092
        %v3096 = vrsqrt.pop %v2702
        %v3097 = vmul.f32 %v3096, %v2702
        %v3098 = vmul.f32 %v3097, %v3096
        %v3099 = vmul.f32 0.5, %v3098
        %v3100 = vsub.f32 1.5, %v3099
        %v3101 = vmul.f32 %v3096, %v3100
        %v3102 = vmul.f32 %v2702, %v3101
        %vm3103 = vcmp.eq.f32.partialorder %v2702, inf
        %v3104 = vsel %vm3103, %v2702, %v3102
        %vm3105 = vcmp.eq.f32.partialorder %v2702, 0.0
        %v3106 = vand.u32 %v2702, 2147483648
        %v3107 = vsel %vm3105, %v3106, %v3104
        %v3108 = vrsqrt.pop %v2705
        %v3109 = vmul.f32 %v3108, %v2705
        %v3110 = vmul.f32 %v3109, %v3108
        %v3111 = vmul.f32 0.5, %v3110
        %v3112 = vsub.f32 1.5, %v3111
        %v3113 = vmul.f32 %v3108, %v3112
        %v3114 = vmul.f32 %v2705, %v3113
        %vm3115 = vcmp.eq.f32.partialorder %v2705, inf
        %v3116 = vsel %vm3115, %v2705, %v3114
        %vm3117 = vcmp.eq.f32.partialorder %v2705, 0.0
        %v3118 = vand.u32 %v2705, 2147483648
        %v3119 = vsel %vm3117, %v3118, %v3116
        %v3120 = vrsqrt.pop %v2708
        %v3121 = vmul.f32 %v3120, %v2708
        %v3122 = vmul.f32 %v3121, %v3120
        %v3123 = vmul.f32 0.5, %v3122
        %v3124 = vsub.f32 1.5, %v3123
        %v3125 = vmul.f32 %v3120, %v3124
        %v3126 = vmul.f32 %v2708, %v3125
        %vm3127 = vcmp.eq.f32.partialorder %v2708, inf
        %v3128 = vsel %vm3127, %v2708, %v3126
        %vm3129 = vcmp.eq.f32.partialorder %v2708, 0.0
        %v3130 = vand.u32 %v2708, 2147483648
        %v3131 = vsel %vm3129, %v3130, %v3128
        %v3132 = vrsqrt.pop %v2711
        %v3133 = vmul.f32 %v3132, %v2711
        %v3134 = vmul.f32 %v3133, %v3132
        %v3135 = vmul.f32 0.5, %v3134
        %v3136 = vsub.f32 1.5, %v3135
        %v3137 = vmul.f32 %v3132, %v3136
        %v3138 = vmul.f32 %v2711, %v3137
        %vm3139 = vcmp.eq.f32.partialorder %v2711, inf
        %v3140 = vsel %vm3139, %v2711, %v3138
        %vm3141 = vcmp.eq.f32.partialorder %v2711, 0.0
        %v3142 = vand.u32 %v2711, 2147483648
        %v3143 = vsel %vm3141, %v3142, %v3140
        %v3144 = vrsqrt.pop %v2714
        %v3145 = vmul.f32 %v3144, %v2714
        %v3146 = vmul.f32 %v3145, %v3144
        %v3147 = vmul.f32 0.5, %v3146
        %v3148 = vsub.f32 1.5, %v3147
        %v3149 = vmul.f32 %v3144, %v3148
        %v3150 = vmul.f32 %v2714, %v3149
        %vm3151 = vcmp.eq.f32.partialorder %v2714, inf
        %v3152 = vsel %vm3151, %v2714, %v3150
        %vm3153 = vcmp.eq.f32.partialorder %v2714, 0.0
        %v3154 = vand.u32 %v2714, 2147483648
        %v3155 = vsel %vm3153, %v3154, %v3152
        %v3156 = vrsqrt.pop %v2717
        %v3157 = vmul.f32 %v3156, %v2717
        %v3158 = vmul.f32 %v3157, %v3156
        %v3159 = vmul.f32 0.5, %v3158
        %v3160 = vsub.f32 1.5, %v3159
        %v3161 = vmul.f32 %v3156, %v3160
        %v3162 = vmul.f32 %v2717, %v3161
        %vm3163 = vcmp.eq.f32.partialorder %v2717, inf
        %v3164 = vsel %vm3163, %v2717, %v3162
        %vm3165 = vcmp.eq.f32.partialorder %v2717, 0.0
        %v3166 = vand.u32 %v2717, 2147483648
        %v3167 = vsel %vm3165, %v3166, %v3164
        %v3168 = vrsqrt.pop %v2720
        %v3169 = vmul.f32 %v3168, %v2720
        %v3170 = vmul.f32 %v3169, %v3168
        %v3171 = vmul.f32 0.5, %v3170
        %v3172 = vsub.f32 1.5, %v3171
        %v3173 = vmul.f32 %v3168, %v3172
        %v3174 = vmul.f32 %v2720, %v3173
        %vm3175 = vcmp.eq.f32.partialorder %v2720, inf
        %v3176 = vsel %vm3175, %v2720, %v3174
        %vm3177 = vcmp.eq.f32.partialorder %v2720, 0.0
        %v3178 = vand.u32 %v2720, 2147483648
        %v3179 = vsel %vm3177, %v3178, %v3176
        %v3180 = vrsqrt.pop %v2723
        %v3181 = vmul.f32 %v3180, %v2723
        %v3182 = vmul.f32 %v3181, %v3180
        %v3183 = vmul.f32 0.5, %v3182
        %v3184 = vsub.f32 1.5, %v3183
        %v3185 = vmul.f32 %v3180, %v3184
        %v3186 = vmul.f32 %v2723, %v3185
        %vm3187 = vcmp.eq.f32.partialorder %v2723, inf
        %v3188 = vsel %vm3187, %v2723, %v3186
        %vm3189 = vcmp.eq.f32.partialorder %v2723, 0.0
        %v3190 = vand.u32 %v2723, 2147483648
        %v3191 = vsel %vm3189, %v3190, %v3188
        %v3192 = vrsqrt.pop %v2726
        %v3193 = vmul.f32 %v3192, %v2726
        %v3194 = vmul.f32 %v3193, %v3192
        %v3195 = vmul.f32 0.5, %v3194
        %v3196 = vsub.f32 1.5, %v3195
        %v3197 = vmul.f32 %v3192, %v3196
        %v3198 = vmul.f32 %v2726, %v3197
        %vm3199 = vcmp.eq.f32.partialorder %v2726, inf
        %v3200 = vsel %vm3199, %v2726, %v3198
        %vm3201 = vcmp.eq.f32.partialorder %v2726, 0.0
        %v3202 = vand.u32 %v2726, 2147483648
        %v3203 = vsel %vm3201, %v3202, %v3200
        %v3204 = vrsqrt.pop %v2729
        %v3205 = vmul.f32 %v3204, %v2729
        %v3206 = vmul.f32 %v3205, %v3204
        %v3207 = vmul.f32 0.5, %v3206
        %v3208 = vsub.f32 1.5, %v3207
        %v3209 = vmul.f32 %v3204, %v3208
        %v3210 = vmul.f32 %v2729, %v3209
        %vm3211 = vcmp.eq.f32.partialorder %v2729, inf
        %v3212 = vsel %vm3211, %v2729, %v3210
        %vm3213 = vcmp.eq.f32.partialorder %v2729, 0.0
        %v3214 = vand.u32 %v2729, 2147483648
        %v3215 = vsel %vm3213, %v3214, %v3212
        %v3216 = vrsqrt.pop %v2732
        %v3217 = vmul.f32 %v3216, %v2732
        %v3218 = vmul.f32 %v3217, %v3216
        %v3219 = vmul.f32 0.5, %v3218
        %v3220 = vsub.f32 1.5, %v3219
        %v3221 = vmul.f32 %v3216, %v3220
        %v3222 = vmul.f32 %v2732, %v3221
        %vm3223 = vcmp.eq.f32.partialorder %v2732, inf
        %v3224 = vsel %vm3223, %v2732, %v3222
        %vm3225 = vcmp.eq.f32.partialorder %v2732, 0.0
        %v3226 = vand.u32 %v2732, 2147483648
        %v3227 = vsel %vm3225, %v3226, %v3224
        %v3228 = vrsqrt.pop %v2735
        %v3229 = vmul.f32 %v3228, %v2735
        %v3230 = vmul.f32 %v3229, %v3228
        %v3231 = vmul.f32 0.5, %v3230
        %v3232 = vsub.f32 1.5, %v3231
        %v3233 = vmul.f32 %v3228, %v3232
        %v3234 = vmul.f32 %v2735, %v3233
        %vm3235 = vcmp.eq.f32.partialorder %v2735, inf
        %v3236 = vsel %vm3235, %v2735, %v3234
        %vm3237 = vcmp.eq.f32.partialorder %v2735, 0.0
        %v3238 = vand.u32 %v2735, 2147483648
        %v3239 = vsel %vm3237, %v3238, %v3236
        %v3240 = vrsqrt.pop %v2738
        %v3241 = vmul.f32 %v3240, %v2738
        %v3242 = vmul.f32 %v3241, %v3240
        %v3243 = vmul.f32 0.5, %v3242
        %v3244 = vsub.f32 1.5, %v3243
        %v3245 = vmul.f32 %v3240, %v3244
        %v3246 = vmul.f32 %v2738, %v3245
        %vm3247 = vcmp.eq.f32.partialorder %v2738, inf
        %v3248 = vsel %vm3247, %v2738, %v3246
        %vm3249 = vcmp.eq.f32.partialorder %v2738, 0.0
        %v3250 = vand.u32 %v2738, 2147483648
        %v3251 = vsel %vm3249, %v3250, %v3248
        %v3252 = vrsqrt.pop %v2741
        %v3253 = vmul.f32 %v3252, %v2741
        %v3254 = vmul.f32 %v3253, %v3252
        %v3255 = vmul.f32 0.5, %v3254
        %v3256 = vsub.f32 1.5, %v3255
        %v3257 = vmul.f32 %v3252, %v3256
        %v3258 = vmul.f32 %v2741, %v3257
        %vm3259 = vcmp.eq.f32.partialorder %v2741, inf
        %v3260 = vsel %vm3259, %v2741, %v3258
        %vm3261 = vcmp.eq.f32.partialorder %v2741, 0.0
        %v3262 = vand.u32 %v2741, 2147483648
        %v3263 = vsel %vm3261, %v3262, %v3260
        %v3264 = vrsqrt.pop %v2744
        %v3265 = vmul.f32 %v3264, %v2744
        %v3266 = vmul.f32 %v3265, %v3264
        %v3267 = vmul.f32 0.5, %v3266
        %v3268 = vsub.f32 1.5, %v3267
        %v3269 = vmul.f32 %v3264, %v3268
        %v3270 = vmul.f32 %v2744, %v3269
        %vm3271 = vcmp.eq.f32.partialorder %v2744, inf
        %v3272 = vsel %vm3271, %v2744, %v3270
        %vm3273 = vcmp.eq.f32.partialorder %v2744, 0.0
        %v3274 = vand.u32 %v2744, 2147483648
        %v3275 = vsel %vm3273, %v3274, %v3272
        %v3276 = vrsqrt.pop %v2747
        %v3277 = vmul.f32 %v3276, %v2747
        %v3278 = vmul.f32 %v3277, %v3276
        %v3279 = vmul.f32 0.5, %v3278
        %v3280 = vsub.f32 1.5, %v3279
        %v3281 = vmul.f32 %v3276, %v3280
        %v3282 = vmul.f32 %v2747, %v3281
        %vm3283 = vcmp.eq.f32.partialorder %v2747, inf
        %v3284 = vsel %vm3283, %v2747, %v3282
        %vm3285 = vcmp.eq.f32.partialorder %v2747, 0.0
        %v3286 = vand.u32 %v2747, 2147483648
        %v3287 = vsel %vm3285, %v3286, %v3284
        %v3288 = vrsqrt.pop %v2750
        %v3289 = vmul.f32 %v3288, %v2750
        %v3290 = vmul.f32 %v3289, %v3288
        %v3291 = vmul.f32 0.5, %v3290
        %v3292 = vsub.f32 1.5, %v3291
        %v3293 = vmul.f32 %v3288, %v3292
        %v3294 = vmul.f32 %v2750, %v3293
        %vm3295 = vcmp.eq.f32.partialorder %v2750, inf
        %v3296 = vsel %vm3295, %v2750, %v3294
        %vm3297 = vcmp.eq.f32.partialorder %v2750, 0.0
        %v3298 = vand.u32 %v2750, 2147483648
        %v3299 = vsel %vm3297, %v3298, %v3296
        %v3300 = vrsqrt.pop %v2753
        %v3301 = vmul.f32 %v3300, %v2753
        %v3302 = vmul.f32 %v3301, %v3300
        %v3303 = vmul.f32 0.5, %v3302
        %v3304 = vsub.f32 1.5, %v3303
        %v3305 = vmul.f32 %v3300, %v3304
        %v3306 = vmul.f32 %v2753, %v3305
        %vm3307 = vcmp.eq.f32.partialorder %v2753, inf
        %v3308 = vsel %vm3307, %v2753, %v3306
        %vm3309 = vcmp.eq.f32.partialorder %v2753, 0.0
        %v3310 = vand.u32 %v2753, 2147483648
        %v3311 = vsel %vm3309, %v3310, %v3308
        %v3312 = vrsqrt.pop %v2756
        %v3313 = vmul.f32 %v3312, %v2756
        %v3314 = vmul.f32 %v3313, %v3312
        %v3315 = vmul.f32 0.5, %v3314
        %v3316 = vsub.f32 1.5, %v3315
        %v3317 = vmul.f32 %v3312, %v3316
        %v3318 = vmul.f32 %v2756, %v3317
        %vm3319 = vcmp.eq.f32.partialorder %v2756, inf
        %v3320 = vsel %vm3319, %v2756, %v3318
        %vm3321 = vcmp.eq.f32.partialorder %v2756, 0.0
        %v3322 = vand.u32 %v2756, 2147483648
        %v3323 = vsel %vm3321, %v3322, %v3320
        %v3324 = vrsqrt.pop %v2759
        %v3325 = vmul.f32 %v3324, %v2759
        %v3326 = vmul.f32 %v3325, %v3324
        %v3327 = vmul.f32 0.5, %v3326
        %v3328 = vsub.f32 1.5, %v3327
        %v3329 = vmul.f32 %v3324, %v3328
        %v3330 = vmul.f32 %v2759, %v3329
        %vm3331 = vcmp.eq.f32.partialorder %v2759, inf
        %v3332 = vsel %vm3331, %v2759, %v3330
        %vm3333 = vcmp.eq.f32.partialorder %v2759, 0.0
        %v3334 = vand.u32 %v2759, 2147483648
        %v3335 = vsel %vm3333, %v3334, %v3332
        %v3336 = vadd.f32 %v2771, 1e-09
        %v3337 = vadd.f32 %v2783, 1e-09
        %v3338 = vadd.f32 %v2795, 1e-09
        %v3339 = vadd.f32 %v2807, 1e-09
        %v3340 = vadd.f32 %v2819, 1e-09
        %v3341 = vadd.f32 %v2831, 1e-09
        %v3342 = vadd.f32 %v2843, 1e-09
        %v3343 = vadd.f32 %v2855, 1e-09
        %v3344 = vadd.f32 %v2867, 1e-09
        %v3345 = vadd.f32 %v2879, 1e-09
        %v3346 = vadd.f32 %v2891, 1e-09
        %v3347 = vadd.f32 %v2903, 1e-09
        %v3348 = vadd.f32 %v2915, 1e-09
        %v3349 = vadd.f32 %v2927, 1e-09
        %v3350 = vadd.f32 %v2939, 1e-09
        %v3351 = vadd.f32 %v2951, 1e-09
        %v3352 = vadd.f32 %v2963, 1e-09
        %v3353 = vadd.f32 %v2975, 1e-09
        %v3354 = vadd.f32 %v2987, 1e-09
        %v3355 = vadd.f32 %v2999, 1e-09
        %v3356 = vadd.f32 %v3011, 1e-09
        %v3357 = vadd.f32 %v3023, 1e-09
        %v3358 = vadd.f32 %v3035, 1e-09
        %v3359 = vadd.f32 %v3047, 1e-09
        %v3360 = vadd.f32 %v3059, 1e-09
        %v3361 = vadd.f32 %v3071, 1e-09
        %v3362 = vadd.f32 %v3083, 1e-09
        %v3363 = vadd.f32 %v3095, 1e-09
        %v3364 = vadd.f32 %v3107, 1e-09
        %v3365 = vadd.f32 %v3119, 1e-09
        %v3366 = vadd.f32 %v3131, 1e-09
        %v3367 = vadd.f32 %v3143, 1e-09
        %v3368 = vadd.f32 %v3155, 1e-09
        %v3369 = vadd.f32 %v3167, 1e-09
        %v3370 = vadd.f32 %v3179, 1e-09
        %v3371 = vadd.f32 %v3191, 1e-09
        %v3372 = vadd.f32 %v3203, 1e-09
        %v3373 = vadd.f32 %v3215, 1e-09
        %v3374 = vadd.f32 %v3227, 1e-09
        %v3375 = vadd.f32 %v3239, 1e-09
        %v3376 = vadd.f32 %v3251, 1e-09
        %v3377 = vadd.f32 %v3263, 1e-09
        %v3378 = vadd.f32 %v3275, 1e-09
        %v3379 = vadd.f32 %v3287, 1e-09
        %v3380 = vadd.f32 %v3299, 1e-09
        %v3381 = vadd.f32 %v3311, 1e-09
        %v3382 = vadd.f32 %v3323, 1e-09
        %v3383 = vadd.f32 %v3335, 1e-09
        %v3384 = vrcp.pop %v3336
        %v3385 = vmul.f32 %v3336, %v3384
        %v3386 = vsub.f32 1.0, %v3385
        %v3387 = vmul.f32 %v3384, %v3386
        %v3388 = vadd.f32 %v3384, %v3387
        %vm3389 = vweird.f32 %v3336
        %vm3390 = vweird.f32 %v3384
        %vm3391 = vmor %vm3389, %vm3390
        %v3392 = vsel %vm3391, %v3384, %v3388
        %v3393 = vand.u32 2147483647, %v3336
        %vm3394 = vcmp.eq.f32.partialorder %v3393, 8.507059e+37
        %v3395 = vand.u32 %v3336, 2147483648
        %v3396 = vor.u32 1.1754944e-38, %v3395
        %v3397 = vsel %vm3394, %v3396, %v3392
        %v3398 = vmul.f32 %v2519, %v3397
        %v3399 = vrcp.pop %v3337
        %v3400 = vmul.f32 %v3337, %v3399
        %v3401 = vsub.f32 1.0, %v3400
        %v3402 = vmul.f32 %v3399, %v3401
        %v3403 = vadd.f32 %v3399, %v3402
        %vm3404 = vweird.f32 %v3337
        %vm3405 = vweird.f32 %v3399
        %vm3406 = vmor %vm3404, %vm3405
        %v3407 = vsel %vm3406, %v3399, %v3403
        %v3408 = vand.u32 2147483647, %v3337
        %vm3409 = vcmp.eq.f32.partialorder %v3408, 8.507059e+37
        %v3410 = vand.u32 %v3337, 2147483648
        %v3411 = vor.u32 1.1754944e-38, %v3410
        %v3412 = vsel %vm3409, %v3411, %v3407
        %v3413 = vmul.f32 %v2520, %v3412
        %v3414 = vrcp.pop %v3338
        %v3415 = vmul.f32 %v3338, %v3414
        %v3416 = vsub.f32 1.0, %v3415
        %v3417 = vmul.f32 %v3414, %v3416
        %v3418 = vadd.f32 %v3414, %v3417
        %vm3419 = vweird.f32 %v3338
        %vm3420 = vweird.f32 %v3414
        %vm3421 = vmor %vm3419, %vm3420
        %v3422 = vsel %vm3421, %v3414, %v3418
        %v3423 = vand.u32 2147483647, %v3338
        %vm3424 = vcmp.eq.f32.partialorder %v3423, 8.507059e+37
        %v3425 = vand.u32 %v3338, 2147483648
        %v3426 = vor.u32 1.1754944e-38, %v3425
        %v3427 = vsel %vm3424, %v3426, %v3422
        %v3428 = vmul.f32 %v2521, %v3427
        %v3429 = vrcp.pop %v3339
        %v3430 = vmul.f32 %v3339, %v3429
        %v3431 = vsub.f32 1.0, %v3430
        %v3432 = vmul.f32 %v3429, %v3431
        %v3433 = vadd.f32 %v3429, %v3432
        %vm3434 = vweird.f32 %v3339
        %vm3435 = vweird.f32 %v3429
        %vm3436 = vmor %vm3434, %vm3435
        %v3437 = vsel %vm3436, %v3429, %v3433
        %v3438 = vand.u32 2147483647, %v3339
        %vm3439 = vcmp.eq.f32.partialorder %v3438, 8.507059e+37
        %v3440 = vand.u32 %v3339, 2147483648
        %v3441 = vor.u32 1.1754944e-38, %v3440
        %v3442 = vsel %vm3439, %v3441, %v3437
        %v3443 = vmul.f32 %v2522, %v3442
        %v3444 = vrcp.pop %v3340
        %v3445 = vmul.f32 %v3340, %v3444
        %v3446 = vsub.f32 1.0, %v3445
        %v3447 = vmul.f32 %v3444, %v3446
        %v3448 = vadd.f32 %v3444, %v3447
        %vm3449 = vweird.f32 %v3340
        %vm3450 = vweird.f32 %v3444
        %vm3451 = vmor %vm3449, %vm3450
        %v3452 = vsel %vm3451, %v3444, %v3448
        %v3453 = vand.u32 2147483647, %v3340
        %vm3454 = vcmp.eq.f32.partialorder %v3453, 8.507059e+37
        %v3455 = vand.u32 %v3340, 2147483648
        %v3456 = vor.u32 1.1754944e-38, %v3455
        %v3457 = vsel %vm3454, %v3456, %v3452
        %v3458 = vmul.f32 %v2523, %v3457
        %v3459 = vrcp.pop %v3341
        %v3460 = vmul.f32 %v3341, %v3459
        %v3461 = vsub.f32 1.0, %v3460
        %v3462 = vmul.f32 %v3459, %v3461
        %v3463 = vadd.f32 %v3459, %v3462
        %vm3464 = vweird.f32 %v3341
        %vm3465 = vweird.f32 %v3459
        %vm3466 = vmor %vm3464, %vm3465
        %v3467 = vsel %vm3466, %v3459, %v3463
        %v3468 = vand.u32 2147483647, %v3341
        %vm3469 = vcmp.eq.f32.partialorder %v3468, 8.507059e+37
        %v3470 = vand.u32 %v3341, 2147483648
        %v3471 = vor.u32 1.1754944e-38, %v3470
        %v3472 = vsel %vm3469, %v3471, %v3467
        %v3473 = vmul.f32 %v2524, %v3472
        %v3474 = vrcp.pop %v3342
        %v3475 = vmul.f32 %v3342, %v3474
        %v3476 = vsub.f32 1.0, %v3475
        %v3477 = vmul.f32 %v3474, %v3476
        %v3478 = vadd.f32 %v3474, %v3477
        %vm3479 = vweird.f32 %v3342
        %vm3480 = vweird.f32 %v3474
        %vm3481 = vmor %vm3479, %vm3480
        %v3482 = vsel %vm3481, %v3474, %v3478
        %v3483 = vand.u32 2147483647, %v3342
        %vm3484 = vcmp.eq.f32.partialorder %v3483, 8.507059e+37
        %v3485 = vand.u32 %v3342, 2147483648
        %v3486 = vor.u32 1.1754944e-38, %v3485
        %v3487 = vsel %vm3484, %v3486, %v3482
        %v3488 = vmul.f32 %v2525, %v3487
        %v3489 = vrcp.pop %v3343
        %v3490 = vmul.f32 %v3343, %v3489
        %v3491 = vsub.f32 1.0, %v3490
        %v3492 = vmul.f32 %v3489, %v3491
        %v3493 = vadd.f32 %v3489, %v3492
        %vm3494 = vweird.f32 %v3343
        %vm3495 = vweird.f32 %v3489
        %vm3496 = vmor %vm3494, %vm3495
        %v3497 = vsel %vm3496, %v3489, %v3493
        %v3498 = vand.u32 2147483647, %v3343
        %vm3499 = vcmp.eq.f32.partialorder %v3498, 8.507059e+37
        %v3500 = vand.u32 %v3343, 2147483648
        %v3501 = vor.u32 1.1754944e-38, %v3500
        %v3502 = vsel %vm3499, %v3501, %v3497
        %v3503 = vmul.f32 %v2526, %v3502
        %v3504 = vrcp.pop %v3344
        %v3505 = vmul.f32 %v3344, %v3504
        %v3506 = vsub.f32 1.0, %v3505
        %v3507 = vmul.f32 %v3504, %v3506
        %v3508 = vadd.f32 %v3504, %v3507
        %vm3509 = vweird.f32 %v3344
        %vm3510 = vweird.f32 %v3504
        %vm3511 = vmor %vm3509, %vm3510
        %v3512 = vsel %vm3511, %v3504, %v3508
        %v3513 = vand.u32 2147483647, %v3344
        %vm3514 = vcmp.eq.f32.partialorder %v3513, 8.507059e+37
        %v3515 = vand.u32 %v3344, 2147483648
        %v3516 = vor.u32 1.1754944e-38, %v3515
        %v3517 = vsel %vm3514, %v3516, %v3512
        %v3518 = vmul.f32 %v2527, %v3517
        %v3519 = vrcp.pop %v3345
        %v3520 = vmul.f32 %v3345, %v3519
        %v3521 = vsub.f32 1.0, %v3520
        %v3522 = vmul.f32 %v3519, %v3521
        %v3523 = vadd.f32 %v3519, %v3522
        %vm3524 = vweird.f32 %v3345
        %vm3525 = vweird.f32 %v3519
        %vm3526 = vmor %vm3524, %vm3525
        %v3527 = vsel %vm3526, %v3519, %v3523
        %v3528 = vand.u32 2147483647, %v3345
        %vm3529 = vcmp.eq.f32.partialorder %v3528, 8.507059e+37
        %v3530 = vand.u32 %v3345, 2147483648
        %v3531 = vor.u32 1.1754944e-38, %v3530
        %v3532 = vsel %vm3529, %v3531, %v3527
        %v3533 = vmul.f32 %v2528, %v3532
        %v3534 = vrcp.pop %v3346
        %v3535 = vmul.f32 %v3346, %v3534
        %v3536 = vsub.f32 1.0, %v3535
        %v3537 = vmul.f32 %v3534, %v3536
        %v3538 = vadd.f32 %v3534, %v3537
        %vm3539 = vweird.f32 %v3346
        %vm3540 = vweird.f32 %v3534
        %vm3541 = vmor %vm3539, %vm3540
        %v3542 = vsel %vm3541, %v3534, %v3538
        %v3543 = vand.u32 2147483647, %v3346
        %vm3544 = vcmp.eq.f32.partialorder %v3543, 8.507059e+37
        %v3545 = vand.u32 %v3346, 2147483648
        %v3546 = vor.u32 1.1754944e-38, %v3545
        %v3547 = vsel %vm3544, %v3546, %v3542
        %v3548 = vmul.f32 %v2529, %v3547
        %v3549 = vrcp.pop %v3347
        %v3550 = vmul.f32 %v3347, %v3549
        %v3551 = vsub.f32 1.0, %v3550
        %v3552 = vmul.f32 %v3549, %v3551
        %v3553 = vadd.f32 %v3549, %v3552
        %vm3554 = vweird.f32 %v3347
        %vm3555 = vweird.f32 %v3549
        %vm3556 = vmor %vm3554, %vm3555
        %v3557 = vsel %vm3556, %v3549, %v3553
        %v3558 = vand.u32 2147483647, %v3347
        %vm3559 = vcmp.eq.f32.partialorder %v3558, 8.507059e+37
        %v3560 = vand.u32 %v3347, 2147483648
        %v3561 = vor.u32 1.1754944e-38, %v3560
        %v3562 = vsel %vm3559, %v3561, %v3557
        %v3563 = vmul.f32 %v2530, %v3562
        %v3564 = vrcp.pop %v3348
        %v3565 = vmul.f32 %v3348, %v3564
        %v3566 = vsub.f32 1.0, %v3565
        %v3567 = vmul.f32 %v3564, %v3566
        %v3568 = vadd.f32 %v3564, %v3567
        %vm3569 = vweird.f32 %v3348
        %vm3570 = vweird.f32 %v3564
        %vm3571 = vmor %vm3569, %vm3570
        %v3572 = vsel %vm3571, %v3564, %v3568
        %v3573 = vand.u32 2147483647, %v3348
        %vm3574 = vcmp.eq.f32.partialorder %v3573, 8.507059e+37
        %v3575 = vand.u32 %v3348, 2147483648
        %v3576 = vor.u32 1.1754944e-38, %v3575
        %v3577 = vsel %vm3574, %v3576, %v3572
        %v3578 = vmul.f32 %v2531, %v3577
        %v3579 = vrcp.pop %v3349
        %v3580 = vmul.f32 %v3349, %v3579
        %v3581 = vsub.f32 1.0, %v3580
        %v3582 = vmul.f32 %v3579, %v3581
        %v3583 = vadd.f32 %v3579, %v3582
        %vm3584 = vweird.f32 %v3349
        %vm3585 = vweird.f32 %v3579
        %vm3586 = vmor %vm3584, %vm3585
        %v3587 = vsel %vm3586, %v3579, %v3583
        %v3588 = vand.u32 2147483647, %v3349
        %vm3589 = vcmp.eq.f32.partialorder %v3588, 8.507059e+37
        %v3590 = vand.u32 %v3349, 2147483648
        %v3591 = vor.u32 1.1754944e-38, %v3590
        %v3592 = vsel %vm3589, %v3591, %v3587
        %v3593 = vmul.f32 %v2532, %v3592
        %v3594 = vrcp.pop %v3350
        %v3595 = vmul.f32 %v3350, %v3594
        %v3596 = vsub.f32 1.0, %v3595
        %v3597 = vmul.f32 %v3594, %v3596
        %v3598 = vadd.f32 %v3594, %v3597
        %vm3599 = vweird.f32 %v3350
        %vm3600 = vweird.f32 %v3594
        %vm3601 = vmor %vm3599, %vm3600
        %v3602 = vsel %vm3601, %v3594, %v3598
        %v3603 = vand.u32 2147483647, %v3350
        %vm3604 = vcmp.eq.f32.partialorder %v3603, 8.507059e+37
        %v3605 = vand.u32 %v3350, 2147483648
        %v3606 = vor.u32 1.1754944e-38, %v3605
        %v3607 = vsel %vm3604, %v3606, %v3602
        %v3608 = vmul.f32 %v2533, %v3607
        %v3609 = vrcp.pop %v3351
        %v3610 = vmul.f32 %v3351, %v3609
        %v3611 = vsub.f32 1.0, %v3610
        %v3612 = vmul.f32 %v3609, %v3611
        %v3613 = vadd.f32 %v3609, %v3612
        %vm3614 = vweird.f32 %v3351
        %vm3615 = vweird.f32 %v3609
        %vm3616 = vmor %vm3614, %vm3615
        %v3617 = vsel %vm3616, %v3609, %v3613
        %v3618 = vand.u32 2147483647, %v3351
        %vm3619 = vcmp.eq.f32.partialorder %v3618, 8.507059e+37
        %v3620 = vand.u32 %v3351, 2147483648
        %v3621 = vor.u32 1.1754944e-38, %v3620
        %v3622 = vsel %vm3619, %v3621, %v3617
        %v3623 = vmul.f32 %v2534, %v3622
        %v3624 = vrcp.pop %v3352
        %v3625 = vmul.f32 %v3352, %v3624
        %v3626 = vsub.f32 1.0, %v3625
        %v3627 = vmul.f32 %v3624, %v3626
        %v3628 = vadd.f32 %v3624, %v3627
        %vm3629 = vweird.f32 %v3352
        %vm3630 = vweird.f32 %v3624
        %vm3631 = vmor %vm3629, %vm3630
        %v3632 = vsel %vm3631, %v3624, %v3628
        %v3633 = vand.u32 2147483647, %v3352
        %vm3634 = vcmp.eq.f32.partialorder %v3633, 8.507059e+37
        %v3635 = vand.u32 %v3352, 2147483648
        %v3636 = vor.u32 1.1754944e-38, %v3635
        %v3637 = vsel %vm3634, %v3636, %v3632
        %v3638 = vmul.f32 %v2535, %v3637
        %v3639 = vrcp.pop %v3353
        %v3640 = vmul.f32 %v3353, %v3639
        %v3641 = vsub.f32 1.0, %v3640
        %v3642 = vmul.f32 %v3639, %v3641
        %v3643 = vadd.f32 %v3639, %v3642
        %vm3644 = vweird.f32 %v3353
        %vm3645 = vweird.f32 %v3639
        %vm3646 = vmor %vm3644, %vm3645
        %v3647 = vsel %vm3646, %v3639, %v3643
        %v3648 = vand.u32 2147483647, %v3353
        %vm3649 = vcmp.eq.f32.partialorder %v3648, 8.507059e+37
        %v3650 = vand.u32 %v3353, 2147483648
        %v3651 = vor.u32 1.1754944e-38, %v3650
        %v3652 = vsel %vm3649, %v3651, %v3647
        %v3653 = vmul.f32 %v2536, %v3652
        %v3654 = vrcp.pop %v3354
        %v3655 = vmul.f32 %v3354, %v3654
        %v3656 = vsub.f32 1.0, %v3655
        %v3657 = vmul.f32 %v3654, %v3656
        %v3658 = vadd.f32 %v3654, %v3657
        %vm3659 = vweird.f32 %v3354
        %vm3660 = vweird.f32 %v3654
        %vm3661 = vmor %vm3659, %vm3660
        %v3662 = vsel %vm3661, %v3654, %v3658
        %v3663 = vand.u32 2147483647, %v3354
        %vm3664 = vcmp.eq.f32.partialorder %v3663, 8.507059e+37
        %v3665 = vand.u32 %v3354, 2147483648
        %v3666 = vor.u32 1.1754944e-38, %v3665
        %v3667 = vsel %vm3664, %v3666, %v3662
        %v3668 = vmul.f32 %v2537, %v3667
        %v3669 = vrcp.pop %v3355
        %v3670 = vmul.f32 %v3355, %v3669
        %v3671 = vsub.f32 1.0, %v3670
        %v3672 = vmul.f32 %v3669, %v3671
        %v3673 = vadd.f32 %v3669, %v3672
        %vm3674 = vweird.f32 %v3355
        %vm3675 = vweird.f32 %v3669
        %vm3676 = vmor %vm3674, %vm3675
        %v3677 = vsel %vm3676, %v3669, %v3673
        %v3678 = vand.u32 2147483647, %v3355
        %vm3679 = vcmp.eq.f32.partialorder %v3678, 8.507059e+37
        %v3680 = vand.u32 %v3355, 2147483648
        %v3681 = vor.u32 1.1754944e-38, %v3680
        %v3682 = vsel %vm3679, %v3681, %v3677
        %v3683 = vmul.f32 %v2538, %v3682
        %v3684 = vrcp.pop %v3356
        %v3685 = vmul.f32 %v3356, %v3684
        %v3686 = vsub.f32 1.0, %v3685
        %v3687 = vmul.f32 %v3684, %v3686
        %v3688 = vadd.f32 %v3684, %v3687
        %vm3689 = vweird.f32 %v3356
        %vm3690 = vweird.f32 %v3684
        %vm3691 = vmor %vm3689, %vm3690
        %v3692 = vsel %vm3691, %v3684, %v3688
        %v3693 = vand.u32 2147483647, %v3356
        %vm3694 = vcmp.eq.f32.partialorder %v3693, 8.507059e+37
        %v3695 = vand.u32 %v3356, 2147483648
        %v3696 = vor.u32 1.1754944e-38, %v3695
        %v3697 = vsel %vm3694, %v3696, %v3692
        %v3698 = vmul.f32 %v2539, %v3697
        %v3699 = vrcp.pop %v3357
        %v3700 = vmul.f32 %v3357, %v3699
        %v3701 = vsub.f32 1.0, %v3700
        %v3702 = vmul.f32 %v3699, %v3701
        %v3703 = vadd.f32 %v3699, %v3702
        %vm3704 = vweird.f32 %v3357
        %vm3705 = vweird.f32 %v3699
        %vm3706 = vmor %vm3704, %vm3705
        %v3707 = vsel %vm3706, %v3699, %v3703
        %v3708 = vand.u32 2147483647, %v3357
        %vm3709 = vcmp.eq.f32.partialorder %v3708, 8.507059e+37
        %v3710 = vand.u32 %v3357, 2147483648
        %v3711 = vor.u32 1.1754944e-38, %v3710
        %v3712 = vsel %vm3709, %v3711, %v3707
        %v3713 = vmul.f32 %v2540, %v3712
        %v3714 = vrcp.pop %v3358
        %v3715 = vmul.f32 %v3358, %v3714
        %v3716 = vsub.f32 1.0, %v3715
        %v3717 = vmul.f32 %v3714, %v3716
        %v3718 = vadd.f32 %v3714, %v3717
        %vm3719 = vweird.f32 %v3358
        %vm3720 = vweird.f32 %v3714
        %vm3721 = vmor %vm3719, %vm3720
        %v3722 = vsel %vm3721, %v3714, %v3718
        %v3723 = vand.u32 2147483647, %v3358
        %vm3724 = vcmp.eq.f32.partialorder %v3723, 8.507059e+37
        %v3725 = vand.u32 %v3358, 2147483648
        %v3726 = vor.u32 1.1754944e-38, %v3725
        %v3727 = vsel %vm3724, %v3726, %v3722
        %v3728 = vmul.f32 %v2541, %v3727
        %v3729 = vrcp.pop %v3359
        %v3730 = vmul.f32 %v3359, %v3729
        %v3731 = vsub.f32 1.0, %v3730
        %v3732 = vmul.f32 %v3729, %v3731
        %v3733 = vadd.f32 %v3729, %v3732
        %vm3734 = vweird.f32 %v3359
        %vm3735 = vweird.f32 %v3729
        %vm3736 = vmor %vm3734, %vm3735
        %v3737 = vsel %vm3736, %v3729, %v3733
        %v3738 = vand.u32 2147483647, %v3359
        %vm3739 = vcmp.eq.f32.partialorder %v3738, 8.507059e+37
        %v3740 = vand.u32 %v3359, 2147483648
        %v3741 = vor.u32 1.1754944e-38, %v3740
        %v3742 = vsel %vm3739, %v3741, %v3737
        %v3743 = vmul.f32 %v2542, %v3742
        %v3744 = vrcp.pop %v3360
        %v3745 = vmul.f32 %v3360, %v3744
        %v3746 = vsub.f32 1.0, %v3745
        %v3747 = vmul.f32 %v3744, %v3746
        %v3748 = vadd.f32 %v3744, %v3747
        %vm3749 = vweird.f32 %v3360
        %vm3750 = vweird.f32 %v3744
        %vm3751 = vmor %vm3749, %vm3750
        %v3752 = vsel %vm3751, %v3744, %v3748
        %v3753 = vand.u32 2147483647, %v3360
        %vm3754 = vcmp.eq.f32.partialorder %v3753, 8.507059e+37
        %v3755 = vand.u32 %v3360, 2147483648
        %v3756 = vor.u32 1.1754944e-38, %v3755
        %v3757 = vsel %vm3754, %v3756, %v3752
        %v3758 = vmul.f32 %v2543, %v3757
        %v3759 = vrcp.pop %v3361
        %v3760 = vmul.f32 %v3361, %v3759
        %v3761 = vsub.f32 1.0, %v3760
        %v3762 = vmul.f32 %v3759, %v3761
        %v3763 = vadd.f32 %v3759, %v3762
        %vm3764 = vweird.f32 %v3361
        %vm3765 = vweird.f32 %v3759
        %vm3766 = vmor %vm3764, %vm3765
        %v3767 = vsel %vm3766, %v3759, %v3763
        %v3768 = vand.u32 2147483647, %v3361
        %vm3769 = vcmp.eq.f32.partialorder %v3768, 8.507059e+37
        %v3770 = vand.u32 %v3361, 2147483648
        %v3771 = vor.u32 1.1754944e-38, %v3770
        %v3772 = vsel %vm3769, %v3771, %v3767
        %v3773 = vmul.f32 %v2544, %v3772
        %v3774 = vrcp.pop %v3362
        %v3775 = vmul.f32 %v3362, %v3774
        %v3776 = vsub.f32 1.0, %v3775
        %v3777 = vmul.f32 %v3774, %v3776
        %v3778 = vadd.f32 %v3774, %v3777
        %vm3779 = vweird.f32 %v3362
        %vm3780 = vweird.f32 %v3774
        %vm3781 = vmor %vm3779, %vm3780
        %v3782 = vsel %vm3781, %v3774, %v3778
        %v3783 = vand.u32 2147483647, %v3362
        %vm3784 = vcmp.eq.f32.partialorder %v3783, 8.507059e+37
        %v3785 = vand.u32 %v3362, 2147483648
        %v3786 = vor.u32 1.1754944e-38, %v3785
        %v3787 = vsel %vm3784, %v3786, %v3782
        %v3788 = vmul.f32 %v2545, %v3787
        %v3789 = vrcp.pop %v3363
        %v3790 = vmul.f32 %v3363, %v3789
        %v3791 = vsub.f32 1.0, %v3790
        %v3792 = vmul.f32 %v3789, %v3791
        %v3793 = vadd.f32 %v3789, %v3792
        %vm3794 = vweird.f32 %v3363
        %vm3795 = vweird.f32 %v3789
        %vm3796 = vmor %vm3794, %vm3795
        %v3797 = vsel %vm3796, %v3789, %v3793
        %v3798 = vand.u32 2147483647, %v3363
        %vm3799 = vcmp.eq.f32.partialorder %v3798, 8.507059e+37
        %v3800 = vand.u32 %v3363, 2147483648
        %v3801 = vor.u32 1.1754944e-38, %v3800
        %v3802 = vsel %vm3799, %v3801, %v3797
        %v3803 = vmul.f32 %v2546, %v3802
        %v3804 = vrcp.pop %v3364
        %v3805 = vmul.f32 %v3364, %v3804
        %v3806 = vsub.f32 1.0, %v3805
        %v3807 = vmul.f32 %v3804, %v3806
        %v3808 = vadd.f32 %v3804, %v3807
        %vm3809 = vweird.f32 %v3364
        %vm3810 = vweird.f32 %v3804
        %vm3811 = vmor %vm3809, %vm3810
        %v3812 = vsel %vm3811, %v3804, %v3808
        %v3813 = vand.u32 2147483647, %v3364
        %vm3814 = vcmp.eq.f32.partialorder %v3813, 8.507059e+37
        %v3815 = vand.u32 %v3364, 2147483648
        %v3816 = vor.u32 1.1754944e-38, %v3815
        %v3817 = vsel %vm3814, %v3816, %v3812
        %v3818 = vmul.f32 %v2547, %v3817
        %v3819 = vrcp.pop %v3365
        %v3820 = vmul.f32 %v3365, %v3819
        %v3821 = vsub.f32 1.0, %v3820
        %v3822 = vmul.f32 %v3819, %v3821
        %v3823 = vadd.f32 %v3819, %v3822
        %vm3824 = vweird.f32 %v3365
        %vm3825 = vweird.f32 %v3819
        %vm3826 = vmor %vm3824, %vm3825
        %v3827 = vsel %vm3826, %v3819, %v3823
        %v3828 = vand.u32 2147483647, %v3365
        %vm3829 = vcmp.eq.f32.partialorder %v3828, 8.507059e+37
        %v3830 = vand.u32 %v3365, 2147483648
        %v3831 = vor.u32 1.1754944e-38, %v3830
        %v3832 = vsel %vm3829, %v3831, %v3827
        %v3833 = vmul.f32 %v2548, %v3832
        %v3834 = vrcp.pop %v3366
        %v3835 = vmul.f32 %v3366, %v3834
        %v3836 = vsub.f32 1.0, %v3835
        %v3837 = vmul.f32 %v3834, %v3836
        %v3838 = vadd.f32 %v3834, %v3837
        %vm3839 = vweird.f32 %v3366
        %vm3840 = vweird.f32 %v3834
        %vm3841 = vmor %vm3839, %vm3840
        %v3842 = vsel %vm3841, %v3834, %v3838
        %v3843 = vand.u32 2147483647, %v3366
        %vm3844 = vcmp.eq.f32.partialorder %v3843, 8.507059e+37
        %v3845 = vand.u32 %v3366, 2147483648
        %v3846 = vor.u32 1.1754944e-38, %v3845
        %v3847 = vsel %vm3844, %v3846, %v3842
        %v3848 = vmul.f32 %v2549, %v3847
        %v3849 = vrcp.pop %v3367
        %v3850 = vmul.f32 %v3367, %v3849
        %v3851 = vsub.f32 1.0, %v3850
        %v3852 = vmul.f32 %v3849, %v3851
        %v3853 = vadd.f32 %v3849, %v3852
        %vm3854 = vweird.f32 %v3367
        %vm3855 = vweird.f32 %v3849
        %vm3856 = vmor %vm3854, %vm3855
        %v3857 = vsel %vm3856, %v3849, %v3853
        %v3858 = vand.u32 2147483647, %v3367
        %vm3859 = vcmp.eq.f32.partialorder %v3858, 8.507059e+37
        %v3860 = vand.u32 %v3367, 2147483648
        %v3861 = vor.u32 1.1754944e-38, %v3860
        %v3862 = vsel %vm3859, %v3861, %v3857
        %v3863 = vmul.f32 %v2550, %v3862
        %v3864 = vrcp.pop %v3368
        %v3865 = vmul.f32 %v3368, %v3864
        %v3866 = vsub.f32 1.0, %v3865
        %v3867 = vmul.f32 %v3864, %v3866
        %v3868 = vadd.f32 %v3864, %v3867
        %vm3869 = vweird.f32 %v3368
        %vm3870 = vweird.f32 %v3864
        %vm3871 = vmor %vm3869, %vm3870
        %v3872 = vsel %vm3871, %v3864, %v3868
        %v3873 = vand.u32 2147483647, %v3368
        %vm3874 = vcmp.eq.f32.partialorder %v3873, 8.507059e+37
        %v3875 = vand.u32 %v3368, 2147483648
        %v3876 = vor.u32 1.1754944e-38, %v3875
        %v3877 = vsel %vm3874, %v3876, %v3872
        %v3878 = vmul.f32 %v2551, %v3877
        %v3879 = vrcp.pop %v3369
        %v3880 = vmul.f32 %v3369, %v3879
        %v3881 = vsub.f32 1.0, %v3880
        %v3882 = vmul.f32 %v3879, %v3881
        %v3883 = vadd.f32 %v3879, %v3882
        %vm3884 = vweird.f32 %v3369
        %vm3885 = vweird.f32 %v3879
        %vm3886 = vmor %vm3884, %vm3885
        %v3887 = vsel %vm3886, %v3879, %v3883
        %v3888 = vand.u32 2147483647, %v3369
        %vm3889 = vcmp.eq.f32.partialorder %v3888, 8.507059e+37
        %v3890 = vand.u32 %v3369, 2147483648
        %v3891 = vor.u32 1.1754944e-38, %v3890
        %v3892 = vsel %vm3889, %v3891, %v3887
        %v3893 = vmul.f32 %v2552, %v3892
        %v3894 = vrcp.pop %v3370
        %v3895 = vmul.f32 %v3370, %v3894
        %v3896 = vsub.f32 1.0, %v3895
        %v3897 = vmul.f32 %v3894, %v3896
        %v3898 = vadd.f32 %v3894, %v3897
        %vm3899 = vweird.f32 %v3370
        %vm3900 = vweird.f32 %v3894
        %vm3901 = vmor %vm3899, %vm3900
        %v3902 = vsel %vm3901, %v3894, %v3898
        %v3903 = vand.u32 2147483647, %v3370
        %vm3904 = vcmp.eq.f32.partialorder %v3903, 8.507059e+37
        %v3905 = vand.u32 %v3370, 2147483648
        %v3906 = vor.u32 1.1754944e-38, %v3905
        %v3907 = vsel %vm3904, %v3906, %v3902
        %v3908 = vmul.f32 %v2553, %v3907
        %v3909 = vrcp.pop %v3371
        %v3910 = vmul.f32 %v3371, %v3909
        %v3911 = vsub.f32 1.0, %v3910
        %v3912 = vmul.f32 %v3909, %v3911
        %v3913 = vadd.f32 %v3909, %v3912
        %vm3914 = vweird.f32 %v3371
        %vm3915 = vweird.f32 %v3909
        %vm3916 = vmor %vm3914, %vm3915
        %v3917 = vsel %vm3916, %v3909, %v3913
        %v3918 = vand.u32 2147483647, %v3371
        %vm3919 = vcmp.eq.f32.partialorder %v3918, 8.507059e+37
        %v3920 = vand.u32 %v3371, 2147483648
        %v3921 = vor.u32 1.1754944e-38, %v3920
        %v3922 = vsel %vm3919, %v3921, %v3917
        %v3923 = vmul.f32 %v2554, %v3922
        %v3924 = vrcp.pop %v3372
        %v3925 = vmul.f32 %v3372, %v3924
        %v3926 = vsub.f32 1.0, %v3925
        %v3927 = vmul.f32 %v3924, %v3926
        %v3928 = vadd.f32 %v3924, %v3927
        %vm3929 = vweird.f32 %v3372
        %vm3930 = vweird.f32 %v3924
        %vm3931 = vmor %vm3929, %vm3930
        %v3932 = vsel %vm3931, %v3924, %v3928
        %v3933 = vand.u32 2147483647, %v3372
        %vm3934 = vcmp.eq.f32.partialorder %v3933, 8.507059e+37
        %v3935 = vand.u32 %v3372, 2147483648
        %v3936 = vor.u32 1.1754944e-38, %v3935
        %v3937 = vsel %vm3934, %v3936, %v3932
        %v3938 = vmul.f32 %v2555, %v3937
        %v3939 = vrcp.pop %v3373
        %v3940 = vmul.f32 %v3373, %v3939
        %v3941 = vsub.f32 1.0, %v3940
        %v3942 = vmul.f32 %v3939, %v3941
        %v3943 = vadd.f32 %v3939, %v3942
        %vm3944 = vweird.f32 %v3373
        %vm3945 = vweird.f32 %v3939
        %vm3946 = vmor %vm3944, %vm3945
        %v3947 = vsel %vm3946, %v3939, %v3943
        %v3948 = vand.u32 2147483647, %v3373
        %vm3949 = vcmp.eq.f32.partialorder %v3948, 8.507059e+37
        %v3950 = vand.u32 %v3373, 2147483648
        %v3951 = vor.u32 1.1754944e-38, %v3950
        %v3952 = vsel %vm3949, %v3951, %v3947
        %v3953 = vmul.f32 %v2556, %v3952
        %v3954 = vrcp.pop %v3374
        %v3955 = vmul.f32 %v3374, %v3954
        %v3956 = vsub.f32 1.0, %v3955
        %v3957 = vmul.f32 %v3954, %v3956
        %v3958 = vadd.f32 %v3954, %v3957
        %vm3959 = vweird.f32 %v3374
        %vm3960 = vweird.f32 %v3954
        %vm3961 = vmor %vm3959, %vm3960
        %v3962 = vsel %vm3961, %v3954, %v3958
        %v3963 = vand.u32 2147483647, %v3374
        %vm3964 = vcmp.eq.f32.partialorder %v3963, 8.507059e+37
        %v3965 = vand.u32 %v3374, 2147483648
        %v3966 = vor.u32 1.1754944e-38, %v3965
        %v3967 = vsel %vm3964, %v3966, %v3962
        %v3968 = vmul.f32 %v2557, %v3967
        %v3969 = vrcp.pop %v3375
        %v3970 = vmul.f32 %v3375, %v3969
        %v3971 = vsub.f32 1.0, %v3970
        %v3972 = vmul.f32 %v3969, %v3971
        %v3973 = vadd.f32 %v3969, %v3972
        %vm3974 = vweird.f32 %v3375
        %vm3975 = vweird.f32 %v3969
        %vm3976 = vmor %vm3974, %vm3975
        %v3977 = vsel %vm3976, %v3969, %v3973
        %v3978 = vand.u32 2147483647, %v3375
        %vm3979 = vcmp.eq.f32.partialorder %v3978, 8.507059e+37
        %v3980 = vand.u32 %v3375, 2147483648
        %v3981 = vor.u32 1.1754944e-38, %v3980
        %v3982 = vsel %vm3979, %v3981, %v3977
        %v3983 = vmul.f32 %v2558, %v3982
        %v3984 = vrcp.pop %v3376
        %v3985 = vmul.f32 %v3376, %v3984
        %v3986 = vsub.f32 1.0, %v3985
        %v3987 = vmul.f32 %v3984, %v3986
        %v3988 = vadd.f32 %v3984, %v3987
        %vm3989 = vweird.f32 %v3376
        %vm3990 = vweird.f32 %v3984
        %vm3991 = vmor %vm3989, %vm3990
        %v3992 = vsel %vm3991, %v3984, %v3988
        %v3993 = vand.u32 2147483647, %v3376
        %vm3994 = vcmp.eq.f32.partialorder %v3993, 8.507059e+37
        %v3995 = vand.u32 %v3376, 2147483648
        %v3996 = vor.u32 1.1754944e-38, %v3995
        %v3997 = vsel %vm3994, %v3996, %v3992
        %v3998 = vmul.f32 %v2559, %v3997
        %v3999 = vrcp.pop %v3377
        %v4000 = vmul.f32 %v3377, %v3999
        %v4001 = vsub.f32 1.0, %v4000
        %v4002 = vmul.f32 %v3999, %v4001
        %v4003 = vadd.f32 %v3999, %v4002
        %vm4004 = vweird.f32 %v3377
        %vm4005 = vweird.f32 %v3999
        %vm4006 = vmor %vm4004, %vm4005
        %v4007 = vsel %vm4006, %v3999, %v4003
        %v4008 = vand.u32 2147483647, %v3377
        %vm4009 = vcmp.eq.f32.partialorder %v4008, 8.507059e+37
        %v4010 = vand.u32 %v3377, 2147483648
        %v4011 = vor.u32 1.1754944e-38, %v4010
        %v4012 = vsel %vm4009, %v4011, %v4007
        %v4013 = vmul.f32 %v2560, %v4012
        %v4014 = vrcp.pop %v3378
        %v4015 = vmul.f32 %v3378, %v4014
        %v4016 = vsub.f32 1.0, %v4015
        %v4017 = vmul.f32 %v4014, %v4016
        %v4018 = vadd.f32 %v4014, %v4017
        %vm4019 = vweird.f32 %v3378
        %vm4020 = vweird.f32 %v4014
        %vm4021 = vmor %vm4019, %vm4020
        %v4022 = vsel %vm4021, %v4014, %v4018
        %v4023 = vand.u32 2147483647, %v3378
        %vm4024 = vcmp.eq.f32.partialorder %v4023, 8.507059e+37
        %v4025 = vand.u32 %v3378, 2147483648
        %v4026 = vor.u32 1.1754944e-38, %v4025
        %v4027 = vsel %vm4024, %v4026, %v4022
        %v4028 = vmul.f32 %v2561, %v4027
        %v4029 = vrcp.pop %v3379
        %v4030 = vmul.f32 %v3379, %v4029
        %v4031 = vsub.f32 1.0, %v4030
        %v4032 = vmul.f32 %v4029, %v4031
        %v4033 = vadd.f32 %v4029, %v4032
        %vm4034 = vweird.f32 %v3379
        %vm4035 = vweird.f32 %v4029
        %vm4036 = vmor %vm4034, %vm4035
        %v4037 = vsel %vm4036, %v4029, %v4033
        %v4038 = vand.u32 2147483647, %v3379
        %vm4039 = vcmp.eq.f32.partialorder %v4038, 8.507059e+37
        %v4040 = vand.u32 %v3379, 2147483648
        %v4041 = vor.u32 1.1754944e-38, %v4040
        %v4042 = vsel %vm4039, %v4041, %v4037
        %v4043 = vmul.f32 %v2562, %v4042
        %v4044 = vrcp.pop %v3380
        %v4045 = vmul.f32 %v3380, %v4044
        %v4046 = vsub.f32 1.0, %v4045
        %v4047 = vmul.f32 %v4044, %v4046
        %v4048 = vadd.f32 %v4044, %v4047
        %vm4049 = vweird.f32 %v3380
        %vm4050 = vweird.f32 %v4044
        %vm4051 = vmor %vm4049, %vm4050
        %v4052 = vsel %vm4051, %v4044, %v4048
        %v4053 = vand.u32 2147483647, %v3380
        %vm4054 = vcmp.eq.f32.partialorder %v4053, 8.507059e+37
        %v4055 = vand.u32 %v3380, 2147483648
        %v4056 = vor.u32 1.1754944e-38, %v4055
        %v4057 = vsel %vm4054, %v4056, %v4052
        %v4058 = vmul.f32 %v2563, %v4057
        %v4059 = vrcp.pop %v3381
        %v4060 = vmul.f32 %v3381, %v4059
        %v4061 = vsub.f32 1.0, %v4060
        %v4062 = vmul.f32 %v4059, %v4061
        %v4063 = vadd.f32 %v4059, %v4062
        %vm4064 = vweird.f32 %v3381
        %vm4065 = vweird.f32 %v4059
        %vm4066 = vmor %vm4064, %vm4065
        %v4067 = vsel %vm4066, %v4059, %v4063
        %v4068 = vand.u32 2147483647, %v3381
        %vm4069 = vcmp.eq.f32.partialorder %v4068, 8.507059e+37
        %v4070 = vand.u32 %v3381, 2147483648
        %v4071 = vor.u32 1.1754944e-38, %v4070
        %v4072 = vsel %vm4069, %v4071, %v4067
        %v4073 = vmul.f32 %v2564, %v4072
        %v4074 = vrcp.pop %v3382
        %v4075 = vmul.f32 %v3382, %v4074
        %v4076 = vsub.f32 1.0, %v4075
        %v4077 = vmul.f32 %v4074, %v4076
        %v4078 = vadd.f32 %v4074, %v4077
        %vm4079 = vweird.f32 %v3382
        %vm4080 = vweird.f32 %v4074
        %vm4081 = vmor %vm4079, %vm4080
        %v4082 = vsel %vm4081, %v4074, %v4078
        %v4083 = vand.u32 2147483647, %v3382
        %vm4084 = vcmp.eq.f32.partialorder %v4083, 8.507059e+37
        %v4085 = vand.u32 %v3382, 2147483648
        %v4086 = vor.u32 1.1754944e-38, %v4085
        %v4087 = vsel %vm4084, %v4086, %v4082
        %v4088 = vmul.f32 %v2565, %v4087
        %v4089 = vrcp.pop %v3383
        %v4090 = vmul.f32 %v3383, %v4089
        %v4091 = vsub.f32 1.0, %v4090
        %v4092 = vmul.f32 %v4089, %v4091
        %v4093 = vadd.f32 %v4089, %v4092
        %vm4094 = vweird.f32 %v3383
        %vm4095 = vweird.f32 %v4089
        %vm4096 = vmor %vm4094, %vm4095
        %v4097 = vsel %vm4096, %v4089, %v4093
        %v4098 = vand.u32 2147483647, %v3383
        %vm4099 = vcmp.eq.f32.partialorder %v4098, 8.507059e+37
        %v4100 = vand.u32 %v3383, 2147483648
        %v4101 = vor.u32 1.1754944e-38, %v4100
        %v4102 = vsel %vm4099, %v4101, %v4097
        %v4103 = vmul.f32 %v2566, %v4102
        %4105 = vset.pattern.permute.xlu0 0
        %4106 = vperm.xlu0 %4105, %v3398
        %v4107 = vpop.permute.xlu0 %4106
        %4110 = vset.pattern.permute.xlu0 0
        %4111 = vperm.xlu0 %4110, %v3413
        %v4112 = vpop.permute.xlu0 %4111
        %4115 = vset.pattern.permute.xlu0 0
        %4116 = vperm.xlu0 %4115, %v3428
        %v4117 = vpop.permute.xlu0 %4116
        %4120 = vset.pattern.permute.xlu0 0
        %4121 = vperm.xlu0 %4120, %v3443
        %v4122 = vpop.permute.xlu0 %4121
        %4125 = vset.pattern.permute.xlu0 0
        %4126 = vperm.xlu0 %4125, %v3458
        %v4127 = vpop.permute.xlu0 %4126
        %4130 = vset.pattern.permute.xlu0 0
        %4131 = vperm.xlu0 %4130, %v3473
        %v4132 = vpop.permute.xlu0 %4131
        %4135 = vset.pattern.permute.xlu0 0
        %4136 = vperm.xlu0 %4135, %v3488
        %v4137 = vpop.permute.xlu0 %4136
        %4140 = vset.pattern.permute.xlu0 0
        %4141 = vperm.xlu0 %4140, %v3503
        %v4142 = vpop.permute.xlu0 %4141
        %4145 = vset.pattern.permute.xlu0 0
        %4146 = vperm.xlu0 %4145, %v3518
        %v4147 = vpop.permute.xlu0 %4146
        %4150 = vset.pattern.permute.xlu0 0
        %4151 = vperm.xlu0 %4150, %v3533
        %v4152 = vpop.permute.xlu0 %4151
        %4155 = vset.pattern.permute.xlu0 0
        %4156 = vperm.xlu0 %4155, %v3548
        %v4157 = vpop.permute.xlu0 %4156
        %4160 = vset.pattern.permute.xlu0 0
        %4161 = vperm.xlu0 %4160, %v3563
        %v4162 = vpop.permute.xlu0 %4161
        %4165 = vset.pattern.permute.xlu0 0
        %4166 = vperm.xlu0 %4165, %v3578
        %v4167 = vpop.permute.xlu0 %4166
        %4170 = vset.pattern.permute.xlu0 0
        %4171 = vperm.xlu0 %4170, %v3593
        %v4172 = vpop.permute.xlu0 %4171
        %4175 = vset.pattern.permute.xlu0 0
        %4176 = vperm.xlu0 %4175, %v3608
        %v4177 = vpop.permute.xlu0 %4176
        %4180 = vset.pattern.permute.xlu0 0
        %4181 = vperm.xlu0 %4180, %v3623
        %v4182 = vpop.permute.xlu0 %4181
        %4185 = vset.pattern.permute.xlu0 0
        %4186 = vperm.xlu0 %4185, %v3638
        %v4187 = vpop.permute.xlu0 %4186
        %4190 = vset.pattern.permute.xlu0 0
        %4191 = vperm.xlu0 %4190, %v3653
        %v4192 = vpop.permute.xlu0 %4191
        %4195 = vset.pattern.permute.xlu0 0
        %4196 = vperm.xlu0 %4195, %v3668
        %v4197 = vpop.permute.xlu0 %4196
        %4200 = vset.pattern.permute.xlu0 0
        %4201 = vperm.xlu0 %4200, %v3683
        %v4202 = vpop.permute.xlu0 %4201
        %4205 = vset.pattern.permute.xlu0 0
        %4206 = vperm.xlu0 %4205, %v3698
        %v4207 = vpop.permute.xlu0 %4206
        %4210 = vset.pattern.permute.xlu0 0
        %4211 = vperm.xlu0 %4210, %v3713
        %v4212 = vpop.permute.xlu0 %4211
        %4215 = vset.pattern.permute.xlu0 0
        %4216 = vperm.xlu0 %4215, %v3728
        %v4217 = vpop.permute.xlu0 %4216
        %4220 = vset.pattern.permute.xlu0 0
        %4221 = vperm.xlu0 %4220, %v3743
        %v4222 = vpop.permute.xlu0 %4221
        %4225 = vset.pattern.permute.xlu0 0
        %4226 = vperm.xlu0 %4225, %v3758
        %v4227 = vpop.permute.xlu0 %4226
        %4230 = vset.pattern.permute.xlu0 0
        %4231 = vperm.xlu0 %4230, %v3773
        %v4232 = vpop.permute.xlu0 %4231
        %4235 = vset.pattern.permute.xlu0 0
        %4236 = vperm.xlu0 %4235, %v3788
        %v4237 = vpop.permute.xlu0 %4236
        %4240 = vset.pattern.permute.xlu0 0
        %4241 = vperm.xlu0 %4240, %v3803
        %v4242 = vpop.permute.xlu0 %4241
        %4245 = vset.pattern.permute.xlu0 0
        %4246 = vperm.xlu0 %4245, %v3818
        %v4247 = vpop.permute.xlu0 %4246
        %4250 = vset.pattern.permute.xlu0 0
        %4251 = vperm.xlu0 %4250, %v3833
        %v4252 = vpop.permute.xlu0 %4251
        %4255 = vset.pattern.permute.xlu0 0
        %4256 = vperm.xlu0 %4255, %v3848
        %v4257 = vpop.permute.xlu0 %4256
        %4260 = vset.pattern.permute.xlu0 0
        %4261 = vperm.xlu0 %4260, %v3863
        %v4262 = vpop.permute.xlu0 %4261
        %4265 = vset.pattern.permute.xlu0 0
        %4266 = vperm.xlu0 %4265, %v3878
        %v4267 = vpop.permute.xlu0 %4266
        %4270 = vset.pattern.permute.xlu0 0
        %4271 = vperm.xlu0 %4270, %v3893
        %v4272 = vpop.permute.xlu0 %4271
        %4275 = vset.pattern.permute.xlu0 0
        %4276 = vperm.xlu0 %4275, %v3908
        %v4277 = vpop.permute.xlu0 %4276
        %4280 = vset.pattern.permute.xlu0 0
        %4281 = vperm.xlu0 %4280, %v3923
        %v4282 = vpop.permute.xlu0 %4281
        %4285 = vset.pattern.permute.xlu0 0
        %4286 = vperm.xlu0 %4285, %v3938
        %v4287 = vpop.permute.xlu0 %4286
        %4290 = vset.pattern.permute.xlu0 0
        %4291 = vperm.xlu0 %4290, %v3953
        %v4292 = vpop.permute.xlu0 %4291
        %4295 = vset.pattern.permute.xlu0 0
        %4296 = vperm.xlu0 %4295, %v3968
        %v4297 = vpop.permute.xlu0 %4296
        %4300 = vset.pattern.permute.xlu0 0
        %4301 = vperm.xlu0 %4300, %v3983
        %v4302 = vpop.permute.xlu0 %4301
        %4305 = vset.pattern.permute.xlu0 0
        %4306 = vperm.xlu0 %4305, %v3998
        %v4307 = vpop.permute.xlu0 %4306
        %4310 = vset.pattern.permute.xlu0 0
        %4311 = vperm.xlu0 %4310, %v4013
        %v4312 = vpop.permute.xlu0 %4311
        %4315 = vset.pattern.permute.xlu0 0
        %4316 = vperm.xlu0 %4315, %v4028
        %v4317 = vpop.permute.xlu0 %4316
        %4320 = vset.pattern.permute.xlu0 0
        %4321 = vperm.xlu0 %4320, %v4043
        %v4322 = vpop.permute.xlu0 %4321
        %4325 = vset.pattern.permute.xlu0 0
        %4326 = vperm.xlu0 %4325, %v4058
        %v4327 = vpop.permute.xlu0 %4326
        %4330 = vset.pattern.permute.xlu0 0
        %4331 = vperm.xlu0 %4330, %v4073
        %v4332 = vpop.permute.xlu0 %4331
        %4335 = vset.pattern.permute.xlu0 0
        %4336 = vperm.xlu0 %4335, %v4088
        %v4337 = vpop.permute.xlu0 %4336
        %4340 = vset.pattern.permute.xlu0 0
        %4341 = vperm.xlu0 %4340, %v4103
        %v4342 = vpop.permute.xlu0 %4341
        %v4344 = vmul.f32 %v4107, %v699
        %v4345 = vmul.f32 %v4112, %v701
        %v4346 = vmul.f32 %v4117, %v704
        %v4347 = vmul.f32 %v4122, %v706
        %v4348 = vmul.f32 %v4127, %v709
        %v4349 = vmul.f32 %v4132, %v711
        %v4350 = vmul.f32 %v4137, %v714
        %v4351 = vmul.f32 %v4142, %v716
        %v4352 = vmul.f32 %v4147, %v719
        %v4353 = vmul.f32 %v4152, %v721
        %v4354 = vmul.f32 %v4157, %v724
        %v4355 = vmul.f32 %v4162, %v726
        %v4356 = vmul.f32 %v4167, %v729
        %v4357 = vmul.f32 %v4172, %v731
        %v4358 = vmul.f32 %v4177, %v734
        %v4359 = vmul.f32 %v4182, %v736
        %v4360 = vmul.f32 %v4187, %v739
        %v4361 = vmul.f32 %v4192, %v741
        %v4362 = vmul.f32 %v4197, %v744
        %v4363 = vmul.f32 %v4202, %v746
        %v4364 = vmul.f32 %v4207, %v749
        %v4365 = vmul.f32 %v4212, %v751
        %v4366 = vmul.f32 %v4217, %v754
        %v4367 = vmul.f32 %v4222, %v756
        %v4368 = vmul.f32 %v4227, %v759
        %v4369 = vmul.f32 %v4232, %v761
        %v4370 = vmul.f32 %v4237, %v764
        %v4371 = vmul.f32 %v4242, %v766
        %v4372 = vmul.f32 %v4247, %v769
        %v4373 = vmul.f32 %v4252, %v771
        %v4374 = vmul.f32 %v4257, %v774
        %v4375 = vmul.f32 %v4262, %v776
        %v4376 = vmul.f32 %v4267, %v779
        %v4377 = vmul.f32 %v4272, %v781
        %v4378 = vmul.f32 %v4277, %v784
        %v4379 = vmul.f32 %v4282, %v786
        %v4380 = vmul.f32 %v4287, %v789
        %v4381 = vmul.f32 %v4292, %v791
        %v4382 = vmul.f32 %v4297, %v794
        %v4383 = vmul.f32 %v4302, %v796
        %v4384 = vmul.f32 %v4307, %v799
        %v4385 = vmul.f32 %v4312, %v801
        %v4386 = vmul.f32 %v4317, %v804
        %v4387 = vmul.f32 %v4322, %v806
        %v4388 = vmul.f32 %v4327, %v809
        %v4389 = vmul.f32 %v4332, %v811
        %v4390 = vmul.f32 %v4337, %v814
        %v4391 = vmul.f32 %v4342, %v816
        %v4392 = vld [vmem:[%s5] sm:$0x1]
        %v4394 = vperm.slane %v4392, 0
        %4395 = vrot.lane.b32.xlu0 %v4394, 32
        %v4396 = vpop.permute.xlu0 %4395
        %v4398 = vadd.f32 %v4344, %v4396
        %v4399 = vadd.f32 %v4345, %v4396
        %v4400 = vadd.f32 %v4346, %v4396
        %v4401 = vadd.f32 %v4347, %v4396
        %v4402 = vadd.f32 %v4348, %v4396
        %v4403 = vadd.f32 %v4349, %v4396
        %v4404 = vadd.f32 %v4350, %v4396
        %v4405 = vadd.f32 %v4351, %v4396
        %v4406 = vadd.f32 %v4352, %v4396
        %v4407 = vadd.f32 %v4353, %v4396
        %v4408 = vadd.f32 %v4354, %v4396
        %v4409 = vadd.f32 %v4355, %v4396
        %v4410 = vadd.f32 %v4356, %v4396
        %v4411 = vadd.f32 %v4357, %v4396
        %v4412 = vadd.f32 %v4358, %v4396
        %v4413 = vadd.f32 %v4359, %v4396
        %v4414 = vadd.f32 %v4360, %v4396
        %v4415 = vadd.f32 %v4361, %v4396
        %v4416 = vadd.f32 %v4362, %v4396
        %v4417 = vadd.f32 %v4363, %v4396
        %v4418 = vadd.f32 %v4364, %v4396
        %v4419 = vadd.f32 %v4365, %v4396
        %v4420 = vadd.f32 %v4366, %v4396
        %v4421 = vadd.f32 %v4367, %v4396
        %v4422 = vadd.f32 %v4368, %v4396
        %v4423 = vadd.f32 %v4369, %v4396
        %v4424 = vadd.f32 %v4370, %v4396
        %v4425 = vadd.f32 %v4371, %v4396
        %v4426 = vadd.f32 %v4372, %v4396
        %v4427 = vadd.f32 %v4373, %v4396
        %v4428 = vadd.f32 %v4374, %v4396
        %v4429 = vadd.f32 %v4375, %v4396
        %v4430 = vadd.f32 %v4376, %v4396
        %v4431 = vadd.f32 %v4377, %v4396
        %v4432 = vadd.f32 %v4378, %v4396
        %v4433 = vadd.f32 %v4379, %v4396
        %v4434 = vadd.f32 %v4380, %v4396
        %v4435 = vadd.f32 %v4381, %v4396
        %v4436 = vadd.f32 %v4382, %v4396
        %v4437 = vadd.f32 %v4383, %v4396
        %v4438 = vadd.f32 %v4384, %v4396
        %v4439 = vadd.f32 %v4385, %v4396
        %v4440 = vadd.f32 %v4386, %v4396
        %v4441 = vadd.f32 %v4387, %v4396
        %v4442 = vadd.f32 %v4388, %v4396
        %v4443 = vadd.f32 %v4389, %v4396
        %v4444 = vadd.f32 %v4390, %v4396
        %v4445 = vadd.f32 %v4391, %v4396
        %v4446 = vxor.u32 %v4398, 2147483648
        %v4447 = vxor.u32 %v4399, 2147483648
        %v4448 = vxor.u32 %v4400, 2147483648
        %v4449 = vxor.u32 %v4401, 2147483648
        %v4450 = vxor.u32 %v4402, 2147483648
        %v4451 = vxor.u32 %v4403, 2147483648
        %v4452 = vxor.u32 %v4404, 2147483648
        %v4453 = vxor.u32 %v4405, 2147483648
        %v4454 = vxor.u32 %v4406, 2147483648
        %v4455 = vxor.u32 %v4407, 2147483648
        %v4456 = vxor.u32 %v4408, 2147483648
        %v4457 = vxor.u32 %v4409, 2147483648
        %v4458 = vxor.u32 %v4410, 2147483648
        %v4459 = vxor.u32 %v4411, 2147483648
        %v4460 = vxor.u32 %v4412, 2147483648
        %v4461 = vxor.u32 %v4413, 2147483648
        %v4462 = vxor.u32 %v4414, 2147483648
        %v4463 = vxor.u32 %v4415, 2147483648
        %v4464 = vxor.u32 %v4416, 2147483648
        %v4465 = vxor.u32 %v4417, 2147483648
        %v4466 = vxor.u32 %v4418, 2147483648
        %v4467 = vxor.u32 %v4419, 2147483648
        %v4468 = vxor.u32 %v4420, 2147483648
        %v4469 = vxor.u32 %v4421, 2147483648
        %v4470 = vxor.u32 %v4422, 2147483648
        %v4471 = vxor.u32 %v4423, 2147483648
        %v4472 = vxor.u32 %v4424, 2147483648
        %v4473 = vxor.u32 %v4425, 2147483648
        %v4474 = vxor.u32 %v4426, 2147483648
        %v4475 = vxor.u32 %v4427, 2147483648
        %v4476 = vxor.u32 %v4428, 2147483648
        %v4477 = vxor.u32 %v4429, 2147483648
        %v4478 = vxor.u32 %v4430, 2147483648
        %v4479 = vxor.u32 %v4431, 2147483648
        %v4480 = vxor.u32 %v4432, 2147483648
        %v4481 = vxor.u32 %v4433, 2147483648
        %v4482 = vxor.u32 %v4434, 2147483648
        %v4483 = vxor.u32 %v4435, 2147483648
        %v4484 = vxor.u32 %v4436, 2147483648
        %v4485 = vxor.u32 %v4437, 2147483648
        %v4486 = vxor.u32 %v4438, 2147483648
        %v4487 = vxor.u32 %v4439, 2147483648
        %v4488 = vxor.u32 %v4440, 2147483648
        %v4489 = vxor.u32 %v4441, 2147483648
        %v4490 = vxor.u32 %v4442, 2147483648
        %v4491 = vxor.u32 %v4443, 2147483648
        %v4492 = vxor.u32 %v4444, 2147483648
        %v4493 = vxor.u32 %v4445, 2147483648
        %v4494 = vmul.f32 %v4446, 1.442695
        %v4495 = vpow.pop %v4494
        %v4496 = vmul.f32 %v4447, 1.442695
        %v4497 = vpow.pop %v4496
        %v4498 = vmul.f32 %v4448, 1.442695
        %v4499 = vpow.pop %v4498
        %v4500 = vmul.f32 %v4449, 1.442695
        %v4501 = vpow.pop %v4500
        %v4502 = vmul.f32 %v4450, 1.442695
        %v4503 = vpow.pop %v4502
        %v4504 = vmul.f32 %v4451, 1.442695
        %v4505 = vpow.pop %v4504
        %v4506 = vmul.f32 %v4452, 1.442695
        %v4507 = vpow.pop %v4506
        %v4508 = vmul.f32 %v4453, 1.442695
        %v4509 = vpow.pop %v4508
        %v4510 = vmul.f32 %v4454, 1.442695
        %v4511 = vpow.pop %v4510
        %v4512 = vmul.f32 %v4455, 1.442695
        %v4513 = vpow.pop %v4512
        %v4514 = vmul.f32 %v4456, 1.442695
        %v4515 = vpow.pop %v4514
        %v4516 = vmul.f32 %v4457, 1.442695
        %v4517 = vpow.pop %v4516
        %v4518 = vmul.f32 %v4458, 1.442695
        %v4519 = vpow.pop %v4518
        %v4520 = vmul.f32 %v4459, 1.442695
        %v4521 = vpow.pop %v4520
        %v4522 = vmul.f32 %v4460, 1.442695
        %v4523 = vpow.pop %v4522
        %v4524 = vmul.f32 %v4461, 1.442695
        %v4525 = vpow.pop %v4524
        %v4526 = vmul.f32 %v4462, 1.442695
        %v4527 = vpow.pop %v4526
        %v4528 = vmul.f32 %v4463, 1.442695
        %v4529 = vpow.pop %v4528
        %v4530 = vmul.f32 %v4464, 1.442695
        %v4531 = vpow.pop %v4530
        %v4532 = vmul.f32 %v4465, 1.442695
        %v4533 = vpow.pop %v4532
        %v4534 = vmul.f32 %v4466, 1.442695
        %v4535 = vpow.pop %v4534
        %v4536 = vmul.f32 %v4467, 1.442695
        %v4537 = vpow.pop %v4536
        %v4538 = vmul.f32 %v4468, 1.442695
        %v4539 = vpow.pop %v4538
        %v4540 = vmul.f32 %v4469, 1.442695
        %v4541 = vpow.pop %v4540
        %v4542 = vmul.f32 %v4470, 1.442695
        %v4543 = vpow.pop %v4542
        %v4544 = vmul.f32 %v4471, 1.442695
        %v4545 = vpow.pop %v4544
        %v4546 = vmul.f32 %v4472, 1.442695
        %v4547 = vpow.pop %v4546
        %v4548 = vmul.f32 %v4473, 1.442695
        %v4549 = vpow.pop %v4548
        %v4550 = vmul.f32 %v4474, 1.442695
        %v4551 = vpow.pop %v4550
        %v4552 = vmul.f32 %v4475, 1.442695
        %v4553 = vpow.pop %v4552
        %v4554 = vmul.f32 %v4476, 1.442695
        %v4555 = vpow.pop %v4554
        %v4556 = vmul.f32 %v4477, 1.442695
        %v4557 = vpow.pop %v4556
        %v4558 = vmul.f32 %v4478, 1.442695
        %v4559 = vpow.pop %v4558
        %v4560 = vmul.f32 %v4479, 1.442695
        %v4561 = vpow.pop %v4560
        %v4562 = vmul.f32 %v4480, 1.442695
        %v4563 = vpow.pop %v4562
        %v4564 = vmul.f32 %v4481, 1.442695
        %v4565 = vpow.pop %v4564
        %v4566 = vmul.f32 %v4482, 1.442695
        %v4567 = vpow.pop %v4566
        %v4568 = vmul.f32 %v4483, 1.442695
        %v4569 = vpow.pop %v4568
        %v4570 = vmul.f32 %v4484, 1.442695
        %v4571 = vpow.pop %v4570
        %v4572 = vmul.f32 %v4485, 1.442695
        %v4573 = vpow.pop %v4572
        %v4574 = vmul.f32 %v4486, 1.442695
        %v4575 = vpow.pop %v4574
        %v4576 = vmul.f32 %v4487, 1.442695
        %v4577 = vpow.pop %v4576
        %v4578 = vmul.f32 %v4488, 1.442695
        %v4579 = vpow.pop %v4578
        %v4580 = vmul.f32 %v4489, 1.442695
        %v4581 = vpow.pop %v4580
        %v4582 = vmul.f32 %v4490, 1.442695
        %v4583 = vpow.pop %v4582
        %v4584 = vmul.f32 %v4491, 1.442695
        %v4585 = vpow.pop %v4584
        %v4586 = vmul.f32 %v4492, 1.442695
        %v4587 = vpow.pop %v4586
        %v4588 = vmul.f32 %v4493, 1.442695
        %v4589 = vpow.pop %v4588
        %v4590 = vadd.f32 %v4495, 1.0
        %v4591 = vadd.f32 %v4497, 1.0
        %v4592 = vadd.f32 %v4499, 1.0
        %v4593 = vadd.f32 %v4501, 1.0
        %v4594 = vadd.f32 %v4503, 1.0
        %v4595 = vadd.f32 %v4505, 1.0
        %v4596 = vadd.f32 %v4507, 1.0
        %v4597 = vadd.f32 %v4509, 1.0
        %v4598 = vadd.f32 %v4511, 1.0
        %v4599 = vadd.f32 %v4513, 1.0
        %v4600 = vadd.f32 %v4515, 1.0
        %v4601 = vadd.f32 %v4517, 1.0
        %v4602 = vadd.f32 %v4519, 1.0
        %v4603 = vadd.f32 %v4521, 1.0
        %v4604 = vadd.f32 %v4523, 1.0
        %v4605 = vadd.f32 %v4525, 1.0
        %v4606 = vadd.f32 %v4527, 1.0
        %v4607 = vadd.f32 %v4529, 1.0
        %v4608 = vadd.f32 %v4531, 1.0
        %v4609 = vadd.f32 %v4533, 1.0
        %v4610 = vadd.f32 %v4535, 1.0
        %v4611 = vadd.f32 %v4537, 1.0
        %v4612 = vadd.f32 %v4539, 1.0
        %v4613 = vadd.f32 %v4541, 1.0
        %v4614 = vadd.f32 %v4543, 1.0
        %v4615 = vadd.f32 %v4545, 1.0
        %v4616 = vadd.f32 %v4547, 1.0
        %v4617 = vadd.f32 %v4549, 1.0
        %v4618 = vadd.f32 %v4551, 1.0
        %v4619 = vadd.f32 %v4553, 1.0
        %v4620 = vadd.f32 %v4555, 1.0
        %v4621 = vadd.f32 %v4557, 1.0
        %v4622 = vadd.f32 %v4559, 1.0
        %v4623 = vadd.f32 %v4561, 1.0
        %v4624 = vadd.f32 %v4563, 1.0
        %v4625 = vadd.f32 %v4565, 1.0
        %v4626 = vadd.f32 %v4567, 1.0
        %v4627 = vadd.f32 %v4569, 1.0
        %v4628 = vadd.f32 %v4571, 1.0
        %v4629 = vadd.f32 %v4573, 1.0
        %v4630 = vadd.f32 %v4575, 1.0
        %v4631 = vadd.f32 %v4577, 1.0
        %v4632 = vadd.f32 %v4579, 1.0
        %v4633 = vadd.f32 %v4581, 1.0
        %v4634 = vadd.f32 %v4583, 1.0
        %v4635 = vadd.f32 %v4585, 1.0
        %v4636 = vadd.f32 %v4587, 1.0
        %v4637 = vadd.f32 %v4589, 1.0
        %v4638 = vrcp.pop %v4590
        %v4639 = vmul.f32 %v4590, %v4638
        %v4640 = vsub.f32 1.0, %v4639
        %v4641 = vmul.f32 %v4638, %v4640
        %v4642 = vadd.f32 %v4638, %v4641
        %vm4643 = vweird.f32 %v4590
        %vm4644 = vweird.f32 %v4638
        %vm4645 = vmor %vm4643, %vm4644
        %v4646 = vsel %vm4645, %v4638, %v4642
        %v4647 = vand.u32 2147483647, %v4590
        %vm4648 = vcmp.eq.f32.partialorder %v4647, 8.507059e+37
        %v4649 = vand.u32 %v4590, 2147483648
        %v4650 = vor.u32 1.1754944e-38, %v4649
        %v4651 = vsel %vm4648, %v4650, %v4646
        %v4652 = vmul.f32 1.0, %v4651
        %v4653 = vrcp.pop %v4591
        %v4654 = vmul.f32 %v4591, %v4653
        %v4655 = vsub.f32 1.0, %v4654
        %v4656 = vmul.f32 %v4653, %v4655
        %v4657 = vadd.f32 %v4653, %v4656
        %vm4658 = vweird.f32 %v4591
        %vm4659 = vweird.f32 %v4653
        %vm4660 = vmor %vm4658, %vm4659
        %v4661 = vsel %vm4660, %v4653, %v4657
        %v4662 = vand.u32 2147483647, %v4591
        %vm4663 = vcmp.eq.f32.partialorder %v4662, 8.507059e+37
        %v4664 = vand.u32 %v4591, 2147483648
        %v4665 = vor.u32 1.1754944e-38, %v4664
        %v4666 = vsel %vm4663, %v4665, %v4661
        %v4667 = vmul.f32 1.0, %v4666
        %v4668 = vrcp.pop %v4592
        %v4669 = vmul.f32 %v4592, %v4668
        %v4670 = vsub.f32 1.0, %v4669
        %v4671 = vmul.f32 %v4668, %v4670
        %v4672 = vadd.f32 %v4668, %v4671
        %vm4673 = vweird.f32 %v4592
        %vm4674 = vweird.f32 %v4668
        %vm4675 = vmor %vm4673, %vm4674
        %v4676 = vsel %vm4675, %v4668, %v4672
        %v4677 = vand.u32 2147483647, %v4592
        %vm4678 = vcmp.eq.f32.partialorder %v4677, 8.507059e+37
        %v4679 = vand.u32 %v4592, 2147483648
        %v4680 = vor.u32 1.1754944e-38, %v4679
        %v4681 = vsel %vm4678, %v4680, %v4676
        %v4682 = vmul.f32 1.0, %v4681
        %v4683 = vrcp.pop %v4593
        %v4684 = vmul.f32 %v4593, %v4683
        %v4685 = vsub.f32 1.0, %v4684
        %v4686 = vmul.f32 %v4683, %v4685
        %v4687 = vadd.f32 %v4683, %v4686
        %vm4688 = vweird.f32 %v4593
        %vm4689 = vweird.f32 %v4683
        %vm4690 = vmor %vm4688, %vm4689
        %v4691 = vsel %vm4690, %v4683, %v4687
        %v4692 = vand.u32 2147483647, %v4593
        %vm4693 = vcmp.eq.f32.partialorder %v4692, 8.507059e+37
        %v4694 = vand.u32 %v4593, 2147483648
        %v4695 = vor.u32 1.1754944e-38, %v4694
        %v4696 = vsel %vm4693, %v4695, %v4691
        %v4697 = vmul.f32 1.0, %v4696
        %v4698 = vrcp.pop %v4594
        %v4699 = vmul.f32 %v4594, %v4698
        %v4700 = vsub.f32 1.0, %v4699
        %v4701 = vmul.f32 %v4698, %v4700
        %v4702 = vadd.f32 %v4698, %v4701
        %vm4703 = vweird.f32 %v4594
        %vm4704 = vweird.f32 %v4698
        %vm4705 = vmor %vm4703, %vm4704
        %v4706 = vsel %vm4705, %v4698, %v4702
        %v4707 = vand.u32 2147483647, %v4594
        %vm4708 = vcmp.eq.f32.partialorder %v4707, 8.507059e+37
        %v4709 = vand.u32 %v4594, 2147483648
        %v4710 = vor.u32 1.1754944e-38, %v4709
        %v4711 = vsel %vm4708, %v4710, %v4706
        %v4712 = vmul.f32 1.0, %v4711
        %v4713 = vrcp.pop %v4595
        %v4714 = vmul.f32 %v4595, %v4713
        %v4715 = vsub.f32 1.0, %v4714
        %v4716 = vmul.f32 %v4713, %v4715
        %v4717 = vadd.f32 %v4713, %v4716
        %vm4718 = vweird.f32 %v4595
        %vm4719 = vweird.f32 %v4713
        %vm4720 = vmor %vm4718, %vm4719
        %v4721 = vsel %vm4720, %v4713, %v4717
        %v4722 = vand.u32 2147483647, %v4595
        %vm4723 = vcmp.eq.f32.partialorder %v4722, 8.507059e+37
        %v4724 = vand.u32 %v4595, 2147483648
        %v4725 = vor.u32 1.1754944e-38, %v4724
        %v4726 = vsel %vm4723, %v4725, %v4721
        %v4727 = vmul.f32 1.0, %v4726
        %v4728 = vrcp.pop %v4596
        %v4729 = vmul.f32 %v4596, %v4728
        %v4730 = vsub.f32 1.0, %v4729
        %v4731 = vmul.f32 %v4728, %v4730
        %v4732 = vadd.f32 %v4728, %v4731
        %vm4733 = vweird.f32 %v4596
        %vm4734 = vweird.f32 %v4728
        %vm4735 = vmor %vm4733, %vm4734
        %v4736 = vsel %vm4735, %v4728, %v4732
        %v4737 = vand.u32 2147483647, %v4596
        %vm4738 = vcmp.eq.f32.partialorder %v4737, 8.507059e+37
        %v4739 = vand.u32 %v4596, 2147483648
        %v4740 = vor.u32 1.1754944e-38, %v4739
        %v4741 = vsel %vm4738, %v4740, %v4736
        %v4742 = vmul.f32 1.0, %v4741
        %v4743 = vrcp.pop %v4597
        %v4744 = vmul.f32 %v4597, %v4743
        %v4745 = vsub.f32 1.0, %v4744
        %v4746 = vmul.f32 %v4743, %v4745
        %v4747 = vadd.f32 %v4743, %v4746
        %vm4748 = vweird.f32 %v4597
        %vm4749 = vweird.f32 %v4743
        %vm4750 = vmor %vm4748, %vm4749
        %v4751 = vsel %vm4750, %v4743, %v4747
        %v4752 = vand.u32 2147483647, %v4597
        %vm4753 = vcmp.eq.f32.partialorder %v4752, 8.507059e+37
        %v4754 = vand.u32 %v4597, 2147483648
        %v4755 = vor.u32 1.1754944e-38, %v4754
        %v4756 = vsel %vm4753, %v4755, %v4751
        %v4757 = vmul.f32 1.0, %v4756
        %v4758 = vrcp.pop %v4598
        %v4759 = vmul.f32 %v4598, %v4758
        %v4760 = vsub.f32 1.0, %v4759
        %v4761 = vmul.f32 %v4758, %v4760
        %v4762 = vadd.f32 %v4758, %v4761
        %vm4763 = vweird.f32 %v4598
        %vm4764 = vweird.f32 %v4758
        %vm4765 = vmor %vm4763, %vm4764
        %v4766 = vsel %vm4765, %v4758, %v4762
        %v4767 = vand.u32 2147483647, %v4598
        %vm4768 = vcmp.eq.f32.partialorder %v4767, 8.507059e+37
        %v4769 = vand.u32 %v4598, 2147483648
        %v4770 = vor.u32 1.1754944e-38, %v4769
        %v4771 = vsel %vm4768, %v4770, %v4766
        %v4772 = vmul.f32 1.0, %v4771
        %v4773 = vrcp.pop %v4599
        %v4774 = vmul.f32 %v4599, %v4773
        %v4775 = vsub.f32 1.0, %v4774
        %v4776 = vmul.f32 %v4773, %v4775
        %v4777 = vadd.f32 %v4773, %v4776
        %vm4778 = vweird.f32 %v4599
        %vm4779 = vweird.f32 %v4773
        %vm4780 = vmor %vm4778, %vm4779
        %v4781 = vsel %vm4780, %v4773, %v4777
        %v4782 = vand.u32 2147483647, %v4599
        %vm4783 = vcmp.eq.f32.partialorder %v4782, 8.507059e+37
        %v4784 = vand.u32 %v4599, 2147483648
        %v4785 = vor.u32 1.1754944e-38, %v4784
        %v4786 = vsel %vm4783, %v4785, %v4781
        %v4787 = vmul.f32 1.0, %v4786
        %v4788 = vrcp.pop %v4600
        %v4789 = vmul.f32 %v4600, %v4788
        %v4790 = vsub.f32 1.0, %v4789
        %v4791 = vmul.f32 %v4788, %v4790
        %v4792 = vadd.f32 %v4788, %v4791
        %vm4793 = vweird.f32 %v4600
        %vm4794 = vweird.f32 %v4788
        %vm4795 = vmor %vm4793, %vm4794
        %v4796 = vsel %vm4795, %v4788, %v4792
        %v4797 = vand.u32 2147483647, %v4600
        %vm4798 = vcmp.eq.f32.partialorder %v4797, 8.507059e+37
        %v4799 = vand.u32 %v4600, 2147483648
        %v4800 = vor.u32 1.1754944e-38, %v4799
        %v4801 = vsel %vm4798, %v4800, %v4796
        %v4802 = vmul.f32 1.0, %v4801
        %v4803 = vrcp.pop %v4601
        %v4804 = vmul.f32 %v4601, %v4803
        %v4805 = vsub.f32 1.0, %v4804
        %v4806 = vmul.f32 %v4803, %v4805
        %v4807 = vadd.f32 %v4803, %v4806
        %vm4808 = vweird.f32 %v4601
        %vm4809 = vweird.f32 %v4803
        %vm4810 = vmor %vm4808, %vm4809
        %v4811 = vsel %vm4810, %v4803, %v4807
        %v4812 = vand.u32 2147483647, %v4601
        %vm4813 = vcmp.eq.f32.partialorder %v4812, 8.507059e+37
        %v4814 = vand.u32 %v4601, 2147483648
        %v4815 = vor.u32 1.1754944e-38, %v4814
        %v4816 = vsel %vm4813, %v4815, %v4811
        %v4817 = vmul.f32 1.0, %v4816
        %v4818 = vrcp.pop %v4602
        %v4819 = vmul.f32 %v4602, %v4818
        %v4820 = vsub.f32 1.0, %v4819
        %v4821 = vmul.f32 %v4818, %v4820
        %v4822 = vadd.f32 %v4818, %v4821
        %vm4823 = vweird.f32 %v4602
        %vm4824 = vweird.f32 %v4818
        %vm4825 = vmor %vm4823, %vm4824
        %v4826 = vsel %vm4825, %v4818, %v4822
        %v4827 = vand.u32 2147483647, %v4602
        %vm4828 = vcmp.eq.f32.partialorder %v4827, 8.507059e+37
        %v4829 = vand.u32 %v4602, 2147483648
        %v4830 = vor.u32 1.1754944e-38, %v4829
        %v4831 = vsel %vm4828, %v4830, %v4826
        %v4832 = vmul.f32 1.0, %v4831
        %v4833 = vrcp.pop %v4603
        %v4834 = vmul.f32 %v4603, %v4833
        %v4835 = vsub.f32 1.0, %v4834
        %v4836 = vmul.f32 %v4833, %v4835
        %v4837 = vadd.f32 %v4833, %v4836
        %vm4838 = vweird.f32 %v4603
        %vm4839 = vweird.f32 %v4833
        %vm4840 = vmor %vm4838, %vm4839
        %v4841 = vsel %vm4840, %v4833, %v4837
        %v4842 = vand.u32 2147483647, %v4603
        %vm4843 = vcmp.eq.f32.partialorder %v4842, 8.507059e+37
        %v4844 = vand.u32 %v4603, 2147483648
        %v4845 = vor.u32 1.1754944e-38, %v4844
        %v4846 = vsel %vm4843, %v4845, %v4841
        %v4847 = vmul.f32 1.0, %v4846
        %v4848 = vrcp.pop %v4604
        %v4849 = vmul.f32 %v4604, %v4848
        %v4850 = vsub.f32 1.0, %v4849
        %v4851 = vmul.f32 %v4848, %v4850
        %v4852 = vadd.f32 %v4848, %v4851
        %vm4853 = vweird.f32 %v4604
        %vm4854 = vweird.f32 %v4848
        %vm4855 = vmor %vm4853, %vm4854
        %v4856 = vsel %vm4855, %v4848, %v4852
        %v4857 = vand.u32 2147483647, %v4604
        %vm4858 = vcmp.eq.f32.partialorder %v4857, 8.507059e+37
        %v4859 = vand.u32 %v4604, 2147483648
        %v4860 = vor.u32 1.1754944e-38, %v4859
        %v4861 = vsel %vm4858, %v4860, %v4856
        %v4862 = vmul.f32 1.0, %v4861
        %v4863 = vrcp.pop %v4605
        %v4864 = vmul.f32 %v4605, %v4863
        %v4865 = vsub.f32 1.0, %v4864
        %v4866 = vmul.f32 %v4863, %v4865
        %v4867 = vadd.f32 %v4863, %v4866
        %vm4868 = vweird.f32 %v4605
        %vm4869 = vweird.f32 %v4863
        %vm4870 = vmor %vm4868, %vm4869
        %v4871 = vsel %vm4870, %v4863, %v4867
        %v4872 = vand.u32 2147483647, %v4605
        %vm4873 = vcmp.eq.f32.partialorder %v4872, 8.507059e+37
        %v4874 = vand.u32 %v4605, 2147483648
        %v4875 = vor.u32 1.1754944e-38, %v4874
        %v4876 = vsel %vm4873, %v4875, %v4871
        %v4877 = vmul.f32 1.0, %v4876
        %v4878 = vrcp.pop %v4606
        %v4879 = vmul.f32 %v4606, %v4878
        %v4880 = vsub.f32 1.0, %v4879
        %v4881 = vmul.f32 %v4878, %v4880
        %v4882 = vadd.f32 %v4878, %v4881
        %vm4883 = vweird.f32 %v4606
        %vm4884 = vweird.f32 %v4878
        %vm4885 = vmor %vm4883, %vm4884
        %v4886 = vsel %vm4885, %v4878, %v4882
        %v4887 = vand.u32 2147483647, %v4606
        %vm4888 = vcmp.eq.f32.partialorder %v4887, 8.507059e+37
        %v4889 = vand.u32 %v4606, 2147483648
        %v4890 = vor.u32 1.1754944e-38, %v4889
        %v4891 = vsel %vm4888, %v4890, %v4886
        %v4892 = vmul.f32 1.0, %v4891
        %v4893 = vrcp.pop %v4607
        %v4894 = vmul.f32 %v4607, %v4893
        %v4895 = vsub.f32 1.0, %v4894
        %v4896 = vmul.f32 %v4893, %v4895
        %v4897 = vadd.f32 %v4893, %v4896
        %vm4898 = vweird.f32 %v4607
        %vm4899 = vweird.f32 %v4893
        %vm4900 = vmor %vm4898, %vm4899
        %v4901 = vsel %vm4900, %v4893, %v4897
        %v4902 = vand.u32 2147483647, %v4607
        %vm4903 = vcmp.eq.f32.partialorder %v4902, 8.507059e+37
        %v4904 = vand.u32 %v4607, 2147483648
        %v4905 = vor.u32 1.1754944e-38, %v4904
        %v4906 = vsel %vm4903, %v4905, %v4901
        %v4907 = vmul.f32 1.0, %v4906
        %v4908 = vrcp.pop %v4608
        %v4909 = vmul.f32 %v4608, %v4908
        %v4910 = vsub.f32 1.0, %v4909
        %v4911 = vmul.f32 %v4908, %v4910
        %v4912 = vadd.f32 %v4908, %v4911
        %vm4913 = vweird.f32 %v4608
        %vm4914 = vweird.f32 %v4908
        %vm4915 = vmor %vm4913, %vm4914
        %v4916 = vsel %vm4915, %v4908, %v4912
        %v4917 = vand.u32 2147483647, %v4608
        %vm4918 = vcmp.eq.f32.partialorder %v4917, 8.507059e+37
        %v4919 = vand.u32 %v4608, 2147483648
        %v4920 = vor.u32 1.1754944e-38, %v4919
        %v4921 = vsel %vm4918, %v4920, %v4916
        %v4922 = vmul.f32 1.0, %v4921
        %v4923 = vrcp.pop %v4609
        %v4924 = vmul.f32 %v4609, %v4923
        %v4925 = vsub.f32 1.0, %v4924
        %v4926 = vmul.f32 %v4923, %v4925
        %v4927 = vadd.f32 %v4923, %v4926
        %vm4928 = vweird.f32 %v4609
        %vm4929 = vweird.f32 %v4923
        %vm4930 = vmor %vm4928, %vm4929
        %v4931 = vsel %vm4930, %v4923, %v4927
        %v4932 = vand.u32 2147483647, %v4609
        %vm4933 = vcmp.eq.f32.partialorder %v4932, 8.507059e+37
        %v4934 = vand.u32 %v4609, 2147483648
        %v4935 = vor.u32 1.1754944e-38, %v4934
        %v4936 = vsel %vm4933, %v4935, %v4931
        %v4937 = vmul.f32 1.0, %v4936
        %v4938 = vrcp.pop %v4610
        %v4939 = vmul.f32 %v4610, %v4938
        %v4940 = vsub.f32 1.0, %v4939
        %v4941 = vmul.f32 %v4938, %v4940
        %v4942 = vadd.f32 %v4938, %v4941
        %vm4943 = vweird.f32 %v4610
        %vm4944 = vweird.f32 %v4938
        %vm4945 = vmor %vm4943, %vm4944
        %v4946 = vsel %vm4945, %v4938, %v4942
        %v4947 = vand.u32 2147483647, %v4610
        %vm4948 = vcmp.eq.f32.partialorder %v4947, 8.507059e+37
        %v4949 = vand.u32 %v4610, 2147483648
        %v4950 = vor.u32 1.1754944e-38, %v4949
        %v4951 = vsel %vm4948, %v4950, %v4946
        %v4952 = vmul.f32 1.0, %v4951
        %v4953 = vrcp.pop %v4611
        %v4954 = vmul.f32 %v4611, %v4953
        %v4955 = vsub.f32 1.0, %v4954
        %v4956 = vmul.f32 %v4953, %v4955
        %v4957 = vadd.f32 %v4953, %v4956
        %vm4958 = vweird.f32 %v4611
        %vm4959 = vweird.f32 %v4953
        %vm4960 = vmor %vm4958, %vm4959
        %v4961 = vsel %vm4960, %v4953, %v4957
        %v4962 = vand.u32 2147483647, %v4611
        %vm4963 = vcmp.eq.f32.partialorder %v4962, 8.507059e+37
        %v4964 = vand.u32 %v4611, 2147483648
        %v4965 = vor.u32 1.1754944e-38, %v4964
        %v4966 = vsel %vm4963, %v4965, %v4961
        %v4967 = vmul.f32 1.0, %v4966
        %v4968 = vrcp.pop %v4612
        %v4969 = vmul.f32 %v4612, %v4968
        %v4970 = vsub.f32 1.0, %v4969
        %v4971 = vmul.f32 %v4968, %v4970
        %v4972 = vadd.f32 %v4968, %v4971
        %vm4973 = vweird.f32 %v4612
        %vm4974 = vweird.f32 %v4968
        %vm4975 = vmor %vm4973, %vm4974
        %v4976 = vsel %vm4975, %v4968, %v4972
        %v4977 = vand.u32 2147483647, %v4612
        %vm4978 = vcmp.eq.f32.partialorder %v4977, 8.507059e+37
        %v4979 = vand.u32 %v4612, 2147483648
        %v4980 = vor.u32 1.1754944e-38, %v4979
        %v4981 = vsel %vm4978, %v4980, %v4976
        %v4982 = vmul.f32 1.0, %v4981
        %v4983 = vrcp.pop %v4613
        %v4984 = vmul.f32 %v4613, %v4983
        %v4985 = vsub.f32 1.0, %v4984
        %v4986 = vmul.f32 %v4983, %v4985
        %v4987 = vadd.f32 %v4983, %v4986
        %vm4988 = vweird.f32 %v4613
        %vm4989 = vweird.f32 %v4983
        %vm4990 = vmor %vm4988, %vm4989
        %v4991 = vsel %vm4990, %v4983, %v4987
        %v4992 = vand.u32 2147483647, %v4613
        %vm4993 = vcmp.eq.f32.partialorder %v4992, 8.507059e+37
        %v4994 = vand.u32 %v4613, 2147483648
        %v4995 = vor.u32 1.1754944e-38, %v4994
        %v4996 = vsel %vm4993, %v4995, %v4991
        %v4997 = vmul.f32 1.0, %v4996
        %v4998 = vrcp.pop %v4614
        %v4999 = vmul.f32 %v4614, %v4998
        %v5000 = vsub.f32 1.0, %v4999
        %v5001 = vmul.f32 %v4998, %v5000
        %v5002 = vadd.f32 %v4998, %v5001
        %vm5003 = vweird.f32 %v4614
        %vm5004 = vweird.f32 %v4998
        %vm5005 = vmor %vm5003, %vm5004
        %v5006 = vsel %vm5005, %v4998, %v5002
        %v5007 = vand.u32 2147483647, %v4614
        %vm5008 = vcmp.eq.f32.partialorder %v5007, 8.507059e+37
        %v5009 = vand.u32 %v4614, 2147483648
        %v5010 = vor.u32 1.1754944e-38, %v5009
        %v5011 = vsel %vm5008, %v5010, %v5006
        %v5012 = vmul.f32 1.0, %v5011
        %v5013 = vrcp.pop %v4615
        %v5014 = vmul.f32 %v4615, %v5013
        %v5015 = vsub.f32 1.0, %v5014
        %v5016 = vmul.f32 %v5013, %v5015
        %v5017 = vadd.f32 %v5013, %v5016
        %vm5018 = vweird.f32 %v4615
        %vm5019 = vweird.f32 %v5013
        %vm5020 = vmor %vm5018, %vm5019
        %v5021 = vsel %vm5020, %v5013, %v5017
        %v5022 = vand.u32 2147483647, %v4615
        %vm5023 = vcmp.eq.f32.partialorder %v5022, 8.507059e+37
        %v5024 = vand.u32 %v4615, 2147483648
        %v5025 = vor.u32 1.1754944e-38, %v5024
        %v5026 = vsel %vm5023, %v5025, %v5021
        %v5027 = vmul.f32 1.0, %v5026
        %v5028 = vrcp.pop %v4616
        %v5029 = vmul.f32 %v4616, %v5028
        %v5030 = vsub.f32 1.0, %v5029
        %v5031 = vmul.f32 %v5028, %v5030
        %v5032 = vadd.f32 %v5028, %v5031
        %vm5033 = vweird.f32 %v4616
        %vm5034 = vweird.f32 %v5028
        %vm5035 = vmor %vm5033, %vm5034
        %v5036 = vsel %vm5035, %v5028, %v5032
        %v5037 = vand.u32 2147483647, %v4616
        %vm5038 = vcmp.eq.f32.partialorder %v5037, 8.507059e+37
        %v5039 = vand.u32 %v4616, 2147483648
        %v5040 = vor.u32 1.1754944e-38, %v5039
        %v5041 = vsel %vm5038, %v5040, %v5036
        %v5042 = vmul.f32 1.0, %v5041
        %v5043 = vrcp.pop %v4617
        %v5044 = vmul.f32 %v4617, %v5043
        %v5045 = vsub.f32 1.0, %v5044
        %v5046 = vmul.f32 %v5043, %v5045
        %v5047 = vadd.f32 %v5043, %v5046
        %vm5048 = vweird.f32 %v4617
        %vm5049 = vweird.f32 %v5043
        %vm5050 = vmor %vm5048, %vm5049
        %v5051 = vsel %vm5050, %v5043, %v5047
        %v5052 = vand.u32 2147483647, %v4617
        %vm5053 = vcmp.eq.f32.partialorder %v5052, 8.507059e+37
        %v5054 = vand.u32 %v4617, 2147483648
        %v5055 = vor.u32 1.1754944e-38, %v5054
        %v5056 = vsel %vm5053, %v5055, %v5051
        %v5057 = vmul.f32 1.0, %v5056
        %v5058 = vrcp.pop %v4618
        %v5059 = vmul.f32 %v4618, %v5058
        %v5060 = vsub.f32 1.0, %v5059
        %v5061 = vmul.f32 %v5058, %v5060
        %v5062 = vadd.f32 %v5058, %v5061
        %vm5063 = vweird.f32 %v4618
        %vm5064 = vweird.f32 %v5058
        %vm5065 = vmor %vm5063, %vm5064
        %v5066 = vsel %vm5065, %v5058, %v5062
        %v5067 = vand.u32 2147483647, %v4618
        %vm5068 = vcmp.eq.f32.partialorder %v5067, 8.507059e+37
        %v5069 = vand.u32 %v4618, 2147483648
        %v5070 = vor.u32 1.1754944e-38, %v5069
        %v5071 = vsel %vm5068, %v5070, %v5066
        %v5072 = vmul.f32 1.0, %v5071
        %v5073 = vrcp.pop %v4619
        %v5074 = vmul.f32 %v4619, %v5073
        %v5075 = vsub.f32 1.0, %v5074
        %v5076 = vmul.f32 %v5073, %v5075
        %v5077 = vadd.f32 %v5073, %v5076
        %vm5078 = vweird.f32 %v4619
        %vm5079 = vweird.f32 %v5073
        %vm5080 = vmor %vm5078, %vm5079
        %v5081 = vsel %vm5080, %v5073, %v5077
        %v5082 = vand.u32 2147483647, %v4619
        %vm5083 = vcmp.eq.f32.partialorder %v5082, 8.507059e+37
        %v5084 = vand.u32 %v4619, 2147483648
        %v5085 = vor.u32 1.1754944e-38, %v5084
        %v5086 = vsel %vm5083, %v5085, %v5081
        %v5087 = vmul.f32 1.0, %v5086
        %v5088 = vrcp.pop %v4620
        %v5089 = vmul.f32 %v4620, %v5088
        %v5090 = vsub.f32 1.0, %v5089
        %v5091 = vmul.f32 %v5088, %v5090
        %v5092 = vadd.f32 %v5088, %v5091
        %vm5093 = vweird.f32 %v4620
        %vm5094 = vweird.f32 %v5088
        %vm5095 = vmor %vm5093, %vm5094
        %v5096 = vsel %vm5095, %v5088, %v5092
        %v5097 = vand.u32 2147483647, %v4620
        %vm5098 = vcmp.eq.f32.partialorder %v5097, 8.507059e+37
        %v5099 = vand.u32 %v4620, 2147483648
        %v5100 = vor.u32 1.1754944e-38, %v5099
        %v5101 = vsel %vm5098, %v5100, %v5096
        %v5102 = vmul.f32 1.0, %v5101
        %v5103 = vrcp.pop %v4621
        %v5104 = vmul.f32 %v4621, %v5103
        %v5105 = vsub.f32 1.0, %v5104
        %v5106 = vmul.f32 %v5103, %v5105
        %v5107 = vadd.f32 %v5103, %v5106
        %vm5108 = vweird.f32 %v4621
        %vm5109 = vweird.f32 %v5103
        %vm5110 = vmor %vm5108, %vm5109
        %v5111 = vsel %vm5110, %v5103, %v5107
        %v5112 = vand.u32 2147483647, %v4621
        %vm5113 = vcmp.eq.f32.partialorder %v5112, 8.507059e+37
        %v5114 = vand.u32 %v4621, 2147483648
        %v5115 = vor.u32 1.1754944e-38, %v5114
        %v5116 = vsel %vm5113, %v5115, %v5111
        %v5117 = vmul.f32 1.0, %v5116
        %v5118 = vrcp.pop %v4622
        %v5119 = vmul.f32 %v4622, %v5118
        %v5120 = vsub.f32 1.0, %v5119
        %v5121 = vmul.f32 %v5118, %v5120
        %v5122 = vadd.f32 %v5118, %v5121
        %vm5123 = vweird.f32 %v4622
        %vm5124 = vweird.f32 %v5118
        %vm5125 = vmor %vm5123, %vm5124
        %v5126 = vsel %vm5125, %v5118, %v5122
        %v5127 = vand.u32 2147483647, %v4622
        %vm5128 = vcmp.eq.f32.partialorder %v5127, 8.507059e+37
        %v5129 = vand.u32 %v4622, 2147483648
        %v5130 = vor.u32 1.1754944e-38, %v5129
        %v5131 = vsel %vm5128, %v5130, %v5126
        %v5132 = vmul.f32 1.0, %v5131
        %v5133 = vrcp.pop %v4623
        %v5134 = vmul.f32 %v4623, %v5133
        %v5135 = vsub.f32 1.0, %v5134
        %v5136 = vmul.f32 %v5133, %v5135
        %v5137 = vadd.f32 %v5133, %v5136
        %vm5138 = vweird.f32 %v4623
        %vm5139 = vweird.f32 %v5133
        %vm5140 = vmor %vm5138, %vm5139
        %v5141 = vsel %vm5140, %v5133, %v5137
        %v5142 = vand.u32 2147483647, %v4623
        %vm5143 = vcmp.eq.f32.partialorder %v5142, 8.507059e+37
        %v5144 = vand.u32 %v4623, 2147483648
        %v5145 = vor.u32 1.1754944e-38, %v5144
        %v5146 = vsel %vm5143, %v5145, %v5141
        %v5147 = vmul.f32 1.0, %v5146
        %v5148 = vrcp.pop %v4624
        %v5149 = vmul.f32 %v4624, %v5148
        %v5150 = vsub.f32 1.0, %v5149
        %v5151 = vmul.f32 %v5148, %v5150
        %v5152 = vadd.f32 %v5148, %v5151
        %vm5153 = vweird.f32 %v4624
        %vm5154 = vweird.f32 %v5148
        %vm5155 = vmor %vm5153, %vm5154
        %v5156 = vsel %vm5155, %v5148, %v5152
        %v5157 = vand.u32 2147483647, %v4624
        %vm5158 = vcmp.eq.f32.partialorder %v5157, 8.507059e+37
        %v5159 = vand.u32 %v4624, 2147483648
        %v5160 = vor.u32 1.1754944e-38, %v5159
        %v5161 = vsel %vm5158, %v5160, %v5156
        %v5162 = vmul.f32 1.0, %v5161
        %v5163 = vrcp.pop %v4625
        %v5164 = vmul.f32 %v4625, %v5163
        %v5165 = vsub.f32 1.0, %v5164
        %v5166 = vmul.f32 %v5163, %v5165
        %v5167 = vadd.f32 %v5163, %v5166
        %vm5168 = vweird.f32 %v4625
        %vm5169 = vweird.f32 %v5163
        %vm5170 = vmor %vm5168, %vm5169
        %v5171 = vsel %vm5170, %v5163, %v5167
        %v5172 = vand.u32 2147483647, %v4625
        %vm5173 = vcmp.eq.f32.partialorder %v5172, 8.507059e+37
        %v5174 = vand.u32 %v4625, 2147483648
        %v5175 = vor.u32 1.1754944e-38, %v5174
        %v5176 = vsel %vm5173, %v5175, %v5171
        %v5177 = vmul.f32 1.0, %v5176
        %v5178 = vrcp.pop %v4626
        %v5179 = vmul.f32 %v4626, %v5178
        %v5180 = vsub.f32 1.0, %v5179
        %v5181 = vmul.f32 %v5178, %v5180
        %v5182 = vadd.f32 %v5178, %v5181
        %vm5183 = vweird.f32 %v4626
        %vm5184 = vweird.f32 %v5178
        %vm5185 = vmor %vm5183, %vm5184
        %v5186 = vsel %vm5185, %v5178, %v5182
        %v5187 = vand.u32 2147483647, %v4626
        %vm5188 = vcmp.eq.f32.partialorder %v5187, 8.507059e+37
        %v5189 = vand.u32 %v4626, 2147483648
        %v5190 = vor.u32 1.1754944e-38, %v5189
        %v5191 = vsel %vm5188, %v5190, %v5186
        %v5192 = vmul.f32 1.0, %v5191
        %v5193 = vrcp.pop %v4627
        %v5194 = vmul.f32 %v4627, %v5193
        %v5195 = vsub.f32 1.0, %v5194
        %v5196 = vmul.f32 %v5193, %v5195
        %v5197 = vadd.f32 %v5193, %v5196
        %vm5198 = vweird.f32 %v4627
        %vm5199 = vweird.f32 %v5193
        %vm5200 = vmor %vm5198, %vm5199
        %v5201 = vsel %vm5200, %v5193, %v5197
        %v5202 = vand.u32 2147483647, %v4627
        %vm5203 = vcmp.eq.f32.partialorder %v5202, 8.507059e+37
        %v5204 = vand.u32 %v4627, 2147483648
        %v5205 = vor.u32 1.1754944e-38, %v5204
        %v5206 = vsel %vm5203, %v5205, %v5201
        %v5207 = vmul.f32 1.0, %v5206
        %v5208 = vrcp.pop %v4628
        %v5209 = vmul.f32 %v4628, %v5208
        %v5210 = vsub.f32 1.0, %v5209
        %v5211 = vmul.f32 %v5208, %v5210
        %v5212 = vadd.f32 %v5208, %v5211
        %vm5213 = vweird.f32 %v4628
        %vm5214 = vweird.f32 %v5208
        %vm5215 = vmor %vm5213, %vm5214
        %v5216 = vsel %vm5215, %v5208, %v5212
        %v5217 = vand.u32 2147483647, %v4628
        %vm5218 = vcmp.eq.f32.partialorder %v5217, 8.507059e+37
        %v5219 = vand.u32 %v4628, 2147483648
        %v5220 = vor.u32 1.1754944e-38, %v5219
        %v5221 = vsel %vm5218, %v5220, %v5216
        %v5222 = vmul.f32 1.0, %v5221
        %v5223 = vrcp.pop %v4629
        %v5224 = vmul.f32 %v4629, %v5223
        %v5225 = vsub.f32 1.0, %v5224
        %v5226 = vmul.f32 %v5223, %v5225
        %v5227 = vadd.f32 %v5223, %v5226
        %vm5228 = vweird.f32 %v4629
        %vm5229 = vweird.f32 %v5223
        %vm5230 = vmor %vm5228, %vm5229
        %v5231 = vsel %vm5230, %v5223, %v5227
        %v5232 = vand.u32 2147483647, %v4629
        %vm5233 = vcmp.eq.f32.partialorder %v5232, 8.507059e+37
        %v5234 = vand.u32 %v4629, 2147483648
        %v5235 = vor.u32 1.1754944e-38, %v5234
        %v5236 = vsel %vm5233, %v5235, %v5231
        %v5237 = vmul.f32 1.0, %v5236
        %v5238 = vrcp.pop %v4630
        %v5239 = vmul.f32 %v4630, %v5238
        %v5240 = vsub.f32 1.0, %v5239
        %v5241 = vmul.f32 %v5238, %v5240
        %v5242 = vadd.f32 %v5238, %v5241
        %vm5243 = vweird.f32 %v4630
        %vm5244 = vweird.f32 %v5238
        %vm5245 = vmor %vm5243, %vm5244
        %v5246 = vsel %vm5245, %v5238, %v5242
        %v5247 = vand.u32 2147483647, %v4630
        %vm5248 = vcmp.eq.f32.partialorder %v5247, 8.507059e+37
        %v5249 = vand.u32 %v4630, 2147483648
        %v5250 = vor.u32 1.1754944e-38, %v5249
        %v5251 = vsel %vm5248, %v5250, %v5246
        %v5252 = vmul.f32 1.0, %v5251
        %v5253 = vrcp.pop %v4631
        %v5254 = vmul.f32 %v4631, %v5253
        %v5255 = vsub.f32 1.0, %v5254
        %v5256 = vmul.f32 %v5253, %v5255
        %v5257 = vadd.f32 %v5253, %v5256
        %vm5258 = vweird.f32 %v4631
        %vm5259 = vweird.f32 %v5253
        %vm5260 = vmor %vm5258, %vm5259
        %v5261 = vsel %vm5260, %v5253, %v5257
        %v5262 = vand.u32 2147483647, %v4631
        %vm5263 = vcmp.eq.f32.partialorder %v5262, 8.507059e+37
        %v5264 = vand.u32 %v4631, 2147483648
        %v5265 = vor.u32 1.1754944e-38, %v5264
        %v5266 = vsel %vm5263, %v5265, %v5261
        %v5267 = vmul.f32 1.0, %v5266
        %v5268 = vrcp.pop %v4632
        %v5269 = vmul.f32 %v4632, %v5268
        %v5270 = vsub.f32 1.0, %v5269
        %v5271 = vmul.f32 %v5268, %v5270
        %v5272 = vadd.f32 %v5268, %v5271
        %vm5273 = vweird.f32 %v4632
        %vm5274 = vweird.f32 %v5268
        %vm5275 = vmor %vm5273, %vm5274
        %v5276 = vsel %vm5275, %v5268, %v5272
        %v5277 = vand.u32 2147483647, %v4632
        %vm5278 = vcmp.eq.f32.partialorder %v5277, 8.507059e+37
        %v5279 = vand.u32 %v4632, 2147483648
        %v5280 = vor.u32 1.1754944e-38, %v5279
        %v5281 = vsel %vm5278, %v5280, %v5276
        %v5282 = vmul.f32 1.0, %v5281
        %v5283 = vrcp.pop %v4633
        %v5284 = vmul.f32 %v4633, %v5283
        %v5285 = vsub.f32 1.0, %v5284
        %v5286 = vmul.f32 %v5283, %v5285
        %v5287 = vadd.f32 %v5283, %v5286
        %vm5288 = vweird.f32 %v4633
        %vm5289 = vweird.f32 %v5283
        %vm5290 = vmor %vm5288, %vm5289
        %v5291 = vsel %vm5290, %v5283, %v5287
        %v5292 = vand.u32 2147483647, %v4633
        %vm5293 = vcmp.eq.f32.partialorder %v5292, 8.507059e+37
        %v5294 = vand.u32 %v4633, 2147483648
        %v5295 = vor.u32 1.1754944e-38, %v5294
        %v5296 = vsel %vm5293, %v5295, %v5291
        %v5297 = vmul.f32 1.0, %v5296
        %v5298 = vrcp.pop %v4634
        %v5299 = vmul.f32 %v4634, %v5298
        %v5300 = vsub.f32 1.0, %v5299
        %v5301 = vmul.f32 %v5298, %v5300
        %v5302 = vadd.f32 %v5298, %v5301
        %vm5303 = vweird.f32 %v4634
        %vm5304 = vweird.f32 %v5298
        %vm5305 = vmor %vm5303, %vm5304
        %v5306 = vsel %vm5305, %v5298, %v5302
        %v5307 = vand.u32 2147483647, %v4634
        %vm5308 = vcmp.eq.f32.partialorder %v5307, 8.507059e+37
        %v5309 = vand.u32 %v4634, 2147483648
        %v5310 = vor.u32 1.1754944e-38, %v5309
        %v5311 = vsel %vm5308, %v5310, %v5306
        %v5312 = vmul.f32 1.0, %v5311
        %v5313 = vrcp.pop %v4635
        %v5314 = vmul.f32 %v4635, %v5313
        %v5315 = vsub.f32 1.0, %v5314
        %v5316 = vmul.f32 %v5313, %v5315
        %v5317 = vadd.f32 %v5313, %v5316
        %vm5318 = vweird.f32 %v4635
        %vm5319 = vweird.f32 %v5313
        %vm5320 = vmor %vm5318, %vm5319
        %v5321 = vsel %vm5320, %v5313, %v5317
        %v5322 = vand.u32 2147483647, %v4635
        %vm5323 = vcmp.eq.f32.partialorder %v5322, 8.507059e+37
        %v5324 = vand.u32 %v4635, 2147483648
        %v5325 = vor.u32 1.1754944e-38, %v5324
        %v5326 = vsel %vm5323, %v5325, %v5321
        %v5327 = vmul.f32 1.0, %v5326
        %v5328 = vrcp.pop %v4636
        %v5329 = vmul.f32 %v4636, %v5328
        %v5330 = vsub.f32 1.0, %v5329
        %v5331 = vmul.f32 %v5328, %v5330
        %v5332 = vadd.f32 %v5328, %v5331
        %vm5333 = vweird.f32 %v4636
        %vm5334 = vweird.f32 %v5328
        %vm5335 = vmor %vm5333, %vm5334
        %v5336 = vsel %vm5335, %v5328, %v5332
        %v5337 = vand.u32 2147483647, %v4636
        %vm5338 = vcmp.eq.f32.partialorder %v5337, 8.507059e+37
        %v5339 = vand.u32 %v4636, 2147483648
        %v5340 = vor.u32 1.1754944e-38, %v5339
        %v5341 = vsel %vm5338, %v5340, %v5336
        %v5342 = vmul.f32 1.0, %v5341
        %v5343 = vrcp.pop %v4637
        %v5344 = vmul.f32 %v4637, %v5343
        %v5345 = vsub.f32 1.0, %v5344
        %v5346 = vmul.f32 %v5343, %v5345
        %v5347 = vadd.f32 %v5343, %v5346
        %vm5348 = vweird.f32 %v4637
        %vm5349 = vweird.f32 %v5343
        %vm5350 = vmor %vm5348, %vm5349
        %v5351 = vsel %vm5350, %v5343, %v5347
        %v5352 = vand.u32 2147483647, %v4637
        %vm5353 = vcmp.eq.f32.partialorder %v5352, 8.507059e+37
        %v5354 = vand.u32 %v4637, 2147483648
        %v5355 = vor.u32 1.1754944e-38, %v5354
        %v5356 = vsel %vm5353, %v5355, %v5351
        %v5357 = vmul.f32 1.0, %v5356
        %v5358 = vmul.f32 %v4398, %v4652
        %v5359 = vmul.f32 %v4399, %v4667
        %v5360 = vmul.f32 %v4400, %v4682
        %v5361 = vmul.f32 %v4401, %v4697
        %v5362 = vmul.f32 %v4402, %v4712
        %v5363 = vmul.f32 %v4403, %v4727
        %v5364 = vmul.f32 %v4404, %v4742
        %v5365 = vmul.f32 %v4405, %v4757
        %v5366 = vmul.f32 %v4406, %v4772
        %v5367 = vmul.f32 %v4407, %v4787
        %v5368 = vmul.f32 %v4408, %v4802
        %v5369 = vmul.f32 %v4409, %v4817
        %v5370 = vmul.f32 %v4410, %v4832
        %v5371 = vmul.f32 %v4411, %v4847
        %v5372 = vmul.f32 %v4412, %v4862
        %v5373 = vmul.f32 %v4413, %v4877
        %v5374 = vmul.f32 %v4414, %v4892
        %v5375 = vmul.f32 %v4415, %v4907
        %v5376 = vmul.f32 %v4416, %v4922
        %v5377 = vmul.f32 %v4417, %v4937
        %v5378 = vmul.f32 %v4418, %v4952
        %v5379 = vmul.f32 %v4419, %v4967
        %v5380 = vmul.f32 %v4420, %v4982
        %v5381 = vmul.f32 %v4421, %v4997
        %v5382 = vmul.f32 %v4422, %v5012
        %v5383 = vmul.f32 %v4423, %v5027
        %v5384 = vmul.f32 %v4424, %v5042
        %v5385 = vmul.f32 %v4425, %v5057
        %v5386 = vmul.f32 %v4426, %v5072
        %v5387 = vmul.f32 %v4427, %v5087
        %v5388 = vmul.f32 %v4428, %v5102
        %v5389 = vmul.f32 %v4429, %v5117
        %v5390 = vmul.f32 %v4430, %v5132
        %v5391 = vmul.f32 %v4431, %v5147
        %v5392 = vmul.f32 %v4432, %v5162
        %v5393 = vmul.f32 %v4433, %v5177
        %v5394 = vmul.f32 %v4434, %v5192
        %v5395 = vmul.f32 %v4435, %v5207
        %v5396 = vmul.f32 %v4436, %v5222
        %v5397 = vmul.f32 %v4437, %v5237
        %v5398 = vmul.f32 %v4438, %v5252
        %v5399 = vmul.f32 %v4439, %v5267
        %v5400 = vmul.f32 %v4440, %v5282
        %v5401 = vmul.f32 %v4441, %v5297
        %v5402 = vmul.f32 %v4442, %v5312
        %v5403 = vmul.f32 %v4443, %v5327
        %v5404 = vmul.f32 %v4444, %v5342
        %v5405 = vmul.f32 %v4445, %v5357
        %v5406 = vld [vmem:[%s6] sm:$0x1]
        %v5408 = vperm.slane %v5406, 0
        %5409 = vrot.lane.b32.xlu0 %v5408, 32
        %v5410 = vpop.permute.xlu0 %5409
        %v5412 = vmul.f32 %v5358, %v5410
        %v5413 = vmul.f32 %v5359, %v5410
        %v5414 = vmul.f32 %v5360, %v5410
        %v5415 = vmul.f32 %v5361, %v5410
        %v5416 = vmul.f32 %v5362, %v5410
        %v5417 = vmul.f32 %v5363, %v5410
        %v5418 = vmul.f32 %v5364, %v5410
        %v5419 = vmul.f32 %v5365, %v5410
        %v5420 = vmul.f32 %v5366, %v5410
        %v5421 = vmul.f32 %v5367, %v5410
        %v5422 = vmul.f32 %v5368, %v5410
        %v5423 = vmul.f32 %v5369, %v5410
        %v5424 = vmul.f32 %v5370, %v5410
        %v5425 = vmul.f32 %v5371, %v5410
        %v5426 = vmul.f32 %v5372, %v5410
        %v5427 = vmul.f32 %v5373, %v5410
        %v5428 = vmul.f32 %v5374, %v5410
        %v5429 = vmul.f32 %v5375, %v5410
        %v5430 = vmul.f32 %v5376, %v5410
        %v5431 = vmul.f32 %v5377, %v5410
        %v5432 = vmul.f32 %v5378, %v5410
        %v5433 = vmul.f32 %v5379, %v5410
        %v5434 = vmul.f32 %v5380, %v5410
        %v5435 = vmul.f32 %v5381, %v5410
        %v5436 = vmul.f32 %v5382, %v5410
        %v5437 = vmul.f32 %v5383, %v5410
        %v5438 = vmul.f32 %v5384, %v5410
        %v5439 = vmul.f32 %v5385, %v5410
        %v5440 = vmul.f32 %v5386, %v5410
        %v5441 = vmul.f32 %v5387, %v5410
        %v5442 = vmul.f32 %v5388, %v5410
        %v5443 = vmul.f32 %v5389, %v5410
        %v5444 = vmul.f32 %v5390, %v5410
        %v5445 = vmul.f32 %v5391, %v5410
        %v5446 = vmul.f32 %v5392, %v5410
        %v5447 = vmul.f32 %v5393, %v5410
        %v5448 = vmul.f32 %v5394, %v5410
        %v5449 = vmul.f32 %v5395, %v5410
        %v5450 = vmul.f32 %v5396, %v5410
        %v5451 = vmul.f32 %v5397, %v5410
        %v5452 = vmul.f32 %v5398, %v5410
        %v5453 = vmul.f32 %v5399, %v5410
        %v5454 = vmul.f32 %v5400, %v5410
        %v5455 = vmul.f32 %v5401, %v5410
        %v5456 = vmul.f32 %v5402, %v5410
        %v5457 = vmul.f32 %v5403, %v5410
        %v5458 = vmul.f32 %v5404, %v5410
        %v5459 = vmul.f32 %v5405, %v5410
        %5508 = vrot.lane.b32.xlu0 %v5412, 96
        %v5509 = vpop.permute.xlu0 %5508
        %5510 = vrot.lane.b32.xlu0 %v5413, 96
        %v5511 = vpop.permute.xlu0 %5510
        %5512 = vrot.lane.b32.xlu0 %v5414, 96
        %v5513 = vpop.permute.xlu0 %5512
        %5514 = vrot.lane.b32.xlu0 %v5415, 96
        %v5515 = vpop.permute.xlu0 %5514
        %5516 = vrot.lane.b32.xlu0 %v5416, 96
        %v5517 = vpop.permute.xlu0 %5516
        %5518 = vrot.lane.b32.xlu0 %v5417, 96
        %v5519 = vpop.permute.xlu0 %5518
        %5520 = vrot.lane.b32.xlu0 %v5418, 96
        %v5521 = vpop.permute.xlu0 %5520
        %5522 = vrot.lane.b32.xlu0 %v5419, 96
        %v5523 = vpop.permute.xlu0 %5522
        %5524 = vrot.lane.b32.xlu0 %v5420, 96
        %v5525 = vpop.permute.xlu0 %5524
        %5526 = vrot.lane.b32.xlu0 %v5421, 96
        %v5527 = vpop.permute.xlu0 %5526
        %5528 = vrot.lane.b32.xlu0 %v5422, 96
        %v5529 = vpop.permute.xlu0 %5528
        %5530 = vrot.lane.b32.xlu0 %v5423, 96
        %v5531 = vpop.permute.xlu0 %5530
        %5532 = vrot.lane.b32.xlu0 %v5424, 96
        %v5533 = vpop.permute.xlu0 %5532
        %5534 = vrot.lane.b32.xlu0 %v5425, 96
        %v5535 = vpop.permute.xlu0 %5534
        %5536 = vrot.lane.b32.xlu0 %v5426, 96
        %v5537 = vpop.permute.xlu0 %5536
        %5538 = vrot.lane.b32.xlu0 %v5427, 96
        %v5539 = vpop.permute.xlu0 %5538
        %5540 = vrot.lane.b32.xlu0 %v5428, 96
        %v5541 = vpop.permute.xlu0 %5540
        %5542 = vrot.lane.b32.xlu0 %v5429, 96
        %v5543 = vpop.permute.xlu0 %5542
        %5544 = vrot.lane.b32.xlu0 %v5430, 96
        %v5545 = vpop.permute.xlu0 %5544
        %5546 = vrot.lane.b32.xlu0 %v5431, 96
        %v5547 = vpop.permute.xlu0 %5546
        %5548 = vrot.lane.b32.xlu0 %v5432, 96
        %v5549 = vpop.permute.xlu0 %5548
        %5550 = vrot.lane.b32.xlu0 %v5433, 96
        %v5551 = vpop.permute.xlu0 %5550
        %5552 = vrot.lane.b32.xlu0 %v5434, 96
        %v5553 = vpop.permute.xlu0 %5552
        %5554 = vrot.lane.b32.xlu0 %v5435, 96
        %v5555 = vpop.permute.xlu0 %5554
        %5556 = vrot.lane.b32.xlu0 %v5436, 96
        %v5557 = vpop.permute.xlu0 %5556
        %5558 = vrot.lane.b32.xlu0 %v5437, 96
        %v5559 = vpop.permute.xlu0 %5558
        %5560 = vrot.lane.b32.xlu0 %v5438, 96
        %v5561 = vpop.permute.xlu0 %5560
        %5562 = vrot.lane.b32.xlu0 %v5439, 96
        %v5563 = vpop.permute.xlu0 %5562
        %5564 = vrot.lane.b32.xlu0 %v5440, 96
        %v5565 = vpop.permute.xlu0 %5564
        %5566 = vrot.lane.b32.xlu0 %v5441, 96
        %v5567 = vpop.permute.xlu0 %5566
        %5568 = vrot.lane.b32.xlu0 %v5442, 96
        %v5569 = vpop.permute.xlu0 %5568
        %5570 = vrot.lane.b32.xlu0 %v5443, 96
        %v5571 = vpop.permute.xlu0 %5570
        %5572 = vrot.lane.b32.xlu0 %v5444, 96
        %v5573 = vpop.permute.xlu0 %5572
        %5574 = vrot.lane.b32.xlu0 %v5445, 96
        %v5575 = vpop.permute.xlu0 %5574
        %5576 = vrot.lane.b32.xlu0 %v5446, 96
        %v5577 = vpop.permute.xlu0 %5576
        %5578 = vrot.lane.b32.xlu0 %v5447, 96
        %v5579 = vpop.permute.xlu0 %5578
        %5580 = vrot.lane.b32.xlu0 %v5448, 96
        %v5581 = vpop.permute.xlu0 %5580
        %5582 = vrot.lane.b32.xlu0 %v5449, 96
        %v5583 = vpop.permute.xlu0 %5582
        %5584 = vrot.lane.b32.xlu0 %v5450, 96
        %v5585 = vpop.permute.xlu0 %5584
        %5586 = vrot.lane.b32.xlu0 %v5451, 96
        %v5587 = vpop.permute.xlu0 %5586
        %5588 = vrot.lane.b32.xlu0 %v5452, 96
        %v5589 = vpop.permute.xlu0 %5588
        %5590 = vrot.lane.b32.xlu0 %v5453, 96
        %v5591 = vpop.permute.xlu0 %5590
        %5592 = vrot.lane.b32.xlu0 %v5454, 96
        %v5593 = vpop.permute.xlu0 %5592
        %5594 = vrot.lane.b32.xlu0 %v5455, 96
        %v5595 = vpop.permute.xlu0 %5594
        %5596 = vrot.lane.b32.xlu0 %v5456, 96
        %v5597 = vpop.permute.xlu0 %5596
        %5598 = vrot.lane.b32.xlu0 %v5457, 96
        %v5599 = vpop.permute.xlu0 %5598
        %5600 = vrot.lane.b32.xlu0 %v5458, 96
        %v5601 = vpop.permute.xlu0 %5600
        %5602 = vrot.lane.b32.xlu0 %v5459, 96
        %v5603 = vpop.permute.xlu0 %5602
        %v5652 = vsel %vm1882, %v5509, 0.0
        %5653 = vadd.xlane.f32.xlu0 %v5652
        %v5654 = vpop.xlane.xlu0 %5653
        %v5655 = vsel %vm1882, %v5511, 0.0
        %5656 = vadd.xlane.f32.xlu0 %v5655
        %v5657 = vpop.xlane.xlu0 %5656
        %v5658 = vsel %vm1882, %v5513, 0.0
        %5659 = vadd.xlane.f32.xlu0 %v5658
        %v5660 = vpop.xlane.xlu0 %5659
        %v5661 = vsel %vm1882, %v5515, 0.0
        %5662 = vadd.xlane.f32.xlu0 %v5661
        %v5663 = vpop.xlane.xlu0 %5662
        %v5664 = vsel %vm1882, %v5517, 0.0
        %5665 = vadd.xlane.f32.xlu0 %v5664
        %v5666 = vpop.xlane.xlu0 %5665
        %v5667 = vsel %vm1882, %v5519, 0.0
        %5668 = vadd.xlane.f32.xlu0 %v5667
        %v5669 = vpop.xlane.xlu0 %5668
        %v5670 = vsel %vm1882, %v5521, 0.0
        %5671 = vadd.xlane.f32.xlu0 %v5670
        %v5672 = vpop.xlane.xlu0 %5671
        %v5673 = vsel %vm1882, %v5523, 0.0
        %5674 = vadd.xlane.f32.xlu0 %v5673
        %v5675 = vpop.xlane.xlu0 %5674
        %v5676 = vsel %vm1882, %v5525, 0.0
        %5677 = vadd.xlane.f32.xlu0 %v5676
        %v5678 = vpop.xlane.xlu0 %5677
        %v5679 = vsel %vm1882, %v5527, 0.0
        %5680 = vadd.xlane.f32.xlu0 %v5679
        %v5681 = vpop.xlane.xlu0 %5680
        %v5682 = vsel %vm1882, %v5529, 0.0
        %5683 = vadd.xlane.f32.xlu0 %v5682
        %v5684 = vpop.xlane.xlu0 %5683
        %v5685 = vsel %vm1882, %v5531, 0.0
        %5686 = vadd.xlane.f32.xlu0 %v5685
        %v5687 = vpop.xlane.xlu0 %5686
        %v5688 = vsel %vm1882, %v5533, 0.0
        %5689 = vadd.xlane.f32.xlu0 %v5688
        %v5690 = vpop.xlane.xlu0 %5689
        %v5691 = vsel %vm1882, %v5535, 0.0
        %5692 = vadd.xlane.f32.xlu0 %v5691
        %v5693 = vpop.xlane.xlu0 %5692
        %v5694 = vsel %vm1882, %v5537, 0.0
        %5695 = vadd.xlane.f32.xlu0 %v5694
        %v5696 = vpop.xlane.xlu0 %5695
        %v5697 = vsel %vm1882, %v5539, 0.0
        %5698 = vadd.xlane.f32.xlu0 %v5697
        %v5699 = vpop.xlane.xlu0 %5698
        %v5700 = vsel %vm1882, %v5541, 0.0
        %5701 = vadd.xlane.f32.xlu0 %v5700
        %v5702 = vpop.xlane.xlu0 %5701
        %v5703 = vsel %vm1882, %v5543, 0.0
        %5704 = vadd.xlane.f32.xlu0 %v5703
        %v5705 = vpop.xlane.xlu0 %5704
        %v5706 = vsel %vm1882, %v5545, 0.0
        %5707 = vadd.xlane.f32.xlu0 %v5706
        %v5708 = vpop.xlane.xlu0 %5707
        %v5709 = vsel %vm1882, %v5547, 0.0
        %5710 = vadd.xlane.f32.xlu0 %v5709
        %v5711 = vpop.xlane.xlu0 %5710
        %v5712 = vsel %vm1882, %v5549, 0.0
        %5713 = vadd.xlane.f32.xlu0 %v5712
        %v5714 = vpop.xlane.xlu0 %5713
        %v5715 = vsel %vm1882, %v5551, 0.0
        %5716 = vadd.xlane.f32.xlu0 %v5715
        %v5717 = vpop.xlane.xlu0 %5716
        %v5718 = vsel %vm1882, %v5553, 0.0
        %5719 = vadd.xlane.f32.xlu0 %v5718
        %v5720 = vpop.xlane.xlu0 %5719
        %v5721 = vsel %vm1882, %v5555, 0.0
        %5722 = vadd.xlane.f32.xlu0 %v5721
        %v5723 = vpop.xlane.xlu0 %5722
        %v5724 = vsel %vm1882, %v5557, 0.0
        %5725 = vadd.xlane.f32.xlu0 %v5724
        %v5726 = vpop.xlane.xlu0 %5725
        %v5727 = vsel %vm1882, %v5559, 0.0
        %5728 = vadd.xlane.f32.xlu0 %v5727
        %v5729 = vpop.xlane.xlu0 %5728
        %v5730 = vsel %vm1882, %v5561, 0.0
        %5731 = vadd.xlane.f32.xlu0 %v5730
        %v5732 = vpop.xlane.xlu0 %5731
        %v5733 = vsel %vm1882, %v5563, 0.0
        %5734 = vadd.xlane.f32.xlu0 %v5733
        %v5735 = vpop.xlane.xlu0 %5734
        %v5736 = vsel %vm1882, %v5565, 0.0
        %5737 = vadd.xlane.f32.xlu0 %v5736
        %v5738 = vpop.xlane.xlu0 %5737
        %v5739 = vsel %vm1882, %v5567, 0.0
        %5740 = vadd.xlane.f32.xlu0 %v5739
        %v5741 = vpop.xlane.xlu0 %5740
        %v5742 = vsel %vm1882, %v5569, 0.0
        %5743 = vadd.xlane.f32.xlu0 %v5742
        %v5744 = vpop.xlane.xlu0 %5743
        %v5745 = vsel %vm1882, %v5571, 0.0
        %5746 = vadd.xlane.f32.xlu0 %v5745
        %v5747 = vpop.xlane.xlu0 %5746
        %v5748 = vsel %vm1882, %v5573, 0.0
        %5749 = vadd.xlane.f32.xlu0 %v5748
        %v5750 = vpop.xlane.xlu0 %5749
        %v5751 = vsel %vm1882, %v5575, 0.0
        %5752 = vadd.xlane.f32.xlu0 %v5751
        %v5753 = vpop.xlane.xlu0 %5752
        %v5754 = vsel %vm1882, %v5577, 0.0
        %5755 = vadd.xlane.f32.xlu0 %v5754
        %v5756 = vpop.xlane.xlu0 %5755
        %v5757 = vsel %vm1882, %v5579, 0.0
        %5758 = vadd.xlane.f32.xlu0 %v5757
        %v5759 = vpop.xlane.xlu0 %5758
        %v5760 = vsel %vm1882, %v5581, 0.0
        %5761 = vadd.xlane.f32.xlu0 %v5760
        %v5762 = vpop.xlane.xlu0 %5761
        %v5763 = vsel %vm1882, %v5583, 0.0
        %5764 = vadd.xlane.f32.xlu0 %v5763
        %v5765 = vpop.xlane.xlu0 %5764
        %v5766 = vsel %vm1882, %v5585, 0.0
        %5767 = vadd.xlane.f32.xlu0 %v5766
        %v5768 = vpop.xlane.xlu0 %5767
        %v5769 = vsel %vm1882, %v5587, 0.0
        %5770 = vadd.xlane.f32.xlu0 %v5769
        %v5771 = vpop.xlane.xlu0 %5770
        %v5772 = vsel %vm1882, %v5589, 0.0
        %5773 = vadd.xlane.f32.xlu0 %v5772
        %v5774 = vpop.xlane.xlu0 %5773
        %v5775 = vsel %vm1882, %v5591, 0.0
        %5776 = vadd.xlane.f32.xlu0 %v5775
        %v5777 = vpop.xlane.xlu0 %5776
        %v5778 = vsel %vm1882, %v5593, 0.0
        %5779 = vadd.xlane.f32.xlu0 %v5778
        %v5780 = vpop.xlane.xlu0 %5779
        %v5781 = vsel %vm1882, %v5595, 0.0
        %5782 = vadd.xlane.f32.xlu0 %v5781
        %v5783 = vpop.xlane.xlu0 %5782
        %v5784 = vsel %vm1882, %v5597, 0.0
        %5785 = vadd.xlane.f32.xlu0 %v5784
        %v5786 = vpop.xlane.xlu0 %5785
        %v5787 = vsel %vm1882, %v5599, 0.0
        %5788 = vadd.xlane.f32.xlu0 %v5787
        %v5789 = vpop.xlane.xlu0 %5788
        %v5790 = vsel %vm1882, %v5601, 0.0
        %5791 = vadd.xlane.f32.xlu0 %v5790
        %v5792 = vpop.xlane.xlu0 %5791
        %v5793 = vsel %vm1882, %v5603, 0.0
        %5794 = vadd.xlane.f32.xlu0 %v5793
        %v5795 = vpop.xlane.xlu0 %5794
        %s5796 = sld [smem:[#allocation3]]
        %v5797 = vstv %s5796
        %v5798 = vadd.f32 %v5654, %v5797
        %v5799 = vadd.f32 %v5657, %v5797
        %v5800 = vadd.f32 %v5660, %v5797
        %v5801 = vadd.f32 %v5663, %v5797
        %v5802 = vadd.f32 %v5666, %v5797
        %v5803 = vadd.f32 %v5669, %v5797
        %v5804 = vadd.f32 %v5672, %v5797
        %v5805 = vadd.f32 %v5675, %v5797
        %v5806 = vadd.f32 %v5678, %v5797
        %v5807 = vadd.f32 %v5681, %v5797
        %v5808 = vadd.f32 %v5684, %v5797
        %v5809 = vadd.f32 %v5687, %v5797
        %v5810 = vadd.f32 %v5690, %v5797
        %v5811 = vadd.f32 %v5693, %v5797
        %v5812 = vadd.f32 %v5696, %v5797
        %v5813 = vadd.f32 %v5699, %v5797
        %v5814 = vadd.f32 %v5702, %v5797
        %v5815 = vadd.f32 %v5705, %v5797
        %v5816 = vadd.f32 %v5708, %v5797
        %v5817 = vadd.f32 %v5711, %v5797
        %v5818 = vadd.f32 %v5714, %v5797
        %v5819 = vadd.f32 %v5717, %v5797
        %v5820 = vadd.f32 %v5720, %v5797
        %v5821 = vadd.f32 %v5723, %v5797
        %v5822 = vadd.f32 %v5726, %v5797
        %v5823 = vadd.f32 %v5729, %v5797
        %v5824 = vadd.f32 %v5732, %v5797
        %v5825 = vadd.f32 %v5735, %v5797
        %v5826 = vadd.f32 %v5738, %v5797
        %v5827 = vadd.f32 %v5741, %v5797
        %v5828 = vadd.f32 %v5744, %v5797
        %v5829 = vadd.f32 %v5747, %v5797
        %v5830 = vadd.f32 %v5750, %v5797
        %v5831 = vadd.f32 %v5753, %v5797
        %v5832 = vadd.f32 %v5756, %v5797
        %v5833 = vadd.f32 %v5759, %v5797
        %v5834 = vadd.f32 %v5762, %v5797
        %v5835 = vadd.f32 %v5765, %v5797
        %v5836 = vadd.f32 %v5768, %v5797
        %v5837 = vadd.f32 %v5771, %v5797
        %v5838 = vadd.f32 %v5774, %v5797
        %v5839 = vadd.f32 %v5777, %v5797
        %v5840 = vadd.f32 %v5780, %v5797
        %v5841 = vadd.f32 %v5783, %v5797
        %v5842 = vadd.f32 %v5786, %v5797
        %v5843 = vadd.f32 %v5789, %v5797
        %v5844 = vadd.f32 %v5792, %v5797
        %v5845 = vadd.f32 %v5795, %v5797
        %5846 = vset.pattern.permute.xlu0 1
        %5847 = vperm.xlu0 %5846, %v3398
        %v5848 = vpop.permute.xlu0 %5847
        %5850 = vset.pattern.permute.xlu0 1
        %5851 = vperm.xlu0 %5850, %v3413
        %v5852 = vpop.permute.xlu0 %5851
        %5854 = vset.pattern.permute.xlu0 1
        %5855 = vperm.xlu0 %5854, %v3428
        %v5856 = vpop.permute.xlu0 %5855
        %5858 = vset.pattern.permute.xlu0 1
        %5859 = vperm.xlu0 %5858, %v3443
        %v5860 = vpop.permute.xlu0 %5859
        %5862 = vset.pattern.permute.xlu0 1
        %5863 = vperm.xlu0 %5862, %v3458
        %v5864 = vpop.permute.xlu0 %5863
        %5866 = vset.pattern.permute.xlu0 1
        %5867 = vperm.xlu0 %5866, %v3473
        %v5868 = vpop.permute.xlu0 %5867
        %5870 = vset.pattern.permute.xlu0 1
        %5871 = vperm.xlu0 %5870, %v3488
        %v5872 = vpop.permute.xlu0 %5871
        %5874 = vset.pattern.permute.xlu0 1
        %5875 = vperm.xlu0 %5874, %v3503
        %v5876 = vpop.permute.xlu0 %5875
        %5878 = vset.pattern.permute.xlu0 1
        %5879 = vperm.xlu0 %5878, %v3518
        %v5880 = vpop.permute.xlu0 %5879
        %5882 = vset.pattern.permute.xlu0 1
        %5883 = vperm.xlu0 %5882, %v3533
        %v5884 = vpop.permute.xlu0 %5883
        %5886 = vset.pattern.permute.xlu0 1
        %5887 = vperm.xlu0 %5886, %v3548
        %v5888 = vpop.permute.xlu0 %5887
        %5890 = vset.pattern.permute.xlu0 1
        %5891 = vperm.xlu0 %5890, %v3563
        %v5892 = vpop.permute.xlu0 %5891
        %5894 = vset.pattern.permute.xlu0 1
        %5895 = vperm.xlu0 %5894, %v3578
        %v5896 = vpop.permute.xlu0 %5895
        %5898 = vset.pattern.permute.xlu0 1
        %5899 = vperm.xlu0 %5898, %v3593
        %v5900 = vpop.permute.xlu0 %5899
        %5902 = vset.pattern.permute.xlu0 1
        %5903 = vperm.xlu0 %5902, %v3608
        %v5904 = vpop.permute.xlu0 %5903
        %5906 = vset.pattern.permute.xlu0 1
        %5907 = vperm.xlu0 %5906, %v3623
        %v5908 = vpop.permute.xlu0 %5907
        %5910 = vset.pattern.permute.xlu0 1
        %5911 = vperm.xlu0 %5910, %v3638
        %v5912 = vpop.permute.xlu0 %5911
        %5914 = vset.pattern.permute.xlu0 1
        %5915 = vperm.xlu0 %5914, %v3653
        %v5916 = vpop.permute.xlu0 %5915
        %5918 = vset.pattern.permute.xlu0 1
        %5919 = vperm.xlu0 %5918, %v3668
        %v5920 = vpop.permute.xlu0 %5919
        %5922 = vset.pattern.permute.xlu0 1
        %5923 = vperm.xlu0 %5922, %v3683
        %v5924 = vpop.permute.xlu0 %5923
        %5926 = vset.pattern.permute.xlu0 1
        %5927 = vperm.xlu0 %5926, %v3698
        %v5928 = vpop.permute.xlu0 %5927
        %5930 = vset.pattern.permute.xlu0 1
        %5931 = vperm.xlu0 %5930, %v3713
        %v5932 = vpop.permute.xlu0 %5931
        %5934 = vset.pattern.permute.xlu0 1
        %5935 = vperm.xlu0 %5934, %v3728
        %v5936 = vpop.permute.xlu0 %5935
        %5938 = vset.pattern.permute.xlu0 1
        %5939 = vperm.xlu0 %5938, %v3743
        %v5940 = vpop.permute.xlu0 %5939
        %5942 = vset.pattern.permute.xlu0 1
        %5943 = vperm.xlu0 %5942, %v3758
        %v5944 = vpop.permute.xlu0 %5943
        %5946 = vset.pattern.permute.xlu0 1
        %5947 = vperm.xlu0 %5946, %v3773
        %v5948 = vpop.permute.xlu0 %5947
        %5950 = vset.pattern.permute.xlu0 1
        %5951 = vperm.xlu0 %5950, %v3788
        %v5952 = vpop.permute.xlu0 %5951
        %5954 = vset.pattern.permute.xlu0 1
        %5955 = vperm.xlu0 %5954, %v3803
        %v5956 = vpop.permute.xlu0 %5955
        %5958 = vset.pattern.permute.xlu0 1
        %5959 = vperm.xlu0 %5958, %v3818
        %v5960 = vpop.permute.xlu0 %5959
        %5962 = vset.pattern.permute.xlu0 1
        %5963 = vperm.xlu0 %5962, %v3833
        %v5964 = vpop.permute.xlu0 %5963
        %5966 = vset.pattern.permute.xlu0 1
        %5967 = vperm.xlu0 %5966, %v3848
        %v5968 = vpop.permute.xlu0 %5967
        %5970 = vset.pattern.permute.xlu0 1
        %5971 = vperm.xlu0 %5970, %v3863
        %v5972 = vpop.permute.xlu0 %5971
        %5974 = vset.pattern.permute.xlu0 1
        %5975 = vperm.xlu0 %5974, %v3878
        %v5976 = vpop.permute.xlu0 %5975
        %5978 = vset.pattern.permute.xlu0 1
        %5979 = vperm.xlu0 %5978, %v3893
        %v5980 = vpop.permute.xlu0 %5979
        %5982 = vset.pattern.permute.xlu0 1
        %5983 = vperm.xlu0 %5982, %v3908
        %v5984 = vpop.permute.xlu0 %5983
        %5986 = vset.pattern.permute.xlu0 1
        %5987 = vperm.xlu0 %5986, %v3923
        %v5988 = vpop.permute.xlu0 %5987
        %5990 = vset.pattern.permute.xlu0 1
        %5991 = vperm.xlu0 %5990, %v3938
        %v5992 = vpop.permute.xlu0 %5991
        %5994 = vset.pattern.permute.xlu0 1
        %5995 = vperm.xlu0 %5994, %v3953
        %v5996 = vpop.permute.xlu0 %5995
        %5998 = vset.pattern.permute.xlu0 1
        %5999 = vperm.xlu0 %5998, %v3968
        %v6000 = vpop.permute.xlu0 %5999
        %6002 = vset.pattern.permute.xlu0 1
        %6003 = vperm.xlu0 %6002, %v3983
        %v6004 = vpop.permute.xlu0 %6003
        %6006 = vset.pattern.permute.xlu0 1
        %6007 = vperm.xlu0 %6006, %v3998
        %v6008 = vpop.permute.xlu0 %6007
        %6010 = vset.pattern.permute.xlu0 1
        %6011 = vperm.xlu0 %6010, %v4013
        %v6012 = vpop.permute.xlu0 %6011
        %6014 = vset.pattern.permute.xlu0 1
        %6015 = vperm.xlu0 %6014, %v4028
        %v6016 = vpop.permute.xlu0 %6015
        %6018 = vset.pattern.permute.xlu0 1
        %6019 = vperm.xlu0 %6018, %v4043
        %v6020 = vpop.permute.xlu0 %6019
        %6022 = vset.pattern.permute.xlu0 1
        %6023 = vperm.xlu0 %6022, %v4058
        %v6024 = vpop.permute.xlu0 %6023
        %6026 = vset.pattern.permute.xlu0 1
        %6027 = vperm.xlu0 %6026, %v4073
        %v6028 = vpop.permute.xlu0 %6027
        %6030 = vset.pattern.permute.xlu0 1
        %6031 = vperm.xlu0 %6030, %v4088
        %v6032 = vpop.permute.xlu0 %6031
        %6034 = vset.pattern.permute.xlu0 1
        %6035 = vperm.xlu0 %6034, %v4103
        %v6036 = vpop.permute.xlu0 %6035
        %v6038 = vmul.f32 %v5848, %v699
        %v6039 = vmul.f32 %v5852, %v701
        %v6040 = vmul.f32 %v5856, %v704
        %v6041 = vmul.f32 %v5860, %v706
        %v6042 = vmul.f32 %v5864, %v709
        %v6043 = vmul.f32 %v5868, %v711
        %v6044 = vmul.f32 %v5872, %v714
        %v6045 = vmul.f32 %v5876, %v716
        %v6046 = vmul.f32 %v5880, %v719
        %v6047 = vmul.f32 %v5884, %v721
        %v6048 = vmul.f32 %v5888, %v724
        %v6049 = vmul.f32 %v5892, %v726
        %v6050 = vmul.f32 %v5896, %v729
        %v6051 = vmul.f32 %v5900, %v731
        %v6052 = vmul.f32 %v5904, %v734
        %v6053 = vmul.f32 %v5908, %v736
        %v6054 = vmul.f32 %v5912, %v739
        %v6055 = vmul.f32 %v5916, %v741
        %v6056 = vmul.f32 %v5920, %v744
        %v6057 = vmul.f32 %v5924, %v746
        %v6058 = vmul.f32 %v5928, %v749
        %v6059 = vmul.f32 %v5932, %v751
        %v6060 = vmul.f32 %v5936, %v754
        %v6061 = vmul.f32 %v5940, %v756
        %v6062 = vmul.f32 %v5944, %v759
        %v6063 = vmul.f32 %v5948, %v761
        %v6064 = vmul.f32 %v5952, %v764
        %v6065 = vmul.f32 %v5956, %v766
        %v6066 = vmul.f32 %v5960, %v769
        %v6067 = vmul.f32 %v5964, %v771
        %v6068 = vmul.f32 %v5968, %v774
        %v6069 = vmul.f32 %v5972, %v776
        %v6070 = vmul.f32 %v5976, %v779
        %v6071 = vmul.f32 %v5980, %v781
        %v6072 = vmul.f32 %v5984, %v784
        %v6073 = vmul.f32 %v5988, %v786
        %v6074 = vmul.f32 %v5992, %v789
        %v6075 = vmul.f32 %v5996, %v791
        %v6076 = vmul.f32 %v6000, %v794
        %v6077 = vmul.f32 %v6004, %v796
        %v6078 = vmul.f32 %v6008, %v799
        %v6079 = vmul.f32 %v6012, %v801
        %v6080 = vmul.f32 %v6016, %v804
        %v6081 = vmul.f32 %v6020, %v806
        %v6082 = vmul.f32 %v6024, %v809
        %v6083 = vmul.f32 %v6028, %v811
        %v6084 = vmul.f32 %v6032, %v814
        %v6085 = vmul.f32 %v6036, %v816
        %v6086 = vadd.f32 %v6038, %v4396
        %v6087 = vadd.f32 %v6039, %v4396
        %v6088 = vadd.f32 %v6040, %v4396
        %v6089 = vadd.f32 %v6041, %v4396
        %v6090 = vadd.f32 %v6042, %v4396
        %v6091 = vadd.f32 %v6043, %v4396
        %v6092 = vadd.f32 %v6044, %v4396
        %v6093 = vadd.f32 %v6045, %v4396
        %v6094 = vadd.f32 %v6046, %v4396
        %v6095 = vadd.f32 %v6047, %v4396
        %v6096 = vadd.f32 %v6048, %v4396
        %v6097 = vadd.f32 %v6049, %v4396
        %v6098 = vadd.f32 %v6050, %v4396
        %v6099 = vadd.f32 %v6051, %v4396
        %v6100 = vadd.f32 %v6052, %v4396
        %v6101 = vadd.f32 %v6053, %v4396
        %v6102 = vadd.f32 %v6054, %v4396
        %v6103 = vadd.f32 %v6055, %v4396
        %v6104 = vadd.f32 %v6056, %v4396
        %v6105 = vadd.f32 %v6057, %v4396
        %v6106 = vadd.f32 %v6058, %v4396
        %v6107 = vadd.f32 %v6059, %v4396
        %v6108 = vadd.f32 %v6060, %v4396
        %v6109 = vadd.f32 %v6061, %v4396
        %v6110 = vadd.f32 %v6062, %v4396
        %v6111 = vadd.f32 %v6063, %v4396
        %v6112 = vadd.f32 %v6064, %v4396
        %v6113 = vadd.f32 %v6065, %v4396
        %v6114 = vadd.f32 %v6066, %v4396
        %v6115 = vadd.f32 %v6067, %v4396
        %v6116 = vadd.f32 %v6068, %v4396
        %v6117 = vadd.f32 %v6069, %v4396
        %v6118 = vadd.f32 %v6070, %v4396
        %v6119 = vadd.f32 %v6071, %v4396
        %v6120 = vadd.f32 %v6072, %v4396
        %v6121 = vadd.f32 %v6073, %v4396
        %v6122 = vadd.f32 %v6074, %v4396
        %v6123 = vadd.f32 %v6075, %v4396
        %v6124 = vadd.f32 %v6076, %v4396
        %v6125 = vadd.f32 %v6077, %v4396
        %v6126 = vadd.f32 %v6078, %v4396
        %v6127 = vadd.f32 %v6079, %v4396
        %v6128 = vadd.f32 %v6080, %v4396
        %v6129 = vadd.f32 %v6081, %v4396
        %v6130 = vadd.f32 %v6082, %v4396
        %v6131 = vadd.f32 %v6083, %v4396
        %v6132 = vadd.f32 %v6084, %v4396
        %v6133 = vadd.f32 %v6085, %v4396
        %v6134 = vxor.u32 %v6086, 2147483648
        %v6135 = vxor.u32 %v6087, 2147483648
        %v6136 = vxor.u32 %v6088, 2147483648
        %v6137 = vxor.u32 %v6089, 2147483648
        %v6138 = vxor.u32 %v6090, 2147483648
        %v6139 = vxor.u32 %v6091, 2147483648
        %v6140 = vxor.u32 %v6092, 2147483648
        %v6141 = vxor.u32 %v6093, 2147483648
        %v6142 = vxor.u32 %v6094, 2147483648
        %v6143 = vxor.u32 %v6095, 2147483648
        %v6144 = vxor.u32 %v6096, 2147483648
        %v6145 = vxor.u32 %v6097, 2147483648
        %v6146 = vxor.u32 %v6098, 2147483648
        %v6147 = vxor.u32 %v6099, 2147483648
        %v6148 = vxor.u32 %v6100, 2147483648
        %v6149 = vxor.u32 %v6101, 2147483648
        %v6150 = vxor.u32 %v6102, 2147483648
        %v6151 = vxor.u32 %v6103, 2147483648
        %v6152 = vxor.u32 %v6104, 2147483648
        %v6153 = vxor.u32 %v6105, 2147483648
        %v6154 = vxor.u32 %v6106, 2147483648
        %v6155 = vxor.u32 %v6107, 2147483648
        %v6156 = vxor.u32 %v6108, 2147483648
        %v6157 = vxor.u32 %v6109, 2147483648
        %v6158 = vxor.u32 %v6110, 2147483648
        %v6159 = vxor.u32 %v6111, 2147483648
        %v6160 = vxor.u32 %v6112, 2147483648
        %v6161 = vxor.u32 %v6113, 2147483648
        %v6162 = vxor.u32 %v6114, 2147483648
        %v6163 = vxor.u32 %v6115, 2147483648
        %v6164 = vxor.u32 %v6116, 2147483648
        %v6165 = vxor.u32 %v6117, 2147483648
        %v6166 = vxor.u32 %v6118, 2147483648
        %v6167 = vxor.u32 %v6119, 2147483648
        %v6168 = vxor.u32 %v6120, 2147483648
        %v6169 = vxor.u32 %v6121, 2147483648
        %v6170 = vxor.u32 %v6122, 2147483648
        %v6171 = vxor.u32 %v6123, 2147483648
        %v6172 = vxor.u32 %v6124, 2147483648
        %v6173 = vxor.u32 %v6125, 2147483648
        %v6174 = vxor.u32 %v6126, 2147483648
        %v6175 = vxor.u32 %v6127, 2147483648
        %v6176 = vxor.u32 %v6128, 2147483648
        %v6177 = vxor.u32 %v6129, 2147483648
        %v6178 = vxor.u32 %v6130, 2147483648
        %v6179 = vxor.u32 %v6131, 2147483648
        %v6180 = vxor.u32 %v6132, 2147483648
        %v6181 = vxor.u32 %v6133, 2147483648
        %v6182 = vmul.f32 %v6134, 1.442695
        %v6183 = vpow.pop %v6182
        %v6184 = vmul.f32 %v6135, 1.442695
        %v6185 = vpow.pop %v6184
        %v6186 = vmul.f32 %v6136, 1.442695
        %v6187 = vpow.pop %v6186
        %v6188 = vmul.f32 %v6137, 1.442695
        %v6189 = vpow.pop %v6188
        %v6190 = vmul.f32 %v6138, 1.442695
        %v6191 = vpow.pop %v6190
        %v6192 = vmul.f32 %v6139, 1.442695
        %v6193 = vpow.pop %v6192
        %v6194 = vmul.f32 %v6140, 1.442695
        %v6195 = vpow.pop %v6194
        %v6196 = vmul.f32 %v6141, 1.442695
        %v6197 = vpow.pop %v6196
        %v6198 = vmul.f32 %v6142, 1.442695
        %v6199 = vpow.pop %v6198
        %v6200 = vmul.f32 %v6143, 1.442695
        %v6201 = vpow.pop %v6200
        %v6202 = vmul.f32 %v6144, 1.442695
        %v6203 = vpow.pop %v6202
        %v6204 = vmul.f32 %v6145, 1.442695
        %v6205 = vpow.pop %v6204
        %v6206 = vmul.f32 %v6146, 1.442695
        %v6207 = vpow.pop %v6206
        %v6208 = vmul.f32 %v6147, 1.442695
        %v6209 = vpow.pop %v6208
        %v6210 = vmul.f32 %v6148, 1.442695
        %v6211 = vpow.pop %v6210
        %v6212 = vmul.f32 %v6149, 1.442695
        %v6213 = vpow.pop %v6212
        %v6214 = vmul.f32 %v6150, 1.442695
        %v6215 = vpow.pop %v6214
        %v6216 = vmul.f32 %v6151, 1.442695
        %v6217 = vpow.pop %v6216
        %v6218 = vmul.f32 %v6152, 1.442695
        %v6219 = vpow.pop %v6218
        %v6220 = vmul.f32 %v6153, 1.442695
        %v6221 = vpow.pop %v6220
        %v6222 = vmul.f32 %v6154, 1.442695
        %v6223 = vpow.pop %v6222
        %v6224 = vmul.f32 %v6155, 1.442695
        %v6225 = vpow.pop %v6224
        %v6226 = vmul.f32 %v6156, 1.442695
        %v6227 = vpow.pop %v6226
        %v6228 = vmul.f32 %v6157, 1.442695
        %v6229 = vpow.pop %v6228
        %v6230 = vmul.f32 %v6158, 1.442695
        %v6231 = vpow.pop %v6230
        %v6232 = vmul.f32 %v6159, 1.442695
        %v6233 = vpow.pop %v6232
        %v6234 = vmul.f32 %v6160, 1.442695
        %v6235 = vpow.pop %v6234
        %v6236 = vmul.f32 %v6161, 1.442695
        %v6237 = vpow.pop %v6236
        %v6238 = vmul.f32 %v6162, 1.442695
        %v6239 = vpow.pop %v6238
        %v6240 = vmul.f32 %v6163, 1.442695
        %v6241 = vpow.pop %v6240
        %v6242 = vmul.f32 %v6164, 1.442695
        %v6243 = vpow.pop %v6242
        %v6244 = vmul.f32 %v6165, 1.442695
        %v6245 = vpow.pop %v6244
        %v6246 = vmul.f32 %v6166, 1.442695
        %v6247 = vpow.pop %v6246
        %v6248 = vmul.f32 %v6167, 1.442695
        %v6249 = vpow.pop %v6248
        %v6250 = vmul.f32 %v6168, 1.442695
        %v6251 = vpow.pop %v6250
        %v6252 = vmul.f32 %v6169, 1.442695
        %v6253 = vpow.pop %v6252
        %v6254 = vmul.f32 %v6170, 1.442695
        %v6255 = vpow.pop %v6254
        %v6256 = vmul.f32 %v6171, 1.442695
        %v6257 = vpow.pop %v6256
        %v6258 = vmul.f32 %v6172, 1.442695
        %v6259 = vpow.pop %v6258
        %v6260 = vmul.f32 %v6173, 1.442695
        %v6261 = vpow.pop %v6260
        %v6262 = vmul.f32 %v6174, 1.442695
        %v6263 = vpow.pop %v6262
        %v6264 = vmul.f32 %v6175, 1.442695
        %v6265 = vpow.pop %v6264
        %v6266 = vmul.f32 %v6176, 1.442695
        %v6267 = vpow.pop %v6266
        %v6268 = vmul.f32 %v6177, 1.442695
        %v6269 = vpow.pop %v6268
        %v6270 = vmul.f32 %v6178, 1.442695
        %v6271 = vpow.pop %v6270
        %v6272 = vmul.f32 %v6179, 1.442695
        %v6273 = vpow.pop %v6272
        %v6274 = vmul.f32 %v6180, 1.442695
        %v6275 = vpow.pop %v6274
        %v6276 = vmul.f32 %v6181, 1.442695
        %v6277 = vpow.pop %v6276
        %v6278 = vadd.f32 %v6183, 1.0
        %v6279 = vadd.f32 %v6185, 1.0
        %v6280 = vadd.f32 %v6187, 1.0
        %v6281 = vadd.f32 %v6189, 1.0
        %v6282 = vadd.f32 %v6191, 1.0
        %v6283 = vadd.f32 %v6193, 1.0
        %v6284 = vadd.f32 %v6195, 1.0
        %v6285 = vadd.f32 %v6197, 1.0
        %v6286 = vadd.f32 %v6199, 1.0
        %v6287 = vadd.f32 %v6201, 1.0
        %v6288 = vadd.f32 %v6203, 1.0
        %v6289 = vadd.f32 %v6205, 1.0
        %v6290 = vadd.f32 %v6207, 1.0
        %v6291 = vadd.f32 %v6209, 1.0
        %v6292 = vadd.f32 %v6211, 1.0
        %v6293 = vadd.f32 %v6213, 1.0
        %v6294 = vadd.f32 %v6215, 1.0
        %v6295 = vadd.f32 %v6217, 1.0
        %v6296 = vadd.f32 %v6219, 1.0
        %v6297 = vadd.f32 %v6221, 1.0
        %v6298 = vadd.f32 %v6223, 1.0
        %v6299 = vadd.f32 %v6225, 1.0
        %v6300 = vadd.f32 %v6227, 1.0
        %v6301 = vadd.f32 %v6229, 1.0
        %v6302 = vadd.f32 %v6231, 1.0
        %v6303 = vadd.f32 %v6233, 1.0
        %v6304 = vadd.f32 %v6235, 1.0
        %v6305 = vadd.f32 %v6237, 1.0
        %v6306 = vadd.f32 %v6239, 1.0
        %v6307 = vadd.f32 %v6241, 1.0
        %v6308 = vadd.f32 %v6243, 1.0
        %v6309 = vadd.f32 %v6245, 1.0
        %v6310 = vadd.f32 %v6247, 1.0
        %v6311 = vadd.f32 %v6249, 1.0
        %v6312 = vadd.f32 %v6251, 1.0
        %v6313 = vadd.f32 %v6253, 1.0
        %v6314 = vadd.f32 %v6255, 1.0
        %v6315 = vadd.f32 %v6257, 1.0
        %v6316 = vadd.f32 %v6259, 1.0
        %v6317 = vadd.f32 %v6261, 1.0
        %v6318 = vadd.f32 %v6263, 1.0
        %v6319 = vadd.f32 %v6265, 1.0
        %v6320 = vadd.f32 %v6267, 1.0
        %v6321 = vadd.f32 %v6269, 1.0
        %v6322 = vadd.f32 %v6271, 1.0
        %v6323 = vadd.f32 %v6273, 1.0
        %v6324 = vadd.f32 %v6275, 1.0
        %v6325 = vadd.f32 %v6277, 1.0
        %v6326 = vrcp.pop %v6278
        %v6327 = vmul.f32 %v6278, %v6326
        %v6328 = vsub.f32 1.0, %v6327
        %v6329 = vmul.f32 %v6326, %v6328
        %v6330 = vadd.f32 %v6326, %v6329
        %vm6331 = vweird.f32 %v6278
        %vm6332 = vweird.f32 %v6326
        %vm6333 = vmor %vm6331, %vm6332
        %v6334 = vsel %vm6333, %v6326, %v6330
        %v6335 = vand.u32 2147483647, %v6278
        %vm6336 = vcmp.eq.f32.partialorder %v6335, 8.507059e+37
        %v6337 = vand.u32 %v6278, 2147483648
        %v6338 = vor.u32 1.1754944e-38, %v6337
        %v6339 = vsel %vm6336, %v6338, %v6334
        %v6340 = vmul.f32 1.0, %v6339
        %v6341 = vrcp.pop %v6279
        %v6342 = vmul.f32 %v6279, %v6341
        %v6343 = vsub.f32 1.0, %v6342
        %v6344 = vmul.f32 %v6341, %v6343
        %v6345 = vadd.f32 %v6341, %v6344
        %vm6346 = vweird.f32 %v6279
        %vm6347 = vweird.f32 %v6341
        %vm6348 = vmor %vm6346, %vm6347
        %v6349 = vsel %vm6348, %v6341, %v6345
        %v6350 = vand.u32 2147483647, %v6279
        %vm6351 = vcmp.eq.f32.partialorder %v6350, 8.507059e+37
        %v6352 = vand.u32 %v6279, 2147483648
        %v6353 = vor.u32 1.1754944e-38, %v6352
        %v6354 = vsel %vm6351, %v6353, %v6349
        %v6355 = vmul.f32 1.0, %v6354
        %v6356 = vrcp.pop %v6280
        %v6357 = vmul.f32 %v6280, %v6356
        %v6358 = vsub.f32 1.0, %v6357
        %v6359 = vmul.f32 %v6356, %v6358
        %v6360 = vadd.f32 %v6356, %v6359
        %vm6361 = vweird.f32 %v6280
        %vm6362 = vweird.f32 %v6356
        %vm6363 = vmor %vm6361, %vm6362
        %v6364 = vsel %vm6363, %v6356, %v6360
        %v6365 = vand.u32 2147483647, %v6280
        %vm6366 = vcmp.eq.f32.partialorder %v6365, 8.507059e+37
        %v6367 = vand.u32 %v6280, 2147483648
        %v6368 = vor.u32 1.1754944e-38, %v6367
        %v6369 = vsel %vm6366, %v6368, %v6364
        %v6370 = vmul.f32 1.0, %v6369
        %v6371 = vrcp.pop %v6281
        %v6372 = vmul.f32 %v6281, %v6371
        %v6373 = vsub.f32 1.0, %v6372
        %v6374 = vmul.f32 %v6371, %v6373
        %v6375 = vadd.f32 %v6371, %v6374
        %vm6376 = vweird.f32 %v6281
        %vm6377 = vweird.f32 %v6371
        %vm6378 = vmor %vm6376, %vm6377
        %v6379 = vsel %vm6378, %v6371, %v6375
        %v6380 = vand.u32 2147483647, %v6281
        %vm6381 = vcmp.eq.f32.partialorder %v6380, 8.507059e+37
        %v6382 = vand.u32 %v6281, 2147483648
        %v6383 = vor.u32 1.1754944e-38, %v6382
        %v6384 = vsel %vm6381, %v6383, %v6379
        %v6385 = vmul.f32 1.0, %v6384
        %v6386 = vrcp.pop %v6282
        %v6387 = vmul.f32 %v6282, %v6386
        %v6388 = vsub.f32 1.0, %v6387
        %v6389 = vmul.f32 %v6386, %v6388
        %v6390 = vadd.f32 %v6386, %v6389
        %vm6391 = vweird.f32 %v6282
        %vm6392 = vweird.f32 %v6386
        %vm6393 = vmor %vm6391, %vm6392
        %v6394 = vsel %vm6393, %v6386, %v6390
        %v6395 = vand.u32 2147483647, %v6282
        %vm6396 = vcmp.eq.f32.partialorder %v6395, 8.507059e+37
        %v6397 = vand.u32 %v6282, 2147483648
        %v6398 = vor.u32 1.1754944e-38, %v6397
        %v6399 = vsel %vm6396, %v6398, %v6394
        %v6400 = vmul.f32 1.0, %v6399
        %v6401 = vrcp.pop %v6283
        %v6402 = vmul.f32 %v6283, %v6401
        %v6403 = vsub.f32 1.0, %v6402
        %v6404 = vmul.f32 %v6401, %v6403
        %v6405 = vadd.f32 %v6401, %v6404
        %vm6406 = vweird.f32 %v6283
        %vm6407 = vweird.f32 %v6401
        %vm6408 = vmor %vm6406, %vm6407
        %v6409 = vsel %vm6408, %v6401, %v6405
        %v6410 = vand.u32 2147483647, %v6283
        %vm6411 = vcmp.eq.f32.partialorder %v6410, 8.507059e+37
        %v6412 = vand.u32 %v6283, 2147483648
        %v6413 = vor.u32 1.1754944e-38, %v6412
        %v6414 = vsel %vm6411, %v6413, %v6409
        %v6415 = vmul.f32 1.0, %v6414
        %v6416 = vrcp.pop %v6284
        %v6417 = vmul.f32 %v6284, %v6416
        %v6418 = vsub.f32 1.0, %v6417
        %v6419 = vmul.f32 %v6416, %v6418
        %v6420 = vadd.f32 %v6416, %v6419
        %vm6421 = vweird.f32 %v6284
        %vm6422 = vweird.f32 %v6416
        %vm6423 = vmor %vm6421, %vm6422
        %v6424 = vsel %vm6423, %v6416, %v6420
        %v6425 = vand.u32 2147483647, %v6284
        %vm6426 = vcmp.eq.f32.partialorder %v6425, 8.507059e+37
        %v6427 = vand.u32 %v6284, 2147483648
        %v6428 = vor.u32 1.1754944e-38, %v6427
        %v6429 = vsel %vm6426, %v6428, %v6424
        %v6430 = vmul.f32 1.0, %v6429
        %v6431 = vrcp.pop %v6285
        %v6432 = vmul.f32 %v6285, %v6431
        %v6433 = vsub.f32 1.0, %v6432
        %v6434 = vmul.f32 %v6431, %v6433
        %v6435 = vadd.f32 %v6431, %v6434
        %vm6436 = vweird.f32 %v6285
        %vm6437 = vweird.f32 %v6431
        %vm6438 = vmor %vm6436, %vm6437
        %v6439 = vsel %vm6438, %v6431, %v6435
        %v6440 = vand.u32 2147483647, %v6285
        %vm6441 = vcmp.eq.f32.partialorder %v6440, 8.507059e+37
        %v6442 = vand.u32 %v6285, 2147483648
        %v6443 = vor.u32 1.1754944e-38, %v6442
        %v6444 = vsel %vm6441, %v6443, %v6439
        %v6445 = vmul.f32 1.0, %v6444
        %v6446 = vrcp.pop %v6286
        %v6447 = vmul.f32 %v6286, %v6446
        %v6448 = vsub.f32 1.0, %v6447
        %v6449 = vmul.f32 %v6446, %v6448
        %v6450 = vadd.f32 %v6446, %v6449
        %vm6451 = vweird.f32 %v6286
        %vm6452 = vweird.f32 %v6446
        %vm6453 = vmor %vm6451, %vm6452
        %v6454 = vsel %vm6453, %v6446, %v6450
        %v6455 = vand.u32 2147483647, %v6286
        %vm6456 = vcmp.eq.f32.partialorder %v6455, 8.507059e+37
        %v6457 = vand.u32 %v6286, 2147483648
        %v6458 = vor.u32 1.1754944e-38, %v6457
        %v6459 = vsel %vm6456, %v6458, %v6454
        %v6460 = vmul.f32 1.0, %v6459
        %v6461 = vrcp.pop %v6287
        %v6462 = vmul.f32 %v6287, %v6461
        %v6463 = vsub.f32 1.0, %v6462
        %v6464 = vmul.f32 %v6461, %v6463
        %v6465 = vadd.f32 %v6461, %v6464
        %vm6466 = vweird.f32 %v6287
        %vm6467 = vweird.f32 %v6461
        %vm6468 = vmor %vm6466, %vm6467
        %v6469 = vsel %vm6468, %v6461, %v6465
        %v6470 = vand.u32 2147483647, %v6287
        %vm6471 = vcmp.eq.f32.partialorder %v6470, 8.507059e+37
        %v6472 = vand.u32 %v6287, 2147483648
        %v6473 = vor.u32 1.1754944e-38, %v6472
        %v6474 = vsel %vm6471, %v6473, %v6469
        %v6475 = vmul.f32 1.0, %v6474
        %v6476 = vrcp.pop %v6288
        %v6477 = vmul.f32 %v6288, %v6476
        %v6478 = vsub.f32 1.0, %v6477
        %v6479 = vmul.f32 %v6476, %v6478
        %v6480 = vadd.f32 %v6476, %v6479
        %vm6481 = vweird.f32 %v6288
        %vm6482 = vweird.f32 %v6476
        %vm6483 = vmor %vm6481, %vm6482
        %v6484 = vsel %vm6483, %v6476, %v6480
        %v6485 = vand.u32 2147483647, %v6288
        %vm6486 = vcmp.eq.f32.partialorder %v6485, 8.507059e+37
        %v6487 = vand.u32 %v6288, 2147483648
        %v6488 = vor.u32 1.1754944e-38, %v6487
        %v6489 = vsel %vm6486, %v6488, %v6484
        %v6490 = vmul.f32 1.0, %v6489
        %v6491 = vrcp.pop %v6289
        %v6492 = vmul.f32 %v6289, %v6491
        %v6493 = vsub.f32 1.0, %v6492
        %v6494 = vmul.f32 %v6491, %v6493
        %v6495 = vadd.f32 %v6491, %v6494
        %vm6496 = vweird.f32 %v6289
        %vm6497 = vweird.f32 %v6491
        %vm6498 = vmor %vm6496, %vm6497
        %v6499 = vsel %vm6498, %v6491, %v6495
        %v6500 = vand.u32 2147483647, %v6289
        %vm6501 = vcmp.eq.f32.partialorder %v6500, 8.507059e+37
        %v6502 = vand.u32 %v6289, 2147483648
        %v6503 = vor.u32 1.1754944e-38, %v6502
        %v6504 = vsel %vm6501, %v6503, %v6499
        %v6505 = vmul.f32 1.0, %v6504
        %v6506 = vrcp.pop %v6290
        %v6507 = vmul.f32 %v6290, %v6506
        %v6508 = vsub.f32 1.0, %v6507
        %v6509 = vmul.f32 %v6506, %v6508
        %v6510 = vadd.f32 %v6506, %v6509
        %vm6511 = vweird.f32 %v6290
        %vm6512 = vweird.f32 %v6506
        %vm6513 = vmor %vm6511, %vm6512
        %v6514 = vsel %vm6513, %v6506, %v6510
        %v6515 = vand.u32 2147483647, %v6290
        %vm6516 = vcmp.eq.f32.partialorder %v6515, 8.507059e+37
        %v6517 = vand.u32 %v6290, 2147483648
        %v6518 = vor.u32 1.1754944e-38, %v6517
        %v6519 = vsel %vm6516, %v6518, %v6514
        %v6520 = vmul.f32 1.0, %v6519
        %v6521 = vrcp.pop %v6291
        %v6522 = vmul.f32 %v6291, %v6521
        %v6523 = vsub.f32 1.0, %v6522
        %v6524 = vmul.f32 %v6521, %v6523
        %v6525 = vadd.f32 %v6521, %v6524
        %vm6526 = vweird.f32 %v6291
        %vm6527 = vweird.f32 %v6521
        %vm6528 = vmor %vm6526, %vm6527
        %v6529 = vsel %vm6528, %v6521, %v6525
        %v6530 = vand.u32 2147483647, %v6291
        %vm6531 = vcmp.eq.f32.partialorder %v6530, 8.507059e+37
        %v6532 = vand.u32 %v6291, 2147483648
        %v6533 = vor.u32 1.1754944e-38, %v6532
        %v6534 = vsel %vm6531, %v6533, %v6529
        %v6535 = vmul.f32 1.0, %v6534
        %v6536 = vrcp.pop %v6292
        %v6537 = vmul.f32 %v6292, %v6536
        %v6538 = vsub.f32 1.0, %v6537
        %v6539 = vmul.f32 %v6536, %v6538
        %v6540 = vadd.f32 %v6536, %v6539
        %vm6541 = vweird.f32 %v6292
        %vm6542 = vweird.f32 %v6536
        %vm6543 = vmor %vm6541, %vm6542
        %v6544 = vsel %vm6543, %v6536, %v6540
        %v6545 = vand.u32 2147483647, %v6292
        %vm6546 = vcmp.eq.f32.partialorder %v6545, 8.507059e+37
        %v6547 = vand.u32 %v6292, 2147483648
        %v6548 = vor.u32 1.1754944e-38, %v6547
        %v6549 = vsel %vm6546, %v6548, %v6544
        %v6550 = vmul.f32 1.0, %v6549
        %v6551 = vrcp.pop %v6293
        %v6552 = vmul.f32 %v6293, %v6551
        %v6553 = vsub.f32 1.0, %v6552
        %v6554 = vmul.f32 %v6551, %v6553
        %v6555 = vadd.f32 %v6551, %v6554
        %vm6556 = vweird.f32 %v6293
        %vm6557 = vweird.f32 %v6551
        %vm6558 = vmor %vm6556, %vm6557
        %v6559 = vsel %vm6558, %v6551, %v6555
        %v6560 = vand.u32 2147483647, %v6293
        %vm6561 = vcmp.eq.f32.partialorder %v6560, 8.507059e+37
        %v6562 = vand.u32 %v6293, 2147483648
        %v6563 = vor.u32 1.1754944e-38, %v6562
        %v6564 = vsel %vm6561, %v6563, %v6559
        %v6565 = vmul.f32 1.0, %v6564
        %v6566 = vrcp.pop %v6294
        %v6567 = vmul.f32 %v6294, %v6566
        %v6568 = vsub.f32 1.0, %v6567
        %v6569 = vmul.f32 %v6566, %v6568
        %v6570 = vadd.f32 %v6566, %v6569
        %vm6571 = vweird.f32 %v6294
        %vm6572 = vweird.f32 %v6566
        %vm6573 = vmor %vm6571, %vm6572
        %v6574 = vsel %vm6573, %v6566, %v6570
        %v6575 = vand.u32 2147483647, %v6294
        %vm6576 = vcmp.eq.f32.partialorder %v6575, 8.507059e+37
        %v6577 = vand.u32 %v6294, 2147483648
        %v6578 = vor.u32 1.1754944e-38, %v6577
        %v6579 = vsel %vm6576, %v6578, %v6574
        %v6580 = vmul.f32 1.0, %v6579
        %v6581 = vrcp.pop %v6295
        %v6582 = vmul.f32 %v6295, %v6581
        %v6583 = vsub.f32 1.0, %v6582
        %v6584 = vmul.f32 %v6581, %v6583
        %v6585 = vadd.f32 %v6581, %v6584
        %vm6586 = vweird.f32 %v6295
        %vm6587 = vweird.f32 %v6581
        %vm6588 = vmor %vm6586, %vm6587
        %v6589 = vsel %vm6588, %v6581, %v6585
        %v6590 = vand.u32 2147483647, %v6295
        %vm6591 = vcmp.eq.f32.partialorder %v6590, 8.507059e+37
        %v6592 = vand.u32 %v6295, 2147483648
        %v6593 = vor.u32 1.1754944e-38, %v6592
        %v6594 = vsel %vm6591, %v6593, %v6589
        %v6595 = vmul.f32 1.0, %v6594
        %v6596 = vrcp.pop %v6296
        %v6597 = vmul.f32 %v6296, %v6596
        %v6598 = vsub.f32 1.0, %v6597
        %v6599 = vmul.f32 %v6596, %v6598
        %v6600 = vadd.f32 %v6596, %v6599
        %vm6601 = vweird.f32 %v6296
        %vm6602 = vweird.f32 %v6596
        %vm6603 = vmor %vm6601, %vm6602
        %v6604 = vsel %vm6603, %v6596, %v6600
        %v6605 = vand.u32 2147483647, %v6296
        %vm6606 = vcmp.eq.f32.partialorder %v6605, 8.507059e+37
        %v6607 = vand.u32 %v6296, 2147483648
        %v6608 = vor.u32 1.1754944e-38, %v6607
        %v6609 = vsel %vm6606, %v6608, %v6604
        %v6610 = vmul.f32 1.0, %v6609
        %v6611 = vrcp.pop %v6297
        %v6612 = vmul.f32 %v6297, %v6611
        %v6613 = vsub.f32 1.0, %v6612
        %v6614 = vmul.f32 %v6611, %v6613
        %v6615 = vadd.f32 %v6611, %v6614
        %vm6616 = vweird.f32 %v6297
        %vm6617 = vweird.f32 %v6611
        %vm6618 = vmor %vm6616, %vm6617
        %v6619 = vsel %vm6618, %v6611, %v6615
        %v6620 = vand.u32 2147483647, %v6297
        %vm6621 = vcmp.eq.f32.partialorder %v6620, 8.507059e+37
        %v6622 = vand.u32 %v6297, 2147483648
        %v6623 = vor.u32 1.1754944e-38, %v6622
        %v6624 = vsel %vm6621, %v6623, %v6619
        %v6625 = vmul.f32 1.0, %v6624
        %v6626 = vrcp.pop %v6298
        %v6627 = vmul.f32 %v6298, %v6626
        %v6628 = vsub.f32 1.0, %v6627
        %v6629 = vmul.f32 %v6626, %v6628
        %v6630 = vadd.f32 %v6626, %v6629
        %vm6631 = vweird.f32 %v6298
        %vm6632 = vweird.f32 %v6626
        %vm6633 = vmor %vm6631, %vm6632
        %v6634 = vsel %vm6633, %v6626, %v6630
        %v6635 = vand.u32 2147483647, %v6298
        %vm6636 = vcmp.eq.f32.partialorder %v6635, 8.507059e+37
        %v6637 = vand.u32 %v6298, 2147483648
        %v6638 = vor.u32 1.1754944e-38, %v6637
        %v6639 = vsel %vm6636, %v6638, %v6634
        %v6640 = vmul.f32 1.0, %v6639
        %v6641 = vrcp.pop %v6299
        %v6642 = vmul.f32 %v6299, %v6641
        %v6643 = vsub.f32 1.0, %v6642
        %v6644 = vmul.f32 %v6641, %v6643
        %v6645 = vadd.f32 %v6641, %v6644
        %vm6646 = vweird.f32 %v6299
        %vm6647 = vweird.f32 %v6641
        %vm6648 = vmor %vm6646, %vm6647
        %v6649 = vsel %vm6648, %v6641, %v6645
        %v6650 = vand.u32 2147483647, %v6299
        %vm6651 = vcmp.eq.f32.partialorder %v6650, 8.507059e+37
        %v6652 = vand.u32 %v6299, 2147483648
        %v6653 = vor.u32 1.1754944e-38, %v6652
        %v6654 = vsel %vm6651, %v6653, %v6649
        %v6655 = vmul.f32 1.0, %v6654
        %v6656 = vrcp.pop %v6300
        %v6657 = vmul.f32 %v6300, %v6656
        %v6658 = vsub.f32 1.0, %v6657
        %v6659 = vmul.f32 %v6656, %v6658
        %v6660 = vadd.f32 %v6656, %v6659
        %vm6661 = vweird.f32 %v6300
        %vm6662 = vweird.f32 %v6656
        %vm6663 = vmor %vm6661, %vm6662
        %v6664 = vsel %vm6663, %v6656, %v6660
        %v6665 = vand.u32 2147483647, %v6300
        %vm6666 = vcmp.eq.f32.partialorder %v6665, 8.507059e+37
        %v6667 = vand.u32 %v6300, 2147483648
        %v6668 = vor.u32 1.1754944e-38, %v6667
        %v6669 = vsel %vm6666, %v6668, %v6664
        %v6670 = vmul.f32 1.0, %v6669
        %v6671 = vrcp.pop %v6301
        %v6672 = vmul.f32 %v6301, %v6671
        %v6673 = vsub.f32 1.0, %v6672
        %v6674 = vmul.f32 %v6671, %v6673
        %v6675 = vadd.f32 %v6671, %v6674
        %vm6676 = vweird.f32 %v6301
        %vm6677 = vweird.f32 %v6671
        %vm6678 = vmor %vm6676, %vm6677
        %v6679 = vsel %vm6678, %v6671, %v6675
        %v6680 = vand.u32 2147483647, %v6301
        %vm6681 = vcmp.eq.f32.partialorder %v6680, 8.507059e+37
        %v6682 = vand.u32 %v6301, 2147483648
        %v6683 = vor.u32 1.1754944e-38, %v6682
        %v6684 = vsel %vm6681, %v6683, %v6679
        %v6685 = vmul.f32 1.0, %v6684
        %v6686 = vrcp.pop %v6302
        %v6687 = vmul.f32 %v6302, %v6686
        %v6688 = vsub.f32 1.0, %v6687
        %v6689 = vmul.f32 %v6686, %v6688
        %v6690 = vadd.f32 %v6686, %v6689
        %vm6691 = vweird.f32 %v6302
        %vm6692 = vweird.f32 %v6686
        %vm6693 = vmor %vm6691, %vm6692
        %v6694 = vsel %vm6693, %v6686, %v6690
        %v6695 = vand.u32 2147483647, %v6302
        %vm6696 = vcmp.eq.f32.partialorder %v6695, 8.507059e+37
        %v6697 = vand.u32 %v6302, 2147483648
        %v6698 = vor.u32 1.1754944e-38, %v6697
        %v6699 = vsel %vm6696, %v6698, %v6694
        %v6700 = vmul.f32 1.0, %v6699
        %v6701 = vrcp.pop %v6303
        %v6702 = vmul.f32 %v6303, %v6701
        %v6703 = vsub.f32 1.0, %v6702
        %v6704 = vmul.f32 %v6701, %v6703
        %v6705 = vadd.f32 %v6701, %v6704
        %vm6706 = vweird.f32 %v6303
        %vm6707 = vweird.f32 %v6701
        %vm6708 = vmor %vm6706, %vm6707
        %v6709 = vsel %vm6708, %v6701, %v6705
        %v6710 = vand.u32 2147483647, %v6303
        %vm6711 = vcmp.eq.f32.partialorder %v6710, 8.507059e+37
        %v6712 = vand.u32 %v6303, 2147483648
        %v6713 = vor.u32 1.1754944e-38, %v6712
        %v6714 = vsel %vm6711, %v6713, %v6709
        %v6715 = vmul.f32 1.0, %v6714
        %v6716 = vrcp.pop %v6304
        %v6717 = vmul.f32 %v6304, %v6716
        %v6718 = vsub.f32 1.0, %v6717
        %v6719 = vmul.f32 %v6716, %v6718
        %v6720 = vadd.f32 %v6716, %v6719
        %vm6721 = vweird.f32 %v6304
        %vm6722 = vweird.f32 %v6716
        %vm6723 = vmor %vm6721, %vm6722
        %v6724 = vsel %vm6723, %v6716, %v6720
        %v6725 = vand.u32 2147483647, %v6304
        %vm6726 = vcmp.eq.f32.partialorder %v6725, 8.507059e+37
        %v6727 = vand.u32 %v6304, 2147483648
        %v6728 = vor.u32 1.1754944e-38, %v6727
        %v6729 = vsel %vm6726, %v6728, %v6724
        %v6730 = vmul.f32 1.0, %v6729
        %v6731 = vrcp.pop %v6305
        %v6732 = vmul.f32 %v6305, %v6731
        %v6733 = vsub.f32 1.0, %v6732
        %v6734 = vmul.f32 %v6731, %v6733
        %v6735 = vadd.f32 %v6731, %v6734
        %vm6736 = vweird.f32 %v6305
        %vm6737 = vweird.f32 %v6731
        %vm6738 = vmor %vm6736, %vm6737
        %v6739 = vsel %vm6738, %v6731, %v6735
        %v6740 = vand.u32 2147483647, %v6305
        %vm6741 = vcmp.eq.f32.partialorder %v6740, 8.507059e+37
        %v6742 = vand.u32 %v6305, 2147483648
        %v6743 = vor.u32 1.1754944e-38, %v6742
        %v6744 = vsel %vm6741, %v6743, %v6739
        %v6745 = vmul.f32 1.0, %v6744
        %v6746 = vrcp.pop %v6306
        %v6747 = vmul.f32 %v6306, %v6746
        %v6748 = vsub.f32 1.0, %v6747
        %v6749 = vmul.f32 %v6746, %v6748
        %v6750 = vadd.f32 %v6746, %v6749
        %vm6751 = vweird.f32 %v6306
        %vm6752 = vweird.f32 %v6746
        %vm6753 = vmor %vm6751, %vm6752
        %v6754 = vsel %vm6753, %v6746, %v6750
        %v6755 = vand.u32 2147483647, %v6306
        %vm6756 = vcmp.eq.f32.partialorder %v6755, 8.507059e+37
        %v6757 = vand.u32 %v6306, 2147483648
        %v6758 = vor.u32 1.1754944e-38, %v6757
        %v6759 = vsel %vm6756, %v6758, %v6754
        %v6760 = vmul.f32 1.0, %v6759
        %v6761 = vrcp.pop %v6307
        %v6762 = vmul.f32 %v6307, %v6761
        %v6763 = vsub.f32 1.0, %v6762
        %v6764 = vmul.f32 %v6761, %v6763
        %v6765 = vadd.f32 %v6761, %v6764
        %vm6766 = vweird.f32 %v6307
        %vm6767 = vweird.f32 %v6761
        %vm6768 = vmor %vm6766, %vm6767
        %v6769 = vsel %vm6768, %v6761, %v6765
        %v6770 = vand.u32 2147483647, %v6307
        %vm6771 = vcmp.eq.f32.partialorder %v6770, 8.507059e+37
        %v6772 = vand.u32 %v6307, 2147483648
        %v6773 = vor.u32 1.1754944e-38, %v6772
        %v6774 = vsel %vm6771, %v6773, %v6769
        %v6775 = vmul.f32 1.0, %v6774
        %v6776 = vrcp.pop %v6308
        %v6777 = vmul.f32 %v6308, %v6776
        %v6778 = vsub.f32 1.0, %v6777
        %v6779 = vmul.f32 %v6776, %v6778
        %v6780 = vadd.f32 %v6776, %v6779
        %vm6781 = vweird.f32 %v6308
        %vm6782 = vweird.f32 %v6776
        %vm6783 = vmor %vm6781, %vm6782
        %v6784 = vsel %vm6783, %v6776, %v6780
        %v6785 = vand.u32 2147483647, %v6308
        %vm6786 = vcmp.eq.f32.partialorder %v6785, 8.507059e+37
        %v6787 = vand.u32 %v6308, 2147483648
        %v6788 = vor.u32 1.1754944e-38, %v6787
        %v6789 = vsel %vm6786, %v6788, %v6784
        %v6790 = vmul.f32 1.0, %v6789
        %v6791 = vrcp.pop %v6309
        %v6792 = vmul.f32 %v6309, %v6791
        %v6793 = vsub.f32 1.0, %v6792
        %v6794 = vmul.f32 %v6791, %v6793
        %v6795 = vadd.f32 %v6791, %v6794
        %vm6796 = vweird.f32 %v6309
        %vm6797 = vweird.f32 %v6791
        %vm6798 = vmor %vm6796, %vm6797
        %v6799 = vsel %vm6798, %v6791, %v6795
        %v6800 = vand.u32 2147483647, %v6309
        %vm6801 = vcmp.eq.f32.partialorder %v6800, 8.507059e+37
        %v6802 = vand.u32 %v6309, 2147483648
        %v6803 = vor.u32 1.1754944e-38, %v6802
        %v6804 = vsel %vm6801, %v6803, %v6799
        %v6805 = vmul.f32 1.0, %v6804
        %v6806 = vrcp.pop %v6310
        %v6807 = vmul.f32 %v6310, %v6806
        %v6808 = vsub.f32 1.0, %v6807
        %v6809 = vmul.f32 %v6806, %v6808
        %v6810 = vadd.f32 %v6806, %v6809
        %vm6811 = vweird.f32 %v6310
        %vm6812 = vweird.f32 %v6806
        %vm6813 = vmor %vm6811, %vm6812
        %v6814 = vsel %vm6813, %v6806, %v6810
        %v6815 = vand.u32 2147483647, %v6310
        %vm6816 = vcmp.eq.f32.partialorder %v6815, 8.507059e+37
        %v6817 = vand.u32 %v6310, 2147483648
        %v6818 = vor.u32 1.1754944e-38, %v6817
        %v6819 = vsel %vm6816, %v6818, %v6814
        %v6820 = vmul.f32 1.0, %v6819
        %v6821 = vrcp.pop %v6311
        %v6822 = vmul.f32 %v6311, %v6821
        %v6823 = vsub.f32 1.0, %v6822
        %v6824 = vmul.f32 %v6821, %v6823
        %v6825 = vadd.f32 %v6821, %v6824
        %vm6826 = vweird.f32 %v6311
        %vm6827 = vweird.f32 %v6821
        %vm6828 = vmor %vm6826, %vm6827
        %v6829 = vsel %vm6828, %v6821, %v6825
        %v6830 = vand.u32 2147483647, %v6311
        %vm6831 = vcmp.eq.f32.partialorder %v6830, 8.507059e+37
        %v6832 = vand.u32 %v6311, 2147483648
        %v6833 = vor.u32 1.1754944e-38, %v6832
        %v6834 = vsel %vm6831, %v6833, %v6829
        %v6835 = vmul.f32 1.0, %v6834
        %v6836 = vrcp.pop %v6312
        %v6837 = vmul.f32 %v6312, %v6836
        %v6838 = vsub.f32 1.0, %v6837
        %v6839 = vmul.f32 %v6836, %v6838
        %v6840 = vadd.f32 %v6836, %v6839
        %vm6841 = vweird.f32 %v6312
        %vm6842 = vweird.f32 %v6836
        %vm6843 = vmor %vm6841, %vm6842
        %v6844 = vsel %vm6843, %v6836, %v6840
        %v6845 = vand.u32 2147483647, %v6312
        %vm6846 = vcmp.eq.f32.partialorder %v6845, 8.507059e+37
        %v6847 = vand.u32 %v6312, 2147483648
        %v6848 = vor.u32 1.1754944e-38, %v6847
        %v6849 = vsel %vm6846, %v6848, %v6844
        %v6850 = vmul.f32 1.0, %v6849
        %v6851 = vrcp.pop %v6313
        %v6852 = vmul.f32 %v6313, %v6851
        %v6853 = vsub.f32 1.0, %v6852
        %v6854 = vmul.f32 %v6851, %v6853
        %v6855 = vadd.f32 %v6851, %v6854
        %vm6856 = vweird.f32 %v6313
        %vm6857 = vweird.f32 %v6851
        %vm6858 = vmor %vm6856, %vm6857
        %v6859 = vsel %vm6858, %v6851, %v6855
        %v6860 = vand.u32 2147483647, %v6313
        %vm6861 = vcmp.eq.f32.partialorder %v6860, 8.507059e+37
        %v6862 = vand.u32 %v6313, 2147483648
        %v6863 = vor.u32 1.1754944e-38, %v6862
        %v6864 = vsel %vm6861, %v6863, %v6859
        %v6865 = vmul.f32 1.0, %v6864
        %v6866 = vrcp.pop %v6314
        %v6867 = vmul.f32 %v6314, %v6866
        %v6868 = vsub.f32 1.0, %v6867
        %v6869 = vmul.f32 %v6866, %v6868
        %v6870 = vadd.f32 %v6866, %v6869
        %vm6871 = vweird.f32 %v6314
        %vm6872 = vweird.f32 %v6866
        %vm6873 = vmor %vm6871, %vm6872
        %v6874 = vsel %vm6873, %v6866, %v6870
        %v6875 = vand.u32 2147483647, %v6314
        %vm6876 = vcmp.eq.f32.partialorder %v6875, 8.507059e+37
        %v6877 = vand.u32 %v6314, 2147483648
        %v6878 = vor.u32 1.1754944e-38, %v6877
        %v6879 = vsel %vm6876, %v6878, %v6874
        %v6880 = vmul.f32 1.0, %v6879
        %v6881 = vrcp.pop %v6315
        %v6882 = vmul.f32 %v6315, %v6881
        %v6883 = vsub.f32 1.0, %v6882
        %v6884 = vmul.f32 %v6881, %v6883
        %v6885 = vadd.f32 %v6881, %v6884
        %vm6886 = vweird.f32 %v6315
        %vm6887 = vweird.f32 %v6881
        %vm6888 = vmor %vm6886, %vm6887
        %v6889 = vsel %vm6888, %v6881, %v6885
        %v6890 = vand.u32 2147483647, %v6315
        %vm6891 = vcmp.eq.f32.partialorder %v6890, 8.507059e+37
        %v6892 = vand.u32 %v6315, 2147483648
        %v6893 = vor.u32 1.1754944e-38, %v6892
        %v6894 = vsel %vm6891, %v6893, %v6889
        %v6895 = vmul.f32 1.0, %v6894
        %v6896 = vrcp.pop %v6316
        %v6897 = vmul.f32 %v6316, %v6896
        %v6898 = vsub.f32 1.0, %v6897
        %v6899 = vmul.f32 %v6896, %v6898
        %v6900 = vadd.f32 %v6896, %v6899
        %vm6901 = vweird.f32 %v6316
        %vm6902 = vweird.f32 %v6896
        %vm6903 = vmor %vm6901, %vm6902
        %v6904 = vsel %vm6903, %v6896, %v6900
        %v6905 = vand.u32 2147483647, %v6316
        %vm6906 = vcmp.eq.f32.partialorder %v6905, 8.507059e+37
        %v6907 = vand.u32 %v6316, 2147483648
        %v6908 = vor.u32 1.1754944e-38, %v6907
        %v6909 = vsel %vm6906, %v6908, %v6904
        %v6910 = vmul.f32 1.0, %v6909
        %v6911 = vrcp.pop %v6317
        %v6912 = vmul.f32 %v6317, %v6911
        %v6913 = vsub.f32 1.0, %v6912
        %v6914 = vmul.f32 %v6911, %v6913
        %v6915 = vadd.f32 %v6911, %v6914
        %vm6916 = vweird.f32 %v6317
        %vm6917 = vweird.f32 %v6911
        %vm6918 = vmor %vm6916, %vm6917
        %v6919 = vsel %vm6918, %v6911, %v6915
        %v6920 = vand.u32 2147483647, %v6317
        %vm6921 = vcmp.eq.f32.partialorder %v6920, 8.507059e+37
        %v6922 = vand.u32 %v6317, 2147483648
        %v6923 = vor.u32 1.1754944e-38, %v6922
        %v6924 = vsel %vm6921, %v6923, %v6919
        %v6925 = vmul.f32 1.0, %v6924
        %v6926 = vrcp.pop %v6318
        %v6927 = vmul.f32 %v6318, %v6926
        %v6928 = vsub.f32 1.0, %v6927
        %v6929 = vmul.f32 %v6926, %v6928
        %v6930 = vadd.f32 %v6926, %v6929
        %vm6931 = vweird.f32 %v6318
        %vm6932 = vweird.f32 %v6926
        %vm6933 = vmor %vm6931, %vm6932
        %v6934 = vsel %vm6933, %v6926, %v6930
        %v6935 = vand.u32 2147483647, %v6318
        %vm6936 = vcmp.eq.f32.partialorder %v6935, 8.507059e+37
        %v6937 = vand.u32 %v6318, 2147483648
        %v6938 = vor.u32 1.1754944e-38, %v6937
        %v6939 = vsel %vm6936, %v6938, %v6934
        %v6940 = vmul.f32 1.0, %v6939
        %v6941 = vrcp.pop %v6319
        %v6942 = vmul.f32 %v6319, %v6941
        %v6943 = vsub.f32 1.0, %v6942
        %v6944 = vmul.f32 %v6941, %v6943
        %v6945 = vadd.f32 %v6941, %v6944
        %vm6946 = vweird.f32 %v6319
        %vm6947 = vweird.f32 %v6941
        %vm6948 = vmor %vm6946, %vm6947
        %v6949 = vsel %vm6948, %v6941, %v6945
        %v6950 = vand.u32 2147483647, %v6319
        %vm6951 = vcmp.eq.f32.partialorder %v6950, 8.507059e+37
        %v6952 = vand.u32 %v6319, 2147483648
        %v6953 = vor.u32 1.1754944e-38, %v6952
        %v6954 = vsel %vm6951, %v6953, %v6949
        %v6955 = vmul.f32 1.0, %v6954
        %v6956 = vrcp.pop %v6320
        %v6957 = vmul.f32 %v6320, %v6956
        %v6958 = vsub.f32 1.0, %v6957
        %v6959 = vmul.f32 %v6956, %v6958
        %v6960 = vadd.f32 %v6956, %v6959
        %vm6961 = vweird.f32 %v6320
        %vm6962 = vweird.f32 %v6956
        %vm6963 = vmor %vm6961, %vm6962
        %v6964 = vsel %vm6963, %v6956, %v6960
        %v6965 = vand.u32 2147483647, %v6320
        %vm6966 = vcmp.eq.f32.partialorder %v6965, 8.507059e+37
        %v6967 = vand.u32 %v6320, 2147483648
        %v6968 = vor.u32 1.1754944e-38, %v6967
        %v6969 = vsel %vm6966, %v6968, %v6964
        %v6970 = vmul.f32 1.0, %v6969
        %v6971 = vrcp.pop %v6321
        %v6972 = vmul.f32 %v6321, %v6971
        %v6973 = vsub.f32 1.0, %v6972
        %v6974 = vmul.f32 %v6971, %v6973
        %v6975 = vadd.f32 %v6971, %v6974
        %vm6976 = vweird.f32 %v6321
        %vm6977 = vweird.f32 %v6971
        %vm6978 = vmor %vm6976, %vm6977
        %v6979 = vsel %vm6978, %v6971, %v6975
        %v6980 = vand.u32 2147483647, %v6321
        %vm6981 = vcmp.eq.f32.partialorder %v6980, 8.507059e+37
        %v6982 = vand.u32 %v6321, 2147483648
        %v6983 = vor.u32 1.1754944e-38, %v6982
        %v6984 = vsel %vm6981, %v6983, %v6979
        %v6985 = vmul.f32 1.0, %v6984
        %v6986 = vrcp.pop %v6322
        %v6987 = vmul.f32 %v6322, %v6986
        %v6988 = vsub.f32 1.0, %v6987
        %v6989 = vmul.f32 %v6986, %v6988
        %v6990 = vadd.f32 %v6986, %v6989
        %vm6991 = vweird.f32 %v6322
        %vm6992 = vweird.f32 %v6986
        %vm6993 = vmor %vm6991, %vm6992
        %v6994 = vsel %vm6993, %v6986, %v6990
        %v6995 = vand.u32 2147483647, %v6322
        %vm6996 = vcmp.eq.f32.partialorder %v6995, 8.507059e+37
        %v6997 = vand.u32 %v6322, 2147483648
        %v6998 = vor.u32 1.1754944e-38, %v6997
        %v6999 = vsel %vm6996, %v6998, %v6994
        %v7000 = vmul.f32 1.0, %v6999
        %v7001 = vrcp.pop %v6323
        %v7002 = vmul.f32 %v6323, %v7001
        %v7003 = vsub.f32 1.0, %v7002
        %v7004 = vmul.f32 %v7001, %v7003
        %v7005 = vadd.f32 %v7001, %v7004
        %vm7006 = vweird.f32 %v6323
        %vm7007 = vweird.f32 %v7001
        %vm7008 = vmor %vm7006, %vm7007
        %v7009 = vsel %vm7008, %v7001, %v7005
        %v7010 = vand.u32 2147483647, %v6323
        %vm7011 = vcmp.eq.f32.partialorder %v7010, 8.507059e+37
        %v7012 = vand.u32 %v6323, 2147483648
        %v7013 = vor.u32 1.1754944e-38, %v7012
        %v7014 = vsel %vm7011, %v7013, %v7009
        %v7015 = vmul.f32 1.0, %v7014
        %v7016 = vrcp.pop %v6324
        %v7017 = vmul.f32 %v6324, %v7016
        %v7018 = vsub.f32 1.0, %v7017
        %v7019 = vmul.f32 %v7016, %v7018
        %v7020 = vadd.f32 %v7016, %v7019
        %vm7021 = vweird.f32 %v6324
        %vm7022 = vweird.f32 %v7016
        %vm7023 = vmor %vm7021, %vm7022
        %v7024 = vsel %vm7023, %v7016, %v7020
        %v7025 = vand.u32 2147483647, %v6324
        %vm7026 = vcmp.eq.f32.partialorder %v7025, 8.507059e+37
        %v7027 = vand.u32 %v6324, 2147483648
        %v7028 = vor.u32 1.1754944e-38, %v7027
        %v7029 = vsel %vm7026, %v7028, %v7024
        %v7030 = vmul.f32 1.0, %v7029
        %v7031 = vrcp.pop %v6325
        %v7032 = vmul.f32 %v6325, %v7031
        %v7033 = vsub.f32 1.0, %v7032
        %v7034 = vmul.f32 %v7031, %v7033
        %v7035 = vadd.f32 %v7031, %v7034
        %vm7036 = vweird.f32 %v6325
        %vm7037 = vweird.f32 %v7031
        %vm7038 = vmor %vm7036, %vm7037
        %v7039 = vsel %vm7038, %v7031, %v7035
        %v7040 = vand.u32 2147483647, %v6325
        %vm7041 = vcmp.eq.f32.partialorder %v7040, 8.507059e+37
        %v7042 = vand.u32 %v6325, 2147483648
        %v7043 = vor.u32 1.1754944e-38, %v7042
        %v7044 = vsel %vm7041, %v7043, %v7039
        %v7045 = vmul.f32 1.0, %v7044
        %v7046 = vmul.f32 %v6086, %v6340
        %v7047 = vmul.f32 %v6087, %v6355
        %v7048 = vmul.f32 %v6088, %v6370
        %v7049 = vmul.f32 %v6089, %v6385
        %v7050 = vmul.f32 %v6090, %v6400
        %v7051 = vmul.f32 %v6091, %v6415
        %v7052 = vmul.f32 %v6092, %v6430
        %v7053 = vmul.f32 %v6093, %v6445
        %v7054 = vmul.f32 %v6094, %v6460
        %v7055 = vmul.f32 %v6095, %v6475
        %v7056 = vmul.f32 %v6096, %v6490
        %v7057 = vmul.f32 %v6097, %v6505
        %v7058 = vmul.f32 %v6098, %v6520
        %v7059 = vmul.f32 %v6099, %v6535
        %v7060 = vmul.f32 %v6100, %v6550
        %v7061 = vmul.f32 %v6101, %v6565
        %v7062 = vmul.f32 %v6102, %v6580
        %v7063 = vmul.f32 %v6103, %v6595
        %v7064 = vmul.f32 %v6104, %v6610
        %v7065 = vmul.f32 %v6105, %v6625
        %v7066 = vmul.f32 %v6106, %v6640
        %v7067 = vmul.f32 %v6107, %v6655
        %v7068 = vmul.f32 %v6108, %v6670
        %v7069 = vmul.f32 %v6109, %v6685
        %v7070 = vmul.f32 %v6110, %v6700
        %v7071 = vmul.f32 %v6111, %v6715
        %v7072 = vmul.f32 %v6112, %v6730
        %v7073 = vmul.f32 %v6113, %v6745
        %v7074 = vmul.f32 %v6114, %v6760
        %v7075 = vmul.f32 %v6115, %v6775
        %v7076 = vmul.f32 %v6116, %v6790
        %v7077 = vmul.f32 %v6117, %v6805
        %v7078 = vmul.f32 %v6118, %v6820
        %v7079 = vmul.f32 %v6119, %v6835
        %v7080 = vmul.f32 %v6120, %v6850
        %v7081 = vmul.f32 %v6121, %v6865
        %v7082 = vmul.f32 %v6122, %v6880
        %v7083 = vmul.f32 %v6123, %v6895
        %v7084 = vmul.f32 %v6124, %v6910
        %v7085 = vmul.f32 %v6125, %v6925
        %v7086 = vmul.f32 %v6126, %v6940
        %v7087 = vmul.f32 %v6127, %v6955
        %v7088 = vmul.f32 %v6128, %v6970
        %v7089 = vmul.f32 %v6129, %v6985
        %v7090 = vmul.f32 %v6130, %v7000
        %v7091 = vmul.f32 %v6131, %v7015
        %v7092 = vmul.f32 %v6132, %v7030
        %v7093 = vmul.f32 %v6133, %v7045
        %v7094 = vmul.f32 %v7046, %v5410
        %v7095 = vmul.f32 %v7047, %v5410
        %v7096 = vmul.f32 %v7048, %v5410
        %v7097 = vmul.f32 %v7049, %v5410
        %v7098 = vmul.f32 %v7050, %v5410
        %v7099 = vmul.f32 %v7051, %v5410
        %v7100 = vmul.f32 %v7052, %v5410
        %v7101 = vmul.f32 %v7053, %v5410
        %v7102 = vmul.f32 %v7054, %v5410
        %v7103 = vmul.f32 %v7055, %v5410
        %v7104 = vmul.f32 %v7056, %v5410
        %v7105 = vmul.f32 %v7057, %v5410
        %v7106 = vmul.f32 %v7058, %v5410
        %v7107 = vmul.f32 %v7059, %v5410
        %v7108 = vmul.f32 %v7060, %v5410
        %v7109 = vmul.f32 %v7061, %v5410
        %v7110 = vmul.f32 %v7062, %v5410
        %v7111 = vmul.f32 %v7063, %v5410
        %v7112 = vmul.f32 %v7064, %v5410
        %v7113 = vmul.f32 %v7065, %v5410
        %v7114 = vmul.f32 %v7066, %v5410
        %v7115 = vmul.f32 %v7067, %v5410
        %v7116 = vmul.f32 %v7068, %v5410
        %v7117 = vmul.f32 %v7069, %v5410
        %v7118 = vmul.f32 %v7070, %v5410
        %v7119 = vmul.f32 %v7071, %v5410
        %v7120 = vmul.f32 %v7072, %v5410
        %v7121 = vmul.f32 %v7073, %v5410
        %v7122 = vmul.f32 %v7074, %v5410
        %v7123 = vmul.f32 %v7075, %v5410
        %v7124 = vmul.f32 %v7076, %v5410
        %v7125 = vmul.f32 %v7077, %v5410
        %v7126 = vmul.f32 %v7078, %v5410
        %v7127 = vmul.f32 %v7079, %v5410
        %v7128 = vmul.f32 %v7080, %v5410
        %v7129 = vmul.f32 %v7081, %v5410
        %v7130 = vmul.f32 %v7082, %v5410
        %v7131 = vmul.f32 %v7083, %v5410
        %v7132 = vmul.f32 %v7084, %v5410
        %v7133 = vmul.f32 %v7085, %v5410
        %v7134 = vmul.f32 %v7086, %v5410
        %v7135 = vmul.f32 %v7087, %v5410
        %v7136 = vmul.f32 %v7088, %v5410
        %v7137 = vmul.f32 %v7089, %v5410
        %v7138 = vmul.f32 %v7090, %v5410
        %v7139 = vmul.f32 %v7091, %v5410
        %v7140 = vmul.f32 %v7092, %v5410
        %v7141 = vmul.f32 %v7093, %v5410
        %7190 = vrot.lane.b32.xlu0 %v7094, 96
        %v7191 = vpop.permute.xlu0 %7190
        %7192 = vrot.lane.b32.xlu0 %v7095, 96
        %v7193 = vpop.permute.xlu0 %7192
        %7194 = vrot.lane.b32.xlu0 %v7096, 96
        %v7195 = vpop.permute.xlu0 %7194
        %7196 = vrot.lane.b32.xlu0 %v7097, 96
        %v7197 = vpop.permute.xlu0 %7196
        %7198 = vrot.lane.b32.xlu0 %v7098, 96
        %v7199 = vpop.permute.xlu0 %7198
        %7200 = vrot.lane.b32.xlu0 %v7099, 96
        %v7201 = vpop.permute.xlu0 %7200
        %7202 = vrot.lane.b32.xlu0 %v7100, 96
        %v7203 = vpop.permute.xlu0 %7202
        %7204 = vrot.lane.b32.xlu0 %v7101, 96
        %v7205 = vpop.permute.xlu0 %7204
        %7206 = vrot.lane.b32.xlu0 %v7102, 96
        %v7207 = vpop.permute.xlu0 %7206
        %7208 = vrot.lane.b32.xlu0 %v7103, 96
        %v7209 = vpop.permute.xlu0 %7208
        %7210 = vrot.lane.b32.xlu0 %v7104, 96
        %v7211 = vpop.permute.xlu0 %7210
        %7212 = vrot.lane.b32.xlu0 %v7105, 96
        %v7213 = vpop.permute.xlu0 %7212
        %7214 = vrot.lane.b32.xlu0 %v7106, 96
        %v7215 = vpop.permute.xlu0 %7214
        %7216 = vrot.lane.b32.xlu0 %v7107, 96
        %v7217 = vpop.permute.xlu0 %7216
        %7218 = vrot.lane.b32.xlu0 %v7108, 96
        %v7219 = vpop.permute.xlu0 %7218
        %7220 = vrot.lane.b32.xlu0 %v7109, 96
        %v7221 = vpop.permute.xlu0 %7220
        %7222 = vrot.lane.b32.xlu0 %v7110, 96
        %v7223 = vpop.permute.xlu0 %7222
        %7224 = vrot.lane.b32.xlu0 %v7111, 96
        %v7225 = vpop.permute.xlu0 %7224
        %7226 = vrot.lane.b32.xlu0 %v7112, 96
        %v7227 = vpop.permute.xlu0 %7226
        %7228 = vrot.lane.b32.xlu0 %v7113, 96
        %v7229 = vpop.permute.xlu0 %7228
        %7230 = vrot.lane.b32.xlu0 %v7114, 96
        %v7231 = vpop.permute.xlu0 %7230
        %7232 = vrot.lane.b32.xlu0 %v7115, 96
        %v7233 = vpop.permute.xlu0 %7232
        %7234 = vrot.lane.b32.xlu0 %v7116, 96
        %v7235 = vpop.permute.xlu0 %7234
        %7236 = vrot.lane.b32.xlu0 %v7117, 96
        %v7237 = vpop.permute.xlu0 %7236
        %7238 = vrot.lane.b32.xlu0 %v7118, 96
        %v7239 = vpop.permute.xlu0 %7238
        %7240 = vrot.lane.b32.xlu0 %v7119, 96
        %v7241 = vpop.permute.xlu0 %7240
        %7242 = vrot.lane.b32.xlu0 %v7120, 96
        %v7243 = vpop.permute.xlu0 %7242
        %7244 = vrot.lane.b32.xlu0 %v7121, 96
        %v7245 = vpop.permute.xlu0 %7244
        %7246 = vrot.lane.b32.xlu0 %v7122, 96
        %v7247 = vpop.permute.xlu0 %7246
        %7248 = vrot.lane.b32.xlu0 %v7123, 96
        %v7249 = vpop.permute.xlu0 %7248
        %7250 = vrot.lane.b32.xlu0 %v7124, 96
        %v7251 = vpop.permute.xlu0 %7250
        %7252 = vrot.lane.b32.xlu0 %v7125, 96
        %v7253 = vpop.permute.xlu0 %7252
        %7254 = vrot.lane.b32.xlu0 %v7126, 96
        %v7255 = vpop.permute.xlu0 %7254
        %7256 = vrot.lane.b32.xlu0 %v7127, 96
        %v7257 = vpop.permute.xlu0 %7256
        %7258 = vrot.lane.b32.xlu0 %v7128, 96
        %v7259 = vpop.permute.xlu0 %7258
        %7260 = vrot.lane.b32.xlu0 %v7129, 96
        %v7261 = vpop.permute.xlu0 %7260
        %7262 = vrot.lane.b32.xlu0 %v7130, 96
        %v7263 = vpop.permute.xlu0 %7262
        %7264 = vrot.lane.b32.xlu0 %v7131, 96
        %v7265 = vpop.permute.xlu0 %7264
        %7266 = vrot.lane.b32.xlu0 %v7132, 96
        %v7267 = vpop.permute.xlu0 %7266
        %7268 = vrot.lane.b32.xlu0 %v7133, 96
        %v7269 = vpop.permute.xlu0 %7268
        %7270 = vrot.lane.b32.xlu0 %v7134, 96
        %v7271 = vpop.permute.xlu0 %7270
        %7272 = vrot.lane.b32.xlu0 %v7135, 96
        %v7273 = vpop.permute.xlu0 %7272
        %7274 = vrot.lane.b32.xlu0 %v7136, 96
        %v7275 = vpop.permute.xlu0 %7274
        %7276 = vrot.lane.b32.xlu0 %v7137, 96
        %v7277 = vpop.permute.xlu0 %7276
        %7278 = vrot.lane.b32.xlu0 %v7138, 96
        %v7279 = vpop.permute.xlu0 %7278
        %7280 = vrot.lane.b32.xlu0 %v7139, 96
        %v7281 = vpop.permute.xlu0 %7280
        %7282 = vrot.lane.b32.xlu0 %v7140, 96
        %v7283 = vpop.permute.xlu0 %7282
        %7284 = vrot.lane.b32.xlu0 %v7141, 96
        %v7285 = vpop.permute.xlu0 %7284
        %v7334 = vsel %vm1882, %v7191, 0.0
        %7335 = vadd.xlane.f32.xlu0 %v7334
        %v7336 = vpop.xlane.xlu0 %7335
        %v7337 = vsel %vm1882, %v7193, 0.0
        %7338 = vadd.xlane.f32.xlu0 %v7337
        %v7339 = vpop.xlane.xlu0 %7338
        %v7340 = vsel %vm1882, %v7195, 0.0
        %7341 = vadd.xlane.f32.xlu0 %v7340
        %v7342 = vpop.xlane.xlu0 %7341
        %v7343 = vsel %vm1882, %v7197, 0.0
        %7344 = vadd.xlane.f32.xlu0 %v7343
        %v7345 = vpop.xlane.xlu0 %7344
        %v7346 = vsel %vm1882, %v7199, 0.0
        %7347 = vadd.xlane.f32.xlu0 %v7346
        %v7348 = vpop.xlane.xlu0 %7347
        %v7349 = vsel %vm1882, %v7201, 0.0
        %7350 = vadd.xlane.f32.xlu0 %v7349
        %v7351 = vpop.xlane.xlu0 %7350
        %v7352 = vsel %vm1882, %v7203, 0.0
        %7353 = vadd.xlane.f32.xlu0 %v7352
        %v7354 = vpop.xlane.xlu0 %7353
        %v7355 = vsel %vm1882, %v7205, 0.0
        %7356 = vadd.xlane.f32.xlu0 %v7355
        %v7357 = vpop.xlane.xlu0 %7356
        %v7358 = vsel %vm1882, %v7207, 0.0
        %7359 = vadd.xlane.f32.xlu0 %v7358
        %v7360 = vpop.xlane.xlu0 %7359
        %v7361 = vsel %vm1882, %v7209, 0.0
        %7362 = vadd.xlane.f32.xlu0 %v7361
        %v7363 = vpop.xlane.xlu0 %7362
        %v7364 = vsel %vm1882, %v7211, 0.0
        %7365 = vadd.xlane.f32.xlu0 %v7364
        %v7366 = vpop.xlane.xlu0 %7365
        %v7367 = vsel %vm1882, %v7213, 0.0
        %7368 = vadd.xlane.f32.xlu0 %v7367
        %v7369 = vpop.xlane.xlu0 %7368
        %v7370 = vsel %vm1882, %v7215, 0.0
        %7371 = vadd.xlane.f32.xlu0 %v7370
        %v7372 = vpop.xlane.xlu0 %7371
        %v7373 = vsel %vm1882, %v7217, 0.0
        %7374 = vadd.xlane.f32.xlu0 %v7373
        %v7375 = vpop.xlane.xlu0 %7374
        %v7376 = vsel %vm1882, %v7219, 0.0
        %7377 = vadd.xlane.f32.xlu0 %v7376
        %v7378 = vpop.xlane.xlu0 %7377
        %v7379 = vsel %vm1882, %v7221, 0.0
        %7380 = vadd.xlane.f32.xlu0 %v7379
        %v7381 = vpop.xlane.xlu0 %7380
        %v7382 = vsel %vm1882, %v7223, 0.0
        %7383 = vadd.xlane.f32.xlu0 %v7382
        %v7384 = vpop.xlane.xlu0 %7383
        %v7385 = vsel %vm1882, %v7225, 0.0
        %7386 = vadd.xlane.f32.xlu0 %v7385
        %v7387 = vpop.xlane.xlu0 %7386
        %v7388 = vsel %vm1882, %v7227, 0.0
        %7389 = vadd.xlane.f32.xlu0 %v7388
        %v7390 = vpop.xlane.xlu0 %7389
        %v7391 = vsel %vm1882, %v7229, 0.0
        %7392 = vadd.xlane.f32.xlu0 %v7391
        %v7393 = vpop.xlane.xlu0 %7392
        %v7394 = vsel %vm1882, %v7231, 0.0
        %7395 = vadd.xlane.f32.xlu0 %v7394
        %v7396 = vpop.xlane.xlu0 %7395
        %v7397 = vsel %vm1882, %v7233, 0.0
        %7398 = vadd.xlane.f32.xlu0 %v7397
        %v7399 = vpop.xlane.xlu0 %7398
        %v7400 = vsel %vm1882, %v7235, 0.0
        %7401 = vadd.xlane.f32.xlu0 %v7400
        %v7402 = vpop.xlane.xlu0 %7401
        %v7403 = vsel %vm1882, %v7237, 0.0
        %7404 = vadd.xlane.f32.xlu0 %v7403
        %v7405 = vpop.xlane.xlu0 %7404
        %v7406 = vsel %vm1882, %v7239, 0.0
        %7407 = vadd.xlane.f32.xlu0 %v7406
        %v7408 = vpop.xlane.xlu0 %7407
        %v7409 = vsel %vm1882, %v7241, 0.0
        %7410 = vadd.xlane.f32.xlu0 %v7409
        %v7411 = vpop.xlane.xlu0 %7410
        %v7412 = vsel %vm1882, %v7243, 0.0
        %7413 = vadd.xlane.f32.xlu0 %v7412
        %v7414 = vpop.xlane.xlu0 %7413
        %v7415 = vsel %vm1882, %v7245, 0.0
        %7416 = vadd.xlane.f32.xlu0 %v7415
        %v7417 = vpop.xlane.xlu0 %7416
        %v7418 = vsel %vm1882, %v7247, 0.0
        %7419 = vadd.xlane.f32.xlu0 %v7418
        %v7420 = vpop.xlane.xlu0 %7419
        %v7421 = vsel %vm1882, %v7249, 0.0
        %7422 = vadd.xlane.f32.xlu0 %v7421
        %v7423 = vpop.xlane.xlu0 %7422
        %v7424 = vsel %vm1882, %v7251, 0.0
        %7425 = vadd.xlane.f32.xlu0 %v7424
        %v7426 = vpop.xlane.xlu0 %7425
        %v7427 = vsel %vm1882, %v7253, 0.0
        %7428 = vadd.xlane.f32.xlu0 %v7427
        %v7429 = vpop.xlane.xlu0 %7428
        %v7430 = vsel %vm1882, %v7255, 0.0
        %7431 = vadd.xlane.f32.xlu0 %v7430
        %v7432 = vpop.xlane.xlu0 %7431
        %v7433 = vsel %vm1882, %v7257, 0.0
        %7434 = vadd.xlane.f32.xlu0 %v7433
        %v7435 = vpop.xlane.xlu0 %7434
        %v7436 = vsel %vm1882, %v7259, 0.0
        %7437 = vadd.xlane.f32.xlu0 %v7436
        %v7438 = vpop.xlane.xlu0 %7437
        %v7439 = vsel %vm1882, %v7261, 0.0
        %7440 = vadd.xlane.f32.xlu0 %v7439
        %v7441 = vpop.xlane.xlu0 %7440
        %v7442 = vsel %vm1882, %v7263, 0.0
        %7443 = vadd.xlane.f32.xlu0 %v7442
        %v7444 = vpop.xlane.xlu0 %7443
        %v7445 = vsel %vm1882, %v7265, 0.0
        %7446 = vadd.xlane.f32.xlu0 %v7445
        %v7447 = vpop.xlane.xlu0 %7446
        %v7448 = vsel %vm1882, %v7267, 0.0
        %7449 = vadd.xlane.f32.xlu0 %v7448
        %v7450 = vpop.xlane.xlu0 %7449
        %v7451 = vsel %vm1882, %v7269, 0.0
        %7452 = vadd.xlane.f32.xlu0 %v7451
        %v7453 = vpop.xlane.xlu0 %7452
        %v7454 = vsel %vm1882, %v7271, 0.0
        %7455 = vadd.xlane.f32.xlu0 %v7454
        %v7456 = vpop.xlane.xlu0 %7455
        %v7457 = vsel %vm1882, %v7273, 0.0
        %7458 = vadd.xlane.f32.xlu0 %v7457
        %v7459 = vpop.xlane.xlu0 %7458
        %v7460 = vsel %vm1882, %v7275, 0.0
        %7461 = vadd.xlane.f32.xlu0 %v7460
        %v7462 = vpop.xlane.xlu0 %7461
        %v7463 = vsel %vm1882, %v7277, 0.0
        %7464 = vadd.xlane.f32.xlu0 %v7463
        %v7465 = vpop.xlane.xlu0 %7464
        %v7466 = vsel %vm1882, %v7279, 0.0
        %7467 = vadd.xlane.f32.xlu0 %v7466
        %v7468 = vpop.xlane.xlu0 %7467
        %v7469 = vsel %vm1882, %v7281, 0.0
        %7470 = vadd.xlane.f32.xlu0 %v7469
        %v7471 = vpop.xlane.xlu0 %7470
        %v7472 = vsel %vm1882, %v7283, 0.0
        %7473 = vadd.xlane.f32.xlu0 %v7472
        %v7474 = vpop.xlane.xlu0 %7473
        %v7475 = vsel %vm1882, %v7285, 0.0
        %7476 = vadd.xlane.f32.xlu0 %v7475
        %v7477 = vpop.xlane.xlu0 %7476
        %v7478 = vadd.f32 %v7336, %v5797
        %v7479 = vadd.f32 %v7339, %v5797
        %v7480 = vadd.f32 %v7342, %v5797
        %v7481 = vadd.f32 %v7345, %v5797
        %v7482 = vadd.f32 %v7348, %v5797
        %v7483 = vadd.f32 %v7351, %v5797
        %v7484 = vadd.f32 %v7354, %v5797
        %v7485 = vadd.f32 %v7357, %v5797
        %v7486 = vadd.f32 %v7360, %v5797
        %v7487 = vadd.f32 %v7363, %v5797
        %v7488 = vadd.f32 %v7366, %v5797
        %v7489 = vadd.f32 %v7369, %v5797
        %v7490 = vadd.f32 %v7372, %v5797
        %v7491 = vadd.f32 %v7375, %v5797
        %v7492 = vadd.f32 %v7378, %v5797
        %v7493 = vadd.f32 %v7381, %v5797
        %v7494 = vadd.f32 %v7384, %v5797
        %v7495 = vadd.f32 %v7387, %v5797
        %v7496 = vadd.f32 %v7390, %v5797
        %v7497 = vadd.f32 %v7393, %v5797
        %v7498 = vadd.f32 %v7396, %v5797
        %v7499 = vadd.f32 %v7399, %v5797
        %v7500 = vadd.f32 %v7402, %v5797
        %v7501 = vadd.f32 %v7405, %v5797
        %v7502 = vadd.f32 %v7408, %v5797
        %v7503 = vadd.f32 %v7411, %v5797
        %v7504 = vadd.f32 %v7414, %v5797
        %v7505 = vadd.f32 %v7417, %v5797
        %v7506 = vadd.f32 %v7420, %v5797
        %v7507 = vadd.f32 %v7423, %v5797
        %v7508 = vadd.f32 %v7426, %v5797
        %v7509 = vadd.f32 %v7429, %v5797
        %v7510 = vadd.f32 %v7432, %v5797
        %v7511 = vadd.f32 %v7435, %v5797
        %v7512 = vadd.f32 %v7438, %v5797
        %v7513 = vadd.f32 %v7441, %v5797
        %v7514 = vadd.f32 %v7444, %v5797
        %v7515 = vadd.f32 %v7447, %v5797
        %v7516 = vadd.f32 %v7450, %v5797
        %v7517 = vadd.f32 %v7453, %v5797
        %v7518 = vadd.f32 %v7456, %v5797
        %v7519 = vadd.f32 %v7459, %v5797
        %v7520 = vadd.f32 %v7462, %v5797
        %v7521 = vadd.f32 %v7465, %v5797
        %v7522 = vadd.f32 %v7468, %v5797
        %v7523 = vadd.f32 %v7471, %v5797
        %v7524 = vadd.f32 %v7474, %v5797
        %v7525 = vadd.f32 %v7477, %v5797
        %7526 = vset.pattern.permute.xlu0 2
        %7527 = vperm.xlu0 %7526, %v3398
        %v7528 = vpop.permute.xlu0 %7527
        %7530 = vset.pattern.permute.xlu0 2
        %7531 = vperm.xlu0 %7530, %v3413
        %v7532 = vpop.permute.xlu0 %7531
        %7534 = vset.pattern.permute.xlu0 2
        %7535 = vperm.xlu0 %7534, %v3428
        %v7536 = vpop.permute.xlu0 %7535
        %7538 = vset.pattern.permute.xlu0 2
        %7539 = vperm.xlu0 %7538, %v3443
        %v7540 = vpop.permute.xlu0 %7539
        %7542 = vset.pattern.permute.xlu0 2
        %7543 = vperm.xlu0 %7542, %v3458
        %v7544 = vpop.permute.xlu0 %7543
        %7546 = vset.pattern.permute.xlu0 2
        %7547 = vperm.xlu0 %7546, %v3473
        %v7548 = vpop.permute.xlu0 %7547
        %7550 = vset.pattern.permute.xlu0 2
        %7551 = vperm.xlu0 %7550, %v3488
        %v7552 = vpop.permute.xlu0 %7551
        %7554 = vset.pattern.permute.xlu0 2
        %7555 = vperm.xlu0 %7554, %v3503
        %v7556 = vpop.permute.xlu0 %7555
        %7558 = vset.pattern.permute.xlu0 2
        %7559 = vperm.xlu0 %7558, %v3518
        %v7560 = vpop.permute.xlu0 %7559
        %7562 = vset.pattern.permute.xlu0 2
        %7563 = vperm.xlu0 %7562, %v3533
        %v7564 = vpop.permute.xlu0 %7563
        %7566 = vset.pattern.permute.xlu0 2
        %7567 = vperm.xlu0 %7566, %v3548
        %v7568 = vpop.permute.xlu0 %7567
        %7570 = vset.pattern.permute.xlu0 2
        %7571 = vperm.xlu0 %7570, %v3563
        %v7572 = vpop.permute.xlu0 %7571
        %7574 = vset.pattern.permute.xlu0 2
        %7575 = vperm.xlu0 %7574, %v3578
        %v7576 = vpop.permute.xlu0 %7575
        %7578 = vset.pattern.permute.xlu0 2
        %7579 = vperm.xlu0 %7578, %v3593
        %v7580 = vpop.permute.xlu0 %7579
        %7582 = vset.pattern.permute.xlu0 2
        %7583 = vperm.xlu0 %7582, %v3608
        %v7584 = vpop.permute.xlu0 %7583
        %7586 = vset.pattern.permute.xlu0 2
        %7587 = vperm.xlu0 %7586, %v3623
        %v7588 = vpop.permute.xlu0 %7587
        %7590 = vset.pattern.permute.xlu0 2
        %7591 = vperm.xlu0 %7590, %v3638
        %v7592 = vpop.permute.xlu0 %7591
        %7594 = vset.pattern.permute.xlu0 2
        %7595 = vperm.xlu0 %7594, %v3653
        %v7596 = vpop.permute.xlu0 %7595
        %7598 = vset.pattern.permute.xlu0 2
        %7599 = vperm.xlu0 %7598, %v3668
        %v7600 = vpop.permute.xlu0 %7599
        %7602 = vset.pattern.permute.xlu0 2
        %7603 = vperm.xlu0 %7602, %v3683
        %v7604 = vpop.permute.xlu0 %7603
        %7606 = vset.pattern.permute.xlu0 2
        %7607 = vperm.xlu0 %7606, %v3698
        %v7608 = vpop.permute.xlu0 %7607
        %7610 = vset.pattern.permute.xlu0 2
        %7611 = vperm.xlu0 %7610, %v3713
        %v7612 = vpop.permute.xlu0 %7611
        %7614 = vset.pattern.permute.xlu0 2
        %7615 = vperm.xlu0 %7614, %v3728
        %v7616 = vpop.permute.xlu0 %7615
        %7618 = vset.pattern.permute.xlu0 2
        %7619 = vperm.xlu0 %7618, %v3743
        %v7620 = vpop.permute.xlu0 %7619
        %7622 = vset.pattern.permute.xlu0 2
        %7623 = vperm.xlu0 %7622, %v3758
        %v7624 = vpop.permute.xlu0 %7623
        %7626 = vset.pattern.permute.xlu0 2
        %7627 = vperm.xlu0 %7626, %v3773
        %v7628 = vpop.permute.xlu0 %7627
        %7630 = vset.pattern.permute.xlu0 2
        %7631 = vperm.xlu0 %7630, %v3788
        %v7632 = vpop.permute.xlu0 %7631
        %7634 = vset.pattern.permute.xlu0 2
        %7635 = vperm.xlu0 %7634, %v3803
        %v7636 = vpop.permute.xlu0 %7635
        %7638 = vset.pattern.permute.xlu0 2
        %7639 = vperm.xlu0 %7638, %v3818
        %v7640 = vpop.permute.xlu0 %7639
        %7642 = vset.pattern.permute.xlu0 2
        %7643 = vperm.xlu0 %7642, %v3833
        %v7644 = vpop.permute.xlu0 %7643
        %7646 = vset.pattern.permute.xlu0 2
        %7647 = vperm.xlu0 %7646, %v3848
        %v7648 = vpop.permute.xlu0 %7647
        %7650 = vset.pattern.permute.xlu0 2
        %7651 = vperm.xlu0 %7650, %v3863
        %v7652 = vpop.permute.xlu0 %7651
        %7654 = vset.pattern.permute.xlu0 2
        %7655 = vperm.xlu0 %7654, %v3878
        %v7656 = vpop.permute.xlu0 %7655
        %7658 = vset.pattern.permute.xlu0 2
        %7659 = vperm.xlu0 %7658, %v3893
        %v7660 = vpop.permute.xlu0 %7659
        %7662 = vset.pattern.permute.xlu0 2
        %7663 = vperm.xlu0 %7662, %v3908
        %v7664 = vpop.permute.xlu0 %7663
        %7666 = vset.pattern.permute.xlu0 2
        %7667 = vperm.xlu0 %7666, %v3923
        %v7668 = vpop.permute.xlu0 %7667
        %7670 = vset.pattern.permute.xlu0 2
        %7671 = vperm.xlu0 %7670, %v3938
        %v7672 = vpop.permute.xlu0 %7671
        %7674 = vset.pattern.permute.xlu0 2
        %7675 = vperm.xlu0 %7674, %v3953
        %v7676 = vpop.permute.xlu0 %7675
        %7678 = vset.pattern.permute.xlu0 2
        %7679 = vperm.xlu0 %7678, %v3968
        %v7680 = vpop.permute.xlu0 %7679
        %7682 = vset.pattern.permute.xlu0 2
        %7683 = vperm.xlu0 %7682, %v3983
        %v7684 = vpop.permute.xlu0 %7683
        %7686 = vset.pattern.permute.xlu0 2
        %7687 = vperm.xlu0 %7686, %v3998
        %v7688 = vpop.permute.xlu0 %7687
        %7690 = vset.pattern.permute.xlu0 2
        %7691 = vperm.xlu0 %7690, %v4013
        %v7692 = vpop.permute.xlu0 %7691
        %7694 = vset.pattern.permute.xlu0 2
        %7695 = vperm.xlu0 %7694, %v4028
        %v7696 = vpop.permute.xlu0 %7695
        %7698 = vset.pattern.permute.xlu0 2
        %7699 = vperm.xlu0 %7698, %v4043
        %v7700 = vpop.permute.xlu0 %7699
        %7702 = vset.pattern.permute.xlu0 2
        %7703 = vperm.xlu0 %7702, %v4058
        %v7704 = vpop.permute.xlu0 %7703
        %7706 = vset.pattern.permute.xlu0 2
        %7707 = vperm.xlu0 %7706, %v4073
        %v7708 = vpop.permute.xlu0 %7707
        %7710 = vset.pattern.permute.xlu0 2
        %7711 = vperm.xlu0 %7710, %v4088
        %v7712 = vpop.permute.xlu0 %7711
        %7714 = vset.pattern.permute.xlu0 2
        %7715 = vperm.xlu0 %7714, %v4103
        %v7716 = vpop.permute.xlu0 %7715
        %v7718 = vmul.f32 %v7528, %v699
        %v7719 = vmul.f32 %v7532, %v701
        %v7720 = vmul.f32 %v7536, %v704
        %v7721 = vmul.f32 %v7540, %v706
        %v7722 = vmul.f32 %v7544, %v709
        %v7723 = vmul.f32 %v7548, %v711
        %v7724 = vmul.f32 %v7552, %v714
        %v7725 = vmul.f32 %v7556, %v716
        %v7726 = vmul.f32 %v7560, %v719
        %v7727 = vmul.f32 %v7564, %v721
        %v7728 = vmul.f32 %v7568, %v724
        %v7729 = vmul.f32 %v7572, %v726
        %v7730 = vmul.f32 %v7576, %v729
        %v7731 = vmul.f32 %v7580, %v731
        %v7732 = vmul.f32 %v7584, %v734
        %v7733 = vmul.f32 %v7588, %v736
        %v7734 = vmul.f32 %v7592, %v739
        %v7735 = vmul.f32 %v7596, %v741
        %v7736 = vmul.f32 %v7600, %v744
        %v7737 = vmul.f32 %v7604, %v746
        %v7738 = vmul.f32 %v7608, %v749
        %v7739 = vmul.f32 %v7612, %v751
        %v7740 = vmul.f32 %v7616, %v754
        %v7741 = vmul.f32 %v7620, %v756
        %v7742 = vmul.f32 %v7624, %v759
        %v7743 = vmul.f32 %v7628, %v761
        %v7744 = vmul.f32 %v7632, %v764
        %v7745 = vmul.f32 %v7636, %v766
        %v7746 = vmul.f32 %v7640, %v769
        %v7747 = vmul.f32 %v7644, %v771
        %v7748 = vmul.f32 %v7648, %v774
        %v7749 = vmul.f32 %v7652, %v776
        %v7750 = vmul.f32 %v7656, %v779
        %v7751 = vmul.f32 %v7660, %v781
        %v7752 = vmul.f32 %v7664, %v784
        %v7753 = vmul.f32 %v7668, %v786
        %v7754 = vmul.f32 %v7672, %v789
        %v7755 = vmul.f32 %v7676, %v791
        %v7756 = vmul.f32 %v7680, %v794
        %v7757 = vmul.f32 %v7684, %v796
        %v7758 = vmul.f32 %v7688, %v799
        %v7759 = vmul.f32 %v7692, %v801
        %v7760 = vmul.f32 %v7696, %v804
        %v7761 = vmul.f32 %v7700, %v806
        %v7762 = vmul.f32 %v7704, %v809
        %v7763 = vmul.f32 %v7708, %v811
        %v7764 = vmul.f32 %v7712, %v814
        %v7765 = vmul.f32 %v7716, %v816
        %v7766 = vadd.f32 %v7718, %v4396
        %v7767 = vadd.f32 %v7719, %v4396
        %v7768 = vadd.f32 %v7720, %v4396
        %v7769 = vadd.f32 %v7721, %v4396
        %v7770 = vadd.f32 %v7722, %v4396
        %v7771 = vadd.f32 %v7723, %v4396
        %v7772 = vadd.f32 %v7724, %v4396
        %v7773 = vadd.f32 %v7725, %v4396
        %v7774 = vadd.f32 %v7726, %v4396
        %v7775 = vadd.f32 %v7727, %v4396
        %v7776 = vadd.f32 %v7728, %v4396
        %v7777 = vadd.f32 %v7729, %v4396
        %v7778 = vadd.f32 %v7730, %v4396
        %v7779 = vadd.f32 %v7731, %v4396
        %v7780 = vadd.f32 %v7732, %v4396
        %v7781 = vadd.f32 %v7733, %v4396
        %v7782 = vadd.f32 %v7734, %v4396
        %v7783 = vadd.f32 %v7735, %v4396
        %v7784 = vadd.f32 %v7736, %v4396
        %v7785 = vadd.f32 %v7737, %v4396
        %v7786 = vadd.f32 %v7738, %v4396
        %v7787 = vadd.f32 %v7739, %v4396
        %v7788 = vadd.f32 %v7740, %v4396
        %v7789 = vadd.f32 %v7741, %v4396
        %v7790 = vadd.f32 %v7742, %v4396
        %v7791 = vadd.f32 %v7743, %v4396
        %v7792 = vadd.f32 %v7744, %v4396
        %v7793 = vadd.f32 %v7745, %v4396
        %v7794 = vadd.f32 %v7746, %v4396
        %v7795 = vadd.f32 %v7747, %v4396
        %v7796 = vadd.f32 %v7748, %v4396
        %v7797 = vadd.f32 %v7749, %v4396
        %v7798 = vadd.f32 %v7750, %v4396
        %v7799 = vadd.f32 %v7751, %v4396
        %v7800 = vadd.f32 %v7752, %v4396
        %v7801 = vadd.f32 %v7753, %v4396
        %v7802 = vadd.f32 %v7754, %v4396
        %v7803 = vadd.f32 %v7755, %v4396
        %v7804 = vadd.f32 %v7756, %v4396
        %v7805 = vadd.f32 %v7757, %v4396
        %v7806 = vadd.f32 %v7758, %v4396
        %v7807 = vadd.f32 %v7759, %v4396
        %v7808 = vadd.f32 %v7760, %v4396
        %v7809 = vadd.f32 %v7761, %v4396
        %v7810 = vadd.f32 %v7762, %v4396
        %v7811 = vadd.f32 %v7763, %v4396
        %v7812 = vadd.f32 %v7764, %v4396
        %v7813 = vadd.f32 %v7765, %v4396
        %v7814 = vxor.u32 %v7766, 2147483648
        %v7815 = vxor.u32 %v7767, 2147483648
        %v7816 = vxor.u32 %v7768, 2147483648
        %v7817 = vxor.u32 %v7769, 2147483648
        %v7818 = vxor.u32 %v7770, 2147483648
        %v7819 = vxor.u32 %v7771, 2147483648
        %v7820 = vxor.u32 %v7772, 2147483648
        %v7821 = vxor.u32 %v7773, 2147483648
        %v7822 = vxor.u32 %v7774, 2147483648
        %v7823 = vxor.u32 %v7775, 2147483648
        %v7824 = vxor.u32 %v7776, 2147483648
        %v7825 = vxor.u32 %v7777, 2147483648
        %v7826 = vxor.u32 %v7778, 2147483648
        %v7827 = vxor.u32 %v7779, 2147483648
        %v7828 = vxor.u32 %v7780, 2147483648
        %v7829 = vxor.u32 %v7781, 2147483648
        %v7830 = vxor.u32 %v7782, 2147483648
        %v7831 = vxor.u32 %v7783, 2147483648
        %v7832 = vxor.u32 %v7784, 2147483648
        %v7833 = vxor.u32 %v7785, 2147483648
        %v7834 = vxor.u32 %v7786, 2147483648
        %v7835 = vxor.u32 %v7787, 2147483648
        %v7836 = vxor.u32 %v7788, 2147483648
        %v7837 = vxor.u32 %v7789, 2147483648
        %v7838 = vxor.u32 %v7790, 2147483648
        %v7839 = vxor.u32 %v7791, 2147483648
        %v7840 = vxor.u32 %v7792, 2147483648
        %v7841 = vxor.u32 %v7793, 2147483648
        %v7842 = vxor.u32 %v7794, 2147483648
        %v7843 = vxor.u32 %v7795, 2147483648
        %v7844 = vxor.u32 %v7796, 2147483648
        %v7845 = vxor.u32 %v7797, 2147483648
        %v7846 = vxor.u32 %v7798, 2147483648
        %v7847 = vxor.u32 %v7799, 2147483648
        %v7848 = vxor.u32 %v7800, 2147483648
        %v7849 = vxor.u32 %v7801, 2147483648
        %v7850 = vxor.u32 %v7802, 2147483648
        %v7851 = vxor.u32 %v7803, 2147483648
        %v7852 = vxor.u32 %v7804, 2147483648
        %v7853 = vxor.u32 %v7805, 2147483648
        %v7854 = vxor.u32 %v7806, 2147483648
        %v7855 = vxor.u32 %v7807, 2147483648
        %v7856 = vxor.u32 %v7808, 2147483648
        %v7857 = vxor.u32 %v7809, 2147483648
        %v7858 = vxor.u32 %v7810, 2147483648
        %v7859 = vxor.u32 %v7811, 2147483648
        %v7860 = vxor.u32 %v7812, 2147483648
        %v7861 = vxor.u32 %v7813, 2147483648
        %v7862 = vmul.f32 %v7814, 1.442695
        %v7863 = vpow.pop %v7862
        %v7864 = vmul.f32 %v7815, 1.442695
        %v7865 = vpow.pop %v7864
        %v7866 = vmul.f32 %v7816, 1.442695
        %v7867 = vpow.pop %v7866
        %v7868 = vmul.f32 %v7817, 1.442695
        %v7869 = vpow.pop %v7868
        %v7870 = vmul.f32 %v7818, 1.442695
        %v7871 = vpow.pop %v7870
        %v7872 = vmul.f32 %v7819, 1.442695
        %v7873 = vpow.pop %v7872
        %v7874 = vmul.f32 %v7820, 1.442695
        %v7875 = vpow.pop %v7874
        %v7876 = vmul.f32 %v7821, 1.442695
        %v7877 = vpow.pop %v7876
        %v7878 = vmul.f32 %v7822, 1.442695
        %v7879 = vpow.pop %v7878
        %v7880 = vmul.f32 %v7823, 1.442695
        %v7881 = vpow.pop %v7880
        %v7882 = vmul.f32 %v7824, 1.442695
        %v7883 = vpow.pop %v7882
        %v7884 = vmul.f32 %v7825, 1.442695
        %v7885 = vpow.pop %v7884
        %v7886 = vmul.f32 %v7826, 1.442695
        %v7887 = vpow.pop %v7886
        %v7888 = vmul.f32 %v7827, 1.442695
        %v7889 = vpow.pop %v7888
        %v7890 = vmul.f32 %v7828, 1.442695
        %v7891 = vpow.pop %v7890
        %v7892 = vmul.f32 %v7829, 1.442695
        %v7893 = vpow.pop %v7892
        %v7894 = vmul.f32 %v7830, 1.442695
        %v7895 = vpow.pop %v7894
        %v7896 = vmul.f32 %v7831, 1.442695
        %v7897 = vpow.pop %v7896
        %v7898 = vmul.f32 %v7832, 1.442695
        %v7899 = vpow.pop %v7898
        %v7900 = vmul.f32 %v7833, 1.442695
        %v7901 = vpow.pop %v7900
        %v7902 = vmul.f32 %v7834, 1.442695
        %v7903 = vpow.pop %v7902
        %v7904 = vmul.f32 %v7835, 1.442695
        %v7905 = vpow.pop %v7904
        %v7906 = vmul.f32 %v7836, 1.442695
        %v7907 = vpow.pop %v7906
        %v7908 = vmul.f32 %v7837, 1.442695
        %v7909 = vpow.pop %v7908
        %v7910 = vmul.f32 %v7838, 1.442695
        %v7911 = vpow.pop %v7910
        %v7912 = vmul.f32 %v7839, 1.442695
        %v7913 = vpow.pop %v7912
        %v7914 = vmul.f32 %v7840, 1.442695
        %v7915 = vpow.pop %v7914
        %v7916 = vmul.f32 %v7841, 1.442695
        %v7917 = vpow.pop %v7916
        %v7918 = vmul.f32 %v7842, 1.442695
        %v7919 = vpow.pop %v7918
        %v7920 = vmul.f32 %v7843, 1.442695
        %v7921 = vpow.pop %v7920
        %v7922 = vmul.f32 %v7844, 1.442695
        %v7923 = vpow.pop %v7922
        %v7924 = vmul.f32 %v7845, 1.442695
        %v7925 = vpow.pop %v7924
        %v7926 = vmul.f32 %v7846, 1.442695
        %v7927 = vpow.pop %v7926
        %v7928 = vmul.f32 %v7847, 1.442695
        %v7929 = vpow.pop %v7928
        %v7930 = vmul.f32 %v7848, 1.442695
        %v7931 = vpow.pop %v7930
        %v7932 = vmul.f32 %v7849, 1.442695
        %v7933 = vpow.pop %v7932
        %v7934 = vmul.f32 %v7850, 1.442695
        %v7935 = vpow.pop %v7934
        %v7936 = vmul.f32 %v7851, 1.442695
        %v7937 = vpow.pop %v7936
        %v7938 = vmul.f32 %v7852, 1.442695
        %v7939 = vpow.pop %v7938
        %v7940 = vmul.f32 %v7853, 1.442695
        %v7941 = vpow.pop %v7940
        %v7942 = vmul.f32 %v7854, 1.442695
        %v7943 = vpow.pop %v7942
        %v7944 = vmul.f32 %v7855, 1.442695
        %v7945 = vpow.pop %v7944
        %v7946 = vmul.f32 %v7856, 1.442695
        %v7947 = vpow.pop %v7946
        %v7948 = vmul.f32 %v7857, 1.442695
        %v7949 = vpow.pop %v7948
        %v7950 = vmul.f32 %v7858, 1.442695
        %v7951 = vpow.pop %v7950
        %v7952 = vmul.f32 %v7859, 1.442695
        %v7953 = vpow.pop %v7952
        %v7954 = vmul.f32 %v7860, 1.442695
        %v7955 = vpow.pop %v7954
        %v7956 = vmul.f32 %v7861, 1.442695
        %v7957 = vpow.pop %v7956
        %v7958 = vadd.f32 %v7863, 1.0
        %v7959 = vadd.f32 %v7865, 1.0
        %v7960 = vadd.f32 %v7867, 1.0
        %v7961 = vadd.f32 %v7869, 1.0
        %v7962 = vadd.f32 %v7871, 1.0
        %v7963 = vadd.f32 %v7873, 1.0
        %v7964 = vadd.f32 %v7875, 1.0
        %v7965 = vadd.f32 %v7877, 1.0
        %v7966 = vadd.f32 %v7879, 1.0
        %v7967 = vadd.f32 %v7881, 1.0
        %v7968 = vadd.f32 %v7883, 1.0
        %v7969 = vadd.f32 %v7885, 1.0
        %v7970 = vadd.f32 %v7887, 1.0
        %v7971 = vadd.f32 %v7889, 1.0
        %v7972 = vadd.f32 %v7891, 1.0
        %v7973 = vadd.f32 %v7893, 1.0
        %v7974 = vadd.f32 %v7895, 1.0
        %v7975 = vadd.f32 %v7897, 1.0
        %v7976 = vadd.f32 %v7899, 1.0
        %v7977 = vadd.f32 %v7901, 1.0
        %v7978 = vadd.f32 %v7903, 1.0
        %v7979 = vadd.f32 %v7905, 1.0
        %v7980 = vadd.f32 %v7907, 1.0
        %v7981 = vadd.f32 %v7909, 1.0
        %v7982 = vadd.f32 %v7911, 1.0
        %v7983 = vadd.f32 %v7913, 1.0
        %v7984 = vadd.f32 %v7915, 1.0
        %v7985 = vadd.f32 %v7917, 1.0
        %v7986 = vadd.f32 %v7919, 1.0
        %v7987 = vadd.f32 %v7921, 1.0
        %v7988 = vadd.f32 %v7923, 1.0
        %v7989 = vadd.f32 %v7925, 1.0
        %v7990 = vadd.f32 %v7927, 1.0
        %v7991 = vadd.f32 %v7929, 1.0
        %v7992 = vadd.f32 %v7931, 1.0
        %v7993 = vadd.f32 %v7933, 1.0
        %v7994 = vadd.f32 %v7935, 1.0
        %v7995 = vadd.f32 %v7937, 1.0
        %v7996 = vadd.f32 %v7939, 1.0
        %v7997 = vadd.f32 %v7941, 1.0
        %v7998 = vadd.f32 %v7943, 1.0
        %v7999 = vadd.f32 %v7945, 1.0
        %v8000 = vadd.f32 %v7947, 1.0
        %v8001 = vadd.f32 %v7949, 1.0
        %v8002 = vadd.f32 %v7951, 1.0
        %v8003 = vadd.f32 %v7953, 1.0
        %v8004 = vadd.f32 %v7955, 1.0
        %v8005 = vadd.f32 %v7957, 1.0
        %v8006 = vrcp.pop %v7958
        %v8007 = vmul.f32 %v7958, %v8006
        %v8008 = vsub.f32 1.0, %v8007
        %v8009 = vmul.f32 %v8006, %v8008
        %v8010 = vadd.f32 %v8006, %v8009
        %vm8011 = vweird.f32 %v7958
        %vm8012 = vweird.f32 %v8006
        %vm8013 = vmor %vm8011, %vm8012
        %v8014 = vsel %vm8013, %v8006, %v8010
        %v8015 = vand.u32 2147483647, %v7958
        %vm8016 = vcmp.eq.f32.partialorder %v8015, 8.507059e+37
        %v8017 = vand.u32 %v7958, 2147483648
        %v8018 = vor.u32 1.1754944e-38, %v8017
        %v8019 = vsel %vm8016, %v8018, %v8014
        %v8020 = vmul.f32 1.0, %v8019
        %v8021 = vrcp.pop %v7959
        %v8022 = vmul.f32 %v7959, %v8021
        %v8023 = vsub.f32 1.0, %v8022
        %v8024 = vmul.f32 %v8021, %v8023
        %v8025 = vadd.f32 %v8021, %v8024
        %vm8026 = vweird.f32 %v7959
        %vm8027 = vweird.f32 %v8021
        %vm8028 = vmor %vm8026, %vm8027
        %v8029 = vsel %vm8028, %v8021, %v8025
        %v8030 = vand.u32 2147483647, %v7959
        %vm8031 = vcmp.eq.f32.partialorder %v8030, 8.507059e+37
        %v8032 = vand.u32 %v7959, 2147483648
        %v8033 = vor.u32 1.1754944e-38, %v8032
        %v8034 = vsel %vm8031, %v8033, %v8029
        %v8035 = vmul.f32 1.0, %v8034
        %v8036 = vrcp.pop %v7960
        %v8037 = vmul.f32 %v7960, %v8036
        %v8038 = vsub.f32 1.0, %v8037
        %v8039 = vmul.f32 %v8036, %v8038
        %v8040 = vadd.f32 %v8036, %v8039
        %vm8041 = vweird.f32 %v7960
        %vm8042 = vweird.f32 %v8036
        %vm8043 = vmor %vm8041, %vm8042
        %v8044 = vsel %vm8043, %v8036, %v8040
        %v8045 = vand.u32 2147483647, %v7960
        %vm8046 = vcmp.eq.f32.partialorder %v8045, 8.507059e+37
        %v8047 = vand.u32 %v7960, 2147483648
        %v8048 = vor.u32 1.1754944e-38, %v8047
        %v8049 = vsel %vm8046, %v8048, %v8044
        %v8050 = vmul.f32 1.0, %v8049
        %v8051 = vrcp.pop %v7961
        %v8052 = vmul.f32 %v7961, %v8051
        %v8053 = vsub.f32 1.0, %v8052
        %v8054 = vmul.f32 %v8051, %v8053
        %v8055 = vadd.f32 %v8051, %v8054
        %vm8056 = vweird.f32 %v7961
        %vm8057 = vweird.f32 %v8051
        %vm8058 = vmor %vm8056, %vm8057
        %v8059 = vsel %vm8058, %v8051, %v8055
        %v8060 = vand.u32 2147483647, %v7961
        %vm8061 = vcmp.eq.f32.partialorder %v8060, 8.507059e+37
        %v8062 = vand.u32 %v7961, 2147483648
        %v8063 = vor.u32 1.1754944e-38, %v8062
        %v8064 = vsel %vm8061, %v8063, %v8059
        %v8065 = vmul.f32 1.0, %v8064
        %v8066 = vrcp.pop %v7962
        %v8067 = vmul.f32 %v7962, %v8066
        %v8068 = vsub.f32 1.0, %v8067
        %v8069 = vmul.f32 %v8066, %v8068
        %v8070 = vadd.f32 %v8066, %v8069
        %vm8071 = vweird.f32 %v7962
        %vm8072 = vweird.f32 %v8066
        %vm8073 = vmor %vm8071, %vm8072
        %v8074 = vsel %vm8073, %v8066, %v8070
        %v8075 = vand.u32 2147483647, %v7962
        %vm8076 = vcmp.eq.f32.partialorder %v8075, 8.507059e+37
        %v8077 = vand.u32 %v7962, 2147483648
        %v8078 = vor.u32 1.1754944e-38, %v8077
        %v8079 = vsel %vm8076, %v8078, %v8074
        %v8080 = vmul.f32 1.0, %v8079
        %v8081 = vrcp.pop %v7963
        %v8082 = vmul.f32 %v7963, %v8081
        %v8083 = vsub.f32 1.0, %v8082
        %v8084 = vmul.f32 %v8081, %v8083
        %v8085 = vadd.f32 %v8081, %v8084
        %vm8086 = vweird.f32 %v7963
        %vm8087 = vweird.f32 %v8081
        %vm8088 = vmor %vm8086, %vm8087
        %v8089 = vsel %vm8088, %v8081, %v8085
        %v8090 = vand.u32 2147483647, %v7963
        %vm8091 = vcmp.eq.f32.partialorder %v8090, 8.507059e+37
        %v8092 = vand.u32 %v7963, 2147483648
        %v8093 = vor.u32 1.1754944e-38, %v8092
        %v8094 = vsel %vm8091, %v8093, %v8089
        %v8095 = vmul.f32 1.0, %v8094
        %v8096 = vrcp.pop %v7964
        %v8097 = vmul.f32 %v7964, %v8096
        %v8098 = vsub.f32 1.0, %v8097
        %v8099 = vmul.f32 %v8096, %v8098
        %v8100 = vadd.f32 %v8096, %v8099
        %vm8101 = vweird.f32 %v7964
        %vm8102 = vweird.f32 %v8096
        %vm8103 = vmor %vm8101, %vm8102
        %v8104 = vsel %vm8103, %v8096, %v8100
        %v8105 = vand.u32 2147483647, %v7964
        %vm8106 = vcmp.eq.f32.partialorder %v8105, 8.507059e+37
        %v8107 = vand.u32 %v7964, 2147483648
        %v8108 = vor.u32 1.1754944e-38, %v8107
        %v8109 = vsel %vm8106, %v8108, %v8104
        %v8110 = vmul.f32 1.0, %v8109
        %v8111 = vrcp.pop %v7965
        %v8112 = vmul.f32 %v7965, %v8111
        %v8113 = vsub.f32 1.0, %v8112
        %v8114 = vmul.f32 %v8111, %v8113
        %v8115 = vadd.f32 %v8111, %v8114
        %vm8116 = vweird.f32 %v7965
        %vm8117 = vweird.f32 %v8111
        %vm8118 = vmor %vm8116, %vm8117
        %v8119 = vsel %vm8118, %v8111, %v8115
        %v8120 = vand.u32 2147483647, %v7965
        %vm8121 = vcmp.eq.f32.partialorder %v8120, 8.507059e+37
        %v8122 = vand.u32 %v7965, 2147483648
        %v8123 = vor.u32 1.1754944e-38, %v8122
        %v8124 = vsel %vm8121, %v8123, %v8119
        %v8125 = vmul.f32 1.0, %v8124
        %v8126 = vrcp.pop %v7966
        %v8127 = vmul.f32 %v7966, %v8126
        %v8128 = vsub.f32 1.0, %v8127
        %v8129 = vmul.f32 %v8126, %v8128
        %v8130 = vadd.f32 %v8126, %v8129
        %vm8131 = vweird.f32 %v7966
        %vm8132 = vweird.f32 %v8126
        %vm8133 = vmor %vm8131, %vm8132
        %v8134 = vsel %vm8133, %v8126, %v8130
        %v8135 = vand.u32 2147483647, %v7966
        %vm8136 = vcmp.eq.f32.partialorder %v8135, 8.507059e+37
        %v8137 = vand.u32 %v7966, 2147483648
        %v8138 = vor.u32 1.1754944e-38, %v8137
        %v8139 = vsel %vm8136, %v8138, %v8134
        %v8140 = vmul.f32 1.0, %v8139
        %v8141 = vrcp.pop %v7967
        %v8142 = vmul.f32 %v7967, %v8141
        %v8143 = vsub.f32 1.0, %v8142
        %v8144 = vmul.f32 %v8141, %v8143
        %v8145 = vadd.f32 %v8141, %v8144
        %vm8146 = vweird.f32 %v7967
        %vm8147 = vweird.f32 %v8141
        %vm8148 = vmor %vm8146, %vm8147
        %v8149 = vsel %vm8148, %v8141, %v8145
        %v8150 = vand.u32 2147483647, %v7967
        %vm8151 = vcmp.eq.f32.partialorder %v8150, 8.507059e+37
        %v8152 = vand.u32 %v7967, 2147483648
        %v8153 = vor.u32 1.1754944e-38, %v8152
        %v8154 = vsel %vm8151, %v8153, %v8149
        %v8155 = vmul.f32 1.0, %v8154
        %v8156 = vrcp.pop %v7968
        %v8157 = vmul.f32 %v7968, %v8156
        %v8158 = vsub.f32 1.0, %v8157
        %v8159 = vmul.f32 %v8156, %v8158
        %v8160 = vadd.f32 %v8156, %v8159
        %vm8161 = vweird.f32 %v7968
        %vm8162 = vweird.f32 %v8156
        %vm8163 = vmor %vm8161, %vm8162
        %v8164 = vsel %vm8163, %v8156, %v8160
        %v8165 = vand.u32 2147483647, %v7968
        %vm8166 = vcmp.eq.f32.partialorder %v8165, 8.507059e+37
        %v8167 = vand.u32 %v7968, 2147483648
        %v8168 = vor.u32 1.1754944e-38, %v8167
        %v8169 = vsel %vm8166, %v8168, %v8164
        %v8170 = vmul.f32 1.0, %v8169
        %v8171 = vrcp.pop %v7969
        %v8172 = vmul.f32 %v7969, %v8171
        %v8173 = vsub.f32 1.0, %v8172
        %v8174 = vmul.f32 %v8171, %v8173
        %v8175 = vadd.f32 %v8171, %v8174
        %vm8176 = vweird.f32 %v7969
        %vm8177 = vweird.f32 %v8171
        %vm8178 = vmor %vm8176, %vm8177
        %v8179 = vsel %vm8178, %v8171, %v8175
        %v8180 = vand.u32 2147483647, %v7969
        %vm8181 = vcmp.eq.f32.partialorder %v8180, 8.507059e+37
        %v8182 = vand.u32 %v7969, 2147483648
        %v8183 = vor.u32 1.1754944e-38, %v8182
        %v8184 = vsel %vm8181, %v8183, %v8179
        %v8185 = vmul.f32 1.0, %v8184
        %v8186 = vrcp.pop %v7970
        %v8187 = vmul.f32 %v7970, %v8186
        %v8188 = vsub.f32 1.0, %v8187
        %v8189 = vmul.f32 %v8186, %v8188
        %v8190 = vadd.f32 %v8186, %v8189
        %vm8191 = vweird.f32 %v7970
        %vm8192 = vweird.f32 %v8186
        %vm8193 = vmor %vm8191, %vm8192
        %v8194 = vsel %vm8193, %v8186, %v8190
        %v8195 = vand.u32 2147483647, %v7970
        %vm8196 = vcmp.eq.f32.partialorder %v8195, 8.507059e+37
        %v8197 = vand.u32 %v7970, 2147483648
        %v8198 = vor.u32 1.1754944e-38, %v8197
        %v8199 = vsel %vm8196, %v8198, %v8194
        %v8200 = vmul.f32 1.0, %v8199
        %v8201 = vrcp.pop %v7971
        %v8202 = vmul.f32 %v7971, %v8201
        %v8203 = vsub.f32 1.0, %v8202
        %v8204 = vmul.f32 %v8201, %v8203
        %v8205 = vadd.f32 %v8201, %v8204
        %vm8206 = vweird.f32 %v7971
        %vm8207 = vweird.f32 %v8201
        %vm8208 = vmor %vm8206, %vm8207
        %v8209 = vsel %vm8208, %v8201, %v8205
        %v8210 = vand.u32 2147483647, %v7971
        %vm8211 = vcmp.eq.f32.partialorder %v8210, 8.507059e+37
        %v8212 = vand.u32 %v7971, 2147483648
        %v8213 = vor.u32 1.1754944e-38, %v8212
        %v8214 = vsel %vm8211, %v8213, %v8209
        %v8215 = vmul.f32 1.0, %v8214
        %v8216 = vrcp.pop %v7972
        %v8217 = vmul.f32 %v7972, %v8216
        %v8218 = vsub.f32 1.0, %v8217
        %v8219 = vmul.f32 %v8216, %v8218
        %v8220 = vadd.f32 %v8216, %v8219
        %vm8221 = vweird.f32 %v7972
        %vm8222 = vweird.f32 %v8216
        %vm8223 = vmor %vm8221, %vm8222
        %v8224 = vsel %vm8223, %v8216, %v8220
        %v8225 = vand.u32 2147483647, %v7972
        %vm8226 = vcmp.eq.f32.partialorder %v8225, 8.507059e+37
        %v8227 = vand.u32 %v7972, 2147483648
        %v8228 = vor.u32 1.1754944e-38, %v8227
        %v8229 = vsel %vm8226, %v8228, %v8224
        %v8230 = vmul.f32 1.0, %v8229
        %v8231 = vrcp.pop %v7973
        %v8232 = vmul.f32 %v7973, %v8231
        %v8233 = vsub.f32 1.0, %v8232
        %v8234 = vmul.f32 %v8231, %v8233
        %v8235 = vadd.f32 %v8231, %v8234
        %vm8236 = vweird.f32 %v7973
        %vm8237 = vweird.f32 %v8231
        %vm8238 = vmor %vm8236, %vm8237
        %v8239 = vsel %vm8238, %v8231, %v8235
        %v8240 = vand.u32 2147483647, %v7973
        %vm8241 = vcmp.eq.f32.partialorder %v8240, 8.507059e+37
        %v8242 = vand.u32 %v7973, 2147483648
        %v8243 = vor.u32 1.1754944e-38, %v8242
        %v8244 = vsel %vm8241, %v8243, %v8239
        %v8245 = vmul.f32 1.0, %v8244
        %v8246 = vrcp.pop %v7974
        %v8247 = vmul.f32 %v7974, %v8246
        %v8248 = vsub.f32 1.0, %v8247
        %v8249 = vmul.f32 %v8246, %v8248
        %v8250 = vadd.f32 %v8246, %v8249
        %vm8251 = vweird.f32 %v7974
        %vm8252 = vweird.f32 %v8246
        %vm8253 = vmor %vm8251, %vm8252
        %v8254 = vsel %vm8253, %v8246, %v8250
        %v8255 = vand.u32 2147483647, %v7974
        %vm8256 = vcmp.eq.f32.partialorder %v8255, 8.507059e+37
        %v8257 = vand.u32 %v7974, 2147483648
        %v8258 = vor.u32 1.1754944e-38, %v8257
        %v8259 = vsel %vm8256, %v8258, %v8254
        %v8260 = vmul.f32 1.0, %v8259
        %v8261 = vrcp.pop %v7975
        %v8262 = vmul.f32 %v7975, %v8261
        %v8263 = vsub.f32 1.0, %v8262
        %v8264 = vmul.f32 %v8261, %v8263
        %v8265 = vadd.f32 %v8261, %v8264
        %vm8266 = vweird.f32 %v7975
        %vm8267 = vweird.f32 %v8261
        %vm8268 = vmor %vm8266, %vm8267
        %v8269 = vsel %vm8268, %v8261, %v8265
        %v8270 = vand.u32 2147483647, %v7975
        %vm8271 = vcmp.eq.f32.partialorder %v8270, 8.507059e+37
        %v8272 = vand.u32 %v7975, 2147483648
        %v8273 = vor.u32 1.1754944e-38, %v8272
        %v8274 = vsel %vm8271, %v8273, %v8269
        %v8275 = vmul.f32 1.0, %v8274
        %v8276 = vrcp.pop %v7976
        %v8277 = vmul.f32 %v7976, %v8276
        %v8278 = vsub.f32 1.0, %v8277
        %v8279 = vmul.f32 %v8276, %v8278
        %v8280 = vadd.f32 %v8276, %v8279
        %vm8281 = vweird.f32 %v7976
        %vm8282 = vweird.f32 %v8276
        %vm8283 = vmor %vm8281, %vm8282
        %v8284 = vsel %vm8283, %v8276, %v8280
        %v8285 = vand.u32 2147483647, %v7976
        %vm8286 = vcmp.eq.f32.partialorder %v8285, 8.507059e+37
        %v8287 = vand.u32 %v7976, 2147483648
        %v8288 = vor.u32 1.1754944e-38, %v8287
        %v8289 = vsel %vm8286, %v8288, %v8284
        %v8290 = vmul.f32 1.0, %v8289
        %v8291 = vrcp.pop %v7977
        %v8292 = vmul.f32 %v7977, %v8291
        %v8293 = vsub.f32 1.0, %v8292
        %v8294 = vmul.f32 %v8291, %v8293
        %v8295 = vadd.f32 %v8291, %v8294
        %vm8296 = vweird.f32 %v7977
        %vm8297 = vweird.f32 %v8291
        %vm8298 = vmor %vm8296, %vm8297
        %v8299 = vsel %vm8298, %v8291, %v8295
        %v8300 = vand.u32 2147483647, %v7977
        %vm8301 = vcmp.eq.f32.partialorder %v8300, 8.507059e+37
        %v8302 = vand.u32 %v7977, 2147483648
        %v8303 = vor.u32 1.1754944e-38, %v8302
        %v8304 = vsel %vm8301, %v8303, %v8299
        %v8305 = vmul.f32 1.0, %v8304
        %v8306 = vrcp.pop %v7978
        %v8307 = vmul.f32 %v7978, %v8306
        %v8308 = vsub.f32 1.0, %v8307
        %v8309 = vmul.f32 %v8306, %v8308
        %v8310 = vadd.f32 %v8306, %v8309
        %vm8311 = vweird.f32 %v7978
        %vm8312 = vweird.f32 %v8306
        %vm8313 = vmor %vm8311, %vm8312
        %v8314 = vsel %vm8313, %v8306, %v8310
        %v8315 = vand.u32 2147483647, %v7978
        %vm8316 = vcmp.eq.f32.partialorder %v8315, 8.507059e+37
        %v8317 = vand.u32 %v7978, 2147483648
        %v8318 = vor.u32 1.1754944e-38, %v8317
        %v8319 = vsel %vm8316, %v8318, %v8314
        %v8320 = vmul.f32 1.0, %v8319
        %v8321 = vrcp.pop %v7979
        %v8322 = vmul.f32 %v7979, %v8321
        %v8323 = vsub.f32 1.0, %v8322
        %v8324 = vmul.f32 %v8321, %v8323
        %v8325 = vadd.f32 %v8321, %v8324
        %vm8326 = vweird.f32 %v7979
        %vm8327 = vweird.f32 %v8321
        %vm8328 = vmor %vm8326, %vm8327
        %v8329 = vsel %vm8328, %v8321, %v8325
        %v8330 = vand.u32 2147483647, %v7979
        %vm8331 = vcmp.eq.f32.partialorder %v8330, 8.507059e+37
        %v8332 = vand.u32 %v7979, 2147483648
        %v8333 = vor.u32 1.1754944e-38, %v8332
        %v8334 = vsel %vm8331, %v8333, %v8329
        %v8335 = vmul.f32 1.0, %v8334
        %v8336 = vrcp.pop %v7980
        %v8337 = vmul.f32 %v7980, %v8336
        %v8338 = vsub.f32 1.0, %v8337
        %v8339 = vmul.f32 %v8336, %v8338
        %v8340 = vadd.f32 %v8336, %v8339
        %vm8341 = vweird.f32 %v7980
        %vm8342 = vweird.f32 %v8336
        %vm8343 = vmor %vm8341, %vm8342
        %v8344 = vsel %vm8343, %v8336, %v8340
        %v8345 = vand.u32 2147483647, %v7980
        %vm8346 = vcmp.eq.f32.partialorder %v8345, 8.507059e+37
        %v8347 = vand.u32 %v7980, 2147483648
        %v8348 = vor.u32 1.1754944e-38, %v8347
        %v8349 = vsel %vm8346, %v8348, %v8344
        %v8350 = vmul.f32 1.0, %v8349
        %v8351 = vrcp.pop %v7981
        %v8352 = vmul.f32 %v7981, %v8351
        %v8353 = vsub.f32 1.0, %v8352
        %v8354 = vmul.f32 %v8351, %v8353
        %v8355 = vadd.f32 %v8351, %v8354
        %vm8356 = vweird.f32 %v7981
        %vm8357 = vweird.f32 %v8351
        %vm8358 = vmor %vm8356, %vm8357
        %v8359 = vsel %vm8358, %v8351, %v8355
        %v8360 = vand.u32 2147483647, %v7981
        %vm8361 = vcmp.eq.f32.partialorder %v8360, 8.507059e+37
        %v8362 = vand.u32 %v7981, 2147483648
        %v8363 = vor.u32 1.1754944e-38, %v8362
        %v8364 = vsel %vm8361, %v8363, %v8359
        %v8365 = vmul.f32 1.0, %v8364
        %v8366 = vrcp.pop %v7982
        %v8367 = vmul.f32 %v7982, %v8366
        %v8368 = vsub.f32 1.0, %v8367
        %v8369 = vmul.f32 %v8366, %v8368
        %v8370 = vadd.f32 %v8366, %v8369
        %vm8371 = vweird.f32 %v7982
        %vm8372 = vweird.f32 %v8366
        %vm8373 = vmor %vm8371, %vm8372
        %v8374 = vsel %vm8373, %v8366, %v8370
        %v8375 = vand.u32 2147483647, %v7982
        %vm8376 = vcmp.eq.f32.partialorder %v8375, 8.507059e+37
        %v8377 = vand.u32 %v7982, 2147483648
        %v8378 = vor.u32 1.1754944e-38, %v8377
        %v8379 = vsel %vm8376, %v8378, %v8374
        %v8380 = vmul.f32 1.0, %v8379
        %v8381 = vrcp.pop %v7983
        %v8382 = vmul.f32 %v7983, %v8381
        %v8383 = vsub.f32 1.0, %v8382
        %v8384 = vmul.f32 %v8381, %v8383
        %v8385 = vadd.f32 %v8381, %v8384
        %vm8386 = vweird.f32 %v7983
        %vm8387 = vweird.f32 %v8381
        %vm8388 = vmor %vm8386, %vm8387
        %v8389 = vsel %vm8388, %v8381, %v8385
        %v8390 = vand.u32 2147483647, %v7983
        %vm8391 = vcmp.eq.f32.partialorder %v8390, 8.507059e+37
        %v8392 = vand.u32 %v7983, 2147483648
        %v8393 = vor.u32 1.1754944e-38, %v8392
        %v8394 = vsel %vm8391, %v8393, %v8389
        %v8395 = vmul.f32 1.0, %v8394
        %v8396 = vrcp.pop %v7984
        %v8397 = vmul.f32 %v7984, %v8396
        %v8398 = vsub.f32 1.0, %v8397
        %v8399 = vmul.f32 %v8396, %v8398
        %v8400 = vadd.f32 %v8396, %v8399
        %vm8401 = vweird.f32 %v7984
        %vm8402 = vweird.f32 %v8396
        %vm8403 = vmor %vm8401, %vm8402
        %v8404 = vsel %vm8403, %v8396, %v8400
        %v8405 = vand.u32 2147483647, %v7984
        %vm8406 = vcmp.eq.f32.partialorder %v8405, 8.507059e+37
        %v8407 = vand.u32 %v7984, 2147483648
        %v8408 = vor.u32 1.1754944e-38, %v8407
        %v8409 = vsel %vm8406, %v8408, %v8404
        %v8410 = vmul.f32 1.0, %v8409
        %v8411 = vrcp.pop %v7985
        %v8412 = vmul.f32 %v7985, %v8411
        %v8413 = vsub.f32 1.0, %v8412
        %v8414 = vmul.f32 %v8411, %v8413
        %v8415 = vadd.f32 %v8411, %v8414
        %vm8416 = vweird.f32 %v7985
        %vm8417 = vweird.f32 %v8411
        %vm8418 = vmor %vm8416, %vm8417
        %v8419 = vsel %vm8418, %v8411, %v8415
        %v8420 = vand.u32 2147483647, %v7985
        %vm8421 = vcmp.eq.f32.partialorder %v8420, 8.507059e+37
        %v8422 = vand.u32 %v7985, 2147483648
        %v8423 = vor.u32 1.1754944e-38, %v8422
        %v8424 = vsel %vm8421, %v8423, %v8419
        %v8425 = vmul.f32 1.0, %v8424
        %v8426 = vrcp.pop %v7986
        %v8427 = vmul.f32 %v7986, %v8426
        %v8428 = vsub.f32 1.0, %v8427
        %v8429 = vmul.f32 %v8426, %v8428
        %v8430 = vadd.f32 %v8426, %v8429
        %vm8431 = vweird.f32 %v7986
        %vm8432 = vweird.f32 %v8426
        %vm8433 = vmor %vm8431, %vm8432
        %v8434 = vsel %vm8433, %v8426, %v8430
        %v8435 = vand.u32 2147483647, %v7986
        %vm8436 = vcmp.eq.f32.partialorder %v8435, 8.507059e+37
        %v8437 = vand.u32 %v7986, 2147483648
        %v8438 = vor.u32 1.1754944e-38, %v8437
        %v8439 = vsel %vm8436, %v8438, %v8434
        %v8440 = vmul.f32 1.0, %v8439
        %v8441 = vrcp.pop %v7987
        %v8442 = vmul.f32 %v7987, %v8441
        %v8443 = vsub.f32 1.0, %v8442
        %v8444 = vmul.f32 %v8441, %v8443
        %v8445 = vadd.f32 %v8441, %v8444
        %vm8446 = vweird.f32 %v7987
        %vm8447 = vweird.f32 %v8441
        %vm8448 = vmor %vm8446, %vm8447
        %v8449 = vsel %vm8448, %v8441, %v8445
        %v8450 = vand.u32 2147483647, %v7987
        %vm8451 = vcmp.eq.f32.partialorder %v8450, 8.507059e+37
        %v8452 = vand.u32 %v7987, 2147483648
        %v8453 = vor.u32 1.1754944e-38, %v8452
        %v8454 = vsel %vm8451, %v8453, %v8449
        %v8455 = vmul.f32 1.0, %v8454
        %v8456 = vrcp.pop %v7988
        %v8457 = vmul.f32 %v7988, %v8456
        %v8458 = vsub.f32 1.0, %v8457
        %v8459 = vmul.f32 %v8456, %v8458
        %v8460 = vadd.f32 %v8456, %v8459
        %vm8461 = vweird.f32 %v7988
        %vm8462 = vweird.f32 %v8456
        %vm8463 = vmor %vm8461, %vm8462
        %v8464 = vsel %vm8463, %v8456, %v8460
        %v8465 = vand.u32 2147483647, %v7988
        %vm8466 = vcmp.eq.f32.partialorder %v8465, 8.507059e+37
        %v8467 = vand.u32 %v7988, 2147483648
        %v8468 = vor.u32 1.1754944e-38, %v8467
        %v8469 = vsel %vm8466, %v8468, %v8464
        %v8470 = vmul.f32 1.0, %v8469
        %v8471 = vrcp.pop %v7989
        %v8472 = vmul.f32 %v7989, %v8471
        %v8473 = vsub.f32 1.0, %v8472
        %v8474 = vmul.f32 %v8471, %v8473
        %v8475 = vadd.f32 %v8471, %v8474
        %vm8476 = vweird.f32 %v7989
        %vm8477 = vweird.f32 %v8471
        %vm8478 = vmor %vm8476, %vm8477
        %v8479 = vsel %vm8478, %v8471, %v8475
        %v8480 = vand.u32 2147483647, %v7989
        %vm8481 = vcmp.eq.f32.partialorder %v8480, 8.507059e+37
        %v8482 = vand.u32 %v7989, 2147483648
        %v8483 = vor.u32 1.1754944e-38, %v8482
        %v8484 = vsel %vm8481, %v8483, %v8479
        %v8485 = vmul.f32 1.0, %v8484
        %v8486 = vrcp.pop %v7990
        %v8487 = vmul.f32 %v7990, %v8486
        %v8488 = vsub.f32 1.0, %v8487
        %v8489 = vmul.f32 %v8486, %v8488
        %v8490 = vadd.f32 %v8486, %v8489
        %vm8491 = vweird.f32 %v7990
        %vm8492 = vweird.f32 %v8486
        %vm8493 = vmor %vm8491, %vm8492
        %v8494 = vsel %vm8493, %v8486, %v8490
        %v8495 = vand.u32 2147483647, %v7990
        %vm8496 = vcmp.eq.f32.partialorder %v8495, 8.507059e+37
        %v8497 = vand.u32 %v7990, 2147483648
        %v8498 = vor.u32 1.1754944e-38, %v8497
        %v8499 = vsel %vm8496, %v8498, %v8494
        %v8500 = vmul.f32 1.0, %v8499
        %v8501 = vrcp.pop %v7991
        %v8502 = vmul.f32 %v7991, %v8501
        %v8503 = vsub.f32 1.0, %v8502
        %v8504 = vmul.f32 %v8501, %v8503
        %v8505 = vadd.f32 %v8501, %v8504
        %vm8506 = vweird.f32 %v7991
        %vm8507 = vweird.f32 %v8501
        %vm8508 = vmor %vm8506, %vm8507
        %v8509 = vsel %vm8508, %v8501, %v8505
        %v8510 = vand.u32 2147483647, %v7991
        %vm8511 = vcmp.eq.f32.partialorder %v8510, 8.507059e+37
        %v8512 = vand.u32 %v7991, 2147483648
        %v8513 = vor.u32 1.1754944e-38, %v8512
        %v8514 = vsel %vm8511, %v8513, %v8509
        %v8515 = vmul.f32 1.0, %v8514
        %v8516 = vrcp.pop %v7992
        %v8517 = vmul.f32 %v7992, %v8516
        %v8518 = vsub.f32 1.0, %v8517
        %v8519 = vmul.f32 %v8516, %v8518
        %v8520 = vadd.f32 %v8516, %v8519
        %vm8521 = vweird.f32 %v7992
        %vm8522 = vweird.f32 %v8516
        %vm8523 = vmor %vm8521, %vm8522
        %v8524 = vsel %vm8523, %v8516, %v8520
        %v8525 = vand.u32 2147483647, %v7992
        %vm8526 = vcmp.eq.f32.partialorder %v8525, 8.507059e+37
        %v8527 = vand.u32 %v7992, 2147483648
        %v8528 = vor.u32 1.1754944e-38, %v8527
        %v8529 = vsel %vm8526, %v8528, %v8524
        %v8530 = vmul.f32 1.0, %v8529
        %v8531 = vrcp.pop %v7993
        %v8532 = vmul.f32 %v7993, %v8531
        %v8533 = vsub.f32 1.0, %v8532
        %v8534 = vmul.f32 %v8531, %v8533
        %v8535 = vadd.f32 %v8531, %v8534
        %vm8536 = vweird.f32 %v7993
        %vm8537 = vweird.f32 %v8531
        %vm8538 = vmor %vm8536, %vm8537
        %v8539 = vsel %vm8538, %v8531, %v8535
        %v8540 = vand.u32 2147483647, %v7993
        %vm8541 = vcmp.eq.f32.partialorder %v8540, 8.507059e+37
        %v8542 = vand.u32 %v7993, 2147483648
        %v8543 = vor.u32 1.1754944e-38, %v8542
        %v8544 = vsel %vm8541, %v8543, %v8539
        %v8545 = vmul.f32 1.0, %v8544
        %v8546 = vrcp.pop %v7994
        %v8547 = vmul.f32 %v7994, %v8546
        %v8548 = vsub.f32 1.0, %v8547
        %v8549 = vmul.f32 %v8546, %v8548
        %v8550 = vadd.f32 %v8546, %v8549
        %vm8551 = vweird.f32 %v7994
        %vm8552 = vweird.f32 %v8546
        %vm8553 = vmor %vm8551, %vm8552
        %v8554 = vsel %vm8553, %v8546, %v8550
        %v8555 = vand.u32 2147483647, %v7994
        %vm8556 = vcmp.eq.f32.partialorder %v8555, 8.507059e+37
        %v8557 = vand.u32 %v7994, 2147483648
        %v8558 = vor.u32 1.1754944e-38, %v8557
        %v8559 = vsel %vm8556, %v8558, %v8554
        %v8560 = vmul.f32 1.0, %v8559
        %v8561 = vrcp.pop %v7995
        %v8562 = vmul.f32 %v7995, %v8561
        %v8563 = vsub.f32 1.0, %v8562
        %v8564 = vmul.f32 %v8561, %v8563
        %v8565 = vadd.f32 %v8561, %v8564
        %vm8566 = vweird.f32 %v7995
        %vm8567 = vweird.f32 %v8561
        %vm8568 = vmor %vm8566, %vm8567
        %v8569 = vsel %vm8568, %v8561, %v8565
        %v8570 = vand.u32 2147483647, %v7995
        %vm8571 = vcmp.eq.f32.partialorder %v8570, 8.507059e+37
        %v8572 = vand.u32 %v7995, 2147483648
        %v8573 = vor.u32 1.1754944e-38, %v8572
        %v8574 = vsel %vm8571, %v8573, %v8569
        %v8575 = vmul.f32 1.0, %v8574
        %v8576 = vrcp.pop %v7996
        %v8577 = vmul.f32 %v7996, %v8576
        %v8578 = vsub.f32 1.0, %v8577
        %v8579 = vmul.f32 %v8576, %v8578
        %v8580 = vadd.f32 %v8576, %v8579
        %vm8581 = vweird.f32 %v7996
        %vm8582 = vweird.f32 %v8576
        %vm8583 = vmor %vm8581, %vm8582
        %v8584 = vsel %vm8583, %v8576, %v8580
        %v8585 = vand.u32 2147483647, %v7996
        %vm8586 = vcmp.eq.f32.partialorder %v8585, 8.507059e+37
        %v8587 = vand.u32 %v7996, 2147483648
        %v8588 = vor.u32 1.1754944e-38, %v8587
        %v8589 = vsel %vm8586, %v8588, %v8584
        %v8590 = vmul.f32 1.0, %v8589
        %v8591 = vrcp.pop %v7997
        %v8592 = vmul.f32 %v7997, %v8591
        %v8593 = vsub.f32 1.0, %v8592
        %v8594 = vmul.f32 %v8591, %v8593
        %v8595 = vadd.f32 %v8591, %v8594
        %vm8596 = vweird.f32 %v7997
        %vm8597 = vweird.f32 %v8591
        %vm8598 = vmor %vm8596, %vm8597
        %v8599 = vsel %vm8598, %v8591, %v8595
        %v8600 = vand.u32 2147483647, %v7997
        %vm8601 = vcmp.eq.f32.partialorder %v8600, 8.507059e+37
        %v8602 = vand.u32 %v7997, 2147483648
        %v8603 = vor.u32 1.1754944e-38, %v8602
        %v8604 = vsel %vm8601, %v8603, %v8599
        %v8605 = vmul.f32 1.0, %v8604
        %v8606 = vrcp.pop %v7998
        %v8607 = vmul.f32 %v7998, %v8606
        %v8608 = vsub.f32 1.0, %v8607
        %v8609 = vmul.f32 %v8606, %v8608
        %v8610 = vadd.f32 %v8606, %v8609
        %vm8611 = vweird.f32 %v7998
        %vm8612 = vweird.f32 %v8606
        %vm8613 = vmor %vm8611, %vm8612
        %v8614 = vsel %vm8613, %v8606, %v8610
        %v8615 = vand.u32 2147483647, %v7998
        %vm8616 = vcmp.eq.f32.partialorder %v8615, 8.507059e+37
        %v8617 = vand.u32 %v7998, 2147483648
        %v8618 = vor.u32 1.1754944e-38, %v8617
        %v8619 = vsel %vm8616, %v8618, %v8614
        %v8620 = vmul.f32 1.0, %v8619
        %v8621 = vrcp.pop %v7999
        %v8622 = vmul.f32 %v7999, %v8621
        %v8623 = vsub.f32 1.0, %v8622
        %v8624 = vmul.f32 %v8621, %v8623
        %v8625 = vadd.f32 %v8621, %v8624
        %vm8626 = vweird.f32 %v7999
        %vm8627 = vweird.f32 %v8621
        %vm8628 = vmor %vm8626, %vm8627
        %v8629 = vsel %vm8628, %v8621, %v8625
        %v8630 = vand.u32 2147483647, %v7999
        %vm8631 = vcmp.eq.f32.partialorder %v8630, 8.507059e+37
        %v8632 = vand.u32 %v7999, 2147483648
        %v8633 = vor.u32 1.1754944e-38, %v8632
        %v8634 = vsel %vm8631, %v8633, %v8629
        %v8635 = vmul.f32 1.0, %v8634
        %v8636 = vrcp.pop %v8000
        %v8637 = vmul.f32 %v8000, %v8636
        %v8638 = vsub.f32 1.0, %v8637
        %v8639 = vmul.f32 %v8636, %v8638
        %v8640 = vadd.f32 %v8636, %v8639
        %vm8641 = vweird.f32 %v8000
        %vm8642 = vweird.f32 %v8636
        %vm8643 = vmor %vm8641, %vm8642
        %v8644 = vsel %vm8643, %v8636, %v8640
        %v8645 = vand.u32 2147483647, %v8000
        %vm8646 = vcmp.eq.f32.partialorder %v8645, 8.507059e+37
        %v8647 = vand.u32 %v8000, 2147483648
        %v8648 = vor.u32 1.1754944e-38, %v8647
        %v8649 = vsel %vm8646, %v8648, %v8644
        %v8650 = vmul.f32 1.0, %v8649
        %v8651 = vrcp.pop %v8001
        %v8652 = vmul.f32 %v8001, %v8651
        %v8653 = vsub.f32 1.0, %v8652
        %v8654 = vmul.f32 %v8651, %v8653
        %v8655 = vadd.f32 %v8651, %v8654
        %vm8656 = vweird.f32 %v8001
        %vm8657 = vweird.f32 %v8651
        %vm8658 = vmor %vm8656, %vm8657
        %v8659 = vsel %vm8658, %v8651, %v8655
        %v8660 = vand.u32 2147483647, %v8001
        %vm8661 = vcmp.eq.f32.partialorder %v8660, 8.507059e+37
        %v8662 = vand.u32 %v8001, 2147483648
        %v8663 = vor.u32 1.1754944e-38, %v8662
        %v8664 = vsel %vm8661, %v8663, %v8659
        %v8665 = vmul.f32 1.0, %v8664
        %v8666 = vrcp.pop %v8002
        %v8667 = vmul.f32 %v8002, %v8666
        %v8668 = vsub.f32 1.0, %v8667
        %v8669 = vmul.f32 %v8666, %v8668
        %v8670 = vadd.f32 %v8666, %v8669
        %vm8671 = vweird.f32 %v8002
        %vm8672 = vweird.f32 %v8666
        %vm8673 = vmor %vm8671, %vm8672
        %v8674 = vsel %vm8673, %v8666, %v8670
        %v8675 = vand.u32 2147483647, %v8002
        %vm8676 = vcmp.eq.f32.partialorder %v8675, 8.507059e+37
        %v8677 = vand.u32 %v8002, 2147483648
        %v8678 = vor.u32 1.1754944e-38, %v8677
        %v8679 = vsel %vm8676, %v8678, %v8674
        %v8680 = vmul.f32 1.0, %v8679
        %v8681 = vrcp.pop %v8003
        %v8682 = vmul.f32 %v8003, %v8681
        %v8683 = vsub.f32 1.0, %v8682
        %v8684 = vmul.f32 %v8681, %v8683
        %v8685 = vadd.f32 %v8681, %v8684
        %vm8686 = vweird.f32 %v8003
        %vm8687 = vweird.f32 %v8681
        %vm8688 = vmor %vm8686, %vm8687
        %v8689 = vsel %vm8688, %v8681, %v8685
        %v8690 = vand.u32 2147483647, %v8003
        %vm8691 = vcmp.eq.f32.partialorder %v8690, 8.507059e+37
        %v8692 = vand.u32 %v8003, 2147483648
        %v8693 = vor.u32 1.1754944e-38, %v8692
        %v8694 = vsel %vm8691, %v8693, %v8689
        %v8695 = vmul.f32 1.0, %v8694
        %v8696 = vrcp.pop %v8004
        %v8697 = vmul.f32 %v8004, %v8696
        %v8698 = vsub.f32 1.0, %v8697
        %v8699 = vmul.f32 %v8696, %v8698
        %v8700 = vadd.f32 %v8696, %v8699
        %vm8701 = vweird.f32 %v8004
        %vm8702 = vweird.f32 %v8696
        %vm8703 = vmor %vm8701, %vm8702
        %v8704 = vsel %vm8703, %v8696, %v8700
        %v8705 = vand.u32 2147483647, %v8004
        %vm8706 = vcmp.eq.f32.partialorder %v8705, 8.507059e+37
        %v8707 = vand.u32 %v8004, 2147483648
        %v8708 = vor.u32 1.1754944e-38, %v8707
        %v8709 = vsel %vm8706, %v8708, %v8704
        %v8710 = vmul.f32 1.0, %v8709
        %v8711 = vrcp.pop %v8005
        %v8712 = vmul.f32 %v8005, %v8711
        %v8713 = vsub.f32 1.0, %v8712
        %v8714 = vmul.f32 %v8711, %v8713
        %v8715 = vadd.f32 %v8711, %v8714
        %vm8716 = vweird.f32 %v8005
        %vm8717 = vweird.f32 %v8711
        %vm8718 = vmor %vm8716, %vm8717
        %v8719 = vsel %vm8718, %v8711, %v8715
        %v8720 = vand.u32 2147483647, %v8005
        %vm8721 = vcmp.eq.f32.partialorder %v8720, 8.507059e+37
        %v8722 = vand.u32 %v8005, 2147483648
        %v8723 = vor.u32 1.1754944e-38, %v8722
        %v8724 = vsel %vm8721, %v8723, %v8719
        %v8725 = vmul.f32 1.0, %v8724
        %v8726 = vmul.f32 %v7766, %v8020
        %v8727 = vmul.f32 %v7767, %v8035
        %v8728 = vmul.f32 %v7768, %v8050
        %v8729 = vmul.f32 %v7769, %v8065
        %v8730 = vmul.f32 %v7770, %v8080
        %v8731 = vmul.f32 %v7771, %v8095
        %v8732 = vmul.f32 %v7772, %v8110
        %v8733 = vmul.f32 %v7773, %v8125
        %v8734 = vmul.f32 %v7774, %v8140
        %v8735 = vmul.f32 %v7775, %v8155
        %v8736 = vmul.f32 %v7776, %v8170
        %v8737 = vmul.f32 %v7777, %v8185
        %v8738 = vmul.f32 %v7778, %v8200
        %v8739 = vmul.f32 %v7779, %v8215
        %v8740 = vmul.f32 %v7780, %v8230
        %v8741 = vmul.f32 %v7781, %v8245
        %v8742 = vmul.f32 %v7782, %v8260
        %v8743 = vmul.f32 %v7783, %v8275
        %v8744 = vmul.f32 %v7784, %v8290
        %v8745 = vmul.f32 %v7785, %v8305
        %v8746 = vmul.f32 %v7786, %v8320
        %v8747 = vmul.f32 %v7787, %v8335
        %v8748 = vmul.f32 %v7788, %v8350
        %v8749 = vmul.f32 %v7789, %v8365
        %v8750 = vmul.f32 %v7790, %v8380
        %v8751 = vmul.f32 %v7791, %v8395
        %v8752 = vmul.f32 %v7792, %v8410
        %v8753 = vmul.f32 %v7793, %v8425
        %v8754 = vmul.f32 %v7794, %v8440
        %v8755 = vmul.f32 %v7795, %v8455
        %v8756 = vmul.f32 %v7796, %v8470
        %v8757 = vmul.f32 %v7797, %v8485
        %v8758 = vmul.f32 %v7798, %v8500
        %v8759 = vmul.f32 %v7799, %v8515
        %v8760 = vmul.f32 %v7800, %v8530
        %v8761 = vmul.f32 %v7801, %v8545
        %v8762 = vmul.f32 %v7802, %v8560
        %v8763 = vmul.f32 %v7803, %v8575
        %v8764 = vmul.f32 %v7804, %v8590
        %v8765 = vmul.f32 %v7805, %v8605
        %v8766 = vmul.f32 %v7806, %v8620
        %v8767 = vmul.f32 %v7807, %v8635
        %v8768 = vmul.f32 %v7808, %v8650
        %v8769 = vmul.f32 %v7809, %v8665
        %v8770 = vmul.f32 %v7810, %v8680
        %v8771 = vmul.f32 %v7811, %v8695
        %v8772 = vmul.f32 %v7812, %v8710
        %v8773 = vmul.f32 %v7813, %v8725
        %v8774 = vmul.f32 %v8726, %v5410
        %v8775 = vmul.f32 %v8727, %v5410
        %v8776 = vmul.f32 %v8728, %v5410
        %v8777 = vmul.f32 %v8729, %v5410
        %v8778 = vmul.f32 %v8730, %v5410
        %v8779 = vmul.f32 %v8731, %v5410
        %v8780 = vmul.f32 %v8732, %v5410
        %v8781 = vmul.f32 %v8733, %v5410
        %v8782 = vmul.f32 %v8734, %v5410
        %v8783 = vmul.f32 %v8735, %v5410
        %v8784 = vmul.f32 %v8736, %v5410
        %v8785 = vmul.f32 %v8737, %v5410
        %v8786 = vmul.f32 %v8738, %v5410
        %v8787 = vmul.f32 %v8739, %v5410
        %v8788 = vmul.f32 %v8740, %v5410
        %v8789 = vmul.f32 %v8741, %v5410
        %v8790 = vmul.f32 %v8742, %v5410
        %v8791 = vmul.f32 %v8743, %v5410
        %v8792 = vmul.f32 %v8744, %v5410
        %v8793 = vmul.f32 %v8745, %v5410
        %v8794 = vmul.f32 %v8746, %v5410
        %v8795 = vmul.f32 %v8747, %v5410
        %v8796 = vmul.f32 %v8748, %v5410
        %v8797 = vmul.f32 %v8749, %v5410
        %v8798 = vmul.f32 %v8750, %v5410
        %v8799 = vmul.f32 %v8751, %v5410
        %v8800 = vmul.f32 %v8752, %v5410
        %v8801 = vmul.f32 %v8753, %v5410
        %v8802 = vmul.f32 %v8754, %v5410
        %v8803 = vmul.f32 %v8755, %v5410
        %v8804 = vmul.f32 %v8756, %v5410
        %v8805 = vmul.f32 %v8757, %v5410
        %v8806 = vmul.f32 %v8758, %v5410
        %v8807 = vmul.f32 %v8759, %v5410
        %v8808 = vmul.f32 %v8760, %v5410
        %v8809 = vmul.f32 %v8761, %v5410
        %v8810 = vmul.f32 %v8762, %v5410
        %v8811 = vmul.f32 %v8763, %v5410
        %v8812 = vmul.f32 %v8764, %v5410
        %v8813 = vmul.f32 %v8765, %v5410
        %v8814 = vmul.f32 %v8766, %v5410
        %v8815 = vmul.f32 %v8767, %v5410
        %v8816 = vmul.f32 %v8768, %v5410
        %v8817 = vmul.f32 %v8769, %v5410
        %v8818 = vmul.f32 %v8770, %v5410
        %v8819 = vmul.f32 %v8771, %v5410
        %v8820 = vmul.f32 %v8772, %v5410
        %v8821 = vmul.f32 %v8773, %v5410
        %8870 = vrot.lane.b32.xlu0 %v8774, 96
        %v8871 = vpop.permute.xlu0 %8870
        %8872 = vrot.lane.b32.xlu0 %v8775, 96
        %v8873 = vpop.permute.xlu0 %8872
        %8874 = vrot.lane.b32.xlu0 %v8776, 96
        %v8875 = vpop.permute.xlu0 %8874
        %8876 = vrot.lane.b32.xlu0 %v8777, 96
        %v8877 = vpop.permute.xlu0 %8876
        %8878 = vrot.lane.b32.xlu0 %v8778, 96
        %v8879 = vpop.permute.xlu0 %8878
        %8880 = vrot.lane.b32.xlu0 %v8779, 96
        %v8881 = vpop.permute.xlu0 %8880
        %8882 = vrot.lane.b32.xlu0 %v8780, 96
        %v8883 = vpop.permute.xlu0 %8882
        %8884 = vrot.lane.b32.xlu0 %v8781, 96
        %v8885 = vpop.permute.xlu0 %8884
        %8886 = vrot.lane.b32.xlu0 %v8782, 96
        %v8887 = vpop.permute.xlu0 %8886
        %8888 = vrot.lane.b32.xlu0 %v8783, 96
        %v8889 = vpop.permute.xlu0 %8888
        %8890 = vrot.lane.b32.xlu0 %v8784, 96
        %v8891 = vpop.permute.xlu0 %8890
        %8892 = vrot.lane.b32.xlu0 %v8785, 96
        %v8893 = vpop.permute.xlu0 %8892
        %8894 = vrot.lane.b32.xlu0 %v8786, 96
        %v8895 = vpop.permute.xlu0 %8894
        %8896 = vrot.lane.b32.xlu0 %v8787, 96
        %v8897 = vpop.permute.xlu0 %8896
        %8898 = vrot.lane.b32.xlu0 %v8788, 96
        %v8899 = vpop.permute.xlu0 %8898
        %8900 = vrot.lane.b32.xlu0 %v8789, 96
        %v8901 = vpop.permute.xlu0 %8900
        %8902 = vrot.lane.b32.xlu0 %v8790, 96
        %v8903 = vpop.permute.xlu0 %8902
        %8904 = vrot.lane.b32.xlu0 %v8791, 96
        %v8905 = vpop.permute.xlu0 %8904
        %8906 = vrot.lane.b32.xlu0 %v8792, 96
        %v8907 = vpop.permute.xlu0 %8906
        %8908 = vrot.lane.b32.xlu0 %v8793, 96
        %v8909 = vpop.permute.xlu0 %8908
        %8910 = vrot.lane.b32.xlu0 %v8794, 96
        %v8911 = vpop.permute.xlu0 %8910
        %8912 = vrot.lane.b32.xlu0 %v8795, 96
        %v8913 = vpop.permute.xlu0 %8912
        %8914 = vrot.lane.b32.xlu0 %v8796, 96
        %v8915 = vpop.permute.xlu0 %8914
        %8916 = vrot.lane.b32.xlu0 %v8797, 96
        %v8917 = vpop.permute.xlu0 %8916
        %8918 = vrot.lane.b32.xlu0 %v8798, 96
        %v8919 = vpop.permute.xlu0 %8918
        %8920 = vrot.lane.b32.xlu0 %v8799, 96
        %v8921 = vpop.permute.xlu0 %8920
        %8922 = vrot.lane.b32.xlu0 %v8800, 96
        %v8923 = vpop.permute.xlu0 %8922
        %8924 = vrot.lane.b32.xlu0 %v8801, 96
        %v8925 = vpop.permute.xlu0 %8924
        %8926 = vrot.lane.b32.xlu0 %v8802, 96
        %v8927 = vpop.permute.xlu0 %8926
        %8928 = vrot.lane.b32.xlu0 %v8803, 96
        %v8929 = vpop.permute.xlu0 %8928
        %8930 = vrot.lane.b32.xlu0 %v8804, 96
        %v8931 = vpop.permute.xlu0 %8930
        %8932 = vrot.lane.b32.xlu0 %v8805, 96
        %v8933 = vpop.permute.xlu0 %8932
        %8934 = vrot.lane.b32.xlu0 %v8806, 96
        %v8935 = vpop.permute.xlu0 %8934
        %8936 = vrot.lane.b32.xlu0 %v8807, 96
        %v8937 = vpop.permute.xlu0 %8936
        %8938 = vrot.lane.b32.xlu0 %v8808, 96
        %v8939 = vpop.permute.xlu0 %8938
        %8940 = vrot.lane.b32.xlu0 %v8809, 96
        %v8941 = vpop.permute.xlu0 %8940
        %8942 = vrot.lane.b32.xlu0 %v8810, 96
        %v8943 = vpop.permute.xlu0 %8942
        %8944 = vrot.lane.b32.xlu0 %v8811, 96
        %v8945 = vpop.permute.xlu0 %8944
        %8946 = vrot.lane.b32.xlu0 %v8812, 96
        %v8947 = vpop.permute.xlu0 %8946
        %8948 = vrot.lane.b32.xlu0 %v8813, 96
        %v8949 = vpop.permute.xlu0 %8948
        %8950 = vrot.lane.b32.xlu0 %v8814, 96
        %v8951 = vpop.permute.xlu0 %8950
        %8952 = vrot.lane.b32.xlu0 %v8815, 96
        %v8953 = vpop.permute.xlu0 %8952
        %8954 = vrot.lane.b32.xlu0 %v8816, 96
        %v8955 = vpop.permute.xlu0 %8954
        %8956 = vrot.lane.b32.xlu0 %v8817, 96
        %v8957 = vpop.permute.xlu0 %8956
        %8958 = vrot.lane.b32.xlu0 %v8818, 96
        %v8959 = vpop.permute.xlu0 %8958
        %8960 = vrot.lane.b32.xlu0 %v8819, 96
        %v8961 = vpop.permute.xlu0 %8960
        %8962 = vrot.lane.b32.xlu0 %v8820, 96
        %v8963 = vpop.permute.xlu0 %8962
        %8964 = vrot.lane.b32.xlu0 %v8821, 96
        %v8965 = vpop.permute.xlu0 %8964
        %v9014 = vsel %vm1882, %v8871, 0.0
        %9015 = vadd.xlane.f32.xlu0 %v9014
        %v9016 = vpop.xlane.xlu0 %9015
        %v9017 = vsel %vm1882, %v8873, 0.0
        %9018 = vadd.xlane.f32.xlu0 %v9017
        %v9019 = vpop.xlane.xlu0 %9018
        %v9020 = vsel %vm1882, %v8875, 0.0
        %9021 = vadd.xlane.f32.xlu0 %v9020
        %v9022 = vpop.xlane.xlu0 %9021
        %v9023 = vsel %vm1882, %v8877, 0.0
        %9024 = vadd.xlane.f32.xlu0 %v9023
        %v9025 = vpop.xlane.xlu0 %9024
        %v9026 = vsel %vm1882, %v8879, 0.0
        %9027 = vadd.xlane.f32.xlu0 %v9026
        %v9028 = vpop.xlane.xlu0 %9027
        %v9029 = vsel %vm1882, %v8881, 0.0
        %9030 = vadd.xlane.f32.xlu0 %v9029
        %v9031 = vpop.xlane.xlu0 %9030
        %v9032 = vsel %vm1882, %v8883, 0.0
        %9033 = vadd.xlane.f32.xlu0 %v9032
        %v9034 = vpop.xlane.xlu0 %9033
        %v9035 = vsel %vm1882, %v8885, 0.0
        %9036 = vadd.xlane.f32.xlu0 %v9035
        %v9037 = vpop.xlane.xlu0 %9036
        %v9038 = vsel %vm1882, %v8887, 0.0
        %9039 = vadd.xlane.f32.xlu0 %v9038
        %v9040 = vpop.xlane.xlu0 %9039
        %v9041 = vsel %vm1882, %v8889, 0.0
        %9042 = vadd.xlane.f32.xlu0 %v9041
        %v9043 = vpop.xlane.xlu0 %9042
        %v9044 = vsel %vm1882, %v8891, 0.0
        %9045 = vadd.xlane.f32.xlu0 %v9044
        %v9046 = vpop.xlane.xlu0 %9045
        %v9047 = vsel %vm1882, %v8893, 0.0
        %9048 = vadd.xlane.f32.xlu0 %v9047
        %v9049 = vpop.xlane.xlu0 %9048
        %v9050 = vsel %vm1882, %v8895, 0.0
        %9051 = vadd.xlane.f32.xlu0 %v9050
        %v9052 = vpop.xlane.xlu0 %9051
        %v9053 = vsel %vm1882, %v8897, 0.0
        %9054 = vadd.xlane.f32.xlu0 %v9053
        %v9055 = vpop.xlane.xlu0 %9054
        %v9056 = vsel %vm1882, %v8899, 0.0
        %9057 = vadd.xlane.f32.xlu0 %v9056
        %v9058 = vpop.xlane.xlu0 %9057
        %v9059 = vsel %vm1882, %v8901, 0.0
        %9060 = vadd.xlane.f32.xlu0 %v9059
        %v9061 = vpop.xlane.xlu0 %9060
        %v9062 = vsel %vm1882, %v8903, 0.0
        %9063 = vadd.xlane.f32.xlu0 %v9062
        %v9064 = vpop.xlane.xlu0 %9063
        %v9065 = vsel %vm1882, %v8905, 0.0
        %9066 = vadd.xlane.f32.xlu0 %v9065
        %v9067 = vpop.xlane.xlu0 %9066
        %v9068 = vsel %vm1882, %v8907, 0.0
        %9069 = vadd.xlane.f32.xlu0 %v9068
        %v9070 = vpop.xlane.xlu0 %9069
        %v9071 = vsel %vm1882, %v8909, 0.0
        %9072 = vadd.xlane.f32.xlu0 %v9071
        %v9073 = vpop.xlane.xlu0 %9072
        %v9074 = vsel %vm1882, %v8911, 0.0
        %9075 = vadd.xlane.f32.xlu0 %v9074
        %v9076 = vpop.xlane.xlu0 %9075
        %v9077 = vsel %vm1882, %v8913, 0.0
        %9078 = vadd.xlane.f32.xlu0 %v9077
        %v9079 = vpop.xlane.xlu0 %9078
        %v9080 = vsel %vm1882, %v8915, 0.0
        %9081 = vadd.xlane.f32.xlu0 %v9080
        %v9082 = vpop.xlane.xlu0 %9081
        %v9083 = vsel %vm1882, %v8917, 0.0
        %9084 = vadd.xlane.f32.xlu0 %v9083
        %v9085 = vpop.xlane.xlu0 %9084
        %v9086 = vsel %vm1882, %v8919, 0.0
        %9087 = vadd.xlane.f32.xlu0 %v9086
        %v9088 = vpop.xlane.xlu0 %9087
        %v9089 = vsel %vm1882, %v8921, 0.0
        %9090 = vadd.xlane.f32.xlu0 %v9089
        %v9091 = vpop.xlane.xlu0 %9090
        %v9092 = vsel %vm1882, %v8923, 0.0
        %9093 = vadd.xlane.f32.xlu0 %v9092
        %v9094 = vpop.xlane.xlu0 %9093
        %v9095 = vsel %vm1882, %v8925, 0.0
        %9096 = vadd.xlane.f32.xlu0 %v9095
        %v9097 = vpop.xlane.xlu0 %9096
        %v9098 = vsel %vm1882, %v8927, 0.0
        %9099 = vadd.xlane.f32.xlu0 %v9098
        %v9100 = vpop.xlane.xlu0 %9099
        %v9101 = vsel %vm1882, %v8929, 0.0
        %9102 = vadd.xlane.f32.xlu0 %v9101
        %v9103 = vpop.xlane.xlu0 %9102
        %v9104 = vsel %vm1882, %v8931, 0.0
        %9105 = vadd.xlane.f32.xlu0 %v9104
        %v9106 = vpop.xlane.xlu0 %9105
        %v9107 = vsel %vm1882, %v8933, 0.0
        %9108 = vadd.xlane.f32.xlu0 %v9107
        %v9109 = vpop.xlane.xlu0 %9108
        %v9110 = vsel %vm1882, %v8935, 0.0
        %9111 = vadd.xlane.f32.xlu0 %v9110
        %v9112 = vpop.xlane.xlu0 %9111
        %v9113 = vsel %vm1882, %v8937, 0.0
        %9114 = vadd.xlane.f32.xlu0 %v9113
        %v9115 = vpop.xlane.xlu0 %9114
        %v9116 = vsel %vm1882, %v8939, 0.0
        %9117 = vadd.xlane.f32.xlu0 %v9116
        %v9118 = vpop.xlane.xlu0 %9117
        %v9119 = vsel %vm1882, %v8941, 0.0
        %9120 = vadd.xlane.f32.xlu0 %v9119
        %v9121 = vpop.xlane.xlu0 %9120
        %v9122 = vsel %vm1882, %v8943, 0.0
        %9123 = vadd.xlane.f32.xlu0 %v9122
        %v9124 = vpop.xlane.xlu0 %9123
        %v9125 = vsel %vm1882, %v8945, 0.0
        %9126 = vadd.xlane.f32.xlu0 %v9125
        %v9127 = vpop.xlane.xlu0 %9126
        %v9128 = vsel %vm1882, %v8947, 0.0
        %9129 = vadd.xlane.f32.xlu0 %v9128
        %v9130 = vpop.xlane.xlu0 %9129
        %v9131 = vsel %vm1882, %v8949, 0.0
        %9132 = vadd.xlane.f32.xlu0 %v9131
        %v9133 = vpop.xlane.xlu0 %9132
        %v9134 = vsel %vm1882, %v8951, 0.0
        %9135 = vadd.xlane.f32.xlu0 %v9134
        %v9136 = vpop.xlane.xlu0 %9135
        %v9137 = vsel %vm1882, %v8953, 0.0
        %9138 = vadd.xlane.f32.xlu0 %v9137
        %v9139 = vpop.xlane.xlu0 %9138
        %v9140 = vsel %vm1882, %v8955, 0.0
        %9141 = vadd.xlane.f32.xlu0 %v9140
        %v9142 = vpop.xlane.xlu0 %9141
        %v9143 = vsel %vm1882, %v8957, 0.0
        %9144 = vadd.xlane.f32.xlu0 %v9143
        %v9145 = vpop.xlane.xlu0 %9144
        %v9146 = vsel %vm1882, %v8959, 0.0
        %9147 = vadd.xlane.f32.xlu0 %v9146
        %v9148 = vpop.xlane.xlu0 %9147
        %v9149 = vsel %vm1882, %v8961, 0.0
        %9150 = vadd.xlane.f32.xlu0 %v9149
        %v9151 = vpop.xlane.xlu0 %9150
        %v9152 = vsel %vm1882, %v8963, 0.0
        %9153 = vadd.xlane.f32.xlu0 %v9152
        %v9154 = vpop.xlane.xlu0 %9153
        %v9155 = vsel %vm1882, %v8965, 0.0
        %9156 = vadd.xlane.f32.xlu0 %v9155
        %v9157 = vpop.xlane.xlu0 %9156
        %v9158 = vadd.f32 %v9016, %v5797
        %v9159 = vadd.f32 %v9019, %v5797
        %v9160 = vadd.f32 %v9022, %v5797
        %v9161 = vadd.f32 %v9025, %v5797
        %v9162 = vadd.f32 %v9028, %v5797
        %v9163 = vadd.f32 %v9031, %v5797
        %v9164 = vadd.f32 %v9034, %v5797
        %v9165 = vadd.f32 %v9037, %v5797
        %v9166 = vadd.f32 %v9040, %v5797
        %v9167 = vadd.f32 %v9043, %v5797
        %v9168 = vadd.f32 %v9046, %v5797
        %v9169 = vadd.f32 %v9049, %v5797
        %v9170 = vadd.f32 %v9052, %v5797
        %v9171 = vadd.f32 %v9055, %v5797
        %v9172 = vadd.f32 %v9058, %v5797
        %v9173 = vadd.f32 %v9061, %v5797
        %v9174 = vadd.f32 %v9064, %v5797
        %v9175 = vadd.f32 %v9067, %v5797
        %v9176 = vadd.f32 %v9070, %v5797
        %v9177 = vadd.f32 %v9073, %v5797
        %v9178 = vadd.f32 %v9076, %v5797
        %v9179 = vadd.f32 %v9079, %v5797
        %v9180 = vadd.f32 %v9082, %v5797
        %v9181 = vadd.f32 %v9085, %v5797
        %v9182 = vadd.f32 %v9088, %v5797
        %v9183 = vadd.f32 %v9091, %v5797
        %v9184 = vadd.f32 %v9094, %v5797
        %v9185 = vadd.f32 %v9097, %v5797
        %v9186 = vadd.f32 %v9100, %v5797
        %v9187 = vadd.f32 %v9103, %v5797
        %v9188 = vadd.f32 %v9106, %v5797
        %v9189 = vadd.f32 %v9109, %v5797
        %v9190 = vadd.f32 %v9112, %v5797
        %v9191 = vadd.f32 %v9115, %v5797
        %v9192 = vadd.f32 %v9118, %v5797
        %v9193 = vadd.f32 %v9121, %v5797
        %v9194 = vadd.f32 %v9124, %v5797
        %v9195 = vadd.f32 %v9127, %v5797
        %v9196 = vadd.f32 %v9130, %v5797
        %v9197 = vadd.f32 %v9133, %v5797
        %v9198 = vadd.f32 %v9136, %v5797
        %v9199 = vadd.f32 %v9139, %v5797
        %v9200 = vadd.f32 %v9142, %v5797
        %v9201 = vadd.f32 %v9145, %v5797
        %v9202 = vadd.f32 %v9148, %v5797
        %v9203 = vadd.f32 %v9151, %v5797
        %v9204 = vadd.f32 %v9154, %v5797
        %v9205 = vadd.f32 %v9157, %v5797
        %vm9206 = vcmp.eq.s32.totalorder %v2222, 0
        %vm9207 = vcmp.eq.s32.totalorder %v2222, 1
        %v9208 = vsel %vm9207, %v7478, %v9158
        %v9209 = vsel %vm9207, %v7479, %v9159
        %v9210 = vsel %vm9207, %v7480, %v9160
        %v9211 = vsel %vm9207, %v7481, %v9161
        %v9212 = vsel %vm9207, %v7482, %v9162
        %v9213 = vsel %vm9207, %v7483, %v9163
        %v9214 = vsel %vm9207, %v7484, %v9164
        %v9215 = vsel %vm9207, %v7485, %v9165
        %v9216 = vsel %vm9207, %v7486, %v9166
        %v9217 = vsel %vm9207, %v7487, %v9167
        %v9218 = vsel %vm9207, %v7488, %v9168
        %v9219 = vsel %vm9207, %v7489, %v9169
        %v9220 = vsel %vm9207, %v7490, %v9170
        %v9221 = vsel %vm9207, %v7491, %v9171
        %v9222 = vsel %vm9207, %v7492, %v9172
        %v9223 = vsel %vm9207, %v7493, %v9173
        %v9224 = vsel %vm9207, %v7494, %v9174
        %v9225 = vsel %vm9207, %v7495, %v9175
        %v9226 = vsel %vm9207, %v7496, %v9176
        %v9227 = vsel %vm9207, %v7497, %v9177
        %v9228 = vsel %vm9207, %v7498, %v9178
        %v9229 = vsel %vm9207, %v7499, %v9179
        %v9230 = vsel %vm9207, %v7500, %v9180
        %v9231 = vsel %vm9207, %v7501, %v9181
        %v9232 = vsel %vm9207, %v7502, %v9182
        %v9233 = vsel %vm9207, %v7503, %v9183
        %v9234 = vsel %vm9207, %v7504, %v9184
        %v9235 = vsel %vm9207, %v7505, %v9185
        %v9236 = vsel %vm9207, %v7506, %v9186
        %v9237 = vsel %vm9207, %v7507, %v9187
        %v9238 = vsel %vm9207, %v7508, %v9188
        %v9239 = vsel %vm9207, %v7509, %v9189
        %v9240 = vsel %vm9207, %v7510, %v9190
        %v9241 = vsel %vm9207, %v7511, %v9191
        %v9242 = vsel %vm9207, %v7512, %v9192
        %v9243 = vsel %vm9207, %v7513, %v9193
        %v9244 = vsel %vm9207, %v7514, %v9194
        %v9245 = vsel %vm9207, %v7515, %v9195
        %v9246 = vsel %vm9207, %v7516, %v9196
        %v9247 = vsel %vm9207, %v7517, %v9197
        %v9248 = vsel %vm9207, %v7518, %v9198
        %v9249 = vsel %vm9207, %v7519, %v9199
        %v9250 = vsel %vm9207, %v7520, %v9200
        %v9251 = vsel %vm9207, %v7521, %v9201
        %v9252 = vsel %vm9207, %v7522, %v9202
        %v9253 = vsel %vm9207, %v7523, %v9203
        %v9254 = vsel %vm9207, %v7524, %v9204
        %v9255 = vsel %vm9207, %v7525, %v9205
        %v9256 = vsel %vm9206, %v5798, %v9208
        %v9257 = vsel %vm9206, %v5799, %v9209
        %v9258 = vsel %vm9206, %v5800, %v9210
        %v9259 = vsel %vm9206, %v5801, %v9211
        %v9260 = vsel %vm9206, %v5802, %v9212
        %v9261 = vsel %vm9206, %v5803, %v9213
        %v9262 = vsel %vm9206, %v5804, %v9214
        %v9263 = vsel %vm9206, %v5805, %v9215
        %v9264 = vsel %vm9206, %v5806, %v9216
        %v9265 = vsel %vm9206, %v5807, %v9217
        %v9266 = vsel %vm9206, %v5808, %v9218
        %v9267 = vsel %vm9206, %v5809, %v9219
        %v9268 = vsel %vm9206, %v5810, %v9220
        %v9269 = vsel %vm9206, %v5811, %v9221
        %v9270 = vsel %vm9206, %v5812, %v9222
        %v9271 = vsel %vm9206, %v5813, %v9223
        %v9272 = vsel %vm9206, %v5814, %v9224
        %v9273 = vsel %vm9206, %v5815, %v9225
        %v9274 = vsel %vm9206, %v5816, %v9226
        %v9275 = vsel %vm9206, %v5817, %v9227
        %v9276 = vsel %vm9206, %v5818, %v9228
        %v9277 = vsel %vm9206, %v5819, %v9229
        %v9278 = vsel %vm9206, %v5820, %v9230
        %v9279 = vsel %vm9206, %v5821, %v9231
        %v9280 = vsel %vm9206, %v5822, %v9232
        %v9281 = vsel %vm9206, %v5823, %v9233
        %v9282 = vsel %vm9206, %v5824, %v9234
        %v9283 = vsel %vm9206, %v5825, %v9235
        %v9284 = vsel %vm9206, %v5826, %v9236
        %v9285 = vsel %vm9206, %v5827, %v9237
        %v9286 = vsel %vm9206, %v5828, %v9238
        %v9287 = vsel %vm9206, %v5829, %v9239
        %v9288 = vsel %vm9206, %v5830, %v9240
        %v9289 = vsel %vm9206, %v5831, %v9241
        %v9290 = vsel %vm9206, %v5832, %v9242
        %v9291 = vsel %vm9206, %v5833, %v9243
        %v9292 = vsel %vm9206, %v5834, %v9244
        %v9293 = vsel %vm9206, %v5835, %v9245
        %v9294 = vsel %vm9206, %v5836, %v9246
        %v9295 = vsel %vm9206, %v5837, %v9247
        %v9296 = vsel %vm9206, %v5838, %v9248
        %v9297 = vsel %vm9206, %v5839, %v9249
        %v9298 = vsel %vm9206, %v5840, %v9250
        %v9299 = vsel %vm9206, %v5841, %v9251
        %v9300 = vsel %vm9206, %v5842, %v9252
        %v9301 = vsel %vm9206, %v5843, %v9253
        %v9302 = vsel %vm9206, %v5844, %v9254
        %v9303 = vsel %vm9206, %v5845, %v9255
        %v9304 = vadd.f32 %v2519, %v9256
        %v9305 = vadd.f32 %v2520, %v9257
        %v9306 = vadd.f32 %v2521, %v9258
        %v9307 = vadd.f32 %v2522, %v9259
        %v9308 = vadd.f32 %v2523, %v9260
        %v9309 = vadd.f32 %v2524, %v9261
        %v9310 = vadd.f32 %v2525, %v9262
        %v9311 = vadd.f32 %v2526, %v9263
        %v9312 = vadd.f32 %v2527, %v9264
        %v9313 = vadd.f32 %v2528, %v9265
        %v9314 = vadd.f32 %v2529, %v9266
        %v9315 = vadd.f32 %v2530, %v9267
        %v9316 = vadd.f32 %v2531, %v9268
        %v9317 = vadd.f32 %v2532, %v9269
        %v9318 = vadd.f32 %v2533, %v9270
        %v9319 = vadd.f32 %v2534, %v9271
        %v9320 = vadd.f32 %v2535, %v9272
        %v9321 = vadd.f32 %v2536, %v9273
        %v9322 = vadd.f32 %v2537, %v9274
        %v9323 = vadd.f32 %v2538, %v9275
        %v9324 = vadd.f32 %v2539, %v9276
        %v9325 = vadd.f32 %v2540, %v9277
        %v9326 = vadd.f32 %v2541, %v9278
        %v9327 = vadd.f32 %v2542, %v9279
        %v9328 = vadd.f32 %v2543, %v9280
        %v9329 = vadd.f32 %v2544, %v9281
        %v9330 = vadd.f32 %v2545, %v9282
        %v9331 = vadd.f32 %v2546, %v9283
        %v9332 = vadd.f32 %v2547, %v9284
        %v9333 = vadd.f32 %v2548, %v9285
        %v9334 = vadd.f32 %v2549, %v9286
        %v9335 = vadd.f32 %v2550, %v9287
        %v9336 = vadd.f32 %v2551, %v9288
        %v9337 = vadd.f32 %v2552, %v9289
        %v9338 = vadd.f32 %v2553, %v9290
        %v9339 = vadd.f32 %v2554, %v9291
        %v9340 = vadd.f32 %v2555, %v9292
        %v9341 = vadd.f32 %v2556, %v9293
        %v9342 = vadd.f32 %v2557, %v9294
        %v9343 = vadd.f32 %v2558, %v9295
        %v9344 = vadd.f32 %v2559, %v9296
        %v9345 = vadd.f32 %v2560, %v9297
        %v9346 = vadd.f32 %v2561, %v9298
        %v9347 = vadd.f32 %v2562, %v9299
        %v9348 = vadd.f32 %v2563, %v9300
        %v9349 = vadd.f32 %v2564, %v9301
        %v9350 = vadd.f32 %v2565, %v9302
        %v9351 = vadd.f32 %v2566, %v9303
        %9352 = vst.msk [vmem:[%s425] sm:$0xff] %vm2615, %v9304
        %9353 = vst.msk [vmem:[%s425 + $0x8] sm:$0xff] %vm2615, %v9305
        %9354 = vst.msk [vmem:[%s425 + $0x10] sm:$0xff] %vm2615, %v9306
        %9355 = vst.msk [vmem:[%s425 + $0x18] sm:$0xff] %vm2615, %v9307
        %9356 = vst.msk [vmem:[%s425 + $0x20] sm:$0xff] %vm2615, %v9308
        %9357 = vst.msk [vmem:[%s425 + $0x28] sm:$0xff] %vm2615, %v9309
        %9358 = vst.msk [vmem:[%s425 + $0x30] sm:$0xff] %vm2615, %v9310
        %9359 = vst.msk [vmem:[%s425 + $0x38] sm:$0xff] %vm2615, %v9311
        %9360 = vst.msk [vmem:[%s425 + $0x40] sm:$0xff] %vm2615, %v9312
        %9361 = vst.msk [vmem:[%s425 + $0x48] sm:$0xff] %vm2615, %v9313
        %9362 = vst.msk [vmem:[%s425 + $0x50] sm:$0xff] %vm2615, %v9314
        %9363 = vst.msk [vmem:[%s425 + $0x58] sm:$0xff] %vm2615, %v9315
        %9364 = vst.msk [vmem:[%s425 + $0x60] sm:$0xff] %vm2615, %v9316
        %9365 = vst.msk [vmem:[%s425 + $0x68] sm:$0xff] %vm2615, %v9317
        %9366 = vst.msk [vmem:[%s425 + $0x70] sm:$0xff] %vm2615, %v9318
        %9367 = vst.msk [vmem:[%s425 + $0x78] sm:$0xff] %vm2615, %v9319
        %9368 = vst.msk [vmem:[%s425 + $0x80] sm:$0xff] %vm2615, %v9320
        %9369 = vst.msk [vmem:[%s425 + $0x88] sm:$0xff] %vm2615, %v9321
        %9370 = vst.msk [vmem:[%s425 + $0x90] sm:$0xff] %vm2615, %v9322
        %9371 = vst.msk [vmem:[%s425 + $0x98] sm:$0xff] %vm2615, %v9323
        %9372 = vst.msk [vmem:[%s425 + $0xa0] sm:$0xff] %vm2615, %v9324
        %9373 = vst.msk [vmem:[%s425 + $0xa8] sm:$0xff] %vm2615, %v9325
        %9374 = vst.msk [vmem:[%s425 + $0xb0] sm:$0xff] %vm2615, %v9326
        %9375 = vst.msk [vmem:[%s425 + $0xb8] sm:$0xff] %vm2615, %v9327
        %9376 = vst.msk [vmem:[%s425 + $0xc0] sm:$0xff] %vm2615, %v9328
        %9377 = vst.msk [vmem:[%s425 + $0xc8] sm:$0xff] %vm2615, %v9329
        %9378 = vst.msk [vmem:[%s425 + $0xd0] sm:$0xff] %vm2615, %v9330
        %9379 = vst.msk [vmem:[%s425 + $0xd8] sm:$0xff] %vm2615, %v9331
        %9380 = vst.msk [vmem:[%s425 + $0xe0] sm:$0xff] %vm2615, %v9332
        %9381 = vst.msk [vmem:[%s425 + $0xe8] sm:$0xff] %vm2615, %v9333
        %9382 = vst.msk [vmem:[%s425 + $0xf0] sm:$0xff] %vm2615, %v9334
        %9383 = vst.msk [vmem:[%s425 + $0xf8] sm:$0xff] %vm2615, %v9335
        %9384 = vst.msk [vmem:[%s425 + $0x100] sm:$0xff] %vm2615, %v9336
        %9385 = vst.msk [vmem:[%s425 + $0x108] sm:$0xff] %vm2615, %v9337
        %9386 = vst.msk [vmem:[%s425 + $0x110] sm:$0xff] %vm2615, %v9338
        %9387 = vst.msk [vmem:[%s425 + $0x118] sm:$0xff] %vm2615, %v9339
        %9388 = vst.msk [vmem:[%s425 + $0x120] sm:$0xff] %vm2615, %v9340
        %9389 = vst.msk [vmem:[%s425 + $0x128] sm:$0xff] %vm2615, %v9341
        %9390 = vst.msk [vmem:[%s425 + $0x130] sm:$0xff] %vm2615, %v9342
        %9391 = vst.msk [vmem:[%s425 + $0x138] sm:$0xff] %vm2615, %v9343
        %9392 = vst.msk [vmem:[%s425 + $0x140] sm:$0xff] %vm2615, %v9344
        %9393 = vst.msk [vmem:[%s425 + $0x148] sm:$0xff] %vm2615, %v9345
        %9394 = vst.msk [vmem:[%s425 + $0x150] sm:$0xff] %vm2615, %v9346
        %9395 = vst.msk [vmem:[%s425 + $0x158] sm:$0xff] %vm2615, %v9347
        %9396 = vst.msk [vmem:[%s425 + $0x160] sm:$0xff] %vm2615, %v9348
        %9397 = vst.msk [vmem:[%s425 + $0x168] sm:$0xff] %vm2615, %v9349
        %9398 = vst.msk [vmem:[%s425 + $0x170] sm:$0xff] %vm2615, %v9350
        %9399 = vst.msk [vmem:[%s425 + $0x178] sm:$0xff] %vm2615, %v9351
        %s9400 = sand.u32 %s250, 1
        %s9401 = scalar_lea.sflag [#allocation5], %s9400
        %s9402 = sand.u32 %s250, 1
        %s9403 = scalar_lea.vmem [#allocation4], %s9402
        %s9404 = sadd.s32 %s31, %s32
        %s9405 = smul.u32 48, %s9404
        %p9406 = scmp.lt.s32.totalorder %s9405, 95
        %s9407 = scalar_select %p9406, %s9405, 95
        %s9408 = smul.addr %s9407, 8
        %s9409 = scalar_lea.vmem %s10, %s9408
        // Predicated region
        $region61: #{tpu_custom_call.1} parent=55 // pred_check
          %p9410 = pneg %p260
        $region62: #{tpu_custom_call.1} parent=55 // pred_check_branch
          %9412 = sbr.rel (%p9410) target = $region64
        $region63: #{tpu_custom_call.1} parent=55 // pred_region
          %9414 = vsyncadd %s9401, 0
          %s9415 = scalar_lea.hbm %s9, %s31
          %s9417 = sshll.u32 %s9403, 4
          %s9418 = int_to_ptr.vmem [resolvable:$true] %s9417
          %s9419 = sshll.u32 %s9415, 4
          %s9420 = int_to_ptr.hbm [resolvable:$true] %s9419
          %9422 = dma.vmem_to_hbm [thread:$0]  %s9418, 16, %s9420, %s9401
        $region64: #{tpu_custom_call.1} parent=55 // pred_fallthru
          _
        // Predicated region
        $region65: #{tpu_custom_call.1} parent=55 // pred_check
          %p9423 = pneg %p288
        $region66: #{tpu_custom_call.1} parent=55 // pred_check_branch
          %9425 = sbr.rel (%p9423) target = $region68
        $region67: #{tpu_custom_call.1} parent=55 // pred_region
          %s9426 = sadd.s32 %s31, %s32
          %s9427 = smul.u32 48, %s9426
        $region68: #{tpu_custom_call.1} parent=55 // pred_fallthru
          _
      $region56: #{tpu_custom_call.1} parent=5 // pred_fallthru
        _
      %p9428 = scmp.le.s32.totalorder 2, %s22
      // Predicated region
      $region69: #{tpu_custom_call.1} parent=5 // pred_check
        %p9429 = pneg %p9428
      $region70: #{tpu_custom_call.1} parent=5 // pred_check_branch
        %9431 = sbr.rel (%p9429) target = $region72
      $region71: #{tpu_custom_call.1} parent=5 // pred_region
        %s9432 = ssub.s32 %s22, 2
        // Predicated region
        $region73: #{tpu_custom_call.1} parent=71 // pred_check
          %p9433 = pneg %p266
        $region74: #{tpu_custom_call.1} parent=71 // pred_check_branch
          %9435 = sbr.rel (%p9433) target = $region76
        $region75: #{tpu_custom_call.1} parent=71 // pred_region
          %s9436 = sand.u32 %s251, 1
          %s9437 = scalar_lea.sflag [#allocation5], %s9436
          %s9438 = sand.u32 %s251, 1
          %s9439 = scalar_lea.vmem [#allocation4], %s9438
          %9441 = dma.done %s9437, 16
        $region76: #{tpu_custom_call.1} parent=71 // pred_fallthru
          _
        // Predicated region
        $region77: #{tpu_custom_call.1} parent=71 // pred_check
          %p9442 = pneg %p294
        $region78: #{tpu_custom_call.1} parent=71 // pred_check_branch
          %9444 = sbr.rel (%p9442) target = $region80
        $region79: #{tpu_custom_call.1} parent=71 // pred_region
          %s9445 = sadd.s32 %s33, %s34
          %s9446 = smul.u32 48, %s9445
          %p9447 = scmp.lt.s32.totalorder %s9446, 95
          %s9448 = scalar_select %p9447, %s9446, 95
          %s9449 = smul.addr %s9448, 8
          %s9450 = scalar_lea.vmem %s10, %s9449
        $region80: #{tpu_custom_call.1} parent=71 // pred_fallthru
          _
      $region72: #{tpu_custom_call.1} parent=5 // pred_fallthru
        _
    $region6: #{tpu_custom_call.1} parent=1 // loop_footer
      %s26 = sadd.s32 1, %s22
    $region7: #{tpu_custom_call.1} parent=1 // loop_footer_branch
      %21 = sbr.rel target = $region3
    $region8: #{tpu_custom_call.1} parent=1 // loop_exit
      _
    %9451 = vsyncpa [#allocation5], 1
    %s9452 = scalar_lea.sflag [#allocation5], 1
    %9453 = vsyncpa %s9452, 1

</llo_original>
